<compile_context>
chip_gen: v6e
topology: v6e:2x2x1
jax: 0.10.0
libtpu: 0.0.40
codegen_flags: <defaults>
</compile_context>

<pallas_src>
import functools
import re

import jax
import jax.numpy as jnp
import numpy as np
from jax.experimental import pallas as pl
from jax.experimental.pallas import tpu as pltpu


def _device_prefers_split_k():
    """v5e's MXU is 128-deep -> prefer two K=128 matmuls over one K=256."""
    try:
        kind = jax.devices()[0].device_kind.lower()
        return ("v5 lite" in kind) or ("v5e" in kind) or ("v5litepod" in kind)
    except Exception:
        return False


def _char_rnn_kernel(ids_ref, emb_ref, wih0_ref, whh0_ref, b0_ref, w1_ref,
                     b1_ref, wfc_ref, bfc_ref, out_ref, hN_ref, cN_ref,
                     x_sc, xw0_sc, h1_sc, *, split_k):
    """Embedding gather + 2-layer LSTM recurrence + FC head, one grid step.

    ids_ref : (B, T) int32 token ids in SMEM (scalar prefetch)
    emb_ref : (V, H)  f32 embedding table
    wih0/whh0 : (H, 4H) bf16 layer-0 weights (pre-transposed, gate order i,f,o,g)
    b0/b1   : (1, 4H) f32 combined biases (b_ih + b_hh), gate order i,f,o,g
    w1      : (2H, 4H) bf16 fused [W_ih1 ; W_hh1]
    wfc/bfc : (H, Vp) bf16 / (1, Vp) f32 (vocab padded to a lane multiple)
    out_ref : (T*Bp, Vp) f32 logits, rows ordered t*Bp + b
    hN/cN   : (n_layers, Bp, H) f32 final hidden state
    x_sc    : (T*Bp, H)  f32 scratch — gathered embeddings
    xw0_sc  : (T*Bp, 4H) f32 scratch — hoisted layer-0 input projection (+ b0)
    h1_sc   : (T*Bp, H)  bf16 scratch — layer-1 outputs for the batched FC head
    """
    B, T = ids_ref.shape
    V, H = emb_ref.shape
    TB = x_sc.shape[0]
    Bp = TB // T

    # ---- in-kernel embedding gather (replaces XLA take/transpose/pad glue) ----
    x_sc[...] = jnp.zeros_like(x_sc)              # padded batch rows -> zeros
    for t in range(T):
        for b in range(B):
            idx = ids_ref[b, t]                   # scalar read from SMEM
            x_sc[pl.ds(t * Bp + b, 1), :] = emb_ref[pl.ds(idx, 1), :]

    # ---- hoisted layer-0 input projection (no sequential dependency) ----
    b0b = jnp.broadcast_to(b0_ref[...], (TB, 4 * H))
    xw0_sc[...] = jnp.dot(x_sc[...].astype(jnp.bfloat16), wih0_ref[...],
                          preferred_element_type=jnp.float32) + b0b

    # bias broadcast hoisted out of the unrolled loop (JAX does not CSE it)
    b1b = jnp.broadcast_to(b1_ref[...], (Bp, 4 * H))

    h0 = jnp.zeros((Bp, H), jnp.bfloat16)         # hidden=None -> zero init
    h1 = jnp.zeros((Bp, H), jnp.bfloat16)
    c0 = jnp.zeros((Bp, H), jnp.float32)
    c1 = jnp.zeros((Bp, H), jnp.float32)

    def activate(gates, c_prev):
        # Gate order [i, f, o, g]: one sigmoid over 3H lanes + one tanh.
        sig = jax.nn.sigmoid(gates[:, :3 * H])
        i = sig[:, 0 * H:1 * H]
        f = sig[:, 1 * H:2 * H]
        o = sig[:, 2 * H:3 * H]
        g = jnp.tanh(gates[:, 3 * H:4 * H])
        c_new = f * c_prev + i * g
        h_new = (o * jnp.tanh(c_new)).astype(jnp.bfloat16)
        return h_new, c_new

    # Fully unrolled time recurrence (T small & static): state stays in vregs.
    for t in range(T):
        # layer 0: only the recurrent K=128 matmul is on the serial path.
        g0 = (jnp.dot(h0, whh0_ref[...], preferred_element_type=jnp.float32)
              + xw0_sc[t * Bp:(t + 1) * Bp, :])
        h0, c0 = activate(g0, c0)

        # TODO(synk): inter-layer LSTM dropout + nn.Dropout are identity (eval mode).

        # layer 1: fused K=256 push (v6e/v7x) or two K=128 pushes (v5e).
        if split_k:
            g1 = (jnp.dot(h0, w1_ref[pl.ds(0, H), :],
                          preferred_element_type=jnp.float32)
                  + jnp.dot(h1, w1_ref[pl.ds(H, H), :],
                            preferred_element_type=jnp.float32)
                  + b1b)
        else:
            xh = jnp.concatenate([h0, h1], axis=-1)            # (Bp, 2H) bf16
            g1 = jnp.dot(xh, w1_ref[...],
                         preferred_element_type=jnp.float32) + b1b
        h1, c1 = activate(g1, c1)

        h1_sc[t * Bp:(t + 1) * Bp, :] = h1        # stash (bf16) for batched FC

    # Final (h_n, c_n): written exactly once.
    hN_ref[0] = h0.astype(jnp.float32)
    hN_ref[1] = h1.astype(jnp.float32)
    cN_ref[0] = c0
    cN_ref[1] = c1

    # FC head hoisted out of the recurrence: one lane-dense (T*Bp, H) @ (H, Vp).
    out_ref[...] = (jnp.dot(h1_sc[...], wfc_ref[...],
                            preferred_element_type=jnp.float32)
                    + bfc_ref[...])


def char_rnn_forward(x_ids, params, *, split_k=None):
    """Equivalent of CharRNN.forward(x, hidden=None).

    x_ids : (B, T) int32 token ids
    returns (out, (h_n, c_n)) with out: (B*T, V), h_n/c_n: (n_layers, B, H)
    """
    emb_tbl = params["embed"]                     # (V, H)
    V, H = emb_tbl.shape
    B, T = x_ids.shape
    n_layers = 2

    if split_k is None:
        split_k = _device_prefers_split_k()

    Bp = max(8, ((B + 7) // 8) * 8)               # sublane-full batch
    Vp = ((V + 127) // 128) * 128                 # lane-dense logits

    def reorder(w):
        # torch gate order [i, f, g, o] -> kernel order [i, f, o, g] (last dim).
        return jnp.concatenate(
            [w[:, :2 * H], w[:, 3 * H:4 * H], w[:, 2 * H:3 * H]], axis=-1)

    w_ih0 = reorder(params["w_ih0"]).astype(jnp.bfloat16)        # (H, 4H)
    w_hh0 = reorder(params["w_hh0"]).astype(jnp.bfloat16)        # (H, 4H)
    b0 = reorder(params["b0"])                                   # (1, 4H)
    w1 = jnp.concatenate([reorder(params["w_ih1"]),
                          reorder(params["w_hh1"])],
                         axis=0).astype(jnp.bfloat16)            # (2H, 4H)
    b1 = reorder(params["b1"])                                   # (1, 4H)
    wfc = jnp.pad(params["w_fc"], ((0, 0), (0, Vp - V))).astype(jnp.bfloat16)
    bfc = jnp.pad(params["b_fc"], ((0, 0), (0, Vp - V)))

    kernel = functools.partial(_char_rnn_kernel, split_k=split_k)

    grid_spec = pltpu.PrefetchScalarGridSpec(
        num_scalar_prefetch=1,                    # token ids -> SMEM
        grid=(1,),                                # single fused step
        in_specs=[
            pl.BlockSpec((V, H), lambda i, ids: (0, 0)),            # embed table
            pl.BlockSpec((H, 4 * H), lambda i, ids: (0, 0)),        # W_ih0
            pl.BlockSpec((H, 4 * H), lambda i, ids: (0, 0)),        # W_hh0
            pl.BlockSpec((1, 4 * H), lambda i, ids: (0, 0)),        # b0
            pl.BlockSpec((2 * H, 4 * H), lambda i, ids: (0, 0)),    # fused W1
            pl.BlockSpec((1, 4 * H), lambda i, ids: (0, 0)),        # b1
            pl.BlockSpec((H, Vp), lambda i, ids: (0, 0)),           # fc weight
            pl.BlockSpec((1, Vp), lambda i, ids: (0, 0)),           # fc bias
        ],
        out_specs=[
            pl.BlockSpec((T * Bp, Vp), lambda i, ids: (0, 0)),          # logits
            pl.BlockSpec((n_layers, Bp, H), lambda i, ids: (0, 0, 0)),  # h_n
            pl.BlockSpec((n_layers, Bp, H), lambda i, ids: (0, 0, 0)),  # c_n
        ],
        scratch_shapes=[
            pltpu.VMEM((T * Bp, H), jnp.float32),       # gathered embeddings
            pltpu.VMEM((T * Bp, 4 * H), jnp.float32),   # hoisted xw0 (+ b0)
            pltpu.VMEM((T * Bp, H), jnp.bfloat16),      # layer-1 outputs
        ],
    )

    flops = int(2 * T * Bp * H * 4 * H            # hoisted xw0
                + 2 * T * Bp * H * 4 * H          # layer-0 recurrent
                + 2 * T * Bp * (2 * H) * 4 * H    # layer-1
                + 2 * T * Bp * H * Vp)            # fc head
    transcendentals = int(2 * T * Bp * 5 * H)
    bytes_accessed = int(
        sum(int(np.prod(a.shape)) * a.dtype.itemsize
            for a in (emb_tbl, w_ih0, w_hh0, b0, w1, b1, wfc, bfc))
        + B * T * 4
        + T * Bp * Vp * 4 + 2 * n_layers * Bp * H * 4)

    out_flat, h_n, c_n = pl.pallas_call(
        kernel,
        out_shape=(
            jax.ShapeDtypeStruct((T * Bp, Vp), jnp.float32),
            jax.ShapeDtypeStruct((n_layers, Bp, H), jnp.float32),
            jax.ShapeDtypeStruct((n_layers, Bp, H), jnp.float32),
        ),
        grid_spec=grid_spec,
        compiler_params=pltpu.CompilerParams(
            dimension_semantics=("arbitrary",)),
        cost_estimate=pl.CostEstimate(flops=flops,
                                      transcendentals=transcendentals,
                                      bytes_accessed=bytes_accessed),
    )(x_ids.astype(jnp.int32), emb_tbl, w_ih0, w_hh0, b0, w1, b1, wfc, bfc)

    # torch (batch_first=True): dropout(r_output).view(-1, n_hidden) -> fc
    # => output rows ordered b*T + t; kernel produced t*Bp + b.
    out = jnp.transpose(out_flat.reshape(T, Bp, Vp)[:, :B, :V], (1, 0, 2))
    out = out.reshape(B * T, V)
    return out, (h_n[:, :B, :], c_n[:, :B, :])


def char_rnn_reference(x_ids, params):
    """Pure-JAX f32 reference (same math, no Pallas) for a correctness check."""
    emb = jnp.take(params["embed"], x_ids, axis=0)       # (B, T, H)
    B, T, H = emb.shape

    def cell(x, h, c, wih, whh, b):
        g = x @ wih + h @ whh + b                        # gate order i, f, g, o
        i = jax.nn.sigmoid(g[:, 0 * H:1 * H])
        f = jax.nn.sigmoid(g[:, 1 * H:2 * H])
        gg = jnp.tanh(g[:, 2 * H:3 * H])
        o = jax.nn.sigmoid(g[:, 3 * H:4 * H])
        c = f * c + i * gg
        h = o * jnp.tanh(c)
        return h, c

    h0 = c0 = h1 = c1 = jnp.zeros((B, H), jnp.float32)
    outs = []
    for t in range(T):
        h0, c0 = cell(emb[:, t], h0, c0, params["w_ih0"], params["w_hh0"], params["b0"])
        h1, c1 = cell(h0, h1, c1, params["w_ih1"], params["w_hh1"], params["b1"])
        outs.append(h1)
    r = jnp.stack(outs, axis=1)                          # (B, T, H)
    out = r.reshape(B * T, H) @ params["w_fc"] + params["b_fc"]
    return out, (jnp.stack([h0, h1]), jnp.stack([c0, c1]))


def init_params(key, vocab_size, n_hidden):
    """Deterministic synthetic parameters (shapes match nn.Embedding/nn.LSTM/nn.Linear)."""
    H, V = n_hidden, vocab_size
    ks = jax.random.split(key, 10)
    s = 1.0 / jnp.sqrt(jnp.float32(H))

    def u(k, shape):
        return jax.random.uniform(k, shape, jnp.float32, -s, s)

    return {
        "embed": jax.random.normal(ks[0], (V, H), jnp.float32) * 0.1,   # nn.Embedding(V, H)
        # LSTM layer 0: weights stored pre-transposed (in_dim, 4H); bias = b_ih + b_hh
        "w_ih0": u(ks[1], (H, 4 * H)),
        "w_hh0": u(ks[2], (H, 4 * H)),
        "b0":    u(ks[3], (1, 4 * H)),
        # LSTM layer 1
        "w_ih1": u(ks[4], (H, 4 * H)),
        "w_hh1": u(ks[5], (H, 4 * H)),
        "b1":    u(ks[6], (1, 4 * H)),
        # nn.Linear(H, V): stored transposed (H, V)
        "w_fc":  u(ks[7], (H, V)),
        "b_fc":  u(ks[8], (1, V)),
    }


if __name__ == "__main__":
    # tokenization exactly like the reference snippet
    textfile = "the quick  brown fox   jumps over the lazy  dog and runs again"
    textfile = re.sub(' +', ' ', textfile)
    chars = tuple(sorted(set(textfile)))            # sorted for determinism
    char2int = {ch: ii for ii, ch in enumerate(chars)}

    V = len(chars)
    B, T, H = 2, 8, 128                             # small shapes; H lane-aligned

    ids = jnp.array(
        [[char2int[c] for c in textfile[b * T:(b + 1) * T]] for b in range(B)],
        dtype=jnp.int32)                            # (B, T)

    params = init_params(jax.random.PRNGKey(0), V, H)

    out, (h_n, c_n) = char_rnn_forward(ids, params)
    jax.block_until_ready((out, h_n, c_n))

    assert out.shape == (B * T, V)
    assert h_n.shape == (2, B, H) and c_n.shape == (2, B, H)

    # Correctness check vs pure-JAX f32 reference (kernel matmuls / h-state are bf16).
    out_ref, (h_ref, c_ref) = char_rnn_reference(ids, params)
    np.testing.assert_allclose(np.asarray(out), np.asarray(out_ref), rtol=5e-2, atol=5e-2)
    np.testing.assert_allclose(np.asarray(h_n), np.asarray(h_ref), rtol=5e-2, atol=5e-2)
    np.testing.assert_allclose(np.asarray(c_n), np.asarray(c_ref), rtol=5e-2, atol=5e-2)

    print("KERNEL_OK")
</pallas_src>

<mosaic_0001>
module attributes {stable_mosaic.version = 11 : i64} {
  func.func @_char_rnn_kernel(%arg0: i32, %arg1: memref<2x8xi32, #tpu.memory_space<smem>>, %arg2: memref<27x128xf32, #tpu.memory_space<vmem>>, %arg3: memref<128x512xbf16, #tpu.memory_space<vmem>>, %arg4: memref<128x512xbf16, #tpu.memory_space<vmem>>, %arg5: memref<1x512xf32, #tpu.memory_space<vmem>>, %arg6: memref<256x512xbf16, #tpu.memory_space<vmem>>, %arg7: memref<1x512xf32, #tpu.memory_space<vmem>>, %arg8: memref<128x128xbf16, #tpu.memory_space<vmem>>, %arg9: memref<1x128xf32, #tpu.memory_space<vmem>>, %arg10: memref<64x128xf32, #tpu.memory_space<vmem>>, %arg11: memref<2x8x128xf32, #tpu.memory_space<vmem>>, %arg12: memref<2x8x128xf32, #tpu.memory_space<vmem>>, %arg13: memref<64x128xf32, #tpu.memory_space<vmem>>, %arg14: memref<64x512xf32, #tpu.memory_space<vmem>>, %arg15: memref<64x128xbf16, #tpu.memory_space<vmem>>) attributes {dimension_semantics = [#tpu.dimension_semantics<arbitrary>], iteration_bounds = array<i64: 1>, scalar_prefetch = 1 : i64, scratch_operands = 3 : i64, tpu.core_type = #tpu.core_type<tc>, window_params = [{pipeline_mode = #tpu.pipeline_mode<synchronous>, transform_indices = @transform_0, window_bounds = array<i64: 27, 128>}, {pipeline_mode = #tpu.pipeline_mode<synchronous>, transform_indices = @transform_1, window_bounds = array<i64: 128, 512>}, {pipeline_mode = #tpu.pipeline_mode<synchronous>, transform_indices = @transform_2, window_bounds = array<i64: 128, 512>}, {pipeline_mode = #tpu.pipeline_mode<synchronous>, transform_indices = @transform_3, window_bounds = array<i64: 1, 512>}, {pipeline_mode = #tpu.pipeline_mode<synchronous>, transform_indices = @transform_4, window_bounds = array<i64: 256, 512>}, {pipeline_mode = #tpu.pipeline_mode<synchronous>, transform_indices = @transform_5, window_bounds = array<i64: 1, 512>}, {pipeline_mode = #tpu.pipeline_mode<synchronous>, transform_indices = @transform_6, window_bounds = array<i64: 128, 128>}, {pipeline_mode = #tpu.pipeline_mode<synchronous>, transform_indices = @transform_7, window_bounds = array<i64: 1, 128>}, {pipeline_mode = #tpu.pipeline_mode<synchronous>, transform_indices = @transform_8, window_bounds = array<i64: 64, 128>}, {pipeline_mode = #tpu.pipeline_mode<synchronous>, transform_indices = @transform_9, window_bounds = array<i64: 2, 8, 128>}, {pipeline_mode = #tpu.pipeline_mode<synchronous>, transform_indices = @transform_10, window_bounds = array<i64: 2, 8, 128>}]} {
    %cst = arith.constant 0.000000e+00 : f32
    %0 = vector.broadcast %cst : f32 to vector<64x128xf32>
    %c0 = arith.constant 0 : index
    %c0_0 = arith.constant 0 : index
    %1 = vector.load %arg13[%c0, %c0_0] : memref<64x128xf32, #tpu.memory_space<vmem>>, vector<64x128xf32>
    tpu.vector_store %arg13[%c0, %c0_0], %0 {strides = array<i32>} : memref<64x128xf32, #tpu.memory_space<vmem>>, vector<64x128xf32>,
    %c0_1 = arith.constant 0 : index
    %c0_2 = arith.constant 0 : index
    %2 = memref.load %arg1[%c0_1, %c0_2] : memref<2x8xi32, #tpu.memory_space<smem>>
    %3 = arith.index_cast %2 : i32 to index
    %c0_3 = arith.constant 0 : index
    %4 = vector.load %arg2[%3, %c0_3] : memref<27x128xf32, #tpu.memory_space<vmem>>, vector<1x128xf32>
    %c0_4 = arith.constant 0 : index
    %c0_5 = arith.constant 0 : index
    %5 = vector.load %arg13[%c0_4, %c0_5] : memref<64x128xf32, #tpu.memory_space<vmem>>, vector<1x128xf32>
    tpu.vector_store %arg13[%c0_4, %c0_5], %4 {strides = array<i32>} : memref<64x128xf32, #tpu.memory_space<vmem>>, vector<1x128xf32>,
    %c1 = arith.constant 1 : index
    %c0_6 = arith.constant 0 : index
    %6 = memref.load %arg1[%c1, %c0_6] : memref<2x8xi32, #tpu.memory_space<smem>>
    %7 = arith.index_cast %6 : i32 to index
    %c0_7 = arith.constant 0 : index
    %8 = vector.load %arg2[%7, %c0_7] : memref<27x128xf32, #tpu.memory_space<vmem>>, vector<1x128xf32>
    %c1_8 = arith.constant 1 : index
    %c0_9 = arith.constant 0 : index
    %9 = vector.load %arg13[%c1_8, %c0_9] : memref<64x128xf32, #tpu.memory_space<vmem>>, vector<1x128xf32>
    tpu.vector_store %arg13[%c1_8, %c0_9], %8 {strides = array<i32>} : memref<64x128xf32, #tpu.memory_space<vmem>>, vector<1x128xf32>,
    %c0_10 = arith.constant 0 : index
    %c1_11 = arith.constant 1 : index
    %10 = memref.load %arg1[%c0_10, %c1_11] : memref<2x8xi32, #tpu.memory_space<smem>>
    %11 = arith.index_cast %10 : i32 to index
    %c0_12 = arith.constant 0 : index
    %12 = vector.load %arg2[%11, %c0_12] : memref<27x128xf32, #tpu.memory_space<vmem>>, vector<1x128xf32>
    %c8 = arith.constant 8 : index
    %c0_13 = arith.constant 0 : index
    %13 = vector.load %arg13[%c8, %c0_13] : memref<64x128xf32, #tpu.memory_space<vmem>>, vector<1x128xf32>
    tpu.vector_store %arg13[%c8, %c0_13], %12 {strides = array<i32>} : memref<64x128xf32, #tpu.memory_space<vmem>>, vector<1x128xf32>,
    %c1_14 = arith.constant 1 : index
    %c1_15 = arith.constant 1 : index
    %14 = memref.load %arg1[%c1_14, %c1_15] : memref<2x8xi32, #tpu.memory_space<smem>>
    %15 = arith.index_cast %14 : i32 to index
    %c0_16 = arith.constant 0 : index
    %16 = vector.load %arg2[%15, %c0_16] : memref<27x128xf32, #tpu.memory_space<vmem>>, vector<1x128xf32>
    %c9 = arith.constant 9 : index
    %c0_17 = arith.constant 0 : index
    %17 = vector.load %arg13[%c9, %c0_17] : memref<64x128xf32, #tpu.memory_space<vmem>>, vector<1x128xf32>
    tpu.vector_store %arg13[%c9, %c0_17], %16 {strides = array<i32>} : memref<64x128xf32, #tpu.memory_space<vmem>>, vector<1x128xf32>,
    %c0_18 = arith.constant 0 : index
    %c2 = arith.constant 2 : index
    %18 = memref.load %arg1[%c0_18, %c2] : memref<2x8xi32, #tpu.memory_space<smem>>
    %19 = arith.index_cast %18 : i32 to index
    %c0_19 = arith.constant 0 : index
    %20 = vector.load %arg2[%19, %c0_19] : memref<27x128xf32, #tpu.memory_space<vmem>>, vector<1x128xf32>
    %c16 = arith.constant 16 : index
    %c0_20 = arith.constant 0 : index
    %21 = vector.load %arg13[%c16, %c0_20] : memref<64x128xf32, #tpu.memory_space<vmem>>, vector<1x128xf32>
    tpu.vector_store %arg13[%c16, %c0_20], %20 {strides = array<i32>} : memref<64x128xf32, #tpu.memory_space<vmem>>, vector<1x128xf32>,
    %c1_21 = arith.constant 1 : index
    %c2_22 = arith.constant 2 : index
    %22 = memref.load %arg1[%c1_21, %c2_22] : memref<2x8xi32, #tpu.memory_space<smem>>
    %23 = arith.index_cast %22 : i32 to index
    %c0_23 = arith.constant 0 : index
    %24 = vector.load %arg2[%23, %c0_23] : memref<27x128xf32, #tpu.memory_space<vmem>>, vector<1x128xf32>
    %c17 = arith.constant 17 : index
    %c0_24 = arith.constant 0 : index
    %25 = vector.load %arg13[%c17, %c0_24] : memref<64x128xf32, #tpu.memory_space<vmem>>, vector<1x128xf32>
    tpu.vector_store %arg13[%c17, %c0_24], %24 {strides = array<i32>} : memref<64x128xf32, #tpu.memory_space<vmem>>, vector<1x128xf32>,
    %c0_25 = arith.constant 0 : index
    %c3 = arith.constant 3 : index
    %26 = memref.load %arg1[%c0_25, %c3] : memref<2x8xi32, #tpu.memory_space<smem>>
    %27 = arith.index_cast %26 : i32 to index
    %c0_26 = arith.constant 0 : index
    %28 = vector.load %arg2[%27, %c0_26] : memref<27x128xf32, #tpu.memory_space<vmem>>, vector<1x128xf32>
    %c24 = arith.constant 24 : index
    %c0_27 = arith.constant 0 : index
    %29 = vector.load %arg13[%c24, %c0_27] : memref<64x128xf32, #tpu.memory_space<vmem>>, vector<1x128xf32>
    tpu.vector_store %arg13[%c24, %c0_27], %28 {strides = array<i32>} : memref<64x128xf32, #tpu.memory_space<vmem>>, vector<1x128xf32>,
    %c1_28 = arith.constant 1 : index
    %c3_29 = arith.constant 3 : index
    %30 = memref.load %arg1[%c1_28, %c3_29] : memref<2x8xi32, #tpu.memory_space<smem>>
    %31 = arith.index_cast %30 : i32 to index
    %c0_30 = arith.constant 0 : index
    %32 = vector.load %arg2[%31, %c0_30] : memref<27x128xf32, #tpu.memory_space<vmem>>, vector<1x128xf32>
    %c25 = arith.constant 25 : index
    %c0_31 = arith.constant 0 : index
    %33 = vector.load %arg13[%c25, %c0_31] : memref<64x128xf32, #tpu.memory_space<vmem>>, vector<1x128xf32>
    tpu.vector_store %arg13[%c25, %c0_31], %32 {strides = array<i32>} : memref<64x128xf32, #tpu.memory_space<vmem>>, vector<1x128xf32>,
    %c0_32 = arith.constant 0 : index
    %c4 = arith.constant 4 : index
    %34 = memref.load %arg1[%c0_32, %c4] : memref<2x8xi32, #tpu.memory_space<smem>>
    %35 = arith.index_cast %34 : i32 to index
    %c0_33 = arith.constant 0 : index
    %36 = vector.load %arg2[%35, %c0_33] : memref<27x128xf32, #tpu.memory_space<vmem>>, vector<1x128xf32>
    %c32 = arith.constant 32 : index
    %c0_34 = arith.constant 0 : index
    %37 = vector.load %arg13[%c32, %c0_34] : memref<64x128xf32, #tpu.memory_space<vmem>>, vector<1x128xf32>
    tpu.vector_store %arg13[%c32, %c0_34], %36 {strides = array<i32>} : memref<64x128xf32, #tpu.memory_space<vmem>>, vector<1x128xf32>,
    %c1_35 = arith.constant 1 : index
    %c4_36 = arith.constant 4 : index
    %38 = memref.load %arg1[%c1_35, %c4_36] : memref<2x8xi32, #tpu.memory_space<smem>>
    %39 = arith.index_cast %38 : i32 to index
    %c0_37 = arith.constant 0 : index
    %40 = vector.load %arg2[%39, %c0_37] : memref<27x128xf32, #tpu.memory_space<vmem>>, vector<1x128xf32>
    %c33 = arith.constant 33 : index
    %c0_38 = arith.constant 0 : index
    %41 = vector.load %arg13[%c33, %c0_38] : memref<64x128xf32, #tpu.memory_space<vmem>>, vector<1x128xf32>
    tpu.vector_store %arg13[%c33, %c0_38], %40 {strides = array<i32>} : memref<64x128xf32, #tpu.memory_space<vmem>>, vector<1x128xf32>,
    %c0_39 = arith.constant 0 : index
    %c5 = arith.constant 5 : index
    %42 = memref.load %arg1[%c0_39, %c5] : memref<2x8xi32, #tpu.memory_space<smem>>
    %43 = arith.index_cast %42 : i32 to index
    %c0_40 = arith.constant 0 : index
    %44 = vector.load %arg2[%43, %c0_40] : memref<27x128xf32, #tpu.memory_space<vmem>>, vector<1x128xf32>
    %c40 = arith.constant 40 : index
    %c0_41 = arith.constant 0 : index
    %45 = vector.load %arg13[%c40, %c0_41] : memref<64x128xf32, #tpu.memory_space<vmem>>, vector<1x128xf32>
    tpu.vector_store %arg13[%c40, %c0_41], %44 {strides = array<i32>} : memref<64x128xf32, #tpu.memory_space<vmem>>, vector<1x128xf32>,
    %c1_42 = arith.constant 1 : index
    %c5_43 = arith.constant 5 : index
    %46 = memref.load %arg1[%c1_42, %c5_43] : memref<2x8xi32, #tpu.memory_space<smem>>
    %47 = arith.index_cast %46 : i32 to index
    %c0_44 = arith.constant 0 : index
    %48 = vector.load %arg2[%47, %c0_44] : memref<27x128xf32, #tpu.memory_space<vmem>>, vector<1x128xf32>
    %c41 = arith.constant 41 : index
    %c0_45 = arith.constant 0 : index
    %49 = vector.load %arg13[%c41, %c0_45] : memref<64x128xf32, #tpu.memory_space<vmem>>, vector<1x128xf32>
    tpu.vector_store %arg13[%c41, %c0_45], %48 {strides = array<i32>} : memref<64x128xf32, #tpu.memory_space<vmem>>, vector<1x128xf32>,
    %c0_46 = arith.constant 0 : index
    %c6 = arith.constant 6 : index
    %50 = memref.load %arg1[%c0_46, %c6] : memref<2x8xi32, #tpu.memory_space<smem>>
    %51 = arith.index_cast %50 : i32 to index
    %c0_47 = arith.constant 0 : index
    %52 = vector.load %arg2[%51, %c0_47] : memref<27x128xf32, #tpu.memory_space<vmem>>, vector<1x128xf32>
    %c48 = arith.constant 48 : index
    %c0_48 = arith.constant 0 : index
    %53 = vector.load %arg13[%c48, %c0_48] : memref<64x128xf32, #tpu.memory_space<vmem>>, vector<1x128xf32>
    tpu.vector_store %arg13[%c48, %c0_48], %52 {strides = array<i32>} : memref<64x128xf32, #tpu.memory_space<vmem>>, vector<1x128xf32>,
    %c1_49 = arith.constant 1 : index
    %c6_50 = arith.constant 6 : index
    %54 = memref.load %arg1[%c1_49, %c6_50] : memref<2x8xi32, #tpu.memory_space<smem>>
    %55 = arith.index_cast %54 : i32 to index
    %c0_51 = arith.constant 0 : index
    %56 = vector.load %arg2[%55, %c0_51] : memref<27x128xf32, #tpu.memory_space<vmem>>, vector<1x128xf32>
    %c49 = arith.constant 49 : index
    %c0_52 = arith.constant 0 : index
    %57 = vector.load %arg13[%c49, %c0_52] : memref<64x128xf32, #tpu.memory_space<vmem>>, vector<1x128xf32>
    tpu.vector_store %arg13[%c49, %c0_52], %56 {strides = array<i32>} : memref<64x128xf32, #tpu.memory_space<vmem>>, vector<1x128xf32>,
    %c0_53 = arith.constant 0 : index
    %c7 = arith.constant 7 : index
    %58 = memref.load %arg1[%c0_53, %c7] : memref<2x8xi32, #tpu.memory_space<smem>>
    %59 = arith.index_cast %58 : i32 to index
    %c0_54 = arith.constant 0 : index
    %60 = vector.load %arg2[%59, %c0_54] : memref<27x128xf32, #tpu.memory_space<vmem>>, vector<1x128xf32>
    %c56 = arith.constant 56 : index
    %c0_55 = arith.constant 0 : index
    %61 = vector.load %arg13[%c56, %c0_55] : memref<64x128xf32, #tpu.memory_space<vmem>>, vector<1x128xf32>
    tpu.vector_store %arg13[%c56, %c0_55], %60 {strides = array<i32>} : memref<64x128xf32, #tpu.memory_space<vmem>>, vector<1x128xf32>,
    %c1_56 = arith.constant 1 : index
    %c7_57 = arith.constant 7 : index
    %62 = memref.load %arg1[%c1_56, %c7_57] : memref<2x8xi32, #tpu.memory_space<smem>>
    %63 = arith.index_cast %62 : i32 to index
    %c0_58 = arith.constant 0 : index
    %64 = vector.load %arg2[%63, %c0_58] : memref<27x128xf32, #tpu.memory_space<vmem>>, vector<1x128xf32>
    %c57 = arith.constant 57 : index
    %c0_59 = arith.constant 0 : index
    %65 = vector.load %arg13[%c57, %c0_59] : memref<64x128xf32, #tpu.memory_space<vmem>>, vector<1x128xf32>
    tpu.vector_store %arg13[%c57, %c0_59], %64 {strides = array<i32>} : memref<64x128xf32, #tpu.memory_space<vmem>>, vector<1x128xf32>,
    %c0_60 = arith.constant 0 : index
    %c0_61 = arith.constant 0 : index
    %66 = vector.load %arg5[%c0_60, %c0_61] : memref<1x512xf32, #tpu.memory_space<vmem>>, vector<1x512xf32>
    %67 = vector.shape_cast %66 : vector<1x512xf32> to vector<1x512xf32>
    %68 = vector.broadcast %67 : vector<1x512xf32> to vector<64x512xf32>
    %c0_62 = arith.constant 0 : index
    %c0_63 = arith.constant 0 : index
    %69 = vector.load %arg13[%c0_62, %c0_63] : memref<64x128xf32, #tpu.memory_space<vmem>>, vector<64x128xf32>
    %70 = arith.truncf %69 : vector<64x128xf32> to vector<64x128xbf16>
    %c0_64 = arith.constant 0 : index
    %c0_65 = arith.constant 0 : index
    %71 = vector.load %arg3[%c0_64, %c0_65] : memref<128x512xbf16, #tpu.memory_space<vmem>>, vector<128x512xbf16>
    %cst_66 = arith.constant dense<0.000000e+00> : vector<64x512xf32>
    %72 = tpu.matmul %70, %71, %cst_66 {dimension_numbers = #tpu.dot_dimension_numbers<[1], [0], [0], [1], [0, 0, 1, 1], [], []>} : vector<64x128xbf16>, vector<128x512xbf16>, vector<64x512xf32> -> vector<64x512xf32>
    %73 = arith.addf %72, %68 : vector<64x512xf32>
    %c0_67 = arith.constant 0 : index
    %c0_68 = arith.constant 0 : index
    %74 = vector.load %arg14[%c0_67, %c0_68] : memref<64x512xf32, #tpu.memory_space<vmem>>, vector<64x512xf32>
    tpu.vector_store %arg14[%c0_67, %c0_68], %73 {strides = array<i32>} : memref<64x512xf32, #tpu.memory_space<vmem>>, vector<64x512xf32>,
    %c0_69 = arith.constant 0 : index
    %c0_70 = arith.constant 0 : index
    %75 = vector.load %arg7[%c0_69, %c0_70] : memref<1x512xf32, #tpu.memory_space<vmem>>, vector<1x512xf32>
    %76 = vector.shape_cast %75 : vector<1x512xf32> to vector<1x512xf32>
    %77 = vector.broadcast %76 : vector<1x512xf32> to vector<8x512xf32>
    %cst_71 = arith.constant 0.000000e+00 : bf16
    %78 = vector.broadcast %cst_71 : bf16 to vector<8x128xbf16>
    %cst_72 = arith.constant 0.000000e+00 : bf16
    %79 = vector.broadcast %cst_72 : bf16 to vector<8x128xbf16>
    %cst_73 = arith.constant 0.000000e+00 : f32
    %80 = vector.broadcast %cst_73 : f32 to vector<8x128xf32>
    %cst_74 = arith.constant 0.000000e+00 : f32
    %81 = vector.broadcast %cst_74 : f32 to vector<8x128xf32>
    %c0_75 = arith.constant 0 : index
    %c0_76 = arith.constant 0 : index
    %82 = vector.load %arg4[%c0_75, %c0_76] : memref<128x512xbf16, #tpu.memory_space<vmem>>, vector<128x512xbf16>
    %cst_77 = arith.constant dense<0.000000e+00> : vector<8x512xf32>
    %83 = tpu.matmul %78, %82, %cst_77 {dimension_numbers = #tpu.dot_dimension_numbers<[1], [0], [0], [1], [0, 0, 1, 1], [], []>} : vector<8x128xbf16>, vector<128x512xbf16>, vector<8x512xf32> -> vector<8x512xf32>
    %c0_78 = arith.constant 0 : index
    %c0_79 = arith.constant 0 : index
    %84 = vector.load %arg14[%c0_78, %c0_79] : memref<64x512xf32, #tpu.memory_space<vmem>>, vector<8x512xf32>
    %85 = arith.addf %83, %84 : vector<8x512xf32>
    %86 = vector.extract_strided_slice %85 {offsets = [0, 0], sizes = [8, 384], strides = [1, 1]} : vector<8x512xf32> to vector<8x384xf32>
    %87 = arith.negf %86 : vector<8x384xf32>
    %88 = math.exp %87 : vector<8x384xf32>
    %cst_80 = arith.constant 1.000000e+00 : f32
    %89 = vector.broadcast %cst_80 : f32 to vector<8x384xf32>
    %90 = arith.addf %89, %88 : vector<8x384xf32>
    %91 = arith.divf %89, %90 : vector<8x384xf32>
    %92 = vector.extract_strided_slice %91 {offsets = [0, 0], sizes = [8, 128], strides = [1, 1]} : vector<8x384xf32> to vector<8x128xf32>
    %93 = vector.extract_strided_slice %91 {offsets = [0, 128], sizes = [8, 128], strides = [1, 1]} : vector<8x384xf32> to vector<8x128xf32>
    %94 = vector.extract_strided_slice %91 {offsets = [0, 256], sizes = [8, 128], strides = [1, 1]} : vector<8x384xf32> to vector<8x128xf32>
    %95 = vector.extract_strided_slice %85 {offsets = [0, 384], sizes = [8, 128], strides = [1, 1]} : vector<8x512xf32> to vector<8x128xf32>
    %96 = math.tanh %95 : vector<8x128xf32>
    %97 = arith.mulf %93, %80 : vector<8x128xf32>
    %98 = arith.mulf %92, %96 : vector<8x128xf32>
    %99 = arith.addf %97, %98 : vector<8x128xf32>
    %100 = math.tanh %99 : vector<8x128xf32>
    %101 = arith.mulf %94, %100 : vector<8x128xf32>
    %102 = arith.truncf %101 : vector<8x128xf32> to vector<8x128xbf16>
    %103 = tpu.concatenate %102, %79 in 1 : vector<8x128xbf16>, vector<8x128xbf16> -> vector<8x256xbf16>
    %c0_81 = arith.constant 0 : index
    %c0_82 = arith.constant 0 : index
    %104 = vector.load %arg6[%c0_81, %c0_82] : memref<256x512xbf16, #tpu.memory_space<vmem>>, vector<256x512xbf16>
    %cst_83 = arith.constant dense<0.000000e+00> : vector<8x512xf32>
    %105 = tpu.matmul %103, %104, %cst_83 {dimension_numbers = #tpu.dot_dimension_numbers<[1], [0], [0], [1], [0, 0, 1, 1], [], []>} : vector<8x256xbf16>, vector<256x512xbf16>, vector<8x512xf32> -> vector<8x512xf32>
    %106 = arith.addf %105, %77 : vector<8x512xf32>
    %107 = vector.extract_strided_slice %106 {offsets = [0, 0], sizes = [8, 384], strides = [1, 1]} : vector<8x512xf32> to vector<8x384xf32>
    %108 = arith.negf %107 : vector<8x384xf32>
    %109 = math.exp %108 : vector<8x384xf32>
    %cst_84 = arith.constant 1.000000e+00 : f32
    %110 = vector.broadcast %cst_84 : f32 to vector<8x384xf32>
    %111 = arith.addf %110, %109 : vector<8x384xf32>
    %112 = arith.divf %110, %111 : vector<8x384xf32>
    %113 = vector.extract_strided_slice %112 {offsets = [0, 0], sizes = [8, 128], strides = [1, 1]} : vector<8x384xf32> to vector<8x128xf32>
    %114 = vector.extract_strided_slice %112 {offsets = [0, 128], sizes = [8, 128], strides = [1, 1]} : vector<8x384xf32> to vector<8x128xf32>
    %115 = vector.extract_strided_slice %112 {offsets = [0, 256], sizes = [8, 128], strides = [1, 1]} : vector<8x384xf32> to vector<8x128xf32>
    %116 = vector.extract_strided_slice %106 {offsets = [0, 384], sizes = [8, 128], strides = [1, 1]} : vector<8x512xf32> to vector<8x128xf32>
    %117 = math.tanh %116 : vector<8x128xf32>
    %118 = arith.mulf %114, %81 : vector<8x128xf32>
    %119 = arith.mulf %113, %117 : vector<8x128xf32>
    %120 = arith.addf %118, %119 : vector<8x128xf32>
    %121 = math.tanh %120 : vector<8x128xf32>
    %122 = arith.mulf %115, %121 : vector<8x128xf32>
    %123 = arith.truncf %122 : vector<8x128xf32> to vector<8x128xbf16>
    %c0_85 = arith.constant 0 : index
    %c0_86 = arith.constant 0 : index
    %124 = vector.load %arg15[%c0_85, %c0_86] : memref<64x128xbf16, #tpu.memory_space<vmem>>, vector<8x128xbf16>
    tpu.vector_store %arg15[%c0_85, %c0_86], %123 {strides = array<i32>} : memref<64x128xbf16, #tpu.memory_space<vmem>>, vector<8x128xbf16>,
    %c0_87 = arith.constant 0 : index
    %c0_88 = arith.constant 0 : index
    %125 = vector.load %arg4[%c0_87, %c0_88] : memref<128x512xbf16, #tpu.memory_space<vmem>>, vector<128x512xbf16>
    %cst_89 = arith.constant dense<0.000000e+00> : vector<8x512xf32>
    %126 = tpu.matmul %102, %125, %cst_89 {dimension_numbers = #tpu.dot_dimension_numbers<[1], [0], [0], [1], [0, 0, 1, 1], [], []>} : vector<8x128xbf16>, vector<128x512xbf16>, vector<8x512xf32> -> vector<8x512xf32>
    %c8_90 = arith.constant 8 : index
    %c0_91 = arith.constant 0 : index
    %127 = vector.load %arg14[%c8_90, %c0_91] : memref<64x512xf32, #tpu.memory_space<vmem>>, vector<8x512xf32>
    %128 = arith.addf %126, %127 : vector<8x512xf32>
    %129 = vector.extract_strided_slice %128 {offsets = [0, 0], sizes = [8, 384], strides = [1, 1]} : vector<8x512xf32> to vector<8x384xf32>
    %130 = arith.negf %129 : vector<8x384xf32>
    %131 = math.exp %130 : vector<8x384xf32>
    %cst_92 = arith.constant 1.000000e+00 : f32
    %132 = vector.broadcast %cst_92 : f32 to vector<8x384xf32>
    %133 = arith.addf %132, %131 : vector<8x384xf32>
    %134 = arith.divf %132, %133 : vector<8x384xf32>
    %135 = vector.extract_strided_slice %134 {offsets = [0, 0], sizes = [8, 128], strides = [1, 1]} : vector<8x384xf32> to vector<8x128xf32>
    %136 = vector.extract_strided_slice %134 {offsets = [0, 128], sizes = [8, 128], strides = [1, 1]} : vector<8x384xf32> to vector<8x128xf32>
    %137 = vector.extract_strided_slice %134 {offsets = [0, 256], sizes = [8, 128], strides = [1, 1]} : vector<8x384xf32> to vector<8x128xf32>
    %138 = vector.extract_strided_slice %128 {offsets = [0, 384], sizes = [8, 128], strides = [1, 1]} : vector<8x512xf32> to vector<8x128xf32>
    %139 = math.tanh %138 : vector<8x128xf32>
    %140 = arith.mulf %136, %99 : vector<8x128xf32>
    %141 = arith.mulf %135, %139 : vector<8x128xf32>
    %142 = arith.addf %140, %141 : vector<8x128xf32>
    %143 = math.tanh %142 : vector<8x128xf32>
    %144 = arith.mulf %137, %143 : vector<8x128xf32>
    %145 = arith.truncf %144 : vector<8x128xf32> to vector<8x128xbf16>
    %146 = tpu.concatenate %145, %123 in 1 : vector<8x128xbf16>, vector<8x128xbf16> -> vector<8x256xbf16>
    %c0_93 = arith.constant 0 : index
    %c0_94 = arith.constant 0 : index
    %147 = vector.load %arg6[%c0_93, %c0_94] : memref<256x512xbf16, #tpu.memory_space<vmem>>, vector<256x512xbf16>
    %cst_95 = arith.constant dense<0.000000e+00> : vector<8x512xf32>
    %148 = tpu.matmul %146, %147, %cst_95 {dimension_numbers = #tpu.dot_dimension_numbers<[1], [0], [0], [1], [0, 0, 1, 1], [], []>} : vector<8x256xbf16>, vector<256x512xbf16>, vector<8x512xf32> -> vector<8x512xf32>
    %149 = arith.addf %148, %77 : vector<8x512xf32>
    %150 = vector.extract_strided_slice %149 {offsets = [0, 0], sizes = [8, 384], strides = [1, 1]} : vector<8x512xf32> to vector<8x384xf32>
    %151 = arith.negf %150 : vector<8x384xf32>
    %152 = math.exp %151 : vector<8x384xf32>
    %cst_96 = arith.constant 1.000000e+00 : f32
    %153 = vector.broadcast %cst_96 : f32 to vector<8x384xf32>
    %154 = arith.addf %153, %152 : vector<8x384xf32>
    %155 = arith.divf %153, %154 : vector<8x384xf32>
    %156 = vector.extract_strided_slice %155 {offsets = [0, 0], sizes = [8, 128], strides = [1, 1]} : vector<8x384xf32> to vector<8x128xf32>
    %157 = vector.extract_strided_slice %155 {offsets = [0, 128], sizes = [8, 128], strides = [1, 1]} : vector<8x384xf32> to vector<8x128xf32>
    %158 = vector.extract_strided_slice %155 {offsets = [0, 256], sizes = [8, 128], strides = [1, 1]} : vector<8x384xf32> to vector<8x128xf32>
    %159 = vector.extract_strided_slice %149 {offsets = [0, 384], sizes = [8, 128], strides = [1, 1]} : vector<8x512xf32> to vector<8x128xf32>
    %160 = math.tanh %159 : vector<8x128xf32>
    %161 = arith.mulf %157, %120 : vector<8x128xf32>
    %162 = arith.mulf %156, %160 : vector<8x128xf32>
    %163 = arith.addf %161, %162 : vector<8x128xf32>
    %164 = math.tanh %163 : vector<8x128xf32>
    %165 = arith.mulf %158, %164 : vector<8x128xf32>
    %166 = arith.truncf %165 : vector<8x128xf32> to vector<8x128xbf16>
    %c8_97 = arith.constant 8 : index
    %c0_98 = arith.constant 0 : index
    %167 = vector.load %arg15[%c8_97, %c0_98] : memref<64x128xbf16, #tpu.memory_space<vmem>>, vector<8x128xbf16>
    tpu.vector_store %arg15[%c8_97, %c0_98], %166 {strides = array<i32>} : memref<64x128xbf16, #tpu.memory_space<vmem>>, vector<8x128xbf16>,
    %c0_99 = arith.constant 0 : index
    %c0_100 = arith.constant 0 : index
    %168 = vector.load %arg4[%c0_99, %c0_100] : memref<128x512xbf16, #tpu.memory_space<vmem>>, vector<128x512xbf16>
    %cst_101 = arith.constant dense<0.000000e+00> : vector<8x512xf32>
    %169 = tpu.matmul %145, %168, %cst_101 {dimension_numbers = #tpu.dot_dimension_numbers<[1], [0], [0], [1], [0, 0, 1, 1], [], []>} : vector<8x128xbf16>, vector<128x512xbf16>, vector<8x512xf32> -> vector<8x512xf32>
    %c16_102 = arith.constant 16 : index
    %c0_103 = arith.constant 0 : index
    %170 = vector.load %arg14[%c16_102, %c0_103] : memref<64x512xf32, #tpu.memory_space<vmem>>, vector<8x512xf32>
    %171 = arith.addf %169, %170 : vector<8x512xf32>
    %172 = vector.extract_strided_slice %171 {offsets = [0, 0], sizes = [8, 384], strides = [1, 1]} : vector<8x512xf32> to vector<8x384xf32>
    %173 = arith.negf %172 : vector<8x384xf32>
    %174 = math.exp %173 : vector<8x384xf32>
    %cst_104 = arith.constant 1.000000e+00 : f32
    %175 = vector.broadcast %cst_104 : f32 to vector<8x384xf32>
    %176 = arith.addf %175, %174 : vector<8x384xf32>
    %177 = arith.divf %175, %176 : vector<8x384xf32>
    %178 = vector.extract_strided_slice %177 {offsets = [0, 0], sizes = [8, 128], strides = [1, 1]} : vector<8x384xf32> to vector<8x128xf32>
    %179 = vector.extract_strided_slice %177 {offsets = [0, 128], sizes = [8, 128], strides = [1, 1]} : vector<8x384xf32> to vector<8x128xf32>
    %180 = vector.extract_strided_slice %177 {offsets = [0, 256], sizes = [8, 128], strides = [1, 1]} : vector<8x384xf32> to vector<8x128xf32>
    %181 = vector.extract_strided_slice %171 {offsets = [0, 384], sizes = [8, 128], strides = [1, 1]} : vector<8x512xf32> to vector<8x128xf32>
    %182 = math.tanh %181 : vector<8x128xf32>
    %183 = arith.mulf %179, %142 : vector<8x128xf32>
    %184 = arith.mulf %178, %182 : vector<8x128xf32>
    %185 = arith.addf %183, %184 : vector<8x128xf32>
    %186 = math.tanh %185 : vector<8x128xf32>
    %187 = arith.mulf %180, %186 : vector<8x128xf32>
    %188 = arith.truncf %187 : vector<8x128xf32> to vector<8x128xbf16>
    %189 = tpu.concatenate %188, %166 in 1 : vector<8x128xbf16>, vector<8x128xbf16> -> vector<8x256xbf16>
    %c0_105 = arith.constant 0 : index
    %c0_106 = arith.constant 0 : index
    %190 = vector.load %arg6[%c0_105, %c0_106] : memref<256x512xbf16, #tpu.memory_space<vmem>>, vector<256x512xbf16>
    %cst_107 = arith.constant dense<0.000000e+00> : vector<8x512xf32>
    %191 = tpu.matmul %189, %190, %cst_107 {dimension_numbers = #tpu.dot_dimension_numbers<[1], [0], [0], [1], [0, 0, 1, 1], [], []>} : vector<8x256xbf16>, vector<256x512xbf16>, vector<8x512xf32> -> vector<8x512xf32>
    %192 = arith.addf %191, %77 : vector<8x512xf32>
    %193 = vector.extract_strided_slice %192 {offsets = [0, 0], sizes = [8, 384], strides = [1, 1]} : vector<8x512xf32> to vector<8x384xf32>
    %194 = arith.negf %193 : vector<8x384xf32>
    %195 = math.exp %194 : vector<8x384xf32>
    %cst_108 = arith.constant 1.000000e+00 : f32
    %196 = vector.broadcast %cst_108 : f32 to vector<8x384xf32>
    %197 = arith.addf %196, %195 : vector<8x384xf32>
    %198 = arith.divf %196, %197 : vector<8x384xf32>
    %199 = vector.extract_strided_slice %198 {offsets = [0, 0], sizes = [8, 128], strides = [1, 1]} : vector<8x384xf32> to vector<8x128xf32>
    %200 = vector.extract_strided_slice %198 {offsets = [0, 128], sizes = [8, 128], strides = [1, 1]} : vector<8x384xf32> to vector<8x128xf32>
    %201 = vector.extract_strided_slice %198 {offsets = [0, 256], sizes = [8, 128], strides = [1, 1]} : vector<8x384xf32> to vector<8x128xf32>
    %202 = vector.extract_strided_slice %192 {offsets = [0, 384], sizes = [8, 128], strides = [1, 1]} : vector<8x512xf32> to vector<8x128xf32>
    %203 = math.tanh %202 : vector<8x128xf32>
    %204 = arith.mulf %200, %163 : vector<8x128xf32>
    %205 = arith.mulf %199, %203 : vector<8x128xf32>
    %206 = arith.addf %204, %205 : vector<8x128xf32>
    %207 = math.tanh %206 : vector<8x128xf32>
    %208 = arith.mulf %201, %207 : vector<8x128xf32>
    %209 = arith.truncf %208 : vector<8x128xf32> to vector<8x128xbf16>
    %c16_109 = arith.constant 16 : index
    %c0_110 = arith.constant 0 : index
    %210 = vector.load %arg15[%c16_109, %c0_110] : memref<64x128xbf16, #tpu.memory_space<vmem>>, vector<8x128xbf16>
    tpu.vector_store %arg15[%c16_109, %c0_110], %209 {strides = array<i32>} : memref<64x128xbf16, #tpu.memory_space<vmem>>, vector<8x128xbf16>,
    %c0_111 = arith.constant 0 : index
    %c0_112 = arith.constant 0 : index
    %211 = vector.load %arg4[%c0_111, %c0_112] : memref<128x512xbf16, #tpu.memory_space<vmem>>, vector<128x512xbf16>
    %cst_113 = arith.constant dense<0.000000e+00> : vector<8x512xf32>
    %212 = tpu.matmul %188, %211, %cst_113 {dimension_numbers = #tpu.dot_dimension_numbers<[1], [0], [0], [1], [0, 0, 1, 1], [], []>} : vector<8x128xbf16>, vector<128x512xbf16>, vector<8x512xf32> -> vector<8x512xf32>
    %c24_114 = arith.constant 24 : index
    %c0_115 = arith.constant 0 : index
    %213 = vector.load %arg14[%c24_114, %c0_115] : memref<64x512xf32, #tpu.memory_space<vmem>>, vector<8x512xf32>
    %214 = arith.addf %212, %213 : vector<8x512xf32>
    %215 = vector.extract_strided_slice %214 {offsets = [0, 0], sizes = [8, 384], strides = [1, 1]} : vector<8x512xf32> to vector<8x384xf32>
    %216 = arith.negf %215 : vector<8x384xf32>
    %217 = math.exp %216 : vector<8x384xf32>
    %cst_116 = arith.constant 1.000000e+00 : f32
    %218 = vector.broadcast %cst_116 : f32 to vector<8x384xf32>
    %219 = arith.addf %218, %217 : vector<8x384xf32>
    %220 = arith.divf %218, %219 : vector<8x384xf32>
    %221 = vector.extract_strided_slice %220 {offsets = [0, 0], sizes = [8, 128], strides = [1, 1]} : vector<8x384xf32> to vector<8x128xf32>
    %222 = vector.extract_strided_slice %220 {offsets = [0, 128], sizes = [8, 128], strides = [1, 1]} : vector<8x384xf32> to vector<8x128xf32>
    %223 = vector.extract_strided_slice %220 {offsets = [0, 256], sizes = [8, 128], strides = [1, 1]} : vector<8x384xf32> to vector<8x128xf32>
    %224 = vector.extract_strided_slice %214 {offsets = [0, 384], sizes = [8, 128], strides = [1, 1]} : vector<8x512xf32> to vector<8x128xf32>
    %225 = math.tanh %224 : vector<8x128xf32>
    %226 = arith.mulf %222, %185 : vector<8x128xf32>
    %227 = arith.mulf %221, %225 : vector<8x128xf32>
    %228 = arith.addf %226, %227 : vector<8x128xf32>
    %229 = math.tanh %228 : vector<8x128xf32>
    %230 = arith.mulf %223, %229 : vector<8x128xf32>
    %231 = arith.truncf %230 : vector<8x128xf32> to vector<8x128xbf16>
    %232 = tpu.concatenate %231, %209 in 1 : vector<8x128xbf16>, vector<8x128xbf16> -> vector<8x256xbf16>
    %c0_117 = arith.constant 0 : index
    %c0_118 = arith.constant 0 : index
    %233 = vector.load %arg6[%c0_117, %c0_118] : memref<256x512xbf16, #tpu.memory_space<vmem>>, vector<256x512xbf16>
    %cst_119 = arith.constant dense<0.000000e+00> : vector<8x512xf32>
    %234 = tpu.matmul %232, %233, %cst_119 {dimension_numbers = #tpu.dot_dimension_numbers<[1], [0], [0], [1], [0, 0, 1, 1], [], []>} : vector<8x256xbf16>, vector<256x512xbf16>, vector<8x512xf32> -> vector<8x512xf32>
    %235 = arith.addf %234, %77 : vector<8x512xf32>
    %236 = vector.extract_strided_slice %235 {offsets = [0, 0], sizes = [8, 384], strides = [1, 1]} : vector<8x512xf32> to vector<8x384xf32>
    %237 = arith.negf %236 : vector<8x384xf32>
    %238 = math.exp %237 : vector<8x384xf32>
    %cst_120 = arith.constant 1.000000e+00 : f32
    %239 = vector.broadcast %cst_120 : f32 to vector<8x384xf32>
    %240 = arith.addf %239, %238 : vector<8x384xf32>
    %241 = arith.divf %239, %240 : vector<8x384xf32>
    %242 = vector.extract_strided_slice %241 {offsets = [0, 0], sizes = [8, 128], strides = [1, 1]} : vector<8x384xf32> to vector<8x128xf32>
    %243 = vector.extract_strided_slice %241 {offsets = [0, 128], sizes = [8, 128], strides = [1, 1]} : vector<8x384xf32> to vector<8x128xf32>
    %244 = vector.extract_strided_slice %241 {offsets = [0, 256], sizes = [8, 128], strides = [1, 1]} : vector<8x384xf32> to vector<8x128xf32>
    %245 = vector.extract_strided_slice %235 {offsets = [0, 384], sizes = [8, 128], strides = [1, 1]} : vector<8x512xf32> to vector<8x128xf32>
    %246 = math.tanh %245 : vector<8x128xf32>
    %247 = arith.mulf %243, %206 : vector<8x128xf32>
    %248 = arith.mulf %242, %246 : vector<8x128xf32>
    %249 = arith.addf %247, %248 : vector<8x128xf32>
    %250 = math.tanh %249 : vector<8x128xf32>
    %251 = arith.mulf %244, %250 : vector<8x128xf32>
    %252 = arith.truncf %251 : vector<8x128xf32> to vector<8x128xbf16>
    %c24_121 = arith.constant 24 : index
    %c0_122 = arith.constant 0 : index
    %253 = vector.load %arg15[%c24_121, %c0_122] : memref<64x128xbf16, #tpu.memory_space<vmem>>, vector<8x128xbf16>
    tpu.vector_store %arg15[%c24_121, %c0_122], %252 {strides = array<i32>} : memref<64x128xbf16, #tpu.memory_space<vmem>>, vector<8x128xbf16>,
    %c0_123 = arith.constant 0 : index
    %c0_124 = arith.constant 0 : index
    %254 = vector.load %arg4[%c0_123, %c0_124] : memref<128x512xbf16, #tpu.memory_space<vmem>>, vector<128x512xbf16>
    %cst_125 = arith.constant dense<0.000000e+00> : vector<8x512xf32>
    %255 = tpu.matmul %231, %254, %cst_125 {dimension_numbers = #tpu.dot_dimension_numbers<[1], [0], [0], [1], [0, 0, 1, 1], [], []>} : vector<8x128xbf16>, vector<128x512xbf16>, vector<8x512xf32> -> vector<8x512xf32>
    %c32_126 = arith.constant 32 : index
    %c0_127 = arith.constant 0 : index
    %256 = vector.load %arg14[%c32_126, %c0_127] : memref<64x512xf32, #tpu.memory_space<vmem>>, vector<8x512xf32>
    %257 = arith.addf %255, %256 : vector<8x512xf32>
    %258 = vector.extract_strided_slice %257 {offsets = [0, 0], sizes = [8, 384], strides = [1, 1]} : vector<8x512xf32> to vector<8x384xf32>
    %259 = arith.negf %258 : vector<8x384xf32>
    %260 = math.exp %259 : vector<8x384xf32>
    %cst_128 = arith.constant 1.000000e+00 : f32
    %261 = vector.broadcast %cst_128 : f32 to vector<8x384xf32>
    %262 = arith.addf %261, %260 : vector<8x384xf32>
    %263 = arith.divf %261, %262 : vector<8x384xf32>
    %264 = vector.extract_strided_slice %263 {offsets = [0, 0], sizes = [8, 128], strides = [1, 1]} : vector<8x384xf32> to vector<8x128xf32>
    %265 = vector.extract_strided_slice %263 {offsets = [0, 128], sizes = [8, 128], strides = [1, 1]} : vector<8x384xf32> to vector<8x128xf32>
    %266 = vector.extract_strided_slice %263 {offsets = [0, 256], sizes = [8, 128], strides = [1, 1]} : vector<8x384xf32> to vector<8x128xf32>
    %267 = vector.extract_strided_slice %257 {offsets = [0, 384], sizes = [8, 128], strides = [1, 1]} : vector<8x512xf32> to vector<8x128xf32>
    %268 = math.tanh %267 : vector<8x128xf32>
    %269 = arith.mulf %265, %228 : vector<8x128xf32>
    %270 = arith.mulf %264, %268 : vector<8x128xf32>
    %271 = arith.addf %269, %270 : vector<8x128xf32>
    %272 = math.tanh %271 : vector<8x128xf32>
    %273 = arith.mulf %266, %272 : vector<8x128xf32>
    %274 = arith.truncf %273 : vector<8x128xf32> to vector<8x128xbf16>
    %275 = tpu.concatenate %274, %252 in 1 : vector<8x128xbf16>, vector<8x128xbf16> -> vector<8x256xbf16>
    %c0_129 = arith.constant 0 : index
    %c0_130 = arith.constant 0 : index
    %276 = vector.load %arg6[%c0_129, %c0_130] : memref<256x512xbf16, #tpu.memory_space<vmem>>, vector<256x512xbf16>
    %cst_131 = arith.constant dense<0.000000e+00> : vector<8x512xf32>
    %277 = tpu.matmul %275, %276, %cst_131 {dimension_numbers = #tpu.dot_dimension_numbers<[1], [0], [0], [1], [0, 0, 1, 1], [], []>} : vector<8x256xbf16>, vector<256x512xbf16>, vector<8x512xf32> -> vector<8x512xf32>
    %278 = arith.addf %277, %77 : vector<8x512xf32>
    %279 = vector.extract_strided_slice %278 {offsets = [0, 0], sizes = [8, 384], strides = [1, 1]} : vector<8x512xf32> to vector<8x384xf32>
    %280 = arith.negf %279 : vector<8x384xf32>
    %281 = math.exp %280 : vector<8x384xf32>
    %cst_132 = arith.constant 1.000000e+00 : f32
    %282 = vector.broadcast %cst_132 : f32 to vector<8x384xf32>
    %283 = arith.addf %282, %281 : vector<8x384xf32>
    %284 = arith.divf %282, %283 : vector<8x384xf32>
    %285 = vector.extract_strided_slice %284 {offsets = [0, 0], sizes = [8, 128], strides = [1, 1]} : vector<8x384xf32> to vector<8x128xf32>
    %286 = vector.extract_strided_slice %284 {offsets = [0, 128], sizes = [8, 128], strides = [1, 1]} : vector<8x384xf32> to vector<8x128xf32>
    %287 = vector.extract_strided_slice %284 {offsets = [0, 256], sizes = [8, 128], strides = [1, 1]} : vector<8x384xf32> to vector<8x128xf32>
    %288 = vector.extract_strided_slice %278 {offsets = [0, 384], sizes = [8, 128], strides = [1, 1]} : vector<8x512xf32> to vector<8x128xf32>
    %289 = math.tanh %288 : vector<8x128xf32>
    %290 = arith.mulf %286, %249 : vector<8x128xf32>
    %291 = arith.mulf %285, %289 : vector<8x128xf32>
    %292 = arith.addf %290, %291 : vector<8x128xf32>
    %293 = math.tanh %292 : vector<8x128xf32>
    %294 = arith.mulf %287, %293 : vector<8x128xf32>
    %295 = arith.truncf %294 : vector<8x128xf32> to vector<8x128xbf16>
    %c32_133 = arith.constant 32 : index
    %c0_134 = arith.constant 0 : index
    %296 = vector.load %arg15[%c32_133, %c0_134] : memref<64x128xbf16, #tpu.memory_space<vmem>>, vector<8x128xbf16>
    tpu.vector_store %arg15[%c32_133, %c0_134], %295 {strides = array<i32>} : memref<64x128xbf16, #tpu.memory_space<vmem>>, vector<8x128xbf16>,
    %c0_135 = arith.constant 0 : index
    %c0_136 = arith.constant 0 : index
    %297 = vector.load %arg4[%c0_135, %c0_136] : memref<128x512xbf16, #tpu.memory_space<vmem>>, vector<128x512xbf16>
    %cst_137 = arith.constant dense<0.000000e+00> : vector<8x512xf32>
    %298 = tpu.matmul %274, %297, %cst_137 {dimension_numbers = #tpu.dot_dimension_numbers<[1], [0], [0], [1], [0, 0, 1, 1], [], []>} : vector<8x128xbf16>, vector<128x512xbf16>, vector<8x512xf32> -> vector<8x512xf32>
    %c40_138 = arith.constant 40 : index
    %c0_139 = arith.constant 0 : index
    %299 = vector.load %arg14[%c40_138, %c0_139] : memref<64x512xf32, #tpu.memory_space<vmem>>, vector<8x512xf32>
    %300 = arith.addf %298, %299 : vector<8x512xf32>
    %301 = vector.extract_strided_slice %300 {offsets = [0, 0], sizes = [8, 384], strides = [1, 1]} : vector<8x512xf32> to vector<8x384xf32>
    %302 = arith.negf %301 : vector<8x384xf32>
    %303 = math.exp %302 : vector<8x384xf32>
    %cst_140 = arith.constant 1.000000e+00 : f32
    %304 = vector.broadcast %cst_140 : f32 to vector<8x384xf32>
    %305 = arith.addf %304, %303 : vector<8x384xf32>
    %306 = arith.divf %304, %305 : vector<8x384xf32>
    %307 = vector.extract_strided_slice %306 {offsets = [0, 0], sizes = [8, 128], strides = [1, 1]} : vector<8x384xf32> to vector<8x128xf32>
    %308 = vector.extract_strided_slice %306 {offsets = [0, 128], sizes = [8, 128], strides = [1, 1]} : vector<8x384xf32> to vector<8x128xf32>
    %309 = vector.extract_strided_slice %306 {offsets = [0, 256], sizes = [8, 128], strides = [1, 1]} : vector<8x384xf32> to vector<8x128xf32>
    %310 = vector.extract_strided_slice %300 {offsets = [0, 384], sizes = [8, 128], strides = [1, 1]} : vector<8x512xf32> to vector<8x128xf32>
    %311 = math.tanh %310 : vector<8x128xf32>
    %312 = arith.mulf %308, %271 : vector<8x128xf32>
    %313 = arith.mulf %307, %311 : vector<8x128xf32>
    %314 = arith.addf %312, %313 : vector<8x128xf32>
    %315 = math.tanh %314 : vector<8x128xf32>
    %316 = arith.mulf %309, %315 : vector<8x128xf32>
    %317 = arith.truncf %316 : vector<8x128xf32> to vector<8x128xbf16>
    %318 = tpu.concatenate %317, %295 in 1 : vector<8x128xbf16>, vector<8x128xbf16> -> vector<8x256xbf16>
    %c0_141 = arith.constant 0 : index
    %c0_142 = arith.constant 0 : index
    %319 = vector.load %arg6[%c0_141, %c0_142] : memref<256x512xbf16, #tpu.memory_space<vmem>>, vector<256x512xbf16>
    %cst_143 = arith.constant dense<0.000000e+00> : vector<8x512xf32>
    %320 = tpu.matmul %318, %319, %cst_143 {dimension_numbers = #tpu.dot_dimension_numbers<[1], [0], [0], [1], [0, 0, 1, 1], [], []>} : vector<8x256xbf16>, vector<256x512xbf16>, vector<8x512xf32> -> vector<8x512xf32>
    %321 = arith.addf %320, %77 : vector<8x512xf32>
    %322 = vector.extract_strided_slice %321 {offsets = [0, 0], sizes = [8, 384], strides = [1, 1]} : vector<8x512xf32> to vector<8x384xf32>
    %323 = arith.negf %322 : vector<8x384xf32>
    %324 = math.exp %323 : vector<8x384xf32>
    %cst_144 = arith.constant 1.000000e+00 : f32
    %325 = vector.broadcast %cst_144 : f32 to vector<8x384xf32>
    %326 = arith.addf %325, %324 : vector<8x384xf32>
    %327 = arith.divf %325, %326 : vector<8x384xf32>
    %328 = vector.extract_strided_slice %327 {offsets = [0, 0], sizes = [8, 128], strides = [1, 1]} : vector<8x384xf32> to vector<8x128xf32>
    %329 = vector.extract_strided_slice %327 {offsets = [0, 128], sizes = [8, 128], strides = [1, 1]} : vector<8x384xf32> to vector<8x128xf32>
    %330 = vector.extract_strided_slice %327 {offsets = [0, 256], sizes = [8, 128], strides = [1, 1]} : vector<8x384xf32> to vector<8x128xf32>
    %331 = vector.extract_strided_slice %321 {offsets = [0, 384], sizes = [8, 128], strides = [1, 1]} : vector<8x512xf32> to vector<8x128xf32>
    %332 = math.tanh %331 : vector<8x128xf32>
    %333 = arith.mulf %329, %292 : vector<8x128xf32>
    %334 = arith.mulf %328, %332 : vector<8x128xf32>
    %335 = arith.addf %333, %334 : vector<8x128xf32>
    %336 = math.tanh %335 : vector<8x128xf32>
    %337 = arith.mulf %330, %336 : vector<8x128xf32>
    %338 = arith.truncf %337 : vector<8x128xf32> to vector<8x128xbf16>
    %c40_145 = arith.constant 40 : index
    %c0_146 = arith.constant 0 : index
    %339 = vector.load %arg15[%c40_145, %c0_146] : memref<64x128xbf16, #tpu.memory_space<vmem>>, vector<8x128xbf16>
    tpu.vector_store %arg15[%c40_145, %c0_146], %338 {strides = array<i32>} : memref<64x128xbf16, #tpu.memory_space<vmem>>, vector<8x128xbf16>,
    %c0_147 = arith.constant 0 : index
    %c0_148 = arith.constant 0 : index
    %340 = vector.load %arg4[%c0_147, %c0_148] : memref<128x512xbf16, #tpu.memory_space<vmem>>, vector<128x512xbf16>
    %cst_149 = arith.constant dense<0.000000e+00> : vector<8x512xf32>
    %341 = tpu.matmul %317, %340, %cst_149 {dimension_numbers = #tpu.dot_dimension_numbers<[1], [0], [0], [1], [0, 0, 1, 1], [], []>} : vector<8x128xbf16>, vector<128x512xbf16>, vector<8x512xf32> -> vector<8x512xf32>
    %c48_150 = arith.constant 48 : index
    %c0_151 = arith.constant 0 : index
    %342 = vector.load %arg14[%c48_150, %c0_151] : memref<64x512xf32, #tpu.memory_space<vmem>>, vector<8x512xf32>
    %343 = arith.addf %341, %342 : vector<8x512xf32>
    %344 = vector.extract_strided_slice %343 {offsets = [0, 0], sizes = [8, 384], strides = [1, 1]} : vector<8x512xf32> to vector<8x384xf32>
    %345 = arith.negf %344 : vector<8x384xf32>
    %346 = math.exp %345 : vector<8x384xf32>
    %cst_152 = arith.constant 1.000000e+00 : f32
    %347 = vector.broadcast %cst_152 : f32 to vector<8x384xf32>
    %348 = arith.addf %347, %346 : vector<8x384xf32>
    %349 = arith.divf %347, %348 : vector<8x384xf32>
    %350 = vector.extract_strided_slice %349 {offsets = [0, 0], sizes = [8, 128], strides = [1, 1]} : vector<8x384xf32> to vector<8x128xf32>
    %351 = vector.extract_strided_slice %349 {offsets = [0, 128], sizes = [8, 128], strides = [1, 1]} : vector<8x384xf32> to vector<8x128xf32>
    %352 = vector.extract_strided_slice %349 {offsets = [0, 256], sizes = [8, 128], strides = [1, 1]} : vector<8x384xf32> to vector<8x128xf32>
    %353 = vector.extract_strided_slice %343 {offsets = [0, 384], sizes = [8, 128], strides = [1, 1]} : vector<8x512xf32> to vector<8x128xf32>
    %354 = math.tanh %353 : vector<8x128xf32>
    %355 = arith.mulf %351, %314 : vector<8x128xf32>
    %356 = arith.mulf %350, %354 : vector<8x128xf32>
    %357 = arith.addf %355, %356 : vector<8x128xf32>
    %358 = math.tanh %357 : vector<8x128xf32>
    %359 = arith.mulf %352, %358 : vector<8x128xf32>
    %360 = arith.truncf %359 : vector<8x128xf32> to vector<8x128xbf16>
    %361 = tpu.concatenate %360, %338 in 1 : vector<8x128xbf16>, vector<8x128xbf16> -> vector<8x256xbf16>
    %c0_153 = arith.constant 0 : index
    %c0_154 = arith.constant 0 : index
    %362 = vector.load %arg6[%c0_153, %c0_154] : memref<256x512xbf16, #tpu.memory_space<vmem>>, vector<256x512xbf16>
    %cst_155 = arith.constant dense<0.000000e+00> : vector<8x512xf32>
    %363 = tpu.matmul %361, %362, %cst_155 {dimension_numbers = #tpu.dot_dimension_numbers<[1], [0], [0], [1], [0, 0, 1, 1], [], []>} : vector<8x256xbf16>, vector<256x512xbf16>, vector<8x512xf32> -> vector<8x512xf32>
    %364 = arith.addf %363, %77 : vector<8x512xf32>
    %365 = vector.extract_strided_slice %364 {offsets = [0, 0], sizes = [8, 384], strides = [1, 1]} : vector<8x512xf32> to vector<8x384xf32>
    %366 = arith.negf %365 : vector<8x384xf32>
    %367 = math.exp %366 : vector<8x384xf32>
    %cst_156 = arith.constant 1.000000e+00 : f32
    %368 = vector.broadcast %cst_156 : f32 to vector<8x384xf32>
    %369 = arith.addf %368, %367 : vector<8x384xf32>
    %370 = arith.divf %368, %369 : vector<8x384xf32>
    %371 = vector.extract_strided_slice %370 {offsets = [0, 0], sizes = [8, 128], strides = [1, 1]} : vector<8x384xf32> to vector<8x128xf32>
    %372 = vector.extract_strided_slice %370 {offsets = [0, 128], sizes = [8, 128], strides = [1, 1]} : vector<8x384xf32> to vector<8x128xf32>
    %373 = vector.extract_strided_slice %370 {offsets = [0, 256], sizes = [8, 128], strides = [1, 1]} : vector<8x384xf32> to vector<8x128xf32>
    %374 = vector.extract_strided_slice %364 {offsets = [0, 384], sizes = [8, 128], strides = [1, 1]} : vector<8x512xf32> to vector<8x128xf32>
    %375 = math.tanh %374 : vector<8x128xf32>
    %376 = arith.mulf %372, %335 : vector<8x128xf32>
    %377 = arith.mulf %371, %375 : vector<8x128xf32>
    %378 = arith.addf %376, %377 : vector<8x128xf32>
    %379 = math.tanh %378 : vector<8x128xf32>
    %380 = arith.mulf %373, %379 : vector<8x128xf32>
    %381 = arith.truncf %380 : vector<8x128xf32> to vector<8x128xbf16>
    %c48_157 = arith.constant 48 : index
    %c0_158 = arith.constant 0 : index
    %382 = vector.load %arg15[%c48_157, %c0_158] : memref<64x128xbf16, #tpu.memory_space<vmem>>, vector<8x128xbf16>
    tpu.vector_store %arg15[%c48_157, %c0_158], %381 {strides = array<i32>} : memref<64x128xbf16, #tpu.memory_space<vmem>>, vector<8x128xbf16>,
    %c0_159 = arith.constant 0 : index
    %c0_160 = arith.constant 0 : index
    %383 = vector.load %arg4[%c0_159, %c0_160] : memref<128x512xbf16, #tpu.memory_space<vmem>>, vector<128x512xbf16>
    %cst_161 = arith.constant dense<0.000000e+00> : vector<8x512xf32>
    %384 = tpu.matmul %360, %383, %cst_161 {dimension_numbers = #tpu.dot_dimension_numbers<[1], [0], [0], [1], [0, 0, 1, 1], [], []>} : vector<8x128xbf16>, vector<128x512xbf16>, vector<8x512xf32> -> vector<8x512xf32>
    %c56_162 = arith.constant 56 : index
    %c0_163 = arith.constant 0 : index
    %385 = vector.load %arg14[%c56_162, %c0_163] : memref<64x512xf32, #tpu.memory_space<vmem>>, vector<8x512xf32>
    %386 = arith.addf %384, %385 : vector<8x512xf32>
    %387 = vector.extract_strided_slice %386 {offsets = [0, 0], sizes = [8, 384], strides = [1, 1]} : vector<8x512xf32> to vector<8x384xf32>
    %388 = arith.negf %387 : vector<8x384xf32>
    %389 = math.exp %388 : vector<8x384xf32>
    %cst_164 = arith.constant 1.000000e+00 : f32
    %390 = vector.broadcast %cst_164 : f32 to vector<8x384xf32>
    %391 = arith.addf %390, %389 : vector<8x384xf32>
    %392 = arith.divf %390, %391 : vector<8x384xf32>
    %393 = vector.extract_strided_slice %392 {offsets = [0, 0], sizes = [8, 128], strides = [1, 1]} : vector<8x384xf32> to vector<8x128xf32>
    %394 = vector.extract_strided_slice %392 {offsets = [0, 128], sizes = [8, 128], strides = [1, 1]} : vector<8x384xf32> to vector<8x128xf32>
    %395 = vector.extract_strided_slice %392 {offsets = [0, 256], sizes = [8, 128], strides = [1, 1]} : vector<8x384xf32> to vector<8x128xf32>
    %396 = vector.extract_strided_slice %386 {offsets = [0, 384], sizes = [8, 128], strides = [1, 1]} : vector<8x512xf32> to vector<8x128xf32>
    %397 = math.tanh %396 : vector<8x128xf32>
    %398 = arith.mulf %394, %357 : vector<8x128xf32>
    %399 = arith.mulf %393, %397 : vector<8x128xf32>
    %400 = arith.addf %398, %399 : vector<8x128xf32>
    %401 = math.tanh %400 : vector<8x128xf32>
    %402 = arith.mulf %395, %401 : vector<8x128xf32>
    %403 = arith.truncf %402 : vector<8x128xf32> to vector<8x128xbf16>
    %404 = tpu.concatenate %403, %381 in 1 : vector<8x128xbf16>, vector<8x128xbf16> -> vector<8x256xbf16>
    %c0_165 = arith.constant 0 : index
    %c0_166 = arith.constant 0 : index
    %405 = vector.load %arg6[%c0_165, %c0_166] : memref<256x512xbf16, #tpu.memory_space<vmem>>, vector<256x512xbf16>
    %cst_167 = arith.constant dense<0.000000e+00> : vector<8x512xf32>
    %406 = tpu.matmul %404, %405, %cst_167 {dimension_numbers = #tpu.dot_dimension_numbers<[1], [0], [0], [1], [0, 0, 1, 1], [], []>} : vector<8x256xbf16>, vector<256x512xbf16>, vector<8x512xf32> -> vector<8x512xf32>
    %407 = arith.addf %406, %77 : vector<8x512xf32>
    %408 = vector.extract_strided_slice %407 {offsets = [0, 0], sizes = [8, 384], strides = [1, 1]} : vector<8x512xf32> to vector<8x384xf32>
    %409 = arith.negf %408 : vector<8x384xf32>
    %410 = math.exp %409 : vector<8x384xf32>
    %cst_168 = arith.constant 1.000000e+00 : f32
    %411 = vector.broadcast %cst_168 : f32 to vector<8x384xf32>
    %412 = arith.addf %411, %410 : vector<8x384xf32>
    %413 = arith.divf %411, %412 : vector<8x384xf32>
    %414 = vector.extract_strided_slice %413 {offsets = [0, 0], sizes = [8, 128], strides = [1, 1]} : vector<8x384xf32> to vector<8x128xf32>
    %415 = vector.extract_strided_slice %413 {offsets = [0, 128], sizes = [8, 128], strides = [1, 1]} : vector<8x384xf32> to vector<8x128xf32>
    %416 = vector.extract_strided_slice %413 {offsets = [0, 256], sizes = [8, 128], strides = [1, 1]} : vector<8x384xf32> to vector<8x128xf32>
    %417 = vector.extract_strided_slice %407 {offsets = [0, 384], sizes = [8, 128], strides = [1, 1]} : vector<8x512xf32> to vector<8x128xf32>
    %418 = math.tanh %417 : vector<8x128xf32>
    %419 = arith.mulf %415, %378 : vector<8x128xf32>
    %420 = arith.mulf %414, %418 : vector<8x128xf32>
    %421 = arith.addf %419, %420 : vector<8x128xf32>
    %422 = math.tanh %421 : vector<8x128xf32>
    %423 = arith.mulf %416, %422 : vector<8x128xf32>
    %424 = arith.truncf %423 : vector<8x128xf32> to vector<8x128xbf16>
    %c56_169 = arith.constant 56 : index
    %c0_170 = arith.constant 0 : index
    %425 = vector.load %arg15[%c56_169, %c0_170] : memref<64x128xbf16, #tpu.memory_space<vmem>>, vector<8x128xbf16>
    tpu.vector_store %arg15[%c56_169, %c0_170], %424 {strides = array<i32>} : memref<64x128xbf16, #tpu.memory_space<vmem>>, vector<8x128xbf16>,
    %426 = arith.extf %403 : vector<8x128xbf16> to vector<8x128xf32>
    %c0_171 = arith.constant 0 : index
    %c0_172 = arith.constant 0 : index
    %c0_173 = arith.constant 0 : index
    %427 = vector.load %arg11[%c0_171, %c0_172, %c0_173] : memref<2x8x128xf32, #tpu.memory_space<vmem>>, vector<1x8x128xf32>
    %428 = vector.shape_cast %427 : vector<1x8x128xf32> to vector<8x128xf32>
    %429 = vector.shape_cast %426 : vector<8x128xf32> to vector<1x8x128xf32>
    tpu.vector_store %arg11[%c0_171, %c0_172, %c0_173], %429 {strides = array<i32>} : memref<2x8x128xf32, #tpu.memory_space<vmem>>, vector<1x8x128xf32>,
    %430 = arith.extf %424 : vector<8x128xbf16> to vector<8x128xf32>
    %c1_174 = arith.constant 1 : index
    %c0_175 = arith.constant 0 : index
    %c0_176 = arith.constant 0 : index
    %431 = vector.load %arg11[%c1_174, %c0_175, %c0_176] : memref<2x8x128xf32, #tpu.memory_space<vmem>>, vector<1x8x128xf32>
    %432 = vector.shape_cast %431 : vector<1x8x128xf32> to vector<8x128xf32>
    %433 = vector.shape_cast %430 : vector<8x128xf32> to vector<1x8x128xf32>
    tpu.vector_store %arg11[%c1_174, %c0_175, %c0_176], %433 {strides = array<i32>} : memref<2x8x128xf32, #tpu.memory_space<vmem>>, vector<1x8x128xf32>,
    %c0_177 = arith.constant 0 : index
    %c0_178 = arith.constant 0 : index
    %c0_179 = arith.constant 0 : index
    %434 = vector.load %arg12[%c0_177, %c0_178, %c0_179] : memref<2x8x128xf32, #tpu.memory_space<vmem>>, vector<1x8x128xf32>
    %435 = vector.shape_cast %434 : vector<1x8x128xf32> to vector<8x128xf32>
    %436 = vector.shape_cast %400 : vector<8x128xf32> to vector<1x8x128xf32>
    tpu.vector_store %arg12[%c0_177, %c0_178, %c0_179], %436 {strides = array<i32>} : memref<2x8x128xf32, #tpu.memory_space<vmem>>, vector<1x8x128xf32>,
    %c1_180 = arith.constant 1 : index
    %c0_181 = arith.constant 0 : index
    %c0_182 = arith.constant 0 : index
    %437 = vector.load %arg12[%c1_180, %c0_181, %c0_182] : memref<2x8x128xf32, #tpu.memory_space<vmem>>, vector<1x8x128xf32>
    %438 = vector.shape_cast %437 : vector<1x8x128xf32> to vector<8x128xf32>
    %439 = vector.shape_cast %421 : vector<8x128xf32> to vector<1x8x128xf32>
    tpu.vector_store %arg12[%c1_180, %c0_181, %c0_182], %439 {strides = array<i32>} : memref<2x8x128xf32, #tpu.memory_space<vmem>>, vector<1x8x128xf32>,
    %c0_183 = arith.constant 0 : index
    %c0_184 = arith.constant 0 : index
    %440 = vector.load %arg15[%c0_183, %c0_184] : memref<64x128xbf16, #tpu.memory_space<vmem>>, vector<64x128xbf16>
    %c0_185 = arith.constant 0 : index
    %c0_186 = arith.constant 0 : index
    %441 = vector.load %arg8[%c0_185, %c0_186] : memref<128x128xbf16, #tpu.memory_space<vmem>>, vector<128x128xbf16>
    %cst_187 = arith.constant dense<0.000000e+00> : vector<64x128xf32>
    %442 = tpu.matmul %440, %441, %cst_187 {dimension_numbers = #tpu.dot_dimension_numbers<[1], [0], [0], [1], [0, 0, 1, 1], [], []>} : vector<64x128xbf16>, vector<128x128xbf16>, vector<64x128xf32> -> vector<64x128xf32>
    %c0_188 = arith.constant 0 : index
    %c0_189 = arith.constant 0 : index
    %443 = vector.load %arg9[%c0_188, %c0_189] : memref<1x128xf32, #tpu.memory_space<vmem>>, vector<1x128xf32>
    %444 = vector.broadcast %443 : vector<1x128xf32> to vector<64x128xf32>
    %445 = arith.addf %442, %444 : vector<64x128xf32>
    %c0_190 = arith.constant 0 : index
    %c0_191 = arith.constant 0 : index
    %446 = vector.load %arg10[%c0_190, %c0_191] : memref<64x128xf32, #tpu.memory_space<vmem>>, vector<64x128xf32>
    tpu.vector_store %arg10[%c0_190, %c0_191], %445 {strides = array<i32>} : memref<64x128xf32, #tpu.memory_space<vmem>>, vector<64x128xf32>,
    return
  }
  func.func @transform_0(%arg0: i32, %arg1: memref<2x8xi32, #tpu.memory_space<smem>>) -> (i32, i32) {
    %c0_i32 = arith.constant 0 : i32
    %c0_i32_0 = arith.constant 0 : i32
    %c0_i32_1 = arith.constant 0 : i32
    return %c0_i32, %c0_i32_0 : i32, i32
  }
  func.func @transform_1(%arg0: i32, %arg1: memref<2x8xi32, #tpu.memory_space<smem>>) -> (i32, i32) {
    %c0_i32 = arith.constant 0 : i32
    %c0_i32_0 = arith.constant 0 : i32
    %c0_i32_1 = arith.constant 0 : i32
    return %c0_i32, %c0_i32_0 : i32, i32
  }
  func.func @transform_2(%arg0: i32, %arg1: memref<2x8xi32, #tpu.memory_space<smem>>) -> (i32, i32) {
    %c0_i32 = arith.constant 0 : i32
    %c0_i32_0 = arith.constant 0 : i32
    %c0_i32_1 = arith.constant 0 : i32
    return %c0_i32, %c0_i32_0 : i32, i32
  }
  func.func @transform_3(%arg0: i32, %arg1: memref<2x8xi32, #tpu.memory_space<smem>>) -> (i32, i32) {
    %c0_i32 = arith.constant 0 : i32
    %c0_i32_0 = arith.constant 0 : i32
    %c0_i32_1 = arith.constant 0 : i32
    return %c0_i32, %c0_i32_0 : i32, i32
  }
  func.func @transform_4(%arg0: i32, %arg1: memref<2x8xi32, #tpu.memory_space<smem>>) -> (i32, i32) {
    %c0_i32 = arith.constant 0 : i32
    %c0_i32_0 = arith.constant 0 : i32
    %c0_i32_1 = arith.constant 0 : i32
    return %c0_i32, %c0_i32_0 : i32, i32
  }
  func.func @transform_5(%arg0: i32, %arg1: memref<2x8xi32, #tpu.memory_space<smem>>) -> (i32, i32) {
    %c0_i32 = arith.constant 0 : i32
    %c0_i32_0 = arith.constant 0 : i32
    %c0_i32_1 = arith.constant 0 : i32
    return %c0_i32, %c0_i32_0 : i32, i32
  }
  func.func @transform_6(%arg0: i32, %arg1: memref<2x8xi32, #tpu.memory_space<smem>>) -> (i32, i32) {
    %c0_i32 = arith.constant 0 : i32
    %c0_i32_0 = arith.constant 0 : i32
    %c0_i32_1 = arith.constant 0 : i32
    return %c0_i32, %c0_i32_0 : i32, i32
  }
  func.func @transform_7(%arg0: i32, %arg1: memref<2x8xi32, #tpu.memory_space<smem>>) -> (i32, i32) {
    %c0_i32 = arith.constant 0 : i32
    %c0_i32_0 = arith.constant 0 : i32
    %c0_i32_1 = arith.constant 0 : i32
    return %c0_i32, %c0_i32_0 : i32, i32
  }
  func.func @transform_8(%arg0: i32, %arg1: memref<2x8xi32, #tpu.memory_space<smem>>) -> (i32, i32) {
    %c0_i32 = arith.constant 0 : i32
    %c0_i32_0 = arith.constant 0 : i32
    %c0_i32_1 = arith.constant 0 : i32
    return %c0_i32, %c0_i32_0 : i32, i32
  }
  func.func @transform_9(%arg0: i32, %arg1: memref<2x8xi32, #tpu.memory_space<smem>>) -> (i32, i32, i32) {
    %c0_i32 = arith.constant 0 : i32
    %c0_i32_0 = arith.constant 0 : i32
    %c0_i32_1 = arith.constant 0 : i32
    %c0_i32_2 = arith.constant 0 : i32
    return %c0_i32, %c0_i32_0, %c0_i32_1 : i32, i32, i32
  }
  func.func @transform_10(%arg0: i32, %arg1: memref<2x8xi32, #tpu.memory_space<smem>>) -> (i32, i32, i32) {
    %c0_i32 = arith.constant 0 : i32
    %c0_i32_0 = arith.constant 0 : i32
    %c0_i32_1 = arith.constant 0 : i32
    %c0_i32_2 = arith.constant 0 : i32
    return %c0_i32, %c0_i32_0, %c0_i32_1 : i32, i32, i32
  }
}

</mosaic_0001>

<llo_original>
// kernel: tpu_custom_call.1
$region0: #{tpu_custom_call.1}
  #allocation0 [shape = 'u32[]', space=smem, size = 0x4, offset = 0x4, fixed_abs, tag = 'smem constant byte address 0x4 - core index']
  #allocation1 [shape = 'u32[144,128]{1,0:T(1,128)}', space=vmem, size = 0x12000, scoped, tag = 'internal scratch']
  #allocation2 [shape = 'f32[64,128]{1,0:T(8,128)}', space=vmem, size = 0x8000, scoped, tag = 'scratch operand']
  #allocation3 [shape = 'f32[64,512]{1,0:T(8,128)}', space=vmem, size = 0x20000, scoped, tag = 'scratch operand']
  #allocation4 [shape = 'bf16[64,128]{1,0:T(8,128)(2,1)}', space=vmem, size = 0x4000, scoped, tag = 'scratch operand']
  #allocation5 [shape = 's32[1]{0}', space=sflag, size = 0x4, scoped, tag = 'scoped memory for tpu_custom_call.1']
  #allocation6 [shape = 'u8[1024]{0}', space=smem, size = 0x400, scoped, tag = 'prefetched SMEM operand 0']
  %s0 = inlined_call_operand.hbm [shape: s32[2,8], index: 0, kind: input, shape index: {}]
  %s1 = inlined_call_operand.hbm [shape: f32[27,128], index: 1, kind: input, shape index: {}]
  %s2 = inlined_call_operand.hbm [shape: bf16[128,512], index: 2, kind: input, shape index: {}]
  %s3 = inlined_call_operand.hbm [shape: bf16[128,512], index: 3, kind: input, shape index: {}]
  %s4 = inlined_call_operand.vmem [shape: f32[1,512], index: 4, kind: input, shape index: {}]
  %s5 = inlined_call_operand.hbm [shape: bf16[256,512], index: 5, kind: input, shape index: {}]
  %s6 = inlined_call_operand.vmem [shape: f32[1,512], index: 6, kind: input, shape index: {}]
  %s7 = inlined_call_operand.hbm [shape: bf16[128,128], index: 7, kind: input, shape index: {}]
  %s8 = inlined_call_operand.vmem [shape: f32[1,128], index: 8, kind: input, shape index: {}]
  %s9 = inlined_call_operand.hbm [shape: f32[64,128], index: 9, kind: output, shape index: {0}]
  %s10 = inlined_call_operand.hbm [shape: f32[2,8,128], index: 10, kind: output, shape index: {1}]
  %s11 = inlined_call_operand.hbm [shape: f32[2,8,128], index: 11, kind: output, shape index: {2}]
  %12 = xla_tuple %s9, %s10, %s11
  %s13 = sld [smem:[#allocation0]]
  $region78: #{tpu_custom_call.1} parent=0
    _
  %s15 = ssub.s32 1, %s13
  %s16 = scalar_select 0, %s15, %s13
  %18 = dma.hbm_to_smem %s0, 32, [#allocation6], [#allocation5]
  %19 = dma.done [#allocation5], 32
  %20 = sfence
  $region1: #{tpu_custom_call.1} parent=0
    #allocation7 [shape = 'u8[16384]{0}', space=vmem, size = 0x4000, scoped, tag = 'input window, operand 1, single buffered']
    #allocation8 [shape = 's32[1]{0}', space=sflag, size = 0x4, scoped, tag = 'scoped memory for tpu_custom_call.1']
    #allocation9 [shape = 's32[1]{0}', space=sflag, size = 0x4, scoped, tag = 'scoped memory for tpu_custom_call.1']
    #allocation10 [shape = 'u8[131072]{0}', space=vmem, size = 0x20000, scoped, tag = 'input window, operand 2, single buffered']
    #allocation11 [shape = 's32[1]{0}', space=sflag, size = 0x4, scoped, tag = 'scoped memory for tpu_custom_call.1']
    #allocation12 [shape = 'u8[131072]{0}', space=vmem, size = 0x20000, scoped, tag = 'input window, operand 3, single buffered']
    #allocation13 [shape = 'u8[262144]{0}', space=vmem, size = 0x40000, scoped, tag = 'input window, operand 5, single buffered']
    #allocation14 [shape = 's32[1]{0}', space=sflag, size = 0x4, scoped, tag = 'scoped memory for tpu_custom_call.1']
    #allocation15 [shape = 'u8[32768]{0}', space=vmem, size = 0x8000, scoped, tag = 'input window, operand 7, single buffered']
    #allocation16 [shape = 'u8[32768]{0}', space=vmem, size = 0x8000, scoped, tag = 'output window, operand 0, single buffered']
    #allocation17 [shape = 'u8[8192]{0}', space=vmem, size = 0x2000, scoped, tag = 'output window, operand 1, single buffered']
    #allocation18 [shape = 's32[1]{0}', space=sflag, size = 0x4, scoped, tag = 'scoped memory for tpu_custom_call.1']
    #allocation19 [shape = 'u8[8192]{0}', space=vmem, size = 0x2000, scoped, tag = 'output window, operand 2, single buffered']
    %21 = vsyncpa [#allocation8], 0
    %22 = vsyncpa [#allocation11], 0
    %23 = vsyncpa [#allocation14], 0
    %24 = vsyncpa [#allocation9], 0
    %25 = vsyncpa [#allocation18], 0
    // Predicated region
    $region2: #{tpu_custom_call.1} parent=1 // pred_check
      _
    $region3: #{tpu_custom_call.1} parent=1 // pred_check_branch
      %27 = sbr.rel (0) target = $region5
    $region4: #{tpu_custom_call.1} parent=1 // pred_region
      %s29 = ssub.s32 512, 512
      %30 = vsyncadd [#allocation8], %s29
      %s31 = sshll.u32 [#allocation7], 4
      %s32 = int_to_ptr.vmem [resolvable:$true] %s31
      %37 = dma.hbm_to_vmem [thread:$0]  %s1, 512, %s32, [#allocation8], 128, 128, 8
    $region5: #{tpu_custom_call.1} parent=1 // pred_fallthru
      _
    // Predicated region
    $region6: #{tpu_custom_call.1} parent=1 // pred_check
      _
    $region7: #{tpu_custom_call.1} parent=1 // pred_check_branch
      %39 = sbr.rel (0) target = $region9
    $region8: #{tpu_custom_call.1} parent=1 // pred_region
      %s41 = ssub.s32 4096, 4096
      %42 = vsyncadd [#allocation11], %s41
      %s43 = sshll.u32 [#allocation10], 4
      %s44 = int_to_ptr.vmem [resolvable:$true] %s43
      %49 = dma.hbm_to_vmem [thread:$0]  %s2, 4096, %s44, [#allocation11], 256, 256, 16
    $region9: #{tpu_custom_call.1} parent=1 // pred_fallthru
      _
    // Predicated region
    $region10: #{tpu_custom_call.1} parent=1 // pred_check
      _
    $region11: #{tpu_custom_call.1} parent=1 // pred_check_branch
      %51 = sbr.rel (0) target = $region13
    $region12: #{tpu_custom_call.1} parent=1 // pred_region
      %s53 = ssub.s32 4096, 4096
      %54 = vsyncadd [#allocation11], %s53
      %s55 = sshll.u32 [#allocation12], 4
      %s56 = int_to_ptr.vmem [resolvable:$true] %s55
      %61 = dma.hbm_to_vmem [thread:$0]  %s3, 4096, %s56, [#allocation11], 256, 256, 16
    $region13: #{tpu_custom_call.1} parent=1 // pred_fallthru
      _
    // Predicated region
    $region14: #{tpu_custom_call.1} parent=1 // pred_check
      _
    $region15: #{tpu_custom_call.1} parent=1 // pred_check_branch
      %63 = sbr.rel (0) target = $region17
    $region16: #{tpu_custom_call.1} parent=1 // pred_region
      _
    $region17: #{tpu_custom_call.1} parent=1 // pred_fallthru
      _
    // Predicated region
    $region18: #{tpu_custom_call.1} parent=1 // pred_check
      _
    $region19: #{tpu_custom_call.1} parent=1 // pred_check_branch
      %65 = sbr.rel (0) target = $region21
    $region20: #{tpu_custom_call.1} parent=1 // pred_region
      %s67 = ssub.s32 8192, 8192
      %68 = vsyncadd [#allocation14], %s67
      %s69 = sshll.u32 [#allocation13], 4
      %s70 = int_to_ptr.vmem [resolvable:$true] %s69
      %75 = dma.hbm_to_vmem [thread:$0]  %s5, 8192, %s70, [#allocation14], 256, 256, 16
    $region21: #{tpu_custom_call.1} parent=1 // pred_fallthru
      _
    // Predicated region
    $region22: #{tpu_custom_call.1} parent=1 // pred_check
      _
    $region23: #{tpu_custom_call.1} parent=1 // pred_check_branch
      %77 = sbr.rel (0) target = $region25
    $region24: #{tpu_custom_call.1} parent=1 // pred_region
      _
    $region25: #{tpu_custom_call.1} parent=1 // pred_fallthru
      _
    // Predicated region
    $region26: #{tpu_custom_call.1} parent=1 // pred_check
      _
    $region27: #{tpu_custom_call.1} parent=1 // pred_check_branch
      %79 = sbr.rel (0) target = $region29
    $region28: #{tpu_custom_call.1} parent=1 // pred_region
      %s81 = ssub.s32 1024, 1024
      %82 = vsyncadd [#allocation14], %s81
      %s83 = sshll.u32 [#allocation15], 4
      %s84 = int_to_ptr.vmem [resolvable:$true] %s83
      %89 = dma.hbm_to_vmem [thread:$0]  %s7, 1024, %s84, [#allocation14], 64, 64, 4
    $region29: #{tpu_custom_call.1} parent=1 // pred_fallthru
      _
    // Predicated region
    $region30: #{tpu_custom_call.1} parent=1 // pred_check
      _
    $region31: #{tpu_custom_call.1} parent=1 // pred_check_branch
      %91 = sbr.rel (0) target = $region33
    $region32: #{tpu_custom_call.1} parent=1 // pred_region
      _
    $region33: #{tpu_custom_call.1} parent=1 // pred_fallthru
      _
    // Predicated region
    $region34: #{tpu_custom_call.1} parent=1 // pred_check
      _
    $region35: #{tpu_custom_call.1} parent=1 // pred_check_branch
      %93 = sbr.rel (0) target = $region37
    $region36: #{tpu_custom_call.1} parent=1 // pred_region
      %94 = dma.done [#allocation8], 512
    $region37: #{tpu_custom_call.1} parent=1 // pred_fallthru
      _
    // Predicated region
    $region38: #{tpu_custom_call.1} parent=1 // pred_check
      _
    $region39: #{tpu_custom_call.1} parent=1 // pred_check_branch
      %96 = sbr.rel (0) target = $region41
    $region40: #{tpu_custom_call.1} parent=1 // pred_region
      %97 = dma.done [#allocation11], 4096
    $region41: #{tpu_custom_call.1} parent=1 // pred_fallthru
      _
    // Predicated region
    $region42: #{tpu_custom_call.1} parent=1 // pred_check
      _
    $region43: #{tpu_custom_call.1} parent=1 // pred_check_branch
      %99 = sbr.rel (0) target = $region45
    $region44: #{tpu_custom_call.1} parent=1 // pred_region
      %100 = dma.done [#allocation11], 4096
    $region45: #{tpu_custom_call.1} parent=1 // pred_fallthru
      _
    // Predicated region
    $region46: #{tpu_custom_call.1} parent=1 // pred_check
      _
    $region47: #{tpu_custom_call.1} parent=1 // pred_check_branch
      %102 = sbr.rel (0) target = $region49
    $region48: #{tpu_custom_call.1} parent=1 // pred_region
      %103 = dma.done [#allocation14], 8192
    $region49: #{tpu_custom_call.1} parent=1 // pred_fallthru
      _
    // Predicated region
    $region50: #{tpu_custom_call.1} parent=1 // pred_check
      _
    $region51: #{tpu_custom_call.1} parent=1 // pred_check_branch
      %105 = sbr.rel (0) target = $region53
    $region52: #{tpu_custom_call.1} parent=1 // pred_region
      %106 = dma.done [#allocation14], 1024
    $region53: #{tpu_custom_call.1} parent=1 // pred_fallthru
      _
    %108 = vst [vmem:[#allocation2] sm:$0xff] 0.0
    %109 = vst [vmem:[#allocation2 + $0x8] sm:$0xff] 0.0
    %110 = vst [vmem:[#allocation2 + $0x10] sm:$0xff] 0.0
    %111 = vst [vmem:[#allocation2 + $0x18] sm:$0xff] 0.0
    %112 = vst [vmem:[#allocation2 + $0x20] sm:$0xff] 0.0
    %113 = vst [vmem:[#allocation2 + $0x28] sm:$0xff] 0.0
    %114 = vst [vmem:[#allocation2 + $0x30] sm:$0xff] 0.0
    %115 = vst [vmem:[#allocation2 + $0x38] sm:$0xff] 0.0
    %s116 = sld [smem:[#allocation6]]
    %s117 = scalar_lea.vmem [#allocation7], %s116
    %v118 = vld [vmem:[%s117] sm:$0x1]
    %119 = vst [vmem:[#allocation2] sm:$0x1] %v118
    %s120 = sld [smem:[#allocation6 + $0x80]]
    %s121 = scalar_lea.vmem [#allocation7], %s120
    %v122 = vld [vmem:[%s121] sm:$0x1]
    %123 = vst [vmem:[#allocation2 + $0x1] sm:$0x1] %v122
    %s124 = sld [smem:[#allocation6 + $0x1]]
    %s125 = scalar_lea.vmem [#allocation7], %s124
    %v126 = vld [vmem:[%s125] sm:$0x1]
    %127 = vst [vmem:[#allocation2 + $0x8] sm:$0x1] %v126
    %s128 = sld [smem:[#allocation6 + $0x81]]
    %s129 = scalar_lea.vmem [#allocation7], %s128
    %v130 = vld [vmem:[%s129] sm:$0x1]
    %131 = vst [vmem:[#allocation2 + $0x9] sm:$0x1] %v130
    %s132 = sld [smem:[#allocation6 + $0x2]]
    %s133 = scalar_lea.vmem [#allocation7], %s132
    %v134 = vld [vmem:[%s133] sm:$0x1]
    %135 = vst [vmem:[#allocation2 + $0x10] sm:$0x1] %v134
    %s136 = sld [smem:[#allocation6 + $0x82]]
    %s137 = scalar_lea.vmem [#allocation7], %s136
    %v138 = vld [vmem:[%s137] sm:$0x1]
    %139 = vst [vmem:[#allocation2 + $0x11] sm:$0x1] %v138
    %s140 = sld [smem:[#allocation6 + $0x3]]
    %s141 = scalar_lea.vmem [#allocation7], %s140
    %v142 = vld [vmem:[%s141] sm:$0x1]
    %143 = vst [vmem:[#allocation2 + $0x18] sm:$0x1] %v142
    %s144 = sld [smem:[#allocation6 + $0x83]]
    %s145 = scalar_lea.vmem [#allocation7], %s144
    %v146 = vld [vmem:[%s145] sm:$0x1]
    %147 = vst [vmem:[#allocation2 + $0x19] sm:$0x1] %v146
    %s148 = sld [smem:[#allocation6 + $0x4]]
    %s149 = scalar_lea.vmem [#allocation7], %s148
    %v150 = vld [vmem:[%s149] sm:$0x1]
    %151 = vst [vmem:[#allocation2 + $0x20] sm:$0x1] %v150
    %s152 = sld [smem:[#allocation6 + $0x84]]
    %s153 = scalar_lea.vmem [#allocation7], %s152
    %v154 = vld [vmem:[%s153] sm:$0x1]
    %155 = vst [vmem:[#allocation2 + $0x21] sm:$0x1] %v154
    %s156 = sld [smem:[#allocation6 + $0x5]]
    %s157 = scalar_lea.vmem [#allocation7], %s156
    %v158 = vld [vmem:[%s157] sm:$0x1]
    %159 = vst [vmem:[#allocation2 + $0x28] sm:$0x1] %v158
    %s160 = sld [smem:[#allocation6 + $0x85]]
    %s161 = scalar_lea.vmem [#allocation7], %s160
    %v162 = vld [vmem:[%s161] sm:$0x1]
    %163 = vst [vmem:[#allocation2 + $0x29] sm:$0x1] %v162
    %s164 = sld [smem:[#allocation6 + $0x6]]
    %s165 = scalar_lea.vmem [#allocation7], %s164
    %v166 = vld [vmem:[%s165] sm:$0x1]
    %167 = vst [vmem:[#allocation2 + $0x30] sm:$0x1] %v166
    %s168 = sld [smem:[#allocation6 + $0x86]]
    %s169 = scalar_lea.vmem [#allocation7], %s168
    %v170 = vld [vmem:[%s169] sm:$0x1]
    %171 = vst [vmem:[#allocation2 + $0x31] sm:$0x1] %v170
    %s172 = sld [smem:[#allocation6 + $0x7]]
    %s173 = scalar_lea.vmem [#allocation7], %s172
    %v174 = vld [vmem:[%s173] sm:$0x1]
    %175 = vst [vmem:[#allocation2 + $0x38] sm:$0x1] %v174
    %s176 = sld [smem:[#allocation6 + $0x87]]
    %s177 = scalar_lea.vmem [#allocation7], %s176
    %v178 = vld [vmem:[%s177] sm:$0x1]
    %179 = vst [vmem:[#allocation2 + $0x39] sm:$0x1] %v178
    %v180 = vld [vmem:[%s4] sm:$0xf]
    %v182 = vlaneseq
    %v183 = vshrl.u32 %v182, 7
    %v184 = vsub.s32 0, %v183
    %v185 = vrot.slane %v180, %v184
    %v186 = vlaneseq
    %v187 = vshrl.u32 %v186, 7
    %v188 = vsub.s32 1, %v187
    %v189 = vrot.slane %v180, %v188
    %v190 = vlaneseq
    %v191 = vshrl.u32 %v190, 7
    %v192 = vsub.s32 2, %v191
    %v193 = vrot.slane %v180, %v192
    %v194 = vlaneseq
    %v195 = vshrl.u32 %v194, 7
    %v196 = vsub.s32 3, %v195
    %v197 = vrot.slane %v180, %v196
    %v202 = vld [vmem:[#allocation2] sm:$0xff]
    %v203 = vld [vmem:[#allocation2 + $0x8] sm:$0xff]
    %v204 = vld [vmem:[#allocation2 + $0x10] sm:$0xff]
    %v205 = vld [vmem:[#allocation2 + $0x18] sm:$0xff]
    %v206 = vld [vmem:[#allocation2 + $0x20] sm:$0xff]
    %v207 = vld [vmem:[#allocation2 + $0x28] sm:$0xff]
    %v208 = vld [vmem:[#allocation2 + $0x30] sm:$0xff]
    %v209 = vld [vmem:[#allocation2 + $0x38] sm:$0xff]
    %v210 = vpack.c.bf16 %v203, %v202
    %v211 = vpack.c.bf16 %v205, %v204
    %v212 = vpack.c.bf16 %v207, %v206
    %v213 = vpack.c.bf16 %v209, %v208
    %v214 = vld [vmem:[#allocation10] sm:$0xff]
    %v215 = vld [vmem:[#allocation10 + $0x8] sm:$0xff]
    %v216 = vld [vmem:[#allocation10 + $0x10] sm:$0xff]
    %v217 = vld [vmem:[#allocation10 + $0x18] sm:$0xff]
    %v218 = vld [vmem:[#allocation10 + $0x20] sm:$0xff]
    %v219 = vld [vmem:[#allocation10 + $0x28] sm:$0xff]
    %v220 = vld [vmem:[#allocation10 + $0x30] sm:$0xff]
    %v221 = vld [vmem:[#allocation10 + $0x38] sm:$0xff]
    %v222 = vld [vmem:[#allocation10 + $0x40] sm:$0xff]
    %v223 = vld [vmem:[#allocation10 + $0x48] sm:$0xff]
    %v224 = vld [vmem:[#allocation10 + $0x50] sm:$0xff]
    %v225 = vld [vmem:[#allocation10 + $0x58] sm:$0xff]
    %v226 = vld [vmem:[#allocation10 + $0x60] sm:$0xff]
    %v227 = vld [vmem:[#allocation10 + $0x68] sm:$0xff]
    %v228 = vld [vmem:[#allocation10 + $0x70] sm:$0xff]
    %v229 = vld [vmem:[#allocation10 + $0x78] sm:$0xff]
    %v230 = vld [vmem:[#allocation10 + $0x80] sm:$0xff]
    %v231 = vld [vmem:[#allocation10 + $0x88] sm:$0xff]
    %v232 = vld [vmem:[#allocation10 + $0x90] sm:$0xff]
    %v233 = vld [vmem:[#allocation10 + $0x98] sm:$0xff]
    %v234 = vld [vmem:[#allocation10 + $0xa0] sm:$0xff]
    %v235 = vld [vmem:[#allocation10 + $0xa8] sm:$0xff]
    %v236 = vld [vmem:[#allocation10 + $0xb0] sm:$0xff]
    %v237 = vld [vmem:[#allocation10 + $0xb8] sm:$0xff]
    %v238 = vld [vmem:[#allocation10 + $0xc0] sm:$0xff]
    %v239 = vld [vmem:[#allocation10 + $0xc8] sm:$0xff]
    %v240 = vld [vmem:[#allocation10 + $0xd0] sm:$0xff]
    %v241 = vld [vmem:[#allocation10 + $0xd8] sm:$0xff]
    %v242 = vld [vmem:[#allocation10 + $0xe0] sm:$0xff]
    %v243 = vld [vmem:[#allocation10 + $0xe8] sm:$0xff]
    %v244 = vld [vmem:[#allocation10 + $0xf0] sm:$0xff]
    %v245 = vld [vmem:[#allocation10 + $0xf8] sm:$0xff]
    %v278 = vunpack.c.l.b16 %v214
    %v279 = vunpack.c.h.b16 %v214
    %v280 = vunpack.c.l.b16 %v215
    %v281 = vunpack.c.h.b16 %v215
    %v282 = vunpack.c.l.b16 %v216
    %v283 = vunpack.c.h.b16 %v216
    %v284 = vunpack.c.l.b16 %v217
    %v285 = vunpack.c.h.b16 %v217
    %v286 = vunpack.c.l.b16 %v218
    %v287 = vunpack.c.h.b16 %v218
    %v288 = vunpack.c.l.b16 %v219
    %v289 = vunpack.c.h.b16 %v219
    %v290 = vunpack.c.l.b16 %v220
    %v291 = vunpack.c.h.b16 %v220
    %v292 = vunpack.c.l.b16 %v221
    %v293 = vunpack.c.h.b16 %v221
    %v294 = vunpack.c.l.b16 %v222
    %v295 = vunpack.c.h.b16 %v222
    %v296 = vunpack.c.l.b16 %v223
    %v297 = vunpack.c.h.b16 %v223
    %v298 = vunpack.c.l.b16 %v224
    %v299 = vunpack.c.h.b16 %v224
    %v300 = vunpack.c.l.b16 %v225
    %v301 = vunpack.c.h.b16 %v225
    %v302 = vunpack.c.l.b16 %v226
    %v303 = vunpack.c.h.b16 %v226
    %v304 = vunpack.c.l.b16 %v227
    %v305 = vunpack.c.h.b16 %v227
    %v306 = vunpack.c.l.b16 %v228
    %v307 = vunpack.c.h.b16 %v228
    %v308 = vunpack.c.l.b16 %v229
    %v309 = vunpack.c.h.b16 %v229
    %v310 = vunpack.c.l.b16 %v230
    %v311 = vunpack.c.h.b16 %v230
    %v312 = vunpack.c.l.b16 %v231
    %v313 = vunpack.c.h.b16 %v231
    %v314 = vunpack.c.l.b16 %v232
    %v315 = vunpack.c.h.b16 %v232
    %v316 = vunpack.c.l.b16 %v233
    %v317 = vunpack.c.h.b16 %v233
    %v318 = vunpack.c.l.b16 %v234
    %v319 = vunpack.c.h.b16 %v234
    %v320 = vunpack.c.l.b16 %v235
    %v321 = vunpack.c.h.b16 %v235
    %v322 = vunpack.c.l.b16 %v236
    %v323 = vunpack.c.h.b16 %v236
    %v324 = vunpack.c.l.b16 %v237
    %v325 = vunpack.c.h.b16 %v237
    %v326 = vunpack.c.l.b16 %v238
    %v327 = vunpack.c.h.b16 %v238
    %v328 = vunpack.c.l.b16 %v239
    %v329 = vunpack.c.h.b16 %v239
    %v330 = vunpack.c.l.b16 %v240
    %v331 = vunpack.c.h.b16 %v240
    %v332 = vunpack.c.l.b16 %v241
    %v333 = vunpack.c.h.b16 %v241
    %v334 = vunpack.c.l.b16 %v242
    %v335 = vunpack.c.h.b16 %v242
    %v336 = vunpack.c.l.b16 %v243
    %v337 = vunpack.c.h.b16 %v243
    %v338 = vunpack.c.l.b16 %v244
    %v339 = vunpack.c.h.b16 %v244
    %v340 = vunpack.c.l.b16 %v245
    %v341 = vunpack.c.h.b16 %v245
    %v342 = vpack.c.b16 %v282, %v278
    %v343 = vpack.c.b16 %v283, %v279
    %v344 = vpack.c.b16 %v284, %v280
    %v345 = vpack.c.b16 %v285, %v281
    %v346 = vpack.c.b16 %v290, %v286
    %v347 = vpack.c.b16 %v291, %v287
    %v348 = vpack.c.b16 %v292, %v288
    %v349 = vpack.c.b16 %v293, %v289
    %v350 = vpack.c.b16 %v298, %v294
    %v351 = vpack.c.b16 %v299, %v295
    %v352 = vpack.c.b16 %v300, %v296
    %v353 = vpack.c.b16 %v301, %v297
    %v354 = vpack.c.b16 %v306, %v302
    %v355 = vpack.c.b16 %v307, %v303
    %v356 = vpack.c.b16 %v308, %v304
    %v357 = vpack.c.b16 %v309, %v305
    %v358 = vpack.c.b16 %v314, %v310
    %v359 = vpack.c.b16 %v315, %v311
    %v360 = vpack.c.b16 %v316, %v312
    %v361 = vpack.c.b16 %v317, %v313
    %v362 = vpack.c.b16 %v322, %v318
    %v363 = vpack.c.b16 %v323, %v319
    %v364 = vpack.c.b16 %v324, %v320
    %v365 = vpack.c.b16 %v325, %v321
    %v366 = vpack.c.b16 %v330, %v326
    %v367 = vpack.c.b16 %v331, %v327
    %v368 = vpack.c.b16 %v332, %v328
    %v369 = vpack.c.b16 %v333, %v329
    %v370 = vpack.c.b16 %v338, %v334
    %v371 = vpack.c.b16 %v339, %v335
    %v372 = vpack.c.b16 %v340, %v336
    %v373 = vpack.c.b16 %v341, %v337
    %406 = vmatprep.subr.bf16.mxu0 %v371
    %407 = vmatpush1.bf16.msra.mxu0 %v370
    %408 = vmatprep.subr.bf16.mxu0 %v367
    %409 = vmatpush1.bf16.msra.mxu0 %v366
    %410 = vmatprep.subr.bf16.mxu0 %v363
    %411 = vmatpush1.bf16.msra.mxu0 %v362
    %412 = vmatprep.subr.bf16.mxu0 %v359
    %413 = vmatpush1.bf16.msra.mxu0 %v358
    %414 = vmatprep.subr.bf16.mxu0 %v355
    %415 = vmatpush1.bf16.msra.mxu0 %v354
    %416 = vmatprep.subr.bf16.mxu0 %v351
    %417 = vmatpush1.bf16.msra.mxu0 %v350
    %418 = vmatprep.subr.bf16.mxu0 %v347
    %419 = vmatpush1.bf16.msra.mxu0 %v346
    %420 = vmatprep.subr.bf16.mxu0 %v343
    %421 = vmatpush1.bf16.msra.mxu0 %v342
    %422 = vmatprep.subr.bf16.mxu0 0
    %423 = vmatpush2.bf16.msra.mxu0 0
    %424 = vmatprep.subr.bf16.mxu0 0
    %425 = vmatpush2.bf16.msra.mxu0 0
    %426 = vmatprep.subr.bf16.mxu0 0
    %427 = vmatpush2.bf16.msra.mxu0 0
    %428 = vmatprep.subr.bf16.mxu0 0
    %429 = vmatpush2.bf16.msra.mxu0 0
    %430 = vmatprep.subr.bf16.mxu0 0
    %431 = vmatpush2.bf16.msra.mxu0 0
    %432 = vmatprep.subr.bf16.mxu0 0
    %433 = vmatpush2.bf16.msra.mxu0 0
    %434 = vmatprep.subr.bf16.mxu0 0
    %435 = vmatpush2.bf16.msra.mxu0 0
    %436 = vmatprep.subr.bf16.mxu0 0
    %437 = vmatpush2.bf16.msra.mxu0 0
    %438 = vmatprep.mubr.bf16.mxu0 0
    %439 = vmatmul.mubr.bf16.gmra.mxu0 %v210
    %v440 = vpop.f32.mrf.mxu0
    %v441 = vadd.f32 %v185, %v440
    %v442 = vpop.f32.mrf.mxu0
    %v443 = vadd.f32 %v189, %v442
    %v444 = vpop.f32.mrf.mxu0
    %v445 = vadd.f32 %v185, %v444
    %v446 = vpop.f32.mrf.mxu0
    %v447 = vadd.f32 %v189, %v446
    %448 = vmatprep.mubr.bf16.mxu0 0
    %449 = vmatmul.mubr.bf16.gmra.mxu0 %v211
    %v450 = vpop.f32.mrf.mxu0
    %v451 = vadd.f32 %v185, %v450
    %v452 = vpop.f32.mrf.mxu0
    %v453 = vadd.f32 %v189, %v452
    %v454 = vpop.f32.mrf.mxu0
    %v455 = vadd.f32 %v185, %v454
    %v456 = vpop.f32.mrf.mxu0
    %v457 = vadd.f32 %v189, %v456
    %458 = vmatprep.mubr.bf16.mxu0 0
    %459 = vmatmul.mubr.bf16.gmra.mxu0 %v212
    %v460 = vpop.f32.mrf.mxu0
    %v461 = vadd.f32 %v185, %v460
    %v462 = vpop.f32.mrf.mxu0
    %v463 = vadd.f32 %v189, %v462
    %v464 = vpop.f32.mrf.mxu0
    %v465 = vadd.f32 %v185, %v464
    %v466 = vpop.f32.mrf.mxu0
    %v467 = vadd.f32 %v189, %v466
    %468 = vmatprep.mubr.bf16.mxu0 0
    %469 = vmatmul.mubr.bf16.gmra.mxu0 %v213
    %v470 = vpop.f32.mrf.mxu0
    %v471 = vadd.f32 %v185, %v470
    %v472 = vpop.f32.mrf.mxu0
    %v473 = vadd.f32 %v189, %v472
    %v474 = vpop.f32.mrf.mxu0
    %v475 = vadd.f32 %v185, %v474
    %v476 = vpop.f32.mrf.mxu0
    %v477 = vadd.f32 %v189, %v476
    %478 = vdwg.mxu0
    %479 = vmatprep.subr.bf16.mxu0 %v373
    %480 = vmatpush1.bf16.msra.mxu0 %v372
    %481 = vmatprep.subr.bf16.mxu0 %v369
    %482 = vmatpush1.bf16.msra.mxu0 %v368
    %483 = vmatprep.subr.bf16.mxu0 %v365
    %484 = vmatpush1.bf16.msra.mxu0 %v364
    %485 = vmatprep.subr.bf16.mxu0 %v361
    %486 = vmatpush1.bf16.msra.mxu0 %v360
    %487 = vmatprep.subr.bf16.mxu0 %v357
    %488 = vmatpush1.bf16.msra.mxu0 %v356
    %489 = vmatprep.subr.bf16.mxu0 %v353
    %490 = vmatpush1.bf16.msra.mxu0 %v352
    %491 = vmatprep.subr.bf16.mxu0 %v349
    %492 = vmatpush1.bf16.msra.mxu0 %v348
    %493 = vmatprep.subr.bf16.mxu0 %v345
    %494 = vmatpush1.bf16.msra.mxu0 %v344
    %495 = vmatprep.subr.bf16.mxu0 0
    %496 = vmatpush2.bf16.msra.mxu0 0
    %497 = vmatprep.subr.bf16.mxu0 0
    %498 = vmatpush2.bf16.msra.mxu0 0
    %499 = vmatprep.subr.bf16.mxu0 0
    %500 = vmatpush2.bf16.msra.mxu0 0
    %501 = vmatprep.subr.bf16.mxu0 0
    %502 = vmatpush2.bf16.msra.mxu0 0
    %503 = vmatprep.subr.bf16.mxu0 0
    %504 = vmatpush2.bf16.msra.mxu0 0
    %505 = vmatprep.subr.bf16.mxu0 0
    %506 = vmatpush2.bf16.msra.mxu0 0
    %507 = vmatprep.subr.bf16.mxu0 0
    %508 = vmatpush2.bf16.msra.mxu0 0
    %509 = vmatprep.subr.bf16.mxu0 0
    %510 = vmatpush2.bf16.msra.mxu0 0
    %511 = vmatprep.mubr.bf16.mxu0 0
    %512 = vmatmul.mubr.bf16.gmra.mxu0 %v210
    %v513 = vpop.f32.mrf.mxu0
    %v514 = vadd.f32 %v193, %v513
    %v515 = vpop.f32.mrf.mxu0
    %v516 = vadd.f32 %v197, %v515
    %v517 = vpop.f32.mrf.mxu0
    %v518 = vadd.f32 %v193, %v517
    %v519 = vpop.f32.mrf.mxu0
    %v520 = vadd.f32 %v197, %v519
    %521 = vmatprep.mubr.bf16.mxu0 0
    %522 = vmatmul.mubr.bf16.gmra.mxu0 %v211
    %v523 = vpop.f32.mrf.mxu0
    %v524 = vadd.f32 %v193, %v523
    %v525 = vpop.f32.mrf.mxu0
    %v526 = vadd.f32 %v197, %v525
    %v527 = vpop.f32.mrf.mxu0
    %v528 = vadd.f32 %v193, %v527
    %v529 = vpop.f32.mrf.mxu0
    %v530 = vadd.f32 %v197, %v529
    %531 = vmatprep.mubr.bf16.mxu0 0
    %532 = vmatmul.mubr.bf16.gmra.mxu0 %v212
    %v533 = vpop.f32.mrf.mxu0
    %v534 = vadd.f32 %v193, %v533
    %v535 = vpop.f32.mrf.mxu0
    %v536 = vadd.f32 %v197, %v535
    %v537 = vpop.f32.mrf.mxu0
    %v538 = vadd.f32 %v193, %v537
    %v539 = vpop.f32.mrf.mxu0
    %v540 = vadd.f32 %v197, %v539
    %541 = vmatprep.mubr.bf16.mxu0 0
    %542 = vmatmul.mubr.bf16.gmra.mxu0 %v213
    %v543 = vpop.f32.mrf.mxu0
    %v544 = vadd.f32 %v193, %v543
    %v545 = vpop.f32.mrf.mxu0
    %v546 = vadd.f32 %v197, %v545
    %v547 = vpop.f32.mrf.mxu0
    %v548 = vadd.f32 %v193, %v547
    %v549 = vpop.f32.mrf.mxu0
    %v550 = vadd.f32 %v197, %v549
    %551 = vdwg.mxu0
    %552 = vst [vmem:[#allocation3] sm:$0xff] %v441
    %553 = vst [vmem:[#allocation3 + $0x8] sm:$0xff] %v443
    %554 = vst [vmem:[#allocation3 + $0x10] sm:$0xff] %v514
    %555 = vst [vmem:[#allocation3 + $0x18] sm:$0xff] %v516
    %556 = vst [vmem:[#allocation3 + $0x20] sm:$0xff] %v445
    %557 = vst [vmem:[#allocation3 + $0x28] sm:$0xff] %v447
    %558 = vst [vmem:[#allocation3 + $0x30] sm:$0xff] %v518
    %559 = vst [vmem:[#allocation3 + $0x38] sm:$0xff] %v520
    %560 = vst [vmem:[#allocation3 + $0x40] sm:$0xff] %v451
    %561 = vst [vmem:[#allocation3 + $0x48] sm:$0xff] %v453
    %562 = vst [vmem:[#allocation3 + $0x50] sm:$0xff] %v524
    %563 = vst [vmem:[#allocation3 + $0x58] sm:$0xff] %v526
    %564 = vst [vmem:[#allocation3 + $0x60] sm:$0xff] %v455
    %565 = vst [vmem:[#allocation3 + $0x68] sm:$0xff] %v457
    %566 = vst [vmem:[#allocation3 + $0x70] sm:$0xff] %v528
    %567 = vst [vmem:[#allocation3 + $0x78] sm:$0xff] %v530
    %568 = vst [vmem:[#allocation3 + $0x80] sm:$0xff] %v461
    %569 = vst [vmem:[#allocation3 + $0x88] sm:$0xff] %v463
    %570 = vst [vmem:[#allocation3 + $0x90] sm:$0xff] %v534
    %571 = vst [vmem:[#allocation3 + $0x98] sm:$0xff] %v536
    %572 = vst [vmem:[#allocation3 + $0xa0] sm:$0xff] %v465
    %573 = vst [vmem:[#allocation3 + $0xa8] sm:$0xff] %v467
    %574 = vst [vmem:[#allocation3 + $0xb0] sm:$0xff] %v538
    %575 = vst [vmem:[#allocation3 + $0xb8] sm:$0xff] %v540
    %576 = vst [vmem:[#allocation3 + $0xc0] sm:$0xff] %v471
    %577 = vst [vmem:[#allocation3 + $0xc8] sm:$0xff] %v473
    %578 = vst [vmem:[#allocation3 + $0xd0] sm:$0xff] %v544
    %579 = vst [vmem:[#allocation3 + $0xd8] sm:$0xff] %v546
    %580 = vst [vmem:[#allocation3 + $0xe0] sm:$0xff] %v475
    %581 = vst [vmem:[#allocation3 + $0xe8] sm:$0xff] %v477
    %582 = vst [vmem:[#allocation3 + $0xf0] sm:$0xff] %v548
    %583 = vst [vmem:[#allocation3 + $0xf8] sm:$0xff] %v550
    %v584 = vld [vmem:[%s6] sm:$0xf]
    %v586 = vlaneseq
    %v587 = vshrl.u32 %v586, 7
    %v588 = vsub.s32 0, %v587
    %v589 = vrot.slane %v584, %v588
    %v590 = vlaneseq
    %v591 = vshrl.u32 %v590, 7
    %v592 = vsub.s32 1, %v591
    %v593 = vrot.slane %v584, %v592
    %v594 = vlaneseq
    %v595 = vshrl.u32 %v594, 7
    %v596 = vsub.s32 2, %v595
    %v597 = vrot.slane %v584, %v596
    %v598 = vlaneseq
    %v599 = vshrl.u32 %v598, 7
    %v600 = vsub.s32 3, %v599
    %v601 = vrot.slane %v584, %v600
    %v606 = vld [vmem:[#allocation12] sm:$0xff]
    %v607 = vld [vmem:[#allocation12 + $0x8] sm:$0xff]
    %v608 = vld [vmem:[#allocation12 + $0x10] sm:$0xff]
    %v609 = vld [vmem:[#allocation12 + $0x18] sm:$0xff]
    %v610 = vld [vmem:[#allocation12 + $0x20] sm:$0xff]
    %v611 = vld [vmem:[#allocation12 + $0x28] sm:$0xff]
    %v612 = vld [vmem:[#allocation12 + $0x30] sm:$0xff]
    %v613 = vld [vmem:[#allocation12 + $0x38] sm:$0xff]
    %v614 = vld [vmem:[#allocation12 + $0x40] sm:$0xff]
    %v615 = vld [vmem:[#allocation12 + $0x48] sm:$0xff]
    %v616 = vld [vmem:[#allocation12 + $0x50] sm:$0xff]
    %v617 = vld [vmem:[#allocation12 + $0x58] sm:$0xff]
    %v618 = vld [vmem:[#allocation12 + $0x60] sm:$0xff]
    %v619 = vld [vmem:[#allocation12 + $0x68] sm:$0xff]
    %v620 = vld [vmem:[#allocation12 + $0x70] sm:$0xff]
    %v621 = vld [vmem:[#allocation12 + $0x78] sm:$0xff]
    %v622 = vld [vmem:[#allocation12 + $0x80] sm:$0xff]
    %v623 = vld [vmem:[#allocation12 + $0x88] sm:$0xff]
    %v624 = vld [vmem:[#allocation12 + $0x90] sm:$0xff]
    %v625 = vld [vmem:[#allocation12 + $0x98] sm:$0xff]
    %v626 = vld [vmem:[#allocation12 + $0xa0] sm:$0xff]
    %v627 = vld [vmem:[#allocation12 + $0xa8] sm:$0xff]
    %v628 = vld [vmem:[#allocation12 + $0xb0] sm:$0xff]
    %v629 = vld [vmem:[#allocation12 + $0xb8] sm:$0xff]
    %v630 = vld [vmem:[#allocation12 + $0xc0] sm:$0xff]
    %v631 = vld [vmem:[#allocation12 + $0xc8] sm:$0xff]
    %v632 = vld [vmem:[#allocation12 + $0xd0] sm:$0xff]
    %v633 = vld [vmem:[#allocation12 + $0xd8] sm:$0xff]
    %v634 = vld [vmem:[#allocation12 + $0xe0] sm:$0xff]
    %v635 = vld [vmem:[#allocation12 + $0xe8] sm:$0xff]
    %v636 = vld [vmem:[#allocation12 + $0xf0] sm:$0xff]
    %v637 = vld [vmem:[#allocation12 + $0xf8] sm:$0xff]
    %v638 = vld [vmem:[#allocation3] sm:$0xff]
    %v639 = vld [vmem:[#allocation3 + $0x8] sm:$0xff]
    %v640 = vld [vmem:[#allocation3 + $0x10] sm:$0xff]
    %v641 = vld [vmem:[#allocation3 + $0x18] sm:$0xff]
    %v674 = vunpack.c.l.b16 %v606
    %v675 = vunpack.c.h.b16 %v606
    %v676 = vunpack.c.l.b16 %v607
    %v677 = vunpack.c.h.b16 %v607
    %v678 = vunpack.c.l.b16 %v608
    %v679 = vunpack.c.h.b16 %v608
    %v680 = vunpack.c.l.b16 %v609
    %v681 = vunpack.c.h.b16 %v609
    %v682 = vunpack.c.l.b16 %v610
    %v683 = vunpack.c.h.b16 %v610
    %v684 = vunpack.c.l.b16 %v611
    %v685 = vunpack.c.h.b16 %v611
    %v686 = vunpack.c.l.b16 %v612
    %v687 = vunpack.c.h.b16 %v612
    %v688 = vunpack.c.l.b16 %v613
    %v689 = vunpack.c.h.b16 %v613
    %v690 = vunpack.c.l.b16 %v614
    %v691 = vunpack.c.h.b16 %v614
    %v692 = vunpack.c.l.b16 %v615
    %v693 = vunpack.c.h.b16 %v615
    %v694 = vunpack.c.l.b16 %v616
    %v695 = vunpack.c.h.b16 %v616
    %v696 = vunpack.c.l.b16 %v617
    %v697 = vunpack.c.h.b16 %v617
    %v698 = vunpack.c.l.b16 %v618
    %v699 = vunpack.c.h.b16 %v618
    %v700 = vunpack.c.l.b16 %v619
    %v701 = vunpack.c.h.b16 %v619
    %v702 = vunpack.c.l.b16 %v620
    %v703 = vunpack.c.h.b16 %v620
    %v704 = vunpack.c.l.b16 %v621
    %v705 = vunpack.c.h.b16 %v621
    %v706 = vunpack.c.l.b16 %v622
    %v707 = vunpack.c.h.b16 %v622
    %v708 = vunpack.c.l.b16 %v623
    %v709 = vunpack.c.h.b16 %v623
    %v710 = vunpack.c.l.b16 %v624
    %v711 = vunpack.c.h.b16 %v624
    %v712 = vunpack.c.l.b16 %v625
    %v713 = vunpack.c.h.b16 %v625
    %v714 = vunpack.c.l.b16 %v626
    %v715 = vunpack.c.h.b16 %v626
    %v716 = vunpack.c.l.b16 %v627
    %v717 = vunpack.c.h.b16 %v627
    %v718 = vunpack.c.l.b16 %v628
    %v719 = vunpack.c.h.b16 %v628
    %v720 = vunpack.c.l.b16 %v629
    %v721 = vunpack.c.h.b16 %v629
    %v722 = vunpack.c.l.b16 %v630
    %v723 = vunpack.c.h.b16 %v630
    %v724 = vunpack.c.l.b16 %v631
    %v725 = vunpack.c.h.b16 %v631
    %v726 = vunpack.c.l.b16 %v632
    %v727 = vunpack.c.h.b16 %v632
    %v728 = vunpack.c.l.b16 %v633
    %v729 = vunpack.c.h.b16 %v633
    %v730 = vunpack.c.l.b16 %v634
    %v731 = vunpack.c.h.b16 %v634
    %v732 = vunpack.c.l.b16 %v635
    %v733 = vunpack.c.h.b16 %v635
    %v734 = vunpack.c.l.b16 %v636
    %v735 = vunpack.c.h.b16 %v636
    %v736 = vunpack.c.l.b16 %v637
    %v737 = vunpack.c.h.b16 %v637
    %v738 = vpack.c.b16 %v678, %v674
    %v739 = vpack.c.b16 %v679, %v675
    %v740 = vpack.c.b16 %v680, %v676
    %v741 = vpack.c.b16 %v681, %v677
    %v742 = vpack.c.b16 %v686, %v682
    %v743 = vpack.c.b16 %v687, %v683
    %v744 = vpack.c.b16 %v688, %v684
    %v745 = vpack.c.b16 %v689, %v685
    %v746 = vpack.c.b16 %v694, %v690
    %v747 = vpack.c.b16 %v695, %v691
    %v748 = vpack.c.b16 %v696, %v692
    %v749 = vpack.c.b16 %v697, %v693
    %v750 = vpack.c.b16 %v702, %v698
    %v751 = vpack.c.b16 %v703, %v699
    %v752 = vpack.c.b16 %v704, %v700
    %v753 = vpack.c.b16 %v705, %v701
    %v754 = vpack.c.b16 %v710, %v706
    %v755 = vpack.c.b16 %v711, %v707
    %v756 = vpack.c.b16 %v712, %v708
    %v757 = vpack.c.b16 %v713, %v709
    %v758 = vpack.c.b16 %v718, %v714
    %v759 = vpack.c.b16 %v719, %v715
    %v760 = vpack.c.b16 %v720, %v716
    %v761 = vpack.c.b16 %v721, %v717
    %v762 = vpack.c.b16 %v726, %v722
    %v763 = vpack.c.b16 %v727, %v723
    %v764 = vpack.c.b16 %v728, %v724
    %v765 = vpack.c.b16 %v729, %v725
    %v766 = vpack.c.b16 %v734, %v730
    %v767 = vpack.c.b16 %v735, %v731
    %v768 = vpack.c.b16 %v736, %v732
    %v769 = vpack.c.b16 %v737, %v733
    %802 = vmatprep.subr.bf16.mxu0 %v767
    %803 = vmatpush1.bf16.msra.mxu0 %v766
    %804 = vmatprep.subr.bf16.mxu0 %v763
    %805 = vmatpush1.bf16.msra.mxu0 %v762
    %806 = vmatprep.subr.bf16.mxu0 %v759
    %807 = vmatpush1.bf16.msra.mxu0 %v758
    %808 = vmatprep.subr.bf16.mxu0 %v755
    %809 = vmatpush1.bf16.msra.mxu0 %v754
    %810 = vmatprep.subr.bf16.mxu0 %v751
    %811 = vmatpush1.bf16.msra.mxu0 %v750
    %812 = vmatprep.subr.bf16.mxu0 %v747
    %813 = vmatpush1.bf16.msra.mxu0 %v746
    %814 = vmatprep.subr.bf16.mxu0 %v743
    %815 = vmatpush1.bf16.msra.mxu0 %v742
    %816 = vmatprep.subr.bf16.mxu0 %v739
    %817 = vmatpush1.bf16.msra.mxu0 %v738
    %818 = vmatprep.subr.bf16.mxu0 0
    %819 = vmatpush2.bf16.msra.mxu0 0
    %820 = vmatprep.subr.bf16.mxu0 0
    %821 = vmatpush2.bf16.msra.mxu0 0
    %822 = vmatprep.subr.bf16.mxu0 0
    %823 = vmatpush2.bf16.msra.mxu0 0
    %824 = vmatprep.subr.bf16.mxu0 0
    %825 = vmatpush2.bf16.msra.mxu0 0
    %826 = vmatprep.subr.bf16.mxu0 0
    %827 = vmatpush2.bf16.msra.mxu0 0
    %828 = vmatprep.subr.bf16.mxu0 0
    %829 = vmatpush2.bf16.msra.mxu0 0
    %830 = vmatprep.subr.bf16.mxu0 0
    %831 = vmatpush2.bf16.msra.mxu0 0
    %832 = vmatprep.subr.bf16.mxu0 0
    %833 = vmatpush2.bf16.msra.mxu0 0
    %834 = vmatprep.mubr.bf16.mxu0 0
    %835 = vmatmul.mubr.bf16.gmra.mxu0 0
    %v836 = vpop.f32.mrf.mxu0
    %v837 = vadd.f32 %v638, %v836
    %v838 = vpop.f32.mrf.mxu0
    %v839 = vadd.f32 %v639, %v838
    %v840 = vpop.f32.mrf.mxu0
    %v841 = vpop.f32.mrf.mxu0
    %842 = vdwg.mxu0
    %843 = vmatprep.subr.bf16.mxu0 %v769
    %844 = vmatpush1.bf16.msra.mxu0 %v768
    %845 = vmatprep.subr.bf16.mxu0 %v765
    %846 = vmatpush1.bf16.msra.mxu0 %v764
    %847 = vmatprep.subr.bf16.mxu0 %v761
    %848 = vmatpush1.bf16.msra.mxu0 %v760
    %849 = vmatprep.subr.bf16.mxu0 %v757
    %850 = vmatpush1.bf16.msra.mxu0 %v756
    %851 = vmatprep.subr.bf16.mxu0 %v753
    %852 = vmatpush1.bf16.msra.mxu0 %v752
    %853 = vmatprep.subr.bf16.mxu0 %v749
    %854 = vmatpush1.bf16.msra.mxu0 %v748
    %855 = vmatprep.subr.bf16.mxu0 %v745
    %856 = vmatpush1.bf16.msra.mxu0 %v744
    %857 = vmatprep.subr.bf16.mxu0 %v741
    %858 = vmatpush1.bf16.msra.mxu0 %v740
    %859 = vmatprep.subr.bf16.mxu0 0
    %860 = vmatpush2.bf16.msra.mxu0 0
    %861 = vmatprep.subr.bf16.mxu0 0
    %862 = vmatpush2.bf16.msra.mxu0 0
    %863 = vmatprep.subr.bf16.mxu0 0
    %864 = vmatpush2.bf16.msra.mxu0 0
    %865 = vmatprep.subr.bf16.mxu0 0
    %866 = vmatpush2.bf16.msra.mxu0 0
    %867 = vmatprep.subr.bf16.mxu0 0
    %868 = vmatpush2.bf16.msra.mxu0 0
    %869 = vmatprep.subr.bf16.mxu0 0
    %870 = vmatpush2.bf16.msra.mxu0 0
    %871 = vmatprep.subr.bf16.mxu0 0
    %872 = vmatpush2.bf16.msra.mxu0 0
    %873 = vmatprep.subr.bf16.mxu0 0
    %874 = vmatpush2.bf16.msra.mxu0 0
    %875 = vmatprep.mubr.bf16.mxu0 0
    %876 = vmatmul.mubr.bf16.gmra.mxu0 0
    %v877 = vpop.f32.mrf.mxu0
    %v878 = vadd.f32 %v640, %v877
    %v879 = vpop.f32.mrf.mxu0
    %v880 = vadd.f32 %v641, %v879
    %v881 = vpop.f32.mrf.mxu0
    %v882 = vpop.f32.mrf.mxu0
    %883 = vdwg.mxu0
    %v884 = vxor.u32 %v837, 2147483648
    %v885 = vxor.u32 %v839, 2147483648
    %v886 = vxor.u32 %v878, 2147483648
    %v887 = vmul.f32 %v884, 1.442695
    %v888 = vpow.pop %v887
    %v889 = vmul.f32 %v885, 1.442695
    %v890 = vpow.pop %v889
    %v891 = vmul.f32 %v886, 1.442695
    %v892 = vpow.pop %v891
    %v893 = vadd.f32 %v888, 1.0
    %v894 = vadd.f32 %v890, 1.0
    %v895 = vadd.f32 %v892, 1.0
    %v896 = vrcp.pop %v893
    %v897 = vmul.f32 1.0, %v896
    %v898 = vrcp.pop %v894
    %v899 = vmul.f32 1.0, %v898
    %v900 = vrcp.pop %v895
    %v901 = vmul.f32 1.0, %v900
    %v902 = vtanh.pop %v880
    %v903 = vmul.f32 %v899, 0.0
    %v904 = vmul.f32 %v897, %v902
    %v905 = vadd.f32 %v903, %v904
    %v906 = vtanh.pop %v905
    %v907 = vmul.f32 %v901, %v906
    %v908 = vpack.c.bf16 %v907, %v907
    %v909 = vld [vmem:[#allocation13] sm:$0xff]
    %v910 = vld [vmem:[#allocation13 + $0x8] sm:$0xff]
    %v911 = vld [vmem:[#allocation13 + $0x10] sm:$0xff]
    %v912 = vld [vmem:[#allocation13 + $0x18] sm:$0xff]
    %v913 = vld [vmem:[#allocation13 + $0x20] sm:$0xff]
    %v914 = vld [vmem:[#allocation13 + $0x28] sm:$0xff]
    %v915 = vld [vmem:[#allocation13 + $0x30] sm:$0xff]
    %v916 = vld [vmem:[#allocation13 + $0x38] sm:$0xff]
    %v917 = vld [vmem:[#allocation13 + $0x40] sm:$0xff]
    %v918 = vld [vmem:[#allocation13 + $0x48] sm:$0xff]
    %v919 = vld [vmem:[#allocation13 + $0x50] sm:$0xff]
    %v920 = vld [vmem:[#allocation13 + $0x58] sm:$0xff]
    %v921 = vld [vmem:[#allocation13 + $0x60] sm:$0xff]
    %v922 = vld [vmem:[#allocation13 + $0x68] sm:$0xff]
    %v923 = vld [vmem:[#allocation13 + $0x70] sm:$0xff]
    %v924 = vld [vmem:[#allocation13 + $0x78] sm:$0xff]
    %v925 = vld [vmem:[#allocation13 + $0x80] sm:$0xff]
    %v926 = vld [vmem:[#allocation13 + $0x88] sm:$0xff]
    %v927 = vld [vmem:[#allocation13 + $0x90] sm:$0xff]
    %v928 = vld [vmem:[#allocation13 + $0x98] sm:$0xff]
    %v929 = vld [vmem:[#allocation13 + $0xa0] sm:$0xff]
    %v930 = vld [vmem:[#allocation13 + $0xa8] sm:$0xff]
    %v931 = vld [vmem:[#allocation13 + $0xb0] sm:$0xff]
    %v932 = vld [vmem:[#allocation13 + $0xb8] sm:$0xff]
    %v933 = vld [vmem:[#allocation13 + $0xc0] sm:$0xff]
    %v934 = vld [vmem:[#allocation13 + $0xc8] sm:$0xff]
    %v935 = vld [vmem:[#allocation13 + $0xd0] sm:$0xff]
    %v936 = vld [vmem:[#allocation13 + $0xd8] sm:$0xff]
    %v937 = vld [vmem:[#allocation13 + $0xe0] sm:$0xff]
    %v938 = vld [vmem:[#allocation13 + $0xe8] sm:$0xff]
    %v939 = vld [vmem:[#allocation13 + $0xf0] sm:$0xff]
    %v940 = vld [vmem:[#allocation13 + $0xf8] sm:$0xff]
    %v941 = vld [vmem:[#allocation13 + $0x100] sm:$0xff]
    %v942 = vld [vmem:[#allocation13 + $0x108] sm:$0xff]
    %v943 = vld [vmem:[#allocation13 + $0x110] sm:$0xff]
    %v944 = vld [vmem:[#allocation13 + $0x118] sm:$0xff]
    %v945 = vld [vmem:[#allocation13 + $0x120] sm:$0xff]
    %v946 = vld [vmem:[#allocation13 + $0x128] sm:$0xff]
    %v947 = vld [vmem:[#allocation13 + $0x130] sm:$0xff]
    %v948 = vld [vmem:[#allocation13 + $0x138] sm:$0xff]
    %v949 = vld [vmem:[#allocation13 + $0x140] sm:$0xff]
    %v950 = vld [vmem:[#allocation13 + $0x148] sm:$0xff]
    %v951 = vld [vmem:[#allocation13 + $0x150] sm:$0xff]
    %v952 = vld [vmem:[#allocation13 + $0x158] sm:$0xff]
    %v953 = vld [vmem:[#allocation13 + $0x160] sm:$0xff]
    %v954 = vld [vmem:[#allocation13 + $0x168] sm:$0xff]
    %v955 = vld [vmem:[#allocation13 + $0x170] sm:$0xff]
    %v956 = vld [vmem:[#allocation13 + $0x178] sm:$0xff]
    %v957 = vld [vmem:[#allocation13 + $0x180] sm:$0xff]
    %v958 = vld [vmem:[#allocation13 + $0x188] sm:$0xff]
    %v959 = vld [vmem:[#allocation13 + $0x190] sm:$0xff]
    %v960 = vld [vmem:[#allocation13 + $0x198] sm:$0xff]
    %v961 = vld [vmem:[#allocation13 + $0x1a0] sm:$0xff]
    %v962 = vld [vmem:[#allocation13 + $0x1a8] sm:$0xff]
    %v963 = vld [vmem:[#allocation13 + $0x1b0] sm:$0xff]
    %v964 = vld [vmem:[#allocation13 + $0x1b8] sm:$0xff]
    %v965 = vld [vmem:[#allocation13 + $0x1c0] sm:$0xff]
    %v966 = vld [vmem:[#allocation13 + $0x1c8] sm:$0xff]
    %v967 = vld [vmem:[#allocation13 + $0x1d0] sm:$0xff]
    %v968 = vld [vmem:[#allocation13 + $0x1d8] sm:$0xff]
    %v969 = vld [vmem:[#allocation13 + $0x1e0] sm:$0xff]
    %v970 = vld [vmem:[#allocation13 + $0x1e8] sm:$0xff]
    %v971 = vld [vmem:[#allocation13 + $0x1f0] sm:$0xff]
    %v972 = vld [vmem:[#allocation13 + $0x1f8] sm:$0xff]
    %v1037 = vunpack.c.l.b16 %v909
    %v1038 = vunpack.c.h.b16 %v909
    %v1039 = vunpack.c.l.b16 %v910
    %v1040 = vunpack.c.h.b16 %v910
    %v1041 = vunpack.c.l.b16 %v911
    %v1042 = vunpack.c.h.b16 %v911
    %v1043 = vunpack.c.l.b16 %v912
    %v1044 = vunpack.c.h.b16 %v912
    %v1045 = vunpack.c.l.b16 %v913
    %v1046 = vunpack.c.h.b16 %v913
    %v1047 = vunpack.c.l.b16 %v914
    %v1048 = vunpack.c.h.b16 %v914
    %v1049 = vunpack.c.l.b16 %v915
    %v1050 = vunpack.c.h.b16 %v915
    %v1051 = vunpack.c.l.b16 %v916
    %v1052 = vunpack.c.h.b16 %v916
    %v1053 = vunpack.c.l.b16 %v917
    %v1054 = vunpack.c.h.b16 %v917
    %v1055 = vunpack.c.l.b16 %v918
    %v1056 = vunpack.c.h.b16 %v918
    %v1057 = vunpack.c.l.b16 %v919
    %v1058 = vunpack.c.h.b16 %v919
    %v1059 = vunpack.c.l.b16 %v920
    %v1060 = vunpack.c.h.b16 %v920
    %v1061 = vunpack.c.l.b16 %v921
    %v1062 = vunpack.c.h.b16 %v921
    %v1063 = vunpack.c.l.b16 %v922
    %v1064 = vunpack.c.h.b16 %v922
    %v1065 = vunpack.c.l.b16 %v923
    %v1066 = vunpack.c.h.b16 %v923
    %v1067 = vunpack.c.l.b16 %v924
    %v1068 = vunpack.c.h.b16 %v924
    %v1069 = vunpack.c.l.b16 %v925
    %v1070 = vunpack.c.h.b16 %v925
    %v1071 = vunpack.c.l.b16 %v926
    %v1072 = vunpack.c.h.b16 %v926
    %v1073 = vunpack.c.l.b16 %v927
    %v1074 = vunpack.c.h.b16 %v927
    %v1075 = vunpack.c.l.b16 %v928
    %v1076 = vunpack.c.h.b16 %v928
    %v1077 = vunpack.c.l.b16 %v929
    %v1078 = vunpack.c.h.b16 %v929
    %v1079 = vunpack.c.l.b16 %v930
    %v1080 = vunpack.c.h.b16 %v930
    %v1081 = vunpack.c.l.b16 %v931
    %v1082 = vunpack.c.h.b16 %v931
    %v1083 = vunpack.c.l.b16 %v932
    %v1084 = vunpack.c.h.b16 %v932
    %v1085 = vunpack.c.l.b16 %v933
    %v1086 = vunpack.c.h.b16 %v933
    %v1087 = vunpack.c.l.b16 %v934
    %v1088 = vunpack.c.h.b16 %v934
    %v1089 = vunpack.c.l.b16 %v935
    %v1090 = vunpack.c.h.b16 %v935
    %v1091 = vunpack.c.l.b16 %v936
    %v1092 = vunpack.c.h.b16 %v936
    %v1093 = vunpack.c.l.b16 %v937
    %v1094 = vunpack.c.h.b16 %v937
    %v1095 = vunpack.c.l.b16 %v938
    %v1096 = vunpack.c.h.b16 %v938
    %v1097 = vunpack.c.l.b16 %v939
    %v1098 = vunpack.c.h.b16 %v939
    %v1099 = vunpack.c.l.b16 %v940
    %v1100 = vunpack.c.h.b16 %v940
    %v1101 = vunpack.c.l.b16 %v941
    %v1102 = vunpack.c.h.b16 %v941
    %v1103 = vunpack.c.l.b16 %v942
    %v1104 = vunpack.c.h.b16 %v942
    %v1105 = vunpack.c.l.b16 %v943
    %v1106 = vunpack.c.h.b16 %v943
    %v1107 = vunpack.c.l.b16 %v944
    %v1108 = vunpack.c.h.b16 %v944
    %v1109 = vunpack.c.l.b16 %v945
    %v1110 = vunpack.c.h.b16 %v945
    %v1111 = vunpack.c.l.b16 %v946
    %v1112 = vunpack.c.h.b16 %v946
    %v1113 = vunpack.c.l.b16 %v947
    %v1114 = vunpack.c.h.b16 %v947
    %v1115 = vunpack.c.l.b16 %v948
    %v1116 = vunpack.c.h.b16 %v948
    %v1117 = vunpack.c.l.b16 %v949
    %v1118 = vunpack.c.h.b16 %v949
    %v1119 = vunpack.c.l.b16 %v950
    %v1120 = vunpack.c.h.b16 %v950
    %v1121 = vunpack.c.l.b16 %v951
    %v1122 = vunpack.c.h.b16 %v951
    %v1123 = vunpack.c.l.b16 %v952
    %v1124 = vunpack.c.h.b16 %v952
    %v1125 = vunpack.c.l.b16 %v953
    %v1126 = vunpack.c.h.b16 %v953
    %v1127 = vunpack.c.l.b16 %v954
    %v1128 = vunpack.c.h.b16 %v954
    %v1129 = vunpack.c.l.b16 %v955
    %v1130 = vunpack.c.h.b16 %v955
    %v1131 = vunpack.c.l.b16 %v956
    %v1132 = vunpack.c.h.b16 %v956
    %v1133 = vunpack.c.l.b16 %v957
    %v1134 = vunpack.c.h.b16 %v957
    %v1135 = vunpack.c.l.b16 %v958
    %v1136 = vunpack.c.h.b16 %v958
    %v1137 = vunpack.c.l.b16 %v959
    %v1138 = vunpack.c.h.b16 %v959
    %v1139 = vunpack.c.l.b16 %v960
    %v1140 = vunpack.c.h.b16 %v960
    %v1141 = vunpack.c.l.b16 %v961
    %v1142 = vunpack.c.h.b16 %v961
    %v1143 = vunpack.c.l.b16 %v962
    %v1144 = vunpack.c.h.b16 %v962
    %v1145 = vunpack.c.l.b16 %v963
    %v1146 = vunpack.c.h.b16 %v963
    %v1147 = vunpack.c.l.b16 %v964
    %v1148 = vunpack.c.h.b16 %v964
    %v1149 = vunpack.c.l.b16 %v965
    %v1150 = vunpack.c.h.b16 %v965
    %v1151 = vunpack.c.l.b16 %v966
    %v1152 = vunpack.c.h.b16 %v966
    %v1153 = vunpack.c.l.b16 %v967
    %v1154 = vunpack.c.h.b16 %v967
    %v1155 = vunpack.c.l.b16 %v968
    %v1156 = vunpack.c.h.b16 %v968
    %v1157 = vunpack.c.l.b16 %v969
    %v1158 = vunpack.c.h.b16 %v969
    %v1159 = vunpack.c.l.b16 %v970
    %v1160 = vunpack.c.h.b16 %v970
    %v1161 = vunpack.c.l.b16 %v971
    %v1162 = vunpack.c.h.b16 %v971
    %v1163 = vunpack.c.l.b16 %v972
    %v1164 = vunpack.c.h.b16 %v972
    %v1165 = vpack.c.b16 %v1041, %v1037
    %v1166 = vpack.c.b16 %v1042, %v1038
    %v1167 = vpack.c.b16 %v1043, %v1039
    %v1168 = vpack.c.b16 %v1044, %v1040
    %v1169 = vpack.c.b16 %v1049, %v1045
    %v1170 = vpack.c.b16 %v1050, %v1046
    %v1171 = vpack.c.b16 %v1051, %v1047
    %v1172 = vpack.c.b16 %v1052, %v1048
    %v1173 = vpack.c.b16 %v1057, %v1053
    %v1174 = vpack.c.b16 %v1058, %v1054
    %v1175 = vpack.c.b16 %v1059, %v1055
    %v1176 = vpack.c.b16 %v1060, %v1056
    %v1177 = vpack.c.b16 %v1065, %v1061
    %v1178 = vpack.c.b16 %v1066, %v1062
    %v1179 = vpack.c.b16 %v1067, %v1063
    %v1180 = vpack.c.b16 %v1068, %v1064
    %v1181 = vpack.c.b16 %v1073, %v1069
    %v1182 = vpack.c.b16 %v1074, %v1070
    %v1183 = vpack.c.b16 %v1075, %v1071
    %v1184 = vpack.c.b16 %v1076, %v1072
    %v1185 = vpack.c.b16 %v1081, %v1077
    %v1186 = vpack.c.b16 %v1082, %v1078
    %v1187 = vpack.c.b16 %v1083, %v1079
    %v1188 = vpack.c.b16 %v1084, %v1080
    %v1189 = vpack.c.b16 %v1089, %v1085
    %v1190 = vpack.c.b16 %v1090, %v1086
    %v1191 = vpack.c.b16 %v1091, %v1087
    %v1192 = vpack.c.b16 %v1092, %v1088
    %v1193 = vpack.c.b16 %v1097, %v1093
    %v1194 = vpack.c.b16 %v1098, %v1094
    %v1195 = vpack.c.b16 %v1099, %v1095
    %v1196 = vpack.c.b16 %v1100, %v1096
    %v1197 = vpack.c.b16 %v1105, %v1101
    %v1198 = vpack.c.b16 %v1106, %v1102
    %v1199 = vpack.c.b16 %v1107, %v1103
    %v1200 = vpack.c.b16 %v1108, %v1104
    %v1201 = vpack.c.b16 %v1113, %v1109
    %v1202 = vpack.c.b16 %v1114, %v1110
    %v1203 = vpack.c.b16 %v1115, %v1111
    %v1204 = vpack.c.b16 %v1116, %v1112
    %v1205 = vpack.c.b16 %v1121, %v1117
    %v1206 = vpack.c.b16 %v1122, %v1118
    %v1207 = vpack.c.b16 %v1123, %v1119
    %v1208 = vpack.c.b16 %v1124, %v1120
    %v1209 = vpack.c.b16 %v1129, %v1125
    %v1210 = vpack.c.b16 %v1130, %v1126
    %v1211 = vpack.c.b16 %v1131, %v1127
    %v1212 = vpack.c.b16 %v1132, %v1128
    %v1213 = vpack.c.b16 %v1137, %v1133
    %v1214 = vpack.c.b16 %v1138, %v1134
    %v1215 = vpack.c.b16 %v1139, %v1135
    %v1216 = vpack.c.b16 %v1140, %v1136
    %v1217 = vpack.c.b16 %v1145, %v1141
    %v1218 = vpack.c.b16 %v1146, %v1142
    %v1219 = vpack.c.b16 %v1147, %v1143
    %v1220 = vpack.c.b16 %v1148, %v1144
    %v1221 = vpack.c.b16 %v1153, %v1149
    %v1222 = vpack.c.b16 %v1154, %v1150
    %v1223 = vpack.c.b16 %v1155, %v1151
    %v1224 = vpack.c.b16 %v1156, %v1152
    %v1225 = vpack.c.b16 %v1161, %v1157
    %v1226 = vpack.c.b16 %v1162, %v1158
    %v1227 = vpack.c.b16 %v1163, %v1159
    %v1228 = vpack.c.b16 %v1164, %v1160
    %1293 = vmatprep.subr.bf16.mxu0 %v1194
    %1294 = vmatpush1.bf16.msra.mxu0 %v1193
    %1295 = vmatprep.subr.bf16.mxu0 %v1190
    %1296 = vmatpush1.bf16.msra.mxu0 %v1189
    %1297 = vmatprep.subr.bf16.mxu0 %v1186
    %1298 = vmatpush1.bf16.msra.mxu0 %v1185
    %1299 = vmatprep.subr.bf16.mxu0 %v1182
    %1300 = vmatpush1.bf16.msra.mxu0 %v1181
    %1301 = vmatprep.subr.bf16.mxu0 %v1178
    %1302 = vmatpush1.bf16.msra.mxu0 %v1177
    %1303 = vmatprep.subr.bf16.mxu0 %v1174
    %1304 = vmatpush1.bf16.msra.mxu0 %v1173
    %1305 = vmatprep.subr.bf16.mxu0 %v1170
    %1306 = vmatpush1.bf16.msra.mxu0 %v1169
    %1307 = vmatprep.subr.bf16.mxu0 %v1166
    %1308 = vmatpush1.bf16.msra.mxu0 %v1165
    %1309 = vmatprep.subr.bf16.mxu0 %v1226
    %1310 = vmatpush2.bf16.msra.mxu0 %v1225
    %1311 = vmatprep.subr.bf16.mxu0 %v1222
    %1312 = vmatpush2.bf16.msra.mxu0 %v1221
    %1313 = vmatprep.subr.bf16.mxu0 %v1218
    %1314 = vmatpush2.bf16.msra.mxu0 %v1217
    %1315 = vmatprep.subr.bf16.mxu0 %v1214
    %1316 = vmatpush2.bf16.msra.mxu0 %v1213
    %1317 = vmatprep.subr.bf16.mxu0 %v1210
    %1318 = vmatpush2.bf16.msra.mxu0 %v1209
    %1319 = vmatprep.subr.bf16.mxu0 %v1206
    %1320 = vmatpush2.bf16.msra.mxu0 %v1205
    %1321 = vmatprep.subr.bf16.mxu0 %v1202
    %1322 = vmatpush2.bf16.msra.mxu0 %v1201
    %1323 = vmatprep.subr.bf16.mxu0 %v1198
    %1324 = vmatpush2.bf16.msra.mxu0 %v1197
    %1325 = vmatprep.mubr.bf16.mxu0 0
    %1326 = vmatmul.mubr.bf16.gmra.mxu0 %v908
    %v1327 = vpop.f32.mrf.mxu0
    %v1328 = vadd.f32 %v589, %v1327
    %v1329 = vpop.f32.mrf.mxu0
    %v1330 = vadd.f32 %v593, %v1329
    %v1331 = vpop.f32.mrf.mxu0
    %v1332 = vpop.f32.mrf.mxu0
    %1333 = vdwg.mxu0
    %1334 = vmatprep.subr.bf16.mxu0 %v1196
    %1335 = vmatpush1.bf16.msra.mxu0 %v1195
    %1336 = vmatprep.subr.bf16.mxu0 %v1192
    %1337 = vmatpush1.bf16.msra.mxu0 %v1191
    %1338 = vmatprep.subr.bf16.mxu0 %v1188
    %1339 = vmatpush1.bf16.msra.mxu0 %v1187
    %1340 = vmatprep.subr.bf16.mxu0 %v1184
    %1341 = vmatpush1.bf16.msra.mxu0 %v1183
    %1342 = vmatprep.subr.bf16.mxu0 %v1180
    %1343 = vmatpush1.bf16.msra.mxu0 %v1179
    %1344 = vmatprep.subr.bf16.mxu0 %v1176
    %1345 = vmatpush1.bf16.msra.mxu0 %v1175
    %1346 = vmatprep.subr.bf16.mxu0 %v1172
    %1347 = vmatpush1.bf16.msra.mxu0 %v1171
    %1348 = vmatprep.subr.bf16.mxu0 %v1168
    %1349 = vmatpush1.bf16.msra.mxu0 %v1167
    %1350 = vmatprep.subr.bf16.mxu0 %v1228
    %1351 = vmatpush2.bf16.msra.mxu0 %v1227
    %1352 = vmatprep.subr.bf16.mxu0 %v1224
    %1353 = vmatpush2.bf16.msra.mxu0 %v1223
    %1354 = vmatprep.subr.bf16.mxu0 %v1220
    %1355 = vmatpush2.bf16.msra.mxu0 %v1219
    %1356 = vmatprep.subr.bf16.mxu0 %v1216
    %1357 = vmatpush2.bf16.msra.mxu0 %v1215
    %1358 = vmatprep.subr.bf16.mxu0 %v1212
    %1359 = vmatpush2.bf16.msra.mxu0 %v1211
    %1360 = vmatprep.subr.bf16.mxu0 %v1208
    %1361 = vmatpush2.bf16.msra.mxu0 %v1207
    %1362 = vmatprep.subr.bf16.mxu0 %v1204
    %1363 = vmatpush2.bf16.msra.mxu0 %v1203
    %1364 = vmatprep.subr.bf16.mxu0 %v1200
    %1365 = vmatpush2.bf16.msra.mxu0 %v1199
    %1366 = vmatprep.mubr.bf16.mxu0 0
    %1367 = vmatmul.mubr.bf16.gmra.mxu0 %v908
    %v1368 = vpop.f32.mrf.mxu0
    %v1369 = vadd.f32 %v597, %v1368
    %v1370 = vpop.f32.mrf.mxu0
    %v1371 = vadd.f32 %v601, %v1370
    %v1372 = vpop.f32.mrf.mxu0
    %v1373 = vpop.f32.mrf.mxu0
    %1374 = vdwg.mxu0
    %v1375 = vxor.u32 %v1328, 2147483648
    %v1376 = vxor.u32 %v1330, 2147483648
    %v1377 = vxor.u32 %v1369, 2147483648
    %v1378 = vmul.f32 %v1375, 1.442695
    %v1379 = vpow.pop %v1378
    %v1380 = vmul.f32 %v1376, 1.442695
    %v1381 = vpow.pop %v1380
    %v1382 = vmul.f32 %v1377, 1.442695
    %v1383 = vpow.pop %v1382
    %v1384 = vadd.f32 %v1379, 1.0
    %v1385 = vadd.f32 %v1381, 1.0
    %v1386 = vadd.f32 %v1383, 1.0
    %v1387 = vrcp.pop %v1384
    %v1388 = vmul.f32 1.0, %v1387
    %v1389 = vrcp.pop %v1385
    %v1390 = vmul.f32 1.0, %v1389
    %v1391 = vrcp.pop %v1386
    %v1392 = vmul.f32 1.0, %v1391
    %v1393 = vtanh.pop %v1371
    %v1394 = vmul.f32 %v1390, 0.0
    %v1395 = vmul.f32 %v1388, %v1393
    %v1396 = vadd.f32 %v1394, %v1395
    %v1397 = vtanh.pop %v1396
    %v1398 = vmul.f32 %v1392, %v1397
    %v1399 = vpack.c.bf16 %v1398, %v1398
    %1400 = vst [vmem:[#allocation4] sm:$0xf] %v1399
    %v1401 = vld [vmem:[#allocation12] sm:$0xff]
    %v1402 = vld [vmem:[#allocation12 + $0x8] sm:$0xff]
    %v1403 = vld [vmem:[#allocation12 + $0x10] sm:$0xff]
    %v1404 = vld [vmem:[#allocation12 + $0x18] sm:$0xff]
    %v1405 = vld [vmem:[#allocation12 + $0x20] sm:$0xff]
    %v1406 = vld [vmem:[#allocation12 + $0x28] sm:$0xff]
    %v1407 = vld [vmem:[#allocation12 + $0x30] sm:$0xff]
    %v1408 = vld [vmem:[#allocation12 + $0x38] sm:$0xff]
    %v1409 = vld [vmem:[#allocation12 + $0x40] sm:$0xff]
    %v1410 = vld [vmem:[#allocation12 + $0x48] sm:$0xff]
    %v1411 = vld [vmem:[#allocation12 + $0x50] sm:$0xff]
    %v1412 = vld [vmem:[#allocation12 + $0x58] sm:$0xff]
    %v1413 = vld [vmem:[#allocation12 + $0x60] sm:$0xff]
    %v1414 = vld [vmem:[#allocation12 + $0x68] sm:$0xff]
    %v1415 = vld [vmem:[#allocation12 + $0x70] sm:$0xff]
    %v1416 = vld [vmem:[#allocation12 + $0x78] sm:$0xff]
    %v1417 = vld [vmem:[#allocation12 + $0x80] sm:$0xff]
    %v1418 = vld [vmem:[#allocation12 + $0x88] sm:$0xff]
    %v1419 = vld [vmem:[#allocation12 + $0x90] sm:$0xff]
    %v1420 = vld [vmem:[#allocation12 + $0x98] sm:$0xff]
    %v1421 = vld [vmem:[#allocation12 + $0xa0] sm:$0xff]
    %v1422 = vld [vmem:[#allocation12 + $0xa8] sm:$0xff]
    %v1423 = vld [vmem:[#allocation12 + $0xb0] sm:$0xff]
    %v1424 = vld [vmem:[#allocation12 + $0xb8] sm:$0xff]
    %v1425 = vld [vmem:[#allocation12 + $0xc0] sm:$0xff]
    %v1426 = vld [vmem:[#allocation12 + $0xc8] sm:$0xff]
    %v1427 = vld [vmem:[#allocation12 + $0xd0] sm:$0xff]
    %v1428 = vld [vmem:[#allocation12 + $0xd8] sm:$0xff]
    %v1429 = vld [vmem:[#allocation12 + $0xe0] sm:$0xff]
    %v1430 = vld [vmem:[#allocation12 + $0xe8] sm:$0xff]
    %v1431 = vld [vmem:[#allocation12 + $0xf0] sm:$0xff]
    %v1432 = vld [vmem:[#allocation12 + $0xf8] sm:$0xff]
    %v1433 = vld [vmem:[#allocation3 + $0x20] sm:$0xff]
    %v1434 = vld [vmem:[#allocation3 + $0x28] sm:$0xff]
    %v1435 = vld [vmem:[#allocation3 + $0x30] sm:$0xff]
    %v1436 = vld [vmem:[#allocation3 + $0x38] sm:$0xff]
    %v1469 = vunpack.c.l.b16 %v1401
    %v1470 = vunpack.c.h.b16 %v1401
    %v1471 = vunpack.c.l.b16 %v1402
    %v1472 = vunpack.c.h.b16 %v1402
    %v1473 = vunpack.c.l.b16 %v1403
    %v1474 = vunpack.c.h.b16 %v1403
    %v1475 = vunpack.c.l.b16 %v1404
    %v1476 = vunpack.c.h.b16 %v1404
    %v1477 = vunpack.c.l.b16 %v1405
    %v1478 = vunpack.c.h.b16 %v1405
    %v1479 = vunpack.c.l.b16 %v1406
    %v1480 = vunpack.c.h.b16 %v1406
    %v1481 = vunpack.c.l.b16 %v1407
    %v1482 = vunpack.c.h.b16 %v1407
    %v1483 = vunpack.c.l.b16 %v1408
    %v1484 = vunpack.c.h.b16 %v1408
    %v1485 = vunpack.c.l.b16 %v1409
    %v1486 = vunpack.c.h.b16 %v1409
    %v1487 = vunpack.c.l.b16 %v1410
    %v1488 = vunpack.c.h.b16 %v1410
    %v1489 = vunpack.c.l.b16 %v1411
    %v1490 = vunpack.c.h.b16 %v1411
    %v1491 = vunpack.c.l.b16 %v1412
    %v1492 = vunpack.c.h.b16 %v1412
    %v1493 = vunpack.c.l.b16 %v1413
    %v1494 = vunpack.c.h.b16 %v1413
    %v1495 = vunpack.c.l.b16 %v1414
    %v1496 = vunpack.c.h.b16 %v1414
    %v1497 = vunpack.c.l.b16 %v1415
    %v1498 = vunpack.c.h.b16 %v1415
    %v1499 = vunpack.c.l.b16 %v1416
    %v1500 = vunpack.c.h.b16 %v1416
    %v1501 = vunpack.c.l.b16 %v1417
    %v1502 = vunpack.c.h.b16 %v1417
    %v1503 = vunpack.c.l.b16 %v1418
    %v1504 = vunpack.c.h.b16 %v1418
    %v1505 = vunpack.c.l.b16 %v1419
    %v1506 = vunpack.c.h.b16 %v1419
    %v1507 = vunpack.c.l.b16 %v1420
    %v1508 = vunpack.c.h.b16 %v1420
    %v1509 = vunpack.c.l.b16 %v1421
    %v1510 = vunpack.c.h.b16 %v1421
    %v1511 = vunpack.c.l.b16 %v1422
    %v1512 = vunpack.c.h.b16 %v1422
    %v1513 = vunpack.c.l.b16 %v1423
    %v1514 = vunpack.c.h.b16 %v1423
    %v1515 = vunpack.c.l.b16 %v1424
    %v1516 = vunpack.c.h.b16 %v1424
    %v1517 = vunpack.c.l.b16 %v1425
    %v1518 = vunpack.c.h.b16 %v1425
    %v1519 = vunpack.c.l.b16 %v1426
    %v1520 = vunpack.c.h.b16 %v1426
    %v1521 = vunpack.c.l.b16 %v1427
    %v1522 = vunpack.c.h.b16 %v1427
    %v1523 = vunpack.c.l.b16 %v1428
    %v1524 = vunpack.c.h.b16 %v1428
    %v1525 = vunpack.c.l.b16 %v1429
    %v1526 = vunpack.c.h.b16 %v1429
    %v1527 = vunpack.c.l.b16 %v1430
    %v1528 = vunpack.c.h.b16 %v1430
    %v1529 = vunpack.c.l.b16 %v1431
    %v1530 = vunpack.c.h.b16 %v1431
    %v1531 = vunpack.c.l.b16 %v1432
    %v1532 = vunpack.c.h.b16 %v1432
    %v1533 = vpack.c.b16 %v1473, %v1469
    %v1534 = vpack.c.b16 %v1474, %v1470
    %v1535 = vpack.c.b16 %v1475, %v1471
    %v1536 = vpack.c.b16 %v1476, %v1472
    %v1537 = vpack.c.b16 %v1481, %v1477
    %v1538 = vpack.c.b16 %v1482, %v1478
    %v1539 = vpack.c.b16 %v1483, %v1479
    %v1540 = vpack.c.b16 %v1484, %v1480
    %v1541 = vpack.c.b16 %v1489, %v1485
    %v1542 = vpack.c.b16 %v1490, %v1486
    %v1543 = vpack.c.b16 %v1491, %v1487
    %v1544 = vpack.c.b16 %v1492, %v1488
    %v1545 = vpack.c.b16 %v1497, %v1493
    %v1546 = vpack.c.b16 %v1498, %v1494
    %v1547 = vpack.c.b16 %v1499, %v1495
    %v1548 = vpack.c.b16 %v1500, %v1496
    %v1549 = vpack.c.b16 %v1505, %v1501
    %v1550 = vpack.c.b16 %v1506, %v1502
    %v1551 = vpack.c.b16 %v1507, %v1503
    %v1552 = vpack.c.b16 %v1508, %v1504
    %v1553 = vpack.c.b16 %v1513, %v1509
    %v1554 = vpack.c.b16 %v1514, %v1510
    %v1555 = vpack.c.b16 %v1515, %v1511
    %v1556 = vpack.c.b16 %v1516, %v1512
    %v1557 = vpack.c.b16 %v1521, %v1517
    %v1558 = vpack.c.b16 %v1522, %v1518
    %v1559 = vpack.c.b16 %v1523, %v1519
    %v1560 = vpack.c.b16 %v1524, %v1520
    %v1561 = vpack.c.b16 %v1529, %v1525
    %v1562 = vpack.c.b16 %v1530, %v1526
    %v1563 = vpack.c.b16 %v1531, %v1527
    %v1564 = vpack.c.b16 %v1532, %v1528
    %1597 = vmatprep.subr.bf16.mxu0 %v1562
    %1598 = vmatpush1.bf16.msra.mxu0 %v1561
    %1599 = vmatprep.subr.bf16.mxu0 %v1558
    %1600 = vmatpush1.bf16.msra.mxu0 %v1557
    %1601 = vmatprep.subr.bf16.mxu0 %v1554
    %1602 = vmatpush1.bf16.msra.mxu0 %v1553
    %1603 = vmatprep.subr.bf16.mxu0 %v1550
    %1604 = vmatpush1.bf16.msra.mxu0 %v1549
    %1605 = vmatprep.subr.bf16.mxu0 %v1546
    %1606 = vmatpush1.bf16.msra.mxu0 %v1545
    %1607 = vmatprep.subr.bf16.mxu0 %v1542
    %1608 = vmatpush1.bf16.msra.mxu0 %v1541
    %1609 = vmatprep.subr.bf16.mxu0 %v1538
    %1610 = vmatpush1.bf16.msra.mxu0 %v1537
    %1611 = vmatprep.subr.bf16.mxu0 %v1534
    %1612 = vmatpush1.bf16.msra.mxu0 %v1533
    %1613 = vmatprep.subr.bf16.mxu0 0
    %1614 = vmatpush2.bf16.msra.mxu0 0
    %1615 = vmatprep.subr.bf16.mxu0 0
    %1616 = vmatpush2.bf16.msra.mxu0 0
    %1617 = vmatprep.subr.bf16.mxu0 0
    %1618 = vmatpush2.bf16.msra.mxu0 0
    %1619 = vmatprep.subr.bf16.mxu0 0
    %1620 = vmatpush2.bf16.msra.mxu0 0
    %1621 = vmatprep.subr.bf16.mxu0 0
    %1622 = vmatpush2.bf16.msra.mxu0 0
    %1623 = vmatprep.subr.bf16.mxu0 0
    %1624 = vmatpush2.bf16.msra.mxu0 0
    %1625 = vmatprep.subr.bf16.mxu0 0
    %1626 = vmatpush2.bf16.msra.mxu0 0
    %1627 = vmatprep.subr.bf16.mxu0 0
    %1628 = vmatpush2.bf16.msra.mxu0 0
    %1629 = vmatprep.mubr.bf16.mxu0 0
    %1630 = vmatmul.mubr.bf16.gmra.mxu0 %v908
    %v1631 = vpop.f32.mrf.mxu0
    %v1632 = vadd.f32 %v1433, %v1631
    %v1633 = vpop.f32.mrf.mxu0
    %v1634 = vadd.f32 %v1434, %v1633
    %v1635 = vpop.f32.mrf.mxu0
    %v1636 = vpop.f32.mrf.mxu0
    %1637 = vdwg.mxu0
    %1638 = vmatprep.subr.bf16.mxu0 %v1564
    %1639 = vmatpush1.bf16.msra.mxu0 %v1563
    %1640 = vmatprep.subr.bf16.mxu0 %v1560
    %1641 = vmatpush1.bf16.msra.mxu0 %v1559
    %1642 = vmatprep.subr.bf16.mxu0 %v1556
    %1643 = vmatpush1.bf16.msra.mxu0 %v1555
    %1644 = vmatprep.subr.bf16.mxu0 %v1552
    %1645 = vmatpush1.bf16.msra.mxu0 %v1551
    %1646 = vmatprep.subr.bf16.mxu0 %v1548
    %1647 = vmatpush1.bf16.msra.mxu0 %v1547
    %1648 = vmatprep.subr.bf16.mxu0 %v1544
    %1649 = vmatpush1.bf16.msra.mxu0 %v1543
    %1650 = vmatprep.subr.bf16.mxu0 %v1540
    %1651 = vmatpush1.bf16.msra.mxu0 %v1539
    %1652 = vmatprep.subr.bf16.mxu0 %v1536
    %1653 = vmatpush1.bf16.msra.mxu0 %v1535
    %1654 = vmatprep.subr.bf16.mxu0 0
    %1655 = vmatpush2.bf16.msra.mxu0 0
    %1656 = vmatprep.subr.bf16.mxu0 0
    %1657 = vmatpush2.bf16.msra.mxu0 0
    %1658 = vmatprep.subr.bf16.mxu0 0
    %1659 = vmatpush2.bf16.msra.mxu0 0
    %1660 = vmatprep.subr.bf16.mxu0 0
    %1661 = vmatpush2.bf16.msra.mxu0 0
    %1662 = vmatprep.subr.bf16.mxu0 0
    %1663 = vmatpush2.bf16.msra.mxu0 0
    %1664 = vmatprep.subr.bf16.mxu0 0
    %1665 = vmatpush2.bf16.msra.mxu0 0
    %1666 = vmatprep.subr.bf16.mxu0 0
    %1667 = vmatpush2.bf16.msra.mxu0 0
    %1668 = vmatprep.subr.bf16.mxu0 0
    %1669 = vmatpush2.bf16.msra.mxu0 0
    %1670 = vmatprep.mubr.bf16.mxu0 0
    %1671 = vmatmul.mubr.bf16.gmra.mxu0 %v908
    %v1672 = vpop.f32.mrf.mxu0
    %v1673 = vadd.f32 %v1435, %v1672
    %v1674 = vpop.f32.mrf.mxu0
    %v1675 = vadd.f32 %v1436, %v1674
    %v1676 = vpop.f32.mrf.mxu0
    %v1677 = vpop.f32.mrf.mxu0
    %1678 = vdwg.mxu0
    %v1679 = vxor.u32 %v1632, 2147483648
    %v1680 = vxor.u32 %v1634, 2147483648
    %v1681 = vxor.u32 %v1673, 2147483648
    %v1682 = vmul.f32 %v1679, 1.442695
    %v1683 = vpow.pop %v1682
    %v1684 = vmul.f32 %v1680, 1.442695
    %v1685 = vpow.pop %v1684
    %v1686 = vmul.f32 %v1681, 1.442695
    %v1687 = vpow.pop %v1686
    %v1688 = vadd.f32 %v1683, 1.0
    %v1689 = vadd.f32 %v1685, 1.0
    %v1690 = vadd.f32 %v1687, 1.0
    %v1691 = vrcp.pop %v1688
    %v1692 = vmul.f32 1.0, %v1691
    %v1693 = vrcp.pop %v1689
    %v1694 = vmul.f32 1.0, %v1693
    %v1695 = vrcp.pop %v1690
    %v1696 = vmul.f32 1.0, %v1695
    %v1697 = vtanh.pop %v1675
    %v1698 = vmul.f32 %v1694, %v905
    %v1699 = vmul.f32 %v1692, %v1697
    %v1700 = vadd.f32 %v1698, %v1699
    %v1701 = vtanh.pop %v1700
    %v1702 = vmul.f32 %v1696, %v1701
    %v1703 = vpack.c.bf16 %v1702, %v1702
    %v1704 = vld [vmem:[#allocation13] sm:$0xff]
    %v1705 = vld [vmem:[#allocation13 + $0x8] sm:$0xff]
    %v1706 = vld [vmem:[#allocation13 + $0x10] sm:$0xff]
    %v1707 = vld [vmem:[#allocation13 + $0x18] sm:$0xff]
    %v1708 = vld [vmem:[#allocation13 + $0x20] sm:$0xff]
    %v1709 = vld [vmem:[#allocation13 + $0x28] sm:$0xff]
    %v1710 = vld [vmem:[#allocation13 + $0x30] sm:$0xff]
    %v1711 = vld [vmem:[#allocation13 + $0x38] sm:$0xff]
    %v1712 = vld [vmem:[#allocation13 + $0x40] sm:$0xff]
    %v1713 = vld [vmem:[#allocation13 + $0x48] sm:$0xff]
    %v1714 = vld [vmem:[#allocation13 + $0x50] sm:$0xff]
    %v1715 = vld [vmem:[#allocation13 + $0x58] sm:$0xff]
    %v1716 = vld [vmem:[#allocation13 + $0x60] sm:$0xff]
    %v1717 = vld [vmem:[#allocation13 + $0x68] sm:$0xff]
    %v1718 = vld [vmem:[#allocation13 + $0x70] sm:$0xff]
    %v1719 = vld [vmem:[#allocation13 + $0x78] sm:$0xff]
    %v1720 = vld [vmem:[#allocation13 + $0x80] sm:$0xff]
    %v1721 = vld [vmem:[#allocation13 + $0x88] sm:$0xff]
    %v1722 = vld [vmem:[#allocation13 + $0x90] sm:$0xff]
    %v1723 = vld [vmem:[#allocation13 + $0x98] sm:$0xff]
    %v1724 = vld [vmem:[#allocation13 + $0xa0] sm:$0xff]
    %v1725 = vld [vmem:[#allocation13 + $0xa8] sm:$0xff]
    %v1726 = vld [vmem:[#allocation13 + $0xb0] sm:$0xff]
    %v1727 = vld [vmem:[#allocation13 + $0xb8] sm:$0xff]
    %v1728 = vld [vmem:[#allocation13 + $0xc0] sm:$0xff]
    %v1729 = vld [vmem:[#allocation13 + $0xc8] sm:$0xff]
    %v1730 = vld [vmem:[#allocation13 + $0xd0] sm:$0xff]
    %v1731 = vld [vmem:[#allocation13 + $0xd8] sm:$0xff]
    %v1732 = vld [vmem:[#allocation13 + $0xe0] sm:$0xff]
    %v1733 = vld [vmem:[#allocation13 + $0xe8] sm:$0xff]
    %v1734 = vld [vmem:[#allocation13 + $0xf0] sm:$0xff]
    %v1735 = vld [vmem:[#allocation13 + $0xf8] sm:$0xff]
    %v1736 = vld [vmem:[#allocation13 + $0x100] sm:$0xff]
    %v1737 = vld [vmem:[#allocation13 + $0x108] sm:$0xff]
    %v1738 = vld [vmem:[#allocation13 + $0x110] sm:$0xff]
    %v1739 = vld [vmem:[#allocation13 + $0x118] sm:$0xff]
    %v1740 = vld [vmem:[#allocation13 + $0x120] sm:$0xff]
    %v1741 = vld [vmem:[#allocation13 + $0x128] sm:$0xff]
    %v1742 = vld [vmem:[#allocation13 + $0x130] sm:$0xff]
    %v1743 = vld [vmem:[#allocation13 + $0x138] sm:$0xff]
    %v1744 = vld [vmem:[#allocation13 + $0x140] sm:$0xff]
    %v1745 = vld [vmem:[#allocation13 + $0x148] sm:$0xff]
    %v1746 = vld [vmem:[#allocation13 + $0x150] sm:$0xff]
    %v1747 = vld [vmem:[#allocation13 + $0x158] sm:$0xff]
    %v1748 = vld [vmem:[#allocation13 + $0x160] sm:$0xff]
    %v1749 = vld [vmem:[#allocation13 + $0x168] sm:$0xff]
    %v1750 = vld [vmem:[#allocation13 + $0x170] sm:$0xff]
    %v1751 = vld [vmem:[#allocation13 + $0x178] sm:$0xff]
    %v1752 = vld [vmem:[#allocation13 + $0x180] sm:$0xff]
    %v1753 = vld [vmem:[#allocation13 + $0x188] sm:$0xff]
    %v1754 = vld [vmem:[#allocation13 + $0x190] sm:$0xff]
    %v1755 = vld [vmem:[#allocation13 + $0x198] sm:$0xff]
    %v1756 = vld [vmem:[#allocation13 + $0x1a0] sm:$0xff]
    %v1757 = vld [vmem:[#allocation13 + $0x1a8] sm:$0xff]
    %v1758 = vld [vmem:[#allocation13 + $0x1b0] sm:$0xff]
    %v1759 = vld [vmem:[#allocation13 + $0x1b8] sm:$0xff]
    %v1760 = vld [vmem:[#allocation13 + $0x1c0] sm:$0xff]
    %v1761 = vld [vmem:[#allocation13 + $0x1c8] sm:$0xff]
    %v1762 = vld [vmem:[#allocation13 + $0x1d0] sm:$0xff]
    %v1763 = vld [vmem:[#allocation13 + $0x1d8] sm:$0xff]
    %v1764 = vld [vmem:[#allocation13 + $0x1e0] sm:$0xff]
    %v1765 = vld [vmem:[#allocation13 + $0x1e8] sm:$0xff]
    %v1766 = vld [vmem:[#allocation13 + $0x1f0] sm:$0xff]
    %v1767 = vld [vmem:[#allocation13 + $0x1f8] sm:$0xff]
    %v1832 = vunpack.c.l.b16 %v1704
    %v1833 = vunpack.c.h.b16 %v1704
    %v1834 = vunpack.c.l.b16 %v1705
    %v1835 = vunpack.c.h.b16 %v1705
    %v1836 = vunpack.c.l.b16 %v1706
    %v1837 = vunpack.c.h.b16 %v1706
    %v1838 = vunpack.c.l.b16 %v1707
    %v1839 = vunpack.c.h.b16 %v1707
    %v1840 = vunpack.c.l.b16 %v1708
    %v1841 = vunpack.c.h.b16 %v1708
    %v1842 = vunpack.c.l.b16 %v1709
    %v1843 = vunpack.c.h.b16 %v1709
    %v1844 = vunpack.c.l.b16 %v1710
    %v1845 = vunpack.c.h.b16 %v1710
    %v1846 = vunpack.c.l.b16 %v1711
    %v1847 = vunpack.c.h.b16 %v1711
    %v1848 = vunpack.c.l.b16 %v1712
    %v1849 = vunpack.c.h.b16 %v1712
    %v1850 = vunpack.c.l.b16 %v1713
    %v1851 = vunpack.c.h.b16 %v1713
    %v1852 = vunpack.c.l.b16 %v1714
    %v1853 = vunpack.c.h.b16 %v1714
    %v1854 = vunpack.c.l.b16 %v1715
    %v1855 = vunpack.c.h.b16 %v1715
    %v1856 = vunpack.c.l.b16 %v1716
    %v1857 = vunpack.c.h.b16 %v1716
    %v1858 = vunpack.c.l.b16 %v1717
    %v1859 = vunpack.c.h.b16 %v1717
    %v1860 = vunpack.c.l.b16 %v1718
    %v1861 = vunpack.c.h.b16 %v1718
    %v1862 = vunpack.c.l.b16 %v1719
    %v1863 = vunpack.c.h.b16 %v1719
    %v1864 = vunpack.c.l.b16 %v1720
    %v1865 = vunpack.c.h.b16 %v1720
    %v1866 = vunpack.c.l.b16 %v1721
    %v1867 = vunpack.c.h.b16 %v1721
    %v1868 = vunpack.c.l.b16 %v1722
    %v1869 = vunpack.c.h.b16 %v1722
    %v1870 = vunpack.c.l.b16 %v1723
    %v1871 = vunpack.c.h.b16 %v1723
    %v1872 = vunpack.c.l.b16 %v1724
    %v1873 = vunpack.c.h.b16 %v1724
    %v1874 = vunpack.c.l.b16 %v1725
    %v1875 = vunpack.c.h.b16 %v1725
    %v1876 = vunpack.c.l.b16 %v1726
    %v1877 = vunpack.c.h.b16 %v1726
    %v1878 = vunpack.c.l.b16 %v1727
    %v1879 = vunpack.c.h.b16 %v1727
    %v1880 = vunpack.c.l.b16 %v1728
    %v1881 = vunpack.c.h.b16 %v1728
    %v1882 = vunpack.c.l.b16 %v1729
    %v1883 = vunpack.c.h.b16 %v1729
    %v1884 = vunpack.c.l.b16 %v1730
    %v1885 = vunpack.c.h.b16 %v1730
    %v1886 = vunpack.c.l.b16 %v1731
    %v1887 = vunpack.c.h.b16 %v1731
    %v1888 = vunpack.c.l.b16 %v1732
    %v1889 = vunpack.c.h.b16 %v1732
    %v1890 = vunpack.c.l.b16 %v1733
    %v1891 = vunpack.c.h.b16 %v1733
    %v1892 = vunpack.c.l.b16 %v1734
    %v1893 = vunpack.c.h.b16 %v1734
    %v1894 = vunpack.c.l.b16 %v1735
    %v1895 = vunpack.c.h.b16 %v1735
    %v1896 = vunpack.c.l.b16 %v1736
    %v1897 = vunpack.c.h.b16 %v1736
    %v1898 = vunpack.c.l.b16 %v1737
    %v1899 = vunpack.c.h.b16 %v1737
    %v1900 = vunpack.c.l.b16 %v1738
    %v1901 = vunpack.c.h.b16 %v1738
    %v1902 = vunpack.c.l.b16 %v1739
    %v1903 = vunpack.c.h.b16 %v1739
    %v1904 = vunpack.c.l.b16 %v1740
    %v1905 = vunpack.c.h.b16 %v1740
    %v1906 = vunpack.c.l.b16 %v1741
    %v1907 = vunpack.c.h.b16 %v1741
    %v1908 = vunpack.c.l.b16 %v1742
    %v1909 = vunpack.c.h.b16 %v1742
    %v1910 = vunpack.c.l.b16 %v1743
    %v1911 = vunpack.c.h.b16 %v1743
    %v1912 = vunpack.c.l.b16 %v1744
    %v1913 = vunpack.c.h.b16 %v1744
    %v1914 = vunpack.c.l.b16 %v1745
    %v1915 = vunpack.c.h.b16 %v1745
    %v1916 = vunpack.c.l.b16 %v1746
    %v1917 = vunpack.c.h.b16 %v1746
    %v1918 = vunpack.c.l.b16 %v1747
    %v1919 = vunpack.c.h.b16 %v1747
    %v1920 = vunpack.c.l.b16 %v1748
    %v1921 = vunpack.c.h.b16 %v1748
    %v1922 = vunpack.c.l.b16 %v1749
    %v1923 = vunpack.c.h.b16 %v1749
    %v1924 = vunpack.c.l.b16 %v1750
    %v1925 = vunpack.c.h.b16 %v1750
    %v1926 = vunpack.c.l.b16 %v1751
    %v1927 = vunpack.c.h.b16 %v1751
    %v1928 = vunpack.c.l.b16 %v1752
    %v1929 = vunpack.c.h.b16 %v1752
    %v1930 = vunpack.c.l.b16 %v1753
    %v1931 = vunpack.c.h.b16 %v1753
    %v1932 = vunpack.c.l.b16 %v1754
    %v1933 = vunpack.c.h.b16 %v1754
    %v1934 = vunpack.c.l.b16 %v1755
    %v1935 = vunpack.c.h.b16 %v1755
    %v1936 = vunpack.c.l.b16 %v1756
    %v1937 = vunpack.c.h.b16 %v1756
    %v1938 = vunpack.c.l.b16 %v1757
    %v1939 = vunpack.c.h.b16 %v1757
    %v1940 = vunpack.c.l.b16 %v1758
    %v1941 = vunpack.c.h.b16 %v1758
    %v1942 = vunpack.c.l.b16 %v1759
    %v1943 = vunpack.c.h.b16 %v1759
    %v1944 = vunpack.c.l.b16 %v1760
    %v1945 = vunpack.c.h.b16 %v1760
    %v1946 = vunpack.c.l.b16 %v1761
    %v1947 = vunpack.c.h.b16 %v1761
    %v1948 = vunpack.c.l.b16 %v1762
    %v1949 = vunpack.c.h.b16 %v1762
    %v1950 = vunpack.c.l.b16 %v1763
    %v1951 = vunpack.c.h.b16 %v1763
    %v1952 = vunpack.c.l.b16 %v1764
    %v1953 = vunpack.c.h.b16 %v1764
    %v1954 = vunpack.c.l.b16 %v1765
    %v1955 = vunpack.c.h.b16 %v1765
    %v1956 = vunpack.c.l.b16 %v1766
    %v1957 = vunpack.c.h.b16 %v1766
    %v1958 = vunpack.c.l.b16 %v1767
    %v1959 = vunpack.c.h.b16 %v1767
    %v1960 = vpack.c.b16 %v1836, %v1832
    %v1961 = vpack.c.b16 %v1837, %v1833
    %v1962 = vpack.c.b16 %v1838, %v1834
    %v1963 = vpack.c.b16 %v1839, %v1835
    %v1964 = vpack.c.b16 %v1844, %v1840
    %v1965 = vpack.c.b16 %v1845, %v1841
    %v1966 = vpack.c.b16 %v1846, %v1842
    %v1967 = vpack.c.b16 %v1847, %v1843
    %v1968 = vpack.c.b16 %v1852, %v1848
    %v1969 = vpack.c.b16 %v1853, %v1849
    %v1970 = vpack.c.b16 %v1854, %v1850
    %v1971 = vpack.c.b16 %v1855, %v1851
    %v1972 = vpack.c.b16 %v1860, %v1856
    %v1973 = vpack.c.b16 %v1861, %v1857
    %v1974 = vpack.c.b16 %v1862, %v1858
    %v1975 = vpack.c.b16 %v1863, %v1859
    %v1976 = vpack.c.b16 %v1868, %v1864
    %v1977 = vpack.c.b16 %v1869, %v1865
    %v1978 = vpack.c.b16 %v1870, %v1866
    %v1979 = vpack.c.b16 %v1871, %v1867
    %v1980 = vpack.c.b16 %v1876, %v1872
    %v1981 = vpack.c.b16 %v1877, %v1873
    %v1982 = vpack.c.b16 %v1878, %v1874
    %v1983 = vpack.c.b16 %v1879, %v1875
    %v1984 = vpack.c.b16 %v1884, %v1880
    %v1985 = vpack.c.b16 %v1885, %v1881
    %v1986 = vpack.c.b16 %v1886, %v1882
    %v1987 = vpack.c.b16 %v1887, %v1883
    %v1988 = vpack.c.b16 %v1892, %v1888
    %v1989 = vpack.c.b16 %v1893, %v1889
    %v1990 = vpack.c.b16 %v1894, %v1890
    %v1991 = vpack.c.b16 %v1895, %v1891
    %v1992 = vpack.c.b16 %v1900, %v1896
    %v1993 = vpack.c.b16 %v1901, %v1897
    %v1994 = vpack.c.b16 %v1902, %v1898
    %v1995 = vpack.c.b16 %v1903, %v1899
    %v1996 = vpack.c.b16 %v1908, %v1904
    %v1997 = vpack.c.b16 %v1909, %v1905
    %v1998 = vpack.c.b16 %v1910, %v1906
    %v1999 = vpack.c.b16 %v1911, %v1907
    %v2000 = vpack.c.b16 %v1916, %v1912
    %v2001 = vpack.c.b16 %v1917, %v1913
    %v2002 = vpack.c.b16 %v1918, %v1914
    %v2003 = vpack.c.b16 %v1919, %v1915
    %v2004 = vpack.c.b16 %v1924, %v1920
    %v2005 = vpack.c.b16 %v1925, %v1921
    %v2006 = vpack.c.b16 %v1926, %v1922
    %v2007 = vpack.c.b16 %v1927, %v1923
    %v2008 = vpack.c.b16 %v1932, %v1928
    %v2009 = vpack.c.b16 %v1933, %v1929
    %v2010 = vpack.c.b16 %v1934, %v1930
    %v2011 = vpack.c.b16 %v1935, %v1931
    %v2012 = vpack.c.b16 %v1940, %v1936
    %v2013 = vpack.c.b16 %v1941, %v1937
    %v2014 = vpack.c.b16 %v1942, %v1938
    %v2015 = vpack.c.b16 %v1943, %v1939
    %v2016 = vpack.c.b16 %v1948, %v1944
    %v2017 = vpack.c.b16 %v1949, %v1945
    %v2018 = vpack.c.b16 %v1950, %v1946
    %v2019 = vpack.c.b16 %v1951, %v1947
    %v2020 = vpack.c.b16 %v1956, %v1952
    %v2021 = vpack.c.b16 %v1957, %v1953
    %v2022 = vpack.c.b16 %v1958, %v1954
    %v2023 = vpack.c.b16 %v1959, %v1955
    %2088 = vmatprep.subr.bf16.mxu0 %v1989
    %2089 = vmatpush1.bf16.msra.mxu0 %v1988
    %2090 = vmatprep.subr.bf16.mxu0 %v1985
    %2091 = vmatpush1.bf16.msra.mxu0 %v1984
    %2092 = vmatprep.subr.bf16.mxu0 %v1981
    %2093 = vmatpush1.bf16.msra.mxu0 %v1980
    %2094 = vmatprep.subr.bf16.mxu0 %v1977
    %2095 = vmatpush1.bf16.msra.mxu0 %v1976
    %2096 = vmatprep.subr.bf16.mxu0 %v1973
    %2097 = vmatpush1.bf16.msra.mxu0 %v1972
    %2098 = vmatprep.subr.bf16.mxu0 %v1969
    %2099 = vmatpush1.bf16.msra.mxu0 %v1968
    %2100 = vmatprep.subr.bf16.mxu0 %v1965
    %2101 = vmatpush1.bf16.msra.mxu0 %v1964
    %2102 = vmatprep.subr.bf16.mxu0 %v1961
    %2103 = vmatpush1.bf16.msra.mxu0 %v1960
    %2104 = vmatprep.subr.bf16.mxu0 %v2021
    %2105 = vmatpush2.bf16.msra.mxu0 %v2020
    %2106 = vmatprep.subr.bf16.mxu0 %v2017
    %2107 = vmatpush2.bf16.msra.mxu0 %v2016
    %2108 = vmatprep.subr.bf16.mxu0 %v2013
    %2109 = vmatpush2.bf16.msra.mxu0 %v2012
    %2110 = vmatprep.subr.bf16.mxu0 %v2009
    %2111 = vmatpush2.bf16.msra.mxu0 %v2008
    %2112 = vmatprep.subr.bf16.mxu0 %v2005
    %2113 = vmatpush2.bf16.msra.mxu0 %v2004
    %2114 = vmatprep.subr.bf16.mxu0 %v2001
    %2115 = vmatpush2.bf16.msra.mxu0 %v2000
    %2116 = vmatprep.subr.bf16.mxu0 %v1997
    %2117 = vmatpush2.bf16.msra.mxu0 %v1996
    %2118 = vmatprep.subr.bf16.mxu0 %v1993
    %2119 = vmatpush2.bf16.msra.mxu0 %v1992
    %2120 = vmatprep.mubr.bf16.mxu0 %v1399
    %2121 = vmatmul.mubr.bf16.gmra.mxu0 %v1703
    %v2122 = vpop.f32.mrf.mxu0
    %v2123 = vadd.f32 %v589, %v2122
    %v2124 = vpop.f32.mrf.mxu0
    %v2125 = vadd.f32 %v593, %v2124
    %v2126 = vpop.f32.mrf.mxu0
    %v2127 = vpop.f32.mrf.mxu0
    %2128 = vdwg.mxu0
    %2129 = vmatprep.subr.bf16.mxu0 %v1991
    %2130 = vmatpush1.bf16.msra.mxu0 %v1990
    %2131 = vmatprep.subr.bf16.mxu0 %v1987
    %2132 = vmatpush1.bf16.msra.mxu0 %v1986
    %2133 = vmatprep.subr.bf16.mxu0 %v1983
    %2134 = vmatpush1.bf16.msra.mxu0 %v1982
    %2135 = vmatprep.subr.bf16.mxu0 %v1979
    %2136 = vmatpush1.bf16.msra.mxu0 %v1978
    %2137 = vmatprep.subr.bf16.mxu0 %v1975
    %2138 = vmatpush1.bf16.msra.mxu0 %v1974
    %2139 = vmatprep.subr.bf16.mxu0 %v1971
    %2140 = vmatpush1.bf16.msra.mxu0 %v1970
    %2141 = vmatprep.subr.bf16.mxu0 %v1967
    %2142 = vmatpush1.bf16.msra.mxu0 %v1966
    %2143 = vmatprep.subr.bf16.mxu0 %v1963
    %2144 = vmatpush1.bf16.msra.mxu0 %v1962
    %2145 = vmatprep.subr.bf16.mxu0 %v2023
    %2146 = vmatpush2.bf16.msra.mxu0 %v2022
    %2147 = vmatprep.subr.bf16.mxu0 %v2019
    %2148 = vmatpush2.bf16.msra.mxu0 %v2018
    %2149 = vmatprep.subr.bf16.mxu0 %v2015
    %2150 = vmatpush2.bf16.msra.mxu0 %v2014
    %2151 = vmatprep.subr.bf16.mxu0 %v2011
    %2152 = vmatpush2.bf16.msra.mxu0 %v2010
    %2153 = vmatprep.subr.bf16.mxu0 %v2007
    %2154 = vmatpush2.bf16.msra.mxu0 %v2006
    %2155 = vmatprep.subr.bf16.mxu0 %v2003
    %2156 = vmatpush2.bf16.msra.mxu0 %v2002
    %2157 = vmatprep.subr.bf16.mxu0 %v1999
    %2158 = vmatpush2.bf16.msra.mxu0 %v1998
    %2159 = vmatprep.subr.bf16.mxu0 %v1995
    %2160 = vmatpush2.bf16.msra.mxu0 %v1994
    %2161 = vmatprep.mubr.bf16.mxu0 %v1399
    %2162 = vmatmul.mubr.bf16.gmra.mxu0 %v1703
    %v2163 = vpop.f32.mrf.mxu0
    %v2164 = vadd.f32 %v597, %v2163
    %v2165 = vpop.f32.mrf.mxu0
    %v2166 = vadd.f32 %v601, %v2165
    %v2167 = vpop.f32.mrf.mxu0
    %v2168 = vpop.f32.mrf.mxu0
    %2169 = vdwg.mxu0
    %v2170 = vxor.u32 %v2123, 2147483648
    %v2171 = vxor.u32 %v2125, 2147483648
    %v2172 = vxor.u32 %v2164, 2147483648
    %v2173 = vmul.f32 %v2170, 1.442695
    %v2174 = vpow.pop %v2173
    %v2175 = vmul.f32 %v2171, 1.442695
    %v2176 = vpow.pop %v2175
    %v2177 = vmul.f32 %v2172, 1.442695
    %v2178 = vpow.pop %v2177
    %v2179 = vadd.f32 %v2174, 1.0
    %v2180 = vadd.f32 %v2176, 1.0
    %v2181 = vadd.f32 %v2178, 1.0
    %v2182 = vrcp.pop %v2179
    %v2183 = vmul.f32 1.0, %v2182
    %v2184 = vrcp.pop %v2180
    %v2185 = vmul.f32 1.0, %v2184
    %v2186 = vrcp.pop %v2181
    %v2187 = vmul.f32 1.0, %v2186
    %v2188 = vtanh.pop %v2166
    %v2189 = vmul.f32 %v2185, %v1396
    %v2190 = vmul.f32 %v2183, %v2188
    %v2191 = vadd.f32 %v2189, %v2190
    %v2192 = vtanh.pop %v2191
    %v2193 = vmul.f32 %v2187, %v2192
    %v2194 = vpack.c.bf16 %v2193, %v2193
    %2195 = vst [vmem:[#allocation4 + $0x4] sm:$0xf] %v2194
    %v2196 = vld [vmem:[#allocation12] sm:$0xff]
    %v2197 = vld [vmem:[#allocation12 + $0x8] sm:$0xff]
    %v2198 = vld [vmem:[#allocation12 + $0x10] sm:$0xff]
    %v2199 = vld [vmem:[#allocation12 + $0x18] sm:$0xff]
    %v2200 = vld [vmem:[#allocation12 + $0x20] sm:$0xff]
    %v2201 = vld [vmem:[#allocation12 + $0x28] sm:$0xff]
    %v2202 = vld [vmem:[#allocation12 + $0x30] sm:$0xff]
    %v2203 = vld [vmem:[#allocation12 + $0x38] sm:$0xff]
    %v2204 = vld [vmem:[#allocation12 + $0x40] sm:$0xff]
    %v2205 = vld [vmem:[#allocation12 + $0x48] sm:$0xff]
    %v2206 = vld [vmem:[#allocation12 + $0x50] sm:$0xff]
    %v2207 = vld [vmem:[#allocation12 + $0x58] sm:$0xff]
    %v2208 = vld [vmem:[#allocation12 + $0x60] sm:$0xff]
    %v2209 = vld [vmem:[#allocation12 + $0x68] sm:$0xff]
    %v2210 = vld [vmem:[#allocation12 + $0x70] sm:$0xff]
    %v2211 = vld [vmem:[#allocation12 + $0x78] sm:$0xff]
    %v2212 = vld [vmem:[#allocation12 + $0x80] sm:$0xff]
    %v2213 = vld [vmem:[#allocation12 + $0x88] sm:$0xff]
    %v2214 = vld [vmem:[#allocation12 + $0x90] sm:$0xff]
    %v2215 = vld [vmem:[#allocation12 + $0x98] sm:$0xff]
    %v2216 = vld [vmem:[#allocation12 + $0xa0] sm:$0xff]
    %v2217 = vld [vmem:[#allocation12 + $0xa8] sm:$0xff]
    %v2218 = vld [vmem:[#allocation12 + $0xb0] sm:$0xff]
    %v2219 = vld [vmem:[#allocation12 + $0xb8] sm:$0xff]
    %v2220 = vld [vmem:[#allocation12 + $0xc0] sm:$0xff]
    %v2221 = vld [vmem:[#allocation12 + $0xc8] sm:$0xff]
    %v2222 = vld [vmem:[#allocation12 + $0xd0] sm:$0xff]
    %v2223 = vld [vmem:[#allocation12 + $0xd8] sm:$0xff]
    %v2224 = vld [vmem:[#allocation12 + $0xe0] sm:$0xff]
    %v2225 = vld [vmem:[#allocation12 + $0xe8] sm:$0xff]
    %v2226 = vld [vmem:[#allocation12 + $0xf0] sm:$0xff]
    %v2227 = vld [vmem:[#allocation12 + $0xf8] sm:$0xff]
    %v2228 = vld [vmem:[#allocation3 + $0x40] sm:$0xff]
    %v2229 = vld [vmem:[#allocation3 + $0x48] sm:$0xff]
    %v2230 = vld [vmem:[#allocation3 + $0x50] sm:$0xff]
    %v2231 = vld [vmem:[#allocation3 + $0x58] sm:$0xff]
    %v2264 = vunpack.c.l.b16 %v2196
    %v2265 = vunpack.c.h.b16 %v2196
    %v2266 = vunpack.c.l.b16 %v2197
    %v2267 = vunpack.c.h.b16 %v2197
    %v2268 = vunpack.c.l.b16 %v2198
    %v2269 = vunpack.c.h.b16 %v2198
    %v2270 = vunpack.c.l.b16 %v2199
    %v2271 = vunpack.c.h.b16 %v2199
    %v2272 = vunpack.c.l.b16 %v2200
    %v2273 = vunpack.c.h.b16 %v2200
    %v2274 = vunpack.c.l.b16 %v2201
    %v2275 = vunpack.c.h.b16 %v2201
    %v2276 = vunpack.c.l.b16 %v2202
    %v2277 = vunpack.c.h.b16 %v2202
    %v2278 = vunpack.c.l.b16 %v2203
    %v2279 = vunpack.c.h.b16 %v2203
    %v2280 = vunpack.c.l.b16 %v2204
    %v2281 = vunpack.c.h.b16 %v2204
    %v2282 = vunpack.c.l.b16 %v2205
    %v2283 = vunpack.c.h.b16 %v2205
    %v2284 = vunpack.c.l.b16 %v2206
    %v2285 = vunpack.c.h.b16 %v2206
    %v2286 = vunpack.c.l.b16 %v2207
    %v2287 = vunpack.c.h.b16 %v2207
    %v2288 = vunpack.c.l.b16 %v2208
    %v2289 = vunpack.c.h.b16 %v2208
    %v2290 = vunpack.c.l.b16 %v2209
    %v2291 = vunpack.c.h.b16 %v2209
    %v2292 = vunpack.c.l.b16 %v2210
    %v2293 = vunpack.c.h.b16 %v2210
    %v2294 = vunpack.c.l.b16 %v2211
    %v2295 = vunpack.c.h.b16 %v2211
    %v2296 = vunpack.c.l.b16 %v2212
    %v2297 = vunpack.c.h.b16 %v2212
    %v2298 = vunpack.c.l.b16 %v2213
    %v2299 = vunpack.c.h.b16 %v2213
    %v2300 = vunpack.c.l.b16 %v2214
    %v2301 = vunpack.c.h.b16 %v2214
    %v2302 = vunpack.c.l.b16 %v2215
    %v2303 = vunpack.c.h.b16 %v2215
    %v2304 = vunpack.c.l.b16 %v2216
    %v2305 = vunpack.c.h.b16 %v2216
    %v2306 = vunpack.c.l.b16 %v2217
    %v2307 = vunpack.c.h.b16 %v2217
    %v2308 = vunpack.c.l.b16 %v2218
    %v2309 = vunpack.c.h.b16 %v2218
    %v2310 = vunpack.c.l.b16 %v2219
    %v2311 = vunpack.c.h.b16 %v2219
    %v2312 = vunpack.c.l.b16 %v2220
    %v2313 = vunpack.c.h.b16 %v2220
    %v2314 = vunpack.c.l.b16 %v2221
    %v2315 = vunpack.c.h.b16 %v2221
    %v2316 = vunpack.c.l.b16 %v2222
    %v2317 = vunpack.c.h.b16 %v2222
    %v2318 = vunpack.c.l.b16 %v2223
    %v2319 = vunpack.c.h.b16 %v2223
    %v2320 = vunpack.c.l.b16 %v2224
    %v2321 = vunpack.c.h.b16 %v2224
    %v2322 = vunpack.c.l.b16 %v2225
    %v2323 = vunpack.c.h.b16 %v2225
    %v2324 = vunpack.c.l.b16 %v2226
    %v2325 = vunpack.c.h.b16 %v2226
    %v2326 = vunpack.c.l.b16 %v2227
    %v2327 = vunpack.c.h.b16 %v2227
    %v2328 = vpack.c.b16 %v2268, %v2264
    %v2329 = vpack.c.b16 %v2269, %v2265
    %v2330 = vpack.c.b16 %v2270, %v2266
    %v2331 = vpack.c.b16 %v2271, %v2267
    %v2332 = vpack.c.b16 %v2276, %v2272
    %v2333 = vpack.c.b16 %v2277, %v2273
    %v2334 = vpack.c.b16 %v2278, %v2274
    %v2335 = vpack.c.b16 %v2279, %v2275
    %v2336 = vpack.c.b16 %v2284, %v2280
    %v2337 = vpack.c.b16 %v2285, %v2281
    %v2338 = vpack.c.b16 %v2286, %v2282
    %v2339 = vpack.c.b16 %v2287, %v2283
    %v2340 = vpack.c.b16 %v2292, %v2288
    %v2341 = vpack.c.b16 %v2293, %v2289
    %v2342 = vpack.c.b16 %v2294, %v2290
    %v2343 = vpack.c.b16 %v2295, %v2291
    %v2344 = vpack.c.b16 %v2300, %v2296
    %v2345 = vpack.c.b16 %v2301, %v2297
    %v2346 = vpack.c.b16 %v2302, %v2298
    %v2347 = vpack.c.b16 %v2303, %v2299
    %v2348 = vpack.c.b16 %v2308, %v2304
    %v2349 = vpack.c.b16 %v2309, %v2305
    %v2350 = vpack.c.b16 %v2310, %v2306
    %v2351 = vpack.c.b16 %v2311, %v2307
    %v2352 = vpack.c.b16 %v2316, %v2312
    %v2353 = vpack.c.b16 %v2317, %v2313
    %v2354 = vpack.c.b16 %v2318, %v2314
    %v2355 = vpack.c.b16 %v2319, %v2315
    %v2356 = vpack.c.b16 %v2324, %v2320
    %v2357 = vpack.c.b16 %v2325, %v2321
    %v2358 = vpack.c.b16 %v2326, %v2322
    %v2359 = vpack.c.b16 %v2327, %v2323
    %2392 = vmatprep.subr.bf16.mxu0 %v2357
    %2393 = vmatpush1.bf16.msra.mxu0 %v2356
    %2394 = vmatprep.subr.bf16.mxu0 %v2353
    %2395 = vmatpush1.bf16.msra.mxu0 %v2352
    %2396 = vmatprep.subr.bf16.mxu0 %v2349
    %2397 = vmatpush1.bf16.msra.mxu0 %v2348
    %2398 = vmatprep.subr.bf16.mxu0 %v2345
    %2399 = vmatpush1.bf16.msra.mxu0 %v2344
    %2400 = vmatprep.subr.bf16.mxu0 %v2341
    %2401 = vmatpush1.bf16.msra.mxu0 %v2340
    %2402 = vmatprep.subr.bf16.mxu0 %v2337
    %2403 = vmatpush1.bf16.msra.mxu0 %v2336
    %2404 = vmatprep.subr.bf16.mxu0 %v2333
    %2405 = vmatpush1.bf16.msra.mxu0 %v2332
    %2406 = vmatprep.subr.bf16.mxu0 %v2329
    %2407 = vmatpush1.bf16.msra.mxu0 %v2328
    %2408 = vmatprep.subr.bf16.mxu0 0
    %2409 = vmatpush2.bf16.msra.mxu0 0
    %2410 = vmatprep.subr.bf16.mxu0 0
    %2411 = vmatpush2.bf16.msra.mxu0 0
    %2412 = vmatprep.subr.bf16.mxu0 0
    %2413 = vmatpush2.bf16.msra.mxu0 0
    %2414 = vmatprep.subr.bf16.mxu0 0
    %2415 = vmatpush2.bf16.msra.mxu0 0
    %2416 = vmatprep.subr.bf16.mxu0 0
    %2417 = vmatpush2.bf16.msra.mxu0 0
    %2418 = vmatprep.subr.bf16.mxu0 0
    %2419 = vmatpush2.bf16.msra.mxu0 0
    %2420 = vmatprep.subr.bf16.mxu0 0
    %2421 = vmatpush2.bf16.msra.mxu0 0
    %2422 = vmatprep.subr.bf16.mxu0 0
    %2423 = vmatpush2.bf16.msra.mxu0 0
    %2424 = vmatprep.mubr.bf16.mxu0 0
    %2425 = vmatmul.mubr.bf16.gmra.mxu0 %v1703
    %v2426 = vpop.f32.mrf.mxu0
    %v2427 = vadd.f32 %v2228, %v2426
    %v2428 = vpop.f32.mrf.mxu0
    %v2429 = vadd.f32 %v2229, %v2428
    %v2430 = vpop.f32.mrf.mxu0
    %v2431 = vpop.f32.mrf.mxu0
    %2432 = vdwg.mxu0
    %2433 = vmatprep.subr.bf16.mxu0 %v2359
    %2434 = vmatpush1.bf16.msra.mxu0 %v2358
    %2435 = vmatprep.subr.bf16.mxu0 %v2355
    %2436 = vmatpush1.bf16.msra.mxu0 %v2354
    %2437 = vmatprep.subr.bf16.mxu0 %v2351
    %2438 = vmatpush1.bf16.msra.mxu0 %v2350
    %2439 = vmatprep.subr.bf16.mxu0 %v2347
    %2440 = vmatpush1.bf16.msra.mxu0 %v2346
    %2441 = vmatprep.subr.bf16.mxu0 %v2343
    %2442 = vmatpush1.bf16.msra.mxu0 %v2342
    %2443 = vmatprep.subr.bf16.mxu0 %v2339
    %2444 = vmatpush1.bf16.msra.mxu0 %v2338
    %2445 = vmatprep.subr.bf16.mxu0 %v2335
    %2446 = vmatpush1.bf16.msra.mxu0 %v2334
    %2447 = vmatprep.subr.bf16.mxu0 %v2331
    %2448 = vmatpush1.bf16.msra.mxu0 %v2330
    %2449 = vmatprep.subr.bf16.mxu0 0
    %2450 = vmatpush2.bf16.msra.mxu0 0
    %2451 = vmatprep.subr.bf16.mxu0 0
    %2452 = vmatpush2.bf16.msra.mxu0 0
    %2453 = vmatprep.subr.bf16.mxu0 0
    %2454 = vmatpush2.bf16.msra.mxu0 0
    %2455 = vmatprep.subr.bf16.mxu0 0
    %2456 = vmatpush2.bf16.msra.mxu0 0
    %2457 = vmatprep.subr.bf16.mxu0 0
    %2458 = vmatpush2.bf16.msra.mxu0 0
    %2459 = vmatprep.subr.bf16.mxu0 0
    %2460 = vmatpush2.bf16.msra.mxu0 0
    %2461 = vmatprep.subr.bf16.mxu0 0
    %2462 = vmatpush2.bf16.msra.mxu0 0
    %2463 = vmatprep.subr.bf16.mxu0 0
    %2464 = vmatpush2.bf16.msra.mxu0 0
    %2465 = vmatprep.mubr.bf16.mxu0 0
    %2466 = vmatmul.mubr.bf16.gmra.mxu0 %v1703
    %v2467 = vpop.f32.mrf.mxu0
    %v2468 = vadd.f32 %v2230, %v2467
    %v2469 = vpop.f32.mrf.mxu0
    %v2470 = vadd.f32 %v2231, %v2469
    %v2471 = vpop.f32.mrf.mxu0
    %v2472 = vpop.f32.mrf.mxu0
    %2473 = vdwg.mxu0
    %v2474 = vxor.u32 %v2427, 2147483648
    %v2475 = vxor.u32 %v2429, 2147483648
    %v2476 = vxor.u32 %v2468, 2147483648
    %v2477 = vmul.f32 %v2474, 1.442695
    %v2478 = vpow.pop %v2477
    %v2479 = vmul.f32 %v2475, 1.442695
    %v2480 = vpow.pop %v2479
    %v2481 = vmul.f32 %v2476, 1.442695
    %v2482 = vpow.pop %v2481
    %v2483 = vadd.f32 %v2478, 1.0
    %v2484 = vadd.f32 %v2480, 1.0
    %v2485 = vadd.f32 %v2482, 1.0
    %v2486 = vrcp.pop %v2483
    %v2487 = vmul.f32 1.0, %v2486
    %v2488 = vrcp.pop %v2484
    %v2489 = vmul.f32 1.0, %v2488
    %v2490 = vrcp.pop %v2485
    %v2491 = vmul.f32 1.0, %v2490
    %v2492 = vtanh.pop %v2470
    %v2493 = vmul.f32 %v2489, %v1700
    %v2494 = vmul.f32 %v2487, %v2492
    %v2495 = vadd.f32 %v2493, %v2494
    %v2496 = vtanh.pop %v2495
    %v2497 = vmul.f32 %v2491, %v2496
    %v2498 = vpack.c.bf16 %v2497, %v2497
    %v2499 = vld [vmem:[#allocation13] sm:$0xff]
    %v2500 = vld [vmem:[#allocation13 + $0x8] sm:$0xff]
    %v2501 = vld [vmem:[#allocation13 + $0x10] sm:$0xff]
    %v2502 = vld [vmem:[#allocation13 + $0x18] sm:$0xff]
    %v2503 = vld [vmem:[#allocation13 + $0x20] sm:$0xff]
    %v2504 = vld [vmem:[#allocation13 + $0x28] sm:$0xff]
    %v2505 = vld [vmem:[#allocation13 + $0x30] sm:$0xff]
    %v2506 = vld [vmem:[#allocation13 + $0x38] sm:$0xff]
    %v2507 = vld [vmem:[#allocation13 + $0x40] sm:$0xff]
    %v2508 = vld [vmem:[#allocation13 + $0x48] sm:$0xff]
    %v2509 = vld [vmem:[#allocation13 + $0x50] sm:$0xff]
    %v2510 = vld [vmem:[#allocation13 + $0x58] sm:$0xff]
    %v2511 = vld [vmem:[#allocation13 + $0x60] sm:$0xff]
    %v2512 = vld [vmem:[#allocation13 + $0x68] sm:$0xff]
    %v2513 = vld [vmem:[#allocation13 + $0x70] sm:$0xff]
    %v2514 = vld [vmem:[#allocation13 + $0x78] sm:$0xff]
    %v2515 = vld [vmem:[#allocation13 + $0x80] sm:$0xff]
    %v2516 = vld [vmem:[#allocation13 + $0x88] sm:$0xff]
    %v2517 = vld [vmem:[#allocation13 + $0x90] sm:$0xff]
    %v2518 = vld [vmem:[#allocation13 + $0x98] sm:$0xff]
    %v2519 = vld [vmem:[#allocation13 + $0xa0] sm:$0xff]
    %v2520 = vld [vmem:[#allocation13 + $0xa8] sm:$0xff]
    %v2521 = vld [vmem:[#allocation13 + $0xb0] sm:$0xff]
    %v2522 = vld [vmem:[#allocation13 + $0xb8] sm:$0xff]
    %v2523 = vld [vmem:[#allocation13 + $0xc0] sm:$0xff]
    %v2524 = vld [vmem:[#allocation13 + $0xc8] sm:$0xff]
    %v2525 = vld [vmem:[#allocation13 + $0xd0] sm:$0xff]
    %v2526 = vld [vmem:[#allocation13 + $0xd8] sm:$0xff]
    %v2527 = vld [vmem:[#allocation13 + $0xe0] sm:$0xff]
    %v2528 = vld [vmem:[#allocation13 + $0xe8] sm:$0xff]
    %v2529 = vld [vmem:[#allocation13 + $0xf0] sm:$0xff]
    %v2530 = vld [vmem:[#allocation13 + $0xf8] sm:$0xff]
    %v2531 = vld [vmem:[#allocation13 + $0x100] sm:$0xff]
    %v2532 = vld [vmem:[#allocation13 + $0x108] sm:$0xff]
    %v2533 = vld [vmem:[#allocation13 + $0x110] sm:$0xff]
    %v2534 = vld [vmem:[#allocation13 + $0x118] sm:$0xff]
    %v2535 = vld [vmem:[#allocation13 + $0x120] sm:$0xff]
    %v2536 = vld [vmem:[#allocation13 + $0x128] sm:$0xff]
    %v2537 = vld [vmem:[#allocation13 + $0x130] sm:$0xff]
    %v2538 = vld [vmem:[#allocation13 + $0x138] sm:$0xff]
    %v2539 = vld [vmem:[#allocation13 + $0x140] sm:$0xff]
    %v2540 = vld [vmem:[#allocation13 + $0x148] sm:$0xff]
    %v2541 = vld [vmem:[#allocation13 + $0x150] sm:$0xff]
    %v2542 = vld [vmem:[#allocation13 + $0x158] sm:$0xff]
    %v2543 = vld [vmem:[#allocation13 + $0x160] sm:$0xff]
    %v2544 = vld [vmem:[#allocation13 + $0x168] sm:$0xff]
    %v2545 = vld [vmem:[#allocation13 + $0x170] sm:$0xff]
    %v2546 = vld [vmem:[#allocation13 + $0x178] sm:$0xff]
    %v2547 = vld [vmem:[#allocation13 + $0x180] sm:$0xff]
    %v2548 = vld [vmem:[#allocation13 + $0x188] sm:$0xff]
    %v2549 = vld [vmem:[#allocation13 + $0x190] sm:$0xff]
    %v2550 = vld [vmem:[#allocation13 + $0x198] sm:$0xff]
    %v2551 = vld [vmem:[#allocation13 + $0x1a0] sm:$0xff]
    %v2552 = vld [vmem:[#allocation13 + $0x1a8] sm:$0xff]
    %v2553 = vld [vmem:[#allocation13 + $0x1b0] sm:$0xff]
    %v2554 = vld [vmem:[#allocation13 + $0x1b8] sm:$0xff]
    %v2555 = vld [vmem:[#allocation13 + $0x1c0] sm:$0xff]
    %v2556 = vld [vmem:[#allocation13 + $0x1c8] sm:$0xff]
    %v2557 = vld [vmem:[#allocation13 + $0x1d0] sm:$0xff]
    %v2558 = vld [vmem:[#allocation13 + $0x1d8] sm:$0xff]
    %v2559 = vld [vmem:[#allocation13 + $0x1e0] sm:$0xff]
    %v2560 = vld [vmem:[#allocation13 + $0x1e8] sm:$0xff]
    %v2561 = vld [vmem:[#allocation13 + $0x1f0] sm:$0xff]
    %v2562 = vld [vmem:[#allocation13 + $0x1f8] sm:$0xff]
    %v2627 = vunpack.c.l.b16 %v2499
    %v2628 = vunpack.c.h.b16 %v2499
    %v2629 = vunpack.c.l.b16 %v2500
    %v2630 = vunpack.c.h.b16 %v2500
    %v2631 = vunpack.c.l.b16 %v2501
    %v2632 = vunpack.c.h.b16 %v2501
    %v2633 = vunpack.c.l.b16 %v2502
    %v2634 = vunpack.c.h.b16 %v2502
    %v2635 = vunpack.c.l.b16 %v2503
    %v2636 = vunpack.c.h.b16 %v2503
    %v2637 = vunpack.c.l.b16 %v2504
    %v2638 = vunpack.c.h.b16 %v2504
    %v2639 = vunpack.c.l.b16 %v2505
    %v2640 = vunpack.c.h.b16 %v2505
    %v2641 = vunpack.c.l.b16 %v2506
    %v2642 = vunpack.c.h.b16 %v2506
    %v2643 = vunpack.c.l.b16 %v2507
    %v2644 = vunpack.c.h.b16 %v2507
    %v2645 = vunpack.c.l.b16 %v2508
    %v2646 = vunpack.c.h.b16 %v2508
    %v2647 = vunpack.c.l.b16 %v2509
    %v2648 = vunpack.c.h.b16 %v2509
    %v2649 = vunpack.c.l.b16 %v2510
    %v2650 = vunpack.c.h.b16 %v2510
    %v2651 = vunpack.c.l.b16 %v2511
    %v2652 = vunpack.c.h.b16 %v2511
    %v2653 = vunpack.c.l.b16 %v2512
    %v2654 = vunpack.c.h.b16 %v2512
    %v2655 = vunpack.c.l.b16 %v2513
    %v2656 = vunpack.c.h.b16 %v2513
    %v2657 = vunpack.c.l.b16 %v2514
    %v2658 = vunpack.c.h.b16 %v2514
    %v2659 = vunpack.c.l.b16 %v2515
    %v2660 = vunpack.c.h.b16 %v2515
    %v2661 = vunpack.c.l.b16 %v2516
    %v2662 = vunpack.c.h.b16 %v2516
    %v2663 = vunpack.c.l.b16 %v2517
    %v2664 = vunpack.c.h.b16 %v2517
    %v2665 = vunpack.c.l.b16 %v2518
    %v2666 = vunpack.c.h.b16 %v2518
    %v2667 = vunpack.c.l.b16 %v2519
    %v2668 = vunpack.c.h.b16 %v2519
    %v2669 = vunpack.c.l.b16 %v2520
    %v2670 = vunpack.c.h.b16 %v2520
    %v2671 = vunpack.c.l.b16 %v2521
    %v2672 = vunpack.c.h.b16 %v2521
    %v2673 = vunpack.c.l.b16 %v2522
    %v2674 = vunpack.c.h.b16 %v2522
    %v2675 = vunpack.c.l.b16 %v2523
    %v2676 = vunpack.c.h.b16 %v2523
    %v2677 = vunpack.c.l.b16 %v2524
    %v2678 = vunpack.c.h.b16 %v2524
    %v2679 = vunpack.c.l.b16 %v2525
    %v2680 = vunpack.c.h.b16 %v2525
    %v2681 = vunpack.c.l.b16 %v2526
    %v2682 = vunpack.c.h.b16 %v2526
    %v2683 = vunpack.c.l.b16 %v2527
    %v2684 = vunpack.c.h.b16 %v2527
    %v2685 = vunpack.c.l.b16 %v2528
    %v2686 = vunpack.c.h.b16 %v2528
    %v2687 = vunpack.c.l.b16 %v2529
    %v2688 = vunpack.c.h.b16 %v2529
    %v2689 = vunpack.c.l.b16 %v2530
    %v2690 = vunpack.c.h.b16 %v2530
    %v2691 = vunpack.c.l.b16 %v2531
    %v2692 = vunpack.c.h.b16 %v2531
    %v2693 = vunpack.c.l.b16 %v2532
    %v2694 = vunpack.c.h.b16 %v2532
    %v2695 = vunpack.c.l.b16 %v2533
    %v2696 = vunpack.c.h.b16 %v2533
    %v2697 = vunpack.c.l.b16 %v2534
    %v2698 = vunpack.c.h.b16 %v2534
    %v2699 = vunpack.c.l.b16 %v2535
    %v2700 = vunpack.c.h.b16 %v2535
    %v2701 = vunpack.c.l.b16 %v2536
    %v2702 = vunpack.c.h.b16 %v2536
    %v2703 = vunpack.c.l.b16 %v2537
    %v2704 = vunpack.c.h.b16 %v2537
    %v2705 = vunpack.c.l.b16 %v2538
    %v2706 = vunpack.c.h.b16 %v2538
    %v2707 = vunpack.c.l.b16 %v2539
    %v2708 = vunpack.c.h.b16 %v2539
    %v2709 = vunpack.c.l.b16 %v2540
    %v2710 = vunpack.c.h.b16 %v2540
    %v2711 = vunpack.c.l.b16 %v2541
    %v2712 = vunpack.c.h.b16 %v2541
    %v2713 = vunpack.c.l.b16 %v2542
    %v2714 = vunpack.c.h.b16 %v2542
    %v2715 = vunpack.c.l.b16 %v2543
    %v2716 = vunpack.c.h.b16 %v2543
    %v2717 = vunpack.c.l.b16 %v2544
    %v2718 = vunpack.c.h.b16 %v2544
    %v2719 = vunpack.c.l.b16 %v2545
    %v2720 = vunpack.c.h.b16 %v2545
    %v2721 = vunpack.c.l.b16 %v2546
    %v2722 = vunpack.c.h.b16 %v2546
    %v2723 = vunpack.c.l.b16 %v2547
    %v2724 = vunpack.c.h.b16 %v2547
    %v2725 = vunpack.c.l.b16 %v2548
    %v2726 = vunpack.c.h.b16 %v2548
    %v2727 = vunpack.c.l.b16 %v2549
    %v2728 = vunpack.c.h.b16 %v2549
    %v2729 = vunpack.c.l.b16 %v2550
    %v2730 = vunpack.c.h.b16 %v2550
    %v2731 = vunpack.c.l.b16 %v2551
    %v2732 = vunpack.c.h.b16 %v2551
    %v2733 = vunpack.c.l.b16 %v2552
    %v2734 = vunpack.c.h.b16 %v2552
    %v2735 = vunpack.c.l.b16 %v2553
    %v2736 = vunpack.c.h.b16 %v2553
    %v2737 = vunpack.c.l.b16 %v2554
    %v2738 = vunpack.c.h.b16 %v2554
    %v2739 = vunpack.c.l.b16 %v2555
    %v2740 = vunpack.c.h.b16 %v2555
    %v2741 = vunpack.c.l.b16 %v2556
    %v2742 = vunpack.c.h.b16 %v2556
    %v2743 = vunpack.c.l.b16 %v2557
    %v2744 = vunpack.c.h.b16 %v2557
    %v2745 = vunpack.c.l.b16 %v2558
    %v2746 = vunpack.c.h.b16 %v2558
    %v2747 = vunpack.c.l.b16 %v2559
    %v2748 = vunpack.c.h.b16 %v2559
    %v2749 = vunpack.c.l.b16 %v2560
    %v2750 = vunpack.c.h.b16 %v2560
    %v2751 = vunpack.c.l.b16 %v2561
    %v2752 = vunpack.c.h.b16 %v2561
    %v2753 = vunpack.c.l.b16 %v2562
    %v2754 = vunpack.c.h.b16 %v2562
    %v2755 = vpack.c.b16 %v2631, %v2627
    %v2756 = vpack.c.b16 %v2632, %v2628
    %v2757 = vpack.c.b16 %v2633, %v2629
    %v2758 = vpack.c.b16 %v2634, %v2630
    %v2759 = vpack.c.b16 %v2639, %v2635
    %v2760 = vpack.c.b16 %v2640, %v2636
    %v2761 = vpack.c.b16 %v2641, %v2637
    %v2762 = vpack.c.b16 %v2642, %v2638
    %v2763 = vpack.c.b16 %v2647, %v2643
    %v2764 = vpack.c.b16 %v2648, %v2644
    %v2765 = vpack.c.b16 %v2649, %v2645
    %v2766 = vpack.c.b16 %v2650, %v2646
    %v2767 = vpack.c.b16 %v2655, %v2651
    %v2768 = vpack.c.b16 %v2656, %v2652
    %v2769 = vpack.c.b16 %v2657, %v2653
    %v2770 = vpack.c.b16 %v2658, %v2654
    %v2771 = vpack.c.b16 %v2663, %v2659
    %v2772 = vpack.c.b16 %v2664, %v2660
    %v2773 = vpack.c.b16 %v2665, %v2661
    %v2774 = vpack.c.b16 %v2666, %v2662
    %v2775 = vpack.c.b16 %v2671, %v2667
    %v2776 = vpack.c.b16 %v2672, %v2668
    %v2777 = vpack.c.b16 %v2673, %v2669
    %v2778 = vpack.c.b16 %v2674, %v2670
    %v2779 = vpack.c.b16 %v2679, %v2675
    %v2780 = vpack.c.b16 %v2680, %v2676
    %v2781 = vpack.c.b16 %v2681, %v2677
    %v2782 = vpack.c.b16 %v2682, %v2678
    %v2783 = vpack.c.b16 %v2687, %v2683
    %v2784 = vpack.c.b16 %v2688, %v2684
    %v2785 = vpack.c.b16 %v2689, %v2685
    %v2786 = vpack.c.b16 %v2690, %v2686
    %v2787 = vpack.c.b16 %v2695, %v2691
    %v2788 = vpack.c.b16 %v2696, %v2692
    %v2789 = vpack.c.b16 %v2697, %v2693
    %v2790 = vpack.c.b16 %v2698, %v2694
    %v2791 = vpack.c.b16 %v2703, %v2699
    %v2792 = vpack.c.b16 %v2704, %v2700
    %v2793 = vpack.c.b16 %v2705, %v2701
    %v2794 = vpack.c.b16 %v2706, %v2702
    %v2795 = vpack.c.b16 %v2711, %v2707
    %v2796 = vpack.c.b16 %v2712, %v2708
    %v2797 = vpack.c.b16 %v2713, %v2709
    %v2798 = vpack.c.b16 %v2714, %v2710
    %v2799 = vpack.c.b16 %v2719, %v2715
    %v2800 = vpack.c.b16 %v2720, %v2716
    %v2801 = vpack.c.b16 %v2721, %v2717
    %v2802 = vpack.c.b16 %v2722, %v2718
    %v2803 = vpack.c.b16 %v2727, %v2723
    %v2804 = vpack.c.b16 %v2728, %v2724
    %v2805 = vpack.c.b16 %v2729, %v2725
    %v2806 = vpack.c.b16 %v2730, %v2726
    %v2807 = vpack.c.b16 %v2735, %v2731
    %v2808 = vpack.c.b16 %v2736, %v2732
    %v2809 = vpack.c.b16 %v2737, %v2733
    %v2810 = vpack.c.b16 %v2738, %v2734
    %v2811 = vpack.c.b16 %v2743, %v2739
    %v2812 = vpack.c.b16 %v2744, %v2740
    %v2813 = vpack.c.b16 %v2745, %v2741
    %v2814 = vpack.c.b16 %v2746, %v2742
    %v2815 = vpack.c.b16 %v2751, %v2747
    %v2816 = vpack.c.b16 %v2752, %v2748
    %v2817 = vpack.c.b16 %v2753, %v2749
    %v2818 = vpack.c.b16 %v2754, %v2750
    %2883 = vmatprep.subr.bf16.mxu0 %v2784
    %2884 = vmatpush1.bf16.msra.mxu0 %v2783
    %2885 = vmatprep.subr.bf16.mxu0 %v2780
    %2886 = vmatpush1.bf16.msra.mxu0 %v2779
    %2887 = vmatprep.subr.bf16.mxu0 %v2776
    %2888 = vmatpush1.bf16.msra.mxu0 %v2775
    %2889 = vmatprep.subr.bf16.mxu0 %v2772
    %2890 = vmatpush1.bf16.msra.mxu0 %v2771
    %2891 = vmatprep.subr.bf16.mxu0 %v2768
    %2892 = vmatpush1.bf16.msra.mxu0 %v2767
    %2893 = vmatprep.subr.bf16.mxu0 %v2764
    %2894 = vmatpush1.bf16.msra.mxu0 %v2763
    %2895 = vmatprep.subr.bf16.mxu0 %v2760
    %2896 = vmatpush1.bf16.msra.mxu0 %v2759
    %2897 = vmatprep.subr.bf16.mxu0 %v2756
    %2898 = vmatpush1.bf16.msra.mxu0 %v2755
    %2899 = vmatprep.subr.bf16.mxu0 %v2816
    %2900 = vmatpush2.bf16.msra.mxu0 %v2815
    %2901 = vmatprep.subr.bf16.mxu0 %v2812
    %2902 = vmatpush2.bf16.msra.mxu0 %v2811
    %2903 = vmatprep.subr.bf16.mxu0 %v2808
    %2904 = vmatpush2.bf16.msra.mxu0 %v2807
    %2905 = vmatprep.subr.bf16.mxu0 %v2804
    %2906 = vmatpush2.bf16.msra.mxu0 %v2803
    %2907 = vmatprep.subr.bf16.mxu0 %v2800
    %2908 = vmatpush2.bf16.msra.mxu0 %v2799
    %2909 = vmatprep.subr.bf16.mxu0 %v2796
    %2910 = vmatpush2.bf16.msra.mxu0 %v2795
    %2911 = vmatprep.subr.bf16.mxu0 %v2792
    %2912 = vmatpush2.bf16.msra.mxu0 %v2791
    %2913 = vmatprep.subr.bf16.mxu0 %v2788
    %2914 = vmatpush2.bf16.msra.mxu0 %v2787
    %2915 = vmatprep.mubr.bf16.mxu0 %v2194
    %2916 = vmatmul.mubr.bf16.gmra.mxu0 %v2498
    %v2917 = vpop.f32.mrf.mxu0
    %v2918 = vadd.f32 %v589, %v2917
    %v2919 = vpop.f32.mrf.mxu0
    %v2920 = vadd.f32 %v593, %v2919
    %v2921 = vpop.f32.mrf.mxu0
    %v2922 = vpop.f32.mrf.mxu0
    %2923 = vdwg.mxu0
    %2924 = vmatprep.subr.bf16.mxu0 %v2786
    %2925 = vmatpush1.bf16.msra.mxu0 %v2785
    %2926 = vmatprep.subr.bf16.mxu0 %v2782
    %2927 = vmatpush1.bf16.msra.mxu0 %v2781
    %2928 = vmatprep.subr.bf16.mxu0 %v2778
    %2929 = vmatpush1.bf16.msra.mxu0 %v2777
    %2930 = vmatprep.subr.bf16.mxu0 %v2774
    %2931 = vmatpush1.bf16.msra.mxu0 %v2773
    %2932 = vmatprep.subr.bf16.mxu0 %v2770
    %2933 = vmatpush1.bf16.msra.mxu0 %v2769
    %2934 = vmatprep.subr.bf16.mxu0 %v2766
    %2935 = vmatpush1.bf16.msra.mxu0 %v2765
    %2936 = vmatprep.subr.bf16.mxu0 %v2762
    %2937 = vmatpush1.bf16.msra.mxu0 %v2761
    %2938 = vmatprep.subr.bf16.mxu0 %v2758
    %2939 = vmatpush1.bf16.msra.mxu0 %v2757
    %2940 = vmatprep.subr.bf16.mxu0 %v2818
    %2941 = vmatpush2.bf16.msra.mxu0 %v2817
    %2942 = vmatprep.subr.bf16.mxu0 %v2814
    %2943 = vmatpush2.bf16.msra.mxu0 %v2813
    %2944 = vmatprep.subr.bf16.mxu0 %v2810
    %2945 = vmatpush2.bf16.msra.mxu0 %v2809
    %2946 = vmatprep.subr.bf16.mxu0 %v2806
    %2947 = vmatpush2.bf16.msra.mxu0 %v2805
    %2948 = vmatprep.subr.bf16.mxu0 %v2802
    %2949 = vmatpush2.bf16.msra.mxu0 %v2801
    %2950 = vmatprep.subr.bf16.mxu0 %v2798
    %2951 = vmatpush2.bf16.msra.mxu0 %v2797
    %2952 = vmatprep.subr.bf16.mxu0 %v2794
    %2953 = vmatpush2.bf16.msra.mxu0 %v2793
    %2954 = vmatprep.subr.bf16.mxu0 %v2790
    %2955 = vmatpush2.bf16.msra.mxu0 %v2789
    %2956 = vmatprep.mubr.bf16.mxu0 %v2194
    %2957 = vmatmul.mubr.bf16.gmra.mxu0 %v2498
    %v2958 = vpop.f32.mrf.mxu0
    %v2959 = vadd.f32 %v597, %v2958
    %v2960 = vpop.f32.mrf.mxu0
    %v2961 = vadd.f32 %v601, %v2960
    %v2962 = vpop.f32.mrf.mxu0
    %v2963 = vpop.f32.mrf.mxu0
    %2964 = vdwg.mxu0
    %v2965 = vxor.u32 %v2918, 2147483648
    %v2966 = vxor.u32 %v2920, 2147483648
    %v2967 = vxor.u32 %v2959, 2147483648
    %v2968 = vmul.f32 %v2965, 1.442695
    %v2969 = vpow.pop %v2968
    %v2970 = vmul.f32 %v2966, 1.442695
    %v2971 = vpow.pop %v2970
    %v2972 = vmul.f32 %v2967, 1.442695
    %v2973 = vpow.pop %v2972
    %v2974 = vadd.f32 %v2969, 1.0
    %v2975 = vadd.f32 %v2971, 1.0
    %v2976 = vadd.f32 %v2973, 1.0
    %v2977 = vrcp.pop %v2974
    %v2978 = vmul.f32 1.0, %v2977
    %v2979 = vrcp.pop %v2975
    %v2980 = vmul.f32 1.0, %v2979
    %v2981 = vrcp.pop %v2976
    %v2982 = vmul.f32 1.0, %v2981
    %v2983 = vtanh.pop %v2961
    %v2984 = vmul.f32 %v2980, %v2191
    %v2985 = vmul.f32 %v2978, %v2983
    %v2986 = vadd.f32 %v2984, %v2985
    %v2987 = vtanh.pop %v2986
    %v2988 = vmul.f32 %v2982, %v2987
    %v2989 = vpack.c.bf16 %v2988, %v2988
    %2990 = vst [vmem:[#allocation4 + $0x8] sm:$0xf] %v2989
    %v2991 = vld [vmem:[#allocation12] sm:$0xff]
    %v2992 = vld [vmem:[#allocation12 + $0x8] sm:$0xff]
    %v2993 = vld [vmem:[#allocation12 + $0x10] sm:$0xff]
    %v2994 = vld [vmem:[#allocation12 + $0x18] sm:$0xff]
    %v2995 = vld [vmem:[#allocation12 + $0x20] sm:$0xff]
    %v2996 = vld [vmem:[#allocation12 + $0x28] sm:$0xff]
    %v2997 = vld [vmem:[#allocation12 + $0x30] sm:$0xff]
    %v2998 = vld [vmem:[#allocation12 + $0x38] sm:$0xff]
    %v2999 = vld [vmem:[#allocation12 + $0x40] sm:$0xff]
    %v3000 = vld [vmem:[#allocation12 + $0x48] sm:$0xff]
    %v3001 = vld [vmem:[#allocation12 + $0x50] sm:$0xff]
    %v3002 = vld [vmem:[#allocation12 + $0x58] sm:$0xff]
    %v3003 = vld [vmem:[#allocation12 + $0x60] sm:$0xff]
    %v3004 = vld [vmem:[#allocation12 + $0x68] sm:$0xff]
    %v3005 = vld [vmem:[#allocation12 + $0x70] sm:$0xff]
    %v3006 = vld [vmem:[#allocation12 + $0x78] sm:$0xff]
    %v3007 = vld [vmem:[#allocation12 + $0x80] sm:$0xff]
    %v3008 = vld [vmem:[#allocation12 + $0x88] sm:$0xff]
    %v3009 = vld [vmem:[#allocation12 + $0x90] sm:$0xff]
    %v3010 = vld [vmem:[#allocation12 + $0x98] sm:$0xff]
    %v3011 = vld [vmem:[#allocation12 + $0xa0] sm:$0xff]
    %v3012 = vld [vmem:[#allocation12 + $0xa8] sm:$0xff]
    %v3013 = vld [vmem:[#allocation12 + $0xb0] sm:$0xff]
    %v3014 = vld [vmem:[#allocation12 + $0xb8] sm:$0xff]
    %v3015 = vld [vmem:[#allocation12 + $0xc0] sm:$0xff]
    %v3016 = vld [vmem:[#allocation12 + $0xc8] sm:$0xff]
    %v3017 = vld [vmem:[#allocation12 + $0xd0] sm:$0xff]
    %v3018 = vld [vmem:[#allocation12 + $0xd8] sm:$0xff]
    %v3019 = vld [vmem:[#allocation12 + $0xe0] sm:$0xff]
    %v3020 = vld [vmem:[#allocation12 + $0xe8] sm:$0xff]
    %v3021 = vld [vmem:[#allocation12 + $0xf0] sm:$0xff]
    %v3022 = vld [vmem:[#allocation12 + $0xf8] sm:$0xff]
    %v3023 = vld [vmem:[#allocation3 + $0x60] sm:$0xff]
    %v3024 = vld [vmem:[#allocation3 + $0x68] sm:$0xff]
    %v3025 = vld [vmem:[#allocation3 + $0x70] sm:$0xff]
    %v3026 = vld [vmem:[#allocation3 + $0x78] sm:$0xff]
    %v3059 = vunpack.c.l.b16 %v2991
    %v3060 = vunpack.c.h.b16 %v2991
    %v3061 = vunpack.c.l.b16 %v2992
    %v3062 = vunpack.c.h.b16 %v2992
    %v3063 = vunpack.c.l.b16 %v2993
    %v3064 = vunpack.c.h.b16 %v2993
    %v3065 = vunpack.c.l.b16 %v2994
    %v3066 = vunpack.c.h.b16 %v2994
    %v3067 = vunpack.c.l.b16 %v2995
    %v3068 = vunpack.c.h.b16 %v2995
    %v3069 = vunpack.c.l.b16 %v2996
    %v3070 = vunpack.c.h.b16 %v2996
    %v3071 = vunpack.c.l.b16 %v2997
    %v3072 = vunpack.c.h.b16 %v2997
    %v3073 = vunpack.c.l.b16 %v2998
    %v3074 = vunpack.c.h.b16 %v2998
    %v3075 = vunpack.c.l.b16 %v2999
    %v3076 = vunpack.c.h.b16 %v2999
    %v3077 = vunpack.c.l.b16 %v3000
    %v3078 = vunpack.c.h.b16 %v3000
    %v3079 = vunpack.c.l.b16 %v3001
    %v3080 = vunpack.c.h.b16 %v3001
    %v3081 = vunpack.c.l.b16 %v3002
    %v3082 = vunpack.c.h.b16 %v3002
    %v3083 = vunpack.c.l.b16 %v3003
    %v3084 = vunpack.c.h.b16 %v3003
    %v3085 = vunpack.c.l.b16 %v3004
    %v3086 = vunpack.c.h.b16 %v3004
    %v3087 = vunpack.c.l.b16 %v3005
    %v3088 = vunpack.c.h.b16 %v3005
    %v3089 = vunpack.c.l.b16 %v3006
    %v3090 = vunpack.c.h.b16 %v3006
    %v3091 = vunpack.c.l.b16 %v3007
    %v3092 = vunpack.c.h.b16 %v3007
    %v3093 = vunpack.c.l.b16 %v3008
    %v3094 = vunpack.c.h.b16 %v3008
    %v3095 = vunpack.c.l.b16 %v3009
    %v3096 = vunpack.c.h.b16 %v3009
    %v3097 = vunpack.c.l.b16 %v3010
    %v3098 = vunpack.c.h.b16 %v3010
    %v3099 = vunpack.c.l.b16 %v3011
    %v3100 = vunpack.c.h.b16 %v3011
    %v3101 = vunpack.c.l.b16 %v3012
    %v3102 = vunpack.c.h.b16 %v3012
    %v3103 = vunpack.c.l.b16 %v3013
    %v3104 = vunpack.c.h.b16 %v3013
    %v3105 = vunpack.c.l.b16 %v3014
    %v3106 = vunpack.c.h.b16 %v3014
    %v3107 = vunpack.c.l.b16 %v3015
    %v3108 = vunpack.c.h.b16 %v3015
    %v3109 = vunpack.c.l.b16 %v3016
    %v3110 = vunpack.c.h.b16 %v3016
    %v3111 = vunpack.c.l.b16 %v3017
    %v3112 = vunpack.c.h.b16 %v3017
    %v3113 = vunpack.c.l.b16 %v3018
    %v3114 = vunpack.c.h.b16 %v3018
    %v3115 = vunpack.c.l.b16 %v3019
    %v3116 = vunpack.c.h.b16 %v3019
    %v3117 = vunpack.c.l.b16 %v3020
    %v3118 = vunpack.c.h.b16 %v3020
    %v3119 = vunpack.c.l.b16 %v3021
    %v3120 = vunpack.c.h.b16 %v3021
    %v3121 = vunpack.c.l.b16 %v3022
    %v3122 = vunpack.c.h.b16 %v3022
    %v3123 = vpack.c.b16 %v3063, %v3059
    %v3124 = vpack.c.b16 %v3064, %v3060
    %v3125 = vpack.c.b16 %v3065, %v3061
    %v3126 = vpack.c.b16 %v3066, %v3062
    %v3127 = vpack.c.b16 %v3071, %v3067
    %v3128 = vpack.c.b16 %v3072, %v3068
    %v3129 = vpack.c.b16 %v3073, %v3069
    %v3130 = vpack.c.b16 %v3074, %v3070
    %v3131 = vpack.c.b16 %v3079, %v3075
    %v3132 = vpack.c.b16 %v3080, %v3076
    %v3133 = vpack.c.b16 %v3081, %v3077
    %v3134 = vpack.c.b16 %v3082, %v3078
    %v3135 = vpack.c.b16 %v3087, %v3083
    %v3136 = vpack.c.b16 %v3088, %v3084
    %v3137 = vpack.c.b16 %v3089, %v3085
    %v3138 = vpack.c.b16 %v3090, %v3086
    %v3139 = vpack.c.b16 %v3095, %v3091
    %v3140 = vpack.c.b16 %v3096, %v3092
    %v3141 = vpack.c.b16 %v3097, %v3093
    %v3142 = vpack.c.b16 %v3098, %v3094
    %v3143 = vpack.c.b16 %v3103, %v3099
    %v3144 = vpack.c.b16 %v3104, %v3100
    %v3145 = vpack.c.b16 %v3105, %v3101
    %v3146 = vpack.c.b16 %v3106, %v3102
    %v3147 = vpack.c.b16 %v3111, %v3107
    %v3148 = vpack.c.b16 %v3112, %v3108
    %v3149 = vpack.c.b16 %v3113, %v3109
    %v3150 = vpack.c.b16 %v3114, %v3110
    %v3151 = vpack.c.b16 %v3119, %v3115
    %v3152 = vpack.c.b16 %v3120, %v3116
    %v3153 = vpack.c.b16 %v3121, %v3117
    %v3154 = vpack.c.b16 %v3122, %v3118
    %3187 = vmatprep.subr.bf16.mxu0 %v3152
    %3188 = vmatpush1.bf16.msra.mxu0 %v3151
    %3189 = vmatprep.subr.bf16.mxu0 %v3148
    %3190 = vmatpush1.bf16.msra.mxu0 %v3147
    %3191 = vmatprep.subr.bf16.mxu0 %v3144
    %3192 = vmatpush1.bf16.msra.mxu0 %v3143
    %3193 = vmatprep.subr.bf16.mxu0 %v3140
    %3194 = vmatpush1.bf16.msra.mxu0 %v3139
    %3195 = vmatprep.subr.bf16.mxu0 %v3136
    %3196 = vmatpush1.bf16.msra.mxu0 %v3135
    %3197 = vmatprep.subr.bf16.mxu0 %v3132
    %3198 = vmatpush1.bf16.msra.mxu0 %v3131
    %3199 = vmatprep.subr.bf16.mxu0 %v3128
    %3200 = vmatpush1.bf16.msra.mxu0 %v3127
    %3201 = vmatprep.subr.bf16.mxu0 %v3124
    %3202 = vmatpush1.bf16.msra.mxu0 %v3123
    %3203 = vmatprep.subr.bf16.mxu0 0
    %3204 = vmatpush2.bf16.msra.mxu0 0
    %3205 = vmatprep.subr.bf16.mxu0 0
    %3206 = vmatpush2.bf16.msra.mxu0 0
    %3207 = vmatprep.subr.bf16.mxu0 0
    %3208 = vmatpush2.bf16.msra.mxu0 0
    %3209 = vmatprep.subr.bf16.mxu0 0
    %3210 = vmatpush2.bf16.msra.mxu0 0
    %3211 = vmatprep.subr.bf16.mxu0 0
    %3212 = vmatpush2.bf16.msra.mxu0 0
    %3213 = vmatprep.subr.bf16.mxu0 0
    %3214 = vmatpush2.bf16.msra.mxu0 0
    %3215 = vmatprep.subr.bf16.mxu0 0
    %3216 = vmatpush2.bf16.msra.mxu0 0
    %3217 = vmatprep.subr.bf16.mxu0 0
    %3218 = vmatpush2.bf16.msra.mxu0 0
    %3219 = vmatprep.mubr.bf16.mxu0 0
    %3220 = vmatmul.mubr.bf16.gmra.mxu0 %v2498
    %v3221 = vpop.f32.mrf.mxu0
    %v3222 = vadd.f32 %v3023, %v3221
    %v3223 = vpop.f32.mrf.mxu0
    %v3224 = vadd.f32 %v3024, %v3223
    %v3225 = vpop.f32.mrf.mxu0
    %v3226 = vpop.f32.mrf.mxu0
    %3227 = vdwg.mxu0
    %3228 = vmatprep.subr.bf16.mxu0 %v3154
    %3229 = vmatpush1.bf16.msra.mxu0 %v3153
    %3230 = vmatprep.subr.bf16.mxu0 %v3150
    %3231 = vmatpush1.bf16.msra.mxu0 %v3149
    %3232 = vmatprep.subr.bf16.mxu0 %v3146
    %3233 = vmatpush1.bf16.msra.mxu0 %v3145
    %3234 = vmatprep.subr.bf16.mxu0 %v3142
    %3235 = vmatpush1.bf16.msra.mxu0 %v3141
    %3236 = vmatprep.subr.bf16.mxu0 %v3138
    %3237 = vmatpush1.bf16.msra.mxu0 %v3137
    %3238 = vmatprep.subr.bf16.mxu0 %v3134
    %3239 = vmatpush1.bf16.msra.mxu0 %v3133
    %3240 = vmatprep.subr.bf16.mxu0 %v3130
    %3241 = vmatpush1.bf16.msra.mxu0 %v3129
    %3242 = vmatprep.subr.bf16.mxu0 %v3126
    %3243 = vmatpush1.bf16.msra.mxu0 %v3125
    %3244 = vmatprep.subr.bf16.mxu0 0
    %3245 = vmatpush2.bf16.msra.mxu0 0
    %3246 = vmatprep.subr.bf16.mxu0 0
    %3247 = vmatpush2.bf16.msra.mxu0 0
    %3248 = vmatprep.subr.bf16.mxu0 0
    %3249 = vmatpush2.bf16.msra.mxu0 0
    %3250 = vmatprep.subr.bf16.mxu0 0
    %3251 = vmatpush2.bf16.msra.mxu0 0
    %3252 = vmatprep.subr.bf16.mxu0 0
    %3253 = vmatpush2.bf16.msra.mxu0 0
    %3254 = vmatprep.subr.bf16.mxu0 0
    %3255 = vmatpush2.bf16.msra.mxu0 0
    %3256 = vmatprep.subr.bf16.mxu0 0
    %3257 = vmatpush2.bf16.msra.mxu0 0
    %3258 = vmatprep.subr.bf16.mxu0 0
    %3259 = vmatpush2.bf16.msra.mxu0 0
    %3260 = vmatprep.mubr.bf16.mxu0 0
    %3261 = vmatmul.mubr.bf16.gmra.mxu0 %v2498
    %v3262 = vpop.f32.mrf.mxu0
    %v3263 = vadd.f32 %v3025, %v3262
    %v3264 = vpop.f32.mrf.mxu0
    %v3265 = vadd.f32 %v3026, %v3264
    %v3266 = vpop.f32.mrf.mxu0
    %v3267 = vpop.f32.mrf.mxu0
    %3268 = vdwg.mxu0
    %v3269 = vxor.u32 %v3222, 2147483648
    %v3270 = vxor.u32 %v3224, 2147483648
    %v3271 = vxor.u32 %v3263, 2147483648
    %v3272 = vmul.f32 %v3269, 1.442695
    %v3273 = vpow.pop %v3272
    %v3274 = vmul.f32 %v3270, 1.442695
    %v3275 = vpow.pop %v3274
    %v3276 = vmul.f32 %v3271, 1.442695
    %v3277 = vpow.pop %v3276
    %v3278 = vadd.f32 %v3273, 1.0
    %v3279 = vadd.f32 %v3275, 1.0
    %v3280 = vadd.f32 %v3277, 1.0
    %v3281 = vrcp.pop %v3278
    %v3282 = vmul.f32 1.0, %v3281
    %v3283 = vrcp.pop %v3279
    %v3284 = vmul.f32 1.0, %v3283
    %v3285 = vrcp.pop %v3280
    %v3286 = vmul.f32 1.0, %v3285
    %v3287 = vtanh.pop %v3265
    %v3288 = vmul.f32 %v3284, %v2495
    %v3289 = vmul.f32 %v3282, %v3287
    %v3290 = vadd.f32 %v3288, %v3289
    %v3291 = vtanh.pop %v3290
    %v3292 = vmul.f32 %v3286, %v3291
    %v3293 = vpack.c.bf16 %v3292, %v3292
    %v3294 = vld [vmem:[#allocation13] sm:$0xff]
    %v3295 = vld [vmem:[#allocation13 + $0x8] sm:$0xff]
    %v3296 = vld [vmem:[#allocation13 + $0x10] sm:$0xff]
    %v3297 = vld [vmem:[#allocation13 + $0x18] sm:$0xff]
    %v3298 = vld [vmem:[#allocation13 + $0x20] sm:$0xff]
    %v3299 = vld [vmem:[#allocation13 + $0x28] sm:$0xff]
    %v3300 = vld [vmem:[#allocation13 + $0x30] sm:$0xff]
    %v3301 = vld [vmem:[#allocation13 + $0x38] sm:$0xff]
    %v3302 = vld [vmem:[#allocation13 + $0x40] sm:$0xff]
    %v3303 = vld [vmem:[#allocation13 + $0x48] sm:$0xff]
    %v3304 = vld [vmem:[#allocation13 + $0x50] sm:$0xff]
    %v3305 = vld [vmem:[#allocation13 + $0x58] sm:$0xff]
    %v3306 = vld [vmem:[#allocation13 + $0x60] sm:$0xff]
    %v3307 = vld [vmem:[#allocation13 + $0x68] sm:$0xff]
    %v3308 = vld [vmem:[#allocation13 + $0x70] sm:$0xff]
    %v3309 = vld [vmem:[#allocation13 + $0x78] sm:$0xff]
    %v3310 = vld [vmem:[#allocation13 + $0x80] sm:$0xff]
    %v3311 = vld [vmem:[#allocation13 + $0x88] sm:$0xff]
    %v3312 = vld [vmem:[#allocation13 + $0x90] sm:$0xff]
    %v3313 = vld [vmem:[#allocation13 + $0x98] sm:$0xff]
    %v3314 = vld [vmem:[#allocation13 + $0xa0] sm:$0xff]
    %v3315 = vld [vmem:[#allocation13 + $0xa8] sm:$0xff]
    %v3316 = vld [vmem:[#allocation13 + $0xb0] sm:$0xff]
    %v3317 = vld [vmem:[#allocation13 + $0xb8] sm:$0xff]
    %v3318 = vld [vmem:[#allocation13 + $0xc0] sm:$0xff]
    %v3319 = vld [vmem:[#allocation13 + $0xc8] sm:$0xff]
    %v3320 = vld [vmem:[#allocation13 + $0xd0] sm:$0xff]
    %v3321 = vld [vmem:[#allocation13 + $0xd8] sm:$0xff]
    %v3322 = vld [vmem:[#allocation13 + $0xe0] sm:$0xff]
    %v3323 = vld [vmem:[#allocation13 + $0xe8] sm:$0xff]
    %v3324 = vld [vmem:[#allocation13 + $0xf0] sm:$0xff]
    %v3325 = vld [vmem:[#allocation13 + $0xf8] sm:$0xff]
    %v3326 = vld [vmem:[#allocation13 + $0x100] sm:$0xff]
    %v3327 = vld [vmem:[#allocation13 + $0x108] sm:$0xff]
    %v3328 = vld [vmem:[#allocation13 + $0x110] sm:$0xff]
    %v3329 = vld [vmem:[#allocation13 + $0x118] sm:$0xff]
    %v3330 = vld [vmem:[#allocation13 + $0x120] sm:$0xff]
    %v3331 = vld [vmem:[#allocation13 + $0x128] sm:$0xff]
    %v3332 = vld [vmem:[#allocation13 + $0x130] sm:$0xff]
    %v3333 = vld [vmem:[#allocation13 + $0x138] sm:$0xff]
    %v3334 = vld [vmem:[#allocation13 + $0x140] sm:$0xff]
    %v3335 = vld [vmem:[#allocation13 + $0x148] sm:$0xff]
    %v3336 = vld [vmem:[#allocation13 + $0x150] sm:$0xff]
    %v3337 = vld [vmem:[#allocation13 + $0x158] sm:$0xff]
    %v3338 = vld [vmem:[#allocation13 + $0x160] sm:$0xff]
    %v3339 = vld [vmem:[#allocation13 + $0x168] sm:$0xff]
    %v3340 = vld [vmem:[#allocation13 + $0x170] sm:$0xff]
    %v3341 = vld [vmem:[#allocation13 + $0x178] sm:$0xff]
    %v3342 = vld [vmem:[#allocation13 + $0x180] sm:$0xff]
    %v3343 = vld [vmem:[#allocation13 + $0x188] sm:$0xff]
    %v3344 = vld [vmem:[#allocation13 + $0x190] sm:$0xff]
    %v3345 = vld [vmem:[#allocation13 + $0x198] sm:$0xff]
    %v3346 = vld [vmem:[#allocation13 + $0x1a0] sm:$0xff]
    %v3347 = vld [vmem:[#allocation13 + $0x1a8] sm:$0xff]
    %v3348 = vld [vmem:[#allocation13 + $0x1b0] sm:$0xff]
    %v3349 = vld [vmem:[#allocation13 + $0x1b8] sm:$0xff]
    %v3350 = vld [vmem:[#allocation13 + $0x1c0] sm:$0xff]
    %v3351 = vld [vmem:[#allocation13 + $0x1c8] sm:$0xff]
    %v3352 = vld [vmem:[#allocation13 + $0x1d0] sm:$0xff]
    %v3353 = vld [vmem:[#allocation13 + $0x1d8] sm:$0xff]
    %v3354 = vld [vmem:[#allocation13 + $0x1e0] sm:$0xff]
    %v3355 = vld [vmem:[#allocation13 + $0x1e8] sm:$0xff]
    %v3356 = vld [vmem:[#allocation13 + $0x1f0] sm:$0xff]
    %v3357 = vld [vmem:[#allocation13 + $0x1f8] sm:$0xff]
    %v3422 = vunpack.c.l.b16 %v3294
    %v3423 = vunpack.c.h.b16 %v3294
    %v3424 = vunpack.c.l.b16 %v3295
    %v3425 = vunpack.c.h.b16 %v3295
    %v3426 = vunpack.c.l.b16 %v3296
    %v3427 = vunpack.c.h.b16 %v3296
    %v3428 = vunpack.c.l.b16 %v3297
    %v3429 = vunpack.c.h.b16 %v3297
    %v3430 = vunpack.c.l.b16 %v3298
    %v3431 = vunpack.c.h.b16 %v3298
    %v3432 = vunpack.c.l.b16 %v3299
    %v3433 = vunpack.c.h.b16 %v3299
    %v3434 = vunpack.c.l.b16 %v3300
    %v3435 = vunpack.c.h.b16 %v3300
    %v3436 = vunpack.c.l.b16 %v3301
    %v3437 = vunpack.c.h.b16 %v3301
    %v3438 = vunpack.c.l.b16 %v3302
    %v3439 = vunpack.c.h.b16 %v3302
    %v3440 = vunpack.c.l.b16 %v3303
    %v3441 = vunpack.c.h.b16 %v3303
    %v3442 = vunpack.c.l.b16 %v3304
    %v3443 = vunpack.c.h.b16 %v3304
    %v3444 = vunpack.c.l.b16 %v3305
    %v3445 = vunpack.c.h.b16 %v3305
    %v3446 = vunpack.c.l.b16 %v3306
    %v3447 = vunpack.c.h.b16 %v3306
    %v3448 = vunpack.c.l.b16 %v3307
    %v3449 = vunpack.c.h.b16 %v3307
    %v3450 = vunpack.c.l.b16 %v3308
    %v3451 = vunpack.c.h.b16 %v3308
    %v3452 = vunpack.c.l.b16 %v3309
    %v3453 = vunpack.c.h.b16 %v3309
    %v3454 = vunpack.c.l.b16 %v3310
    %v3455 = vunpack.c.h.b16 %v3310
    %v3456 = vunpack.c.l.b16 %v3311
    %v3457 = vunpack.c.h.b16 %v3311
    %v3458 = vunpack.c.l.b16 %v3312
    %v3459 = vunpack.c.h.b16 %v3312
    %v3460 = vunpack.c.l.b16 %v3313
    %v3461 = vunpack.c.h.b16 %v3313
    %v3462 = vunpack.c.l.b16 %v3314
    %v3463 = vunpack.c.h.b16 %v3314
    %v3464 = vunpack.c.l.b16 %v3315
    %v3465 = vunpack.c.h.b16 %v3315
    %v3466 = vunpack.c.l.b16 %v3316
    %v3467 = vunpack.c.h.b16 %v3316
    %v3468 = vunpack.c.l.b16 %v3317
    %v3469 = vunpack.c.h.b16 %v3317
    %v3470 = vunpack.c.l.b16 %v3318
    %v3471 = vunpack.c.h.b16 %v3318
    %v3472 = vunpack.c.l.b16 %v3319
    %v3473 = vunpack.c.h.b16 %v3319
    %v3474 = vunpack.c.l.b16 %v3320
    %v3475 = vunpack.c.h.b16 %v3320
    %v3476 = vunpack.c.l.b16 %v3321
    %v3477 = vunpack.c.h.b16 %v3321
    %v3478 = vunpack.c.l.b16 %v3322
    %v3479 = vunpack.c.h.b16 %v3322
    %v3480 = vunpack.c.l.b16 %v3323
    %v3481 = vunpack.c.h.b16 %v3323
    %v3482 = vunpack.c.l.b16 %v3324
    %v3483 = vunpack.c.h.b16 %v3324
    %v3484 = vunpack.c.l.b16 %v3325
    %v3485 = vunpack.c.h.b16 %v3325
    %v3486 = vunpack.c.l.b16 %v3326
    %v3487 = vunpack.c.h.b16 %v3326
    %v3488 = vunpack.c.l.b16 %v3327
    %v3489 = vunpack.c.h.b16 %v3327
    %v3490 = vunpack.c.l.b16 %v3328
    %v3491 = vunpack.c.h.b16 %v3328
    %v3492 = vunpack.c.l.b16 %v3329
    %v3493 = vunpack.c.h.b16 %v3329
    %v3494 = vunpack.c.l.b16 %v3330
    %v3495 = vunpack.c.h.b16 %v3330
    %v3496 = vunpack.c.l.b16 %v3331
    %v3497 = vunpack.c.h.b16 %v3331
    %v3498 = vunpack.c.l.b16 %v3332
    %v3499 = vunpack.c.h.b16 %v3332
    %v3500 = vunpack.c.l.b16 %v3333
    %v3501 = vunpack.c.h.b16 %v3333
    %v3502 = vunpack.c.l.b16 %v3334
    %v3503 = vunpack.c.h.b16 %v3334
    %v3504 = vunpack.c.l.b16 %v3335
    %v3505 = vunpack.c.h.b16 %v3335
    %v3506 = vunpack.c.l.b16 %v3336
    %v3507 = vunpack.c.h.b16 %v3336
    %v3508 = vunpack.c.l.b16 %v3337
    %v3509 = vunpack.c.h.b16 %v3337
    %v3510 = vunpack.c.l.b16 %v3338
    %v3511 = vunpack.c.h.b16 %v3338
    %v3512 = vunpack.c.l.b16 %v3339
    %v3513 = vunpack.c.h.b16 %v3339
    %v3514 = vunpack.c.l.b16 %v3340
    %v3515 = vunpack.c.h.b16 %v3340
    %v3516 = vunpack.c.l.b16 %v3341
    %v3517 = vunpack.c.h.b16 %v3341
    %v3518 = vunpack.c.l.b16 %v3342
    %v3519 = vunpack.c.h.b16 %v3342
    %v3520 = vunpack.c.l.b16 %v3343
    %v3521 = vunpack.c.h.b16 %v3343
    %v3522 = vunpack.c.l.b16 %v3344
    %v3523 = vunpack.c.h.b16 %v3344
    %v3524 = vunpack.c.l.b16 %v3345
    %v3525 = vunpack.c.h.b16 %v3345
    %v3526 = vunpack.c.l.b16 %v3346
    %v3527 = vunpack.c.h.b16 %v3346
    %v3528 = vunpack.c.l.b16 %v3347
    %v3529 = vunpack.c.h.b16 %v3347
    %v3530 = vunpack.c.l.b16 %v3348
    %v3531 = vunpack.c.h.b16 %v3348
    %v3532 = vunpack.c.l.b16 %v3349
    %v3533 = vunpack.c.h.b16 %v3349
    %v3534 = vunpack.c.l.b16 %v3350
    %v3535 = vunpack.c.h.b16 %v3350
    %v3536 = vunpack.c.l.b16 %v3351
    %v3537 = vunpack.c.h.b16 %v3351
    %v3538 = vunpack.c.l.b16 %v3352
    %v3539 = vunpack.c.h.b16 %v3352
    %v3540 = vunpack.c.l.b16 %v3353
    %v3541 = vunpack.c.h.b16 %v3353
    %v3542 = vunpack.c.l.b16 %v3354
    %v3543 = vunpack.c.h.b16 %v3354
    %v3544 = vunpack.c.l.b16 %v3355
    %v3545 = vunpack.c.h.b16 %v3355
    %v3546 = vunpack.c.l.b16 %v3356
    %v3547 = vunpack.c.h.b16 %v3356
    %v3548 = vunpack.c.l.b16 %v3357
    %v3549 = vunpack.c.h.b16 %v3357
    %v3550 = vpack.c.b16 %v3426, %v3422
    %v3551 = vpack.c.b16 %v3427, %v3423
    %v3552 = vpack.c.b16 %v3428, %v3424
    %v3553 = vpack.c.b16 %v3429, %v3425
    %v3554 = vpack.c.b16 %v3434, %v3430
    %v3555 = vpack.c.b16 %v3435, %v3431
    %v3556 = vpack.c.b16 %v3436, %v3432
    %v3557 = vpack.c.b16 %v3437, %v3433
    %v3558 = vpack.c.b16 %v3442, %v3438
    %v3559 = vpack.c.b16 %v3443, %v3439
    %v3560 = vpack.c.b16 %v3444, %v3440
    %v3561 = vpack.c.b16 %v3445, %v3441
    %v3562 = vpack.c.b16 %v3450, %v3446
    %v3563 = vpack.c.b16 %v3451, %v3447
    %v3564 = vpack.c.b16 %v3452, %v3448
    %v3565 = vpack.c.b16 %v3453, %v3449
    %v3566 = vpack.c.b16 %v3458, %v3454
    %v3567 = vpack.c.b16 %v3459, %v3455
    %v3568 = vpack.c.b16 %v3460, %v3456
    %v3569 = vpack.c.b16 %v3461, %v3457
    %v3570 = vpack.c.b16 %v3466, %v3462
    %v3571 = vpack.c.b16 %v3467, %v3463
    %v3572 = vpack.c.b16 %v3468, %v3464
    %v3573 = vpack.c.b16 %v3469, %v3465
    %v3574 = vpack.c.b16 %v3474, %v3470
    %v3575 = vpack.c.b16 %v3475, %v3471
    %v3576 = vpack.c.b16 %v3476, %v3472
    %v3577 = vpack.c.b16 %v3477, %v3473
    %v3578 = vpack.c.b16 %v3482, %v3478
    %v3579 = vpack.c.b16 %v3483, %v3479
    %v3580 = vpack.c.b16 %v3484, %v3480
    %v3581 = vpack.c.b16 %v3485, %v3481
    %v3582 = vpack.c.b16 %v3490, %v3486
    %v3583 = vpack.c.b16 %v3491, %v3487
    %v3584 = vpack.c.b16 %v3492, %v3488
    %v3585 = vpack.c.b16 %v3493, %v3489
    %v3586 = vpack.c.b16 %v3498, %v3494
    %v3587 = vpack.c.b16 %v3499, %v3495
    %v3588 = vpack.c.b16 %v3500, %v3496
    %v3589 = vpack.c.b16 %v3501, %v3497
    %v3590 = vpack.c.b16 %v3506, %v3502
    %v3591 = vpack.c.b16 %v3507, %v3503
    %v3592 = vpack.c.b16 %v3508, %v3504
    %v3593 = vpack.c.b16 %v3509, %v3505
    %v3594 = vpack.c.b16 %v3514, %v3510
    %v3595 = vpack.c.b16 %v3515, %v3511
    %v3596 = vpack.c.b16 %v3516, %v3512
    %v3597 = vpack.c.b16 %v3517, %v3513
    %v3598 = vpack.c.b16 %v3522, %v3518
    %v3599 = vpack.c.b16 %v3523, %v3519
    %v3600 = vpack.c.b16 %v3524, %v3520
    %v3601 = vpack.c.b16 %v3525, %v3521
    %v3602 = vpack.c.b16 %v3530, %v3526
    %v3603 = vpack.c.b16 %v3531, %v3527
    %v3604 = vpack.c.b16 %v3532, %v3528
    %v3605 = vpack.c.b16 %v3533, %v3529
    %v3606 = vpack.c.b16 %v3538, %v3534
    %v3607 = vpack.c.b16 %v3539, %v3535
    %v3608 = vpack.c.b16 %v3540, %v3536
    %v3609 = vpack.c.b16 %v3541, %v3537
    %v3610 = vpack.c.b16 %v3546, %v3542
    %v3611 = vpack.c.b16 %v3547, %v3543
    %v3612 = vpack.c.b16 %v3548, %v3544
    %v3613 = vpack.c.b16 %v3549, %v3545
    %3678 = vmatprep.subr.bf16.mxu0 %v3579
    %3679 = vmatpush1.bf16.msra.mxu0 %v3578
    %3680 = vmatprep.subr.bf16.mxu0 %v3575
    %3681 = vmatpush1.bf16.msra.mxu0 %v3574
    %3682 = vmatprep.subr.bf16.mxu0 %v3571
    %3683 = vmatpush1.bf16.msra.mxu0 %v3570
    %3684 = vmatprep.subr.bf16.mxu0 %v3567
    %3685 = vmatpush1.bf16.msra.mxu0 %v3566
    %3686 = vmatprep.subr.bf16.mxu0 %v3563
    %3687 = vmatpush1.bf16.msra.mxu0 %v3562
    %3688 = vmatprep.subr.bf16.mxu0 %v3559
    %3689 = vmatpush1.bf16.msra.mxu0 %v3558
    %3690 = vmatprep.subr.bf16.mxu0 %v3555
    %3691 = vmatpush1.bf16.msra.mxu0 %v3554
    %3692 = vmatprep.subr.bf16.mxu0 %v3551
    %3693 = vmatpush1.bf16.msra.mxu0 %v3550
    %3694 = vmatprep.subr.bf16.mxu0 %v3611
    %3695 = vmatpush2.bf16.msra.mxu0 %v3610
    %3696 = vmatprep.subr.bf16.mxu0 %v3607
    %3697 = vmatpush2.bf16.msra.mxu0 %v3606
    %3698 = vmatprep.subr.bf16.mxu0 %v3603
    %3699 = vmatpush2.bf16.msra.mxu0 %v3602
    %3700 = vmatprep.subr.bf16.mxu0 %v3599
    %3701 = vmatpush2.bf16.msra.mxu0 %v3598
    %3702 = vmatprep.subr.bf16.mxu0 %v3595
    %3703 = vmatpush2.bf16.msra.mxu0 %v3594
    %3704 = vmatprep.subr.bf16.mxu0 %v3591
    %3705 = vmatpush2.bf16.msra.mxu0 %v3590
    %3706 = vmatprep.subr.bf16.mxu0 %v3587
    %3707 = vmatpush2.bf16.msra.mxu0 %v3586
    %3708 = vmatprep.subr.bf16.mxu0 %v3583
    %3709 = vmatpush2.bf16.msra.mxu0 %v3582
    %3710 = vmatprep.mubr.bf16.mxu0 %v2989
    %3711 = vmatmul.mubr.bf16.gmra.mxu0 %v3293
    %v3712 = vpop.f32.mrf.mxu0
    %v3713 = vadd.f32 %v589, %v3712
    %v3714 = vpop.f32.mrf.mxu0
    %v3715 = vadd.f32 %v593, %v3714
    %v3716 = vpop.f32.mrf.mxu0
    %v3717 = vpop.f32.mrf.mxu0
    %3718 = vdwg.mxu0
    %3719 = vmatprep.subr.bf16.mxu0 %v3581
    %3720 = vmatpush1.bf16.msra.mxu0 %v3580
    %3721 = vmatprep.subr.bf16.mxu0 %v3577
    %3722 = vmatpush1.bf16.msra.mxu0 %v3576
    %3723 = vmatprep.subr.bf16.mxu0 %v3573
    %3724 = vmatpush1.bf16.msra.mxu0 %v3572
    %3725 = vmatprep.subr.bf16.mxu0 %v3569
    %3726 = vmatpush1.bf16.msra.mxu0 %v3568
    %3727 = vmatprep.subr.bf16.mxu0 %v3565
    %3728 = vmatpush1.bf16.msra.mxu0 %v3564
    %3729 = vmatprep.subr.bf16.mxu0 %v3561
    %3730 = vmatpush1.bf16.msra.mxu0 %v3560
    %3731 = vmatprep.subr.bf16.mxu0 %v3557
    %3732 = vmatpush1.bf16.msra.mxu0 %v3556
    %3733 = vmatprep.subr.bf16.mxu0 %v3553
    %3734 = vmatpush1.bf16.msra.mxu0 %v3552
    %3735 = vmatprep.subr.bf16.mxu0 %v3613
    %3736 = vmatpush2.bf16.msra.mxu0 %v3612
    %3737 = vmatprep.subr.bf16.mxu0 %v3609
    %3738 = vmatpush2.bf16.msra.mxu0 %v3608
    %3739 = vmatprep.subr.bf16.mxu0 %v3605
    %3740 = vmatpush2.bf16.msra.mxu0 %v3604
    %3741 = vmatprep.subr.bf16.mxu0 %v3601
    %3742 = vmatpush2.bf16.msra.mxu0 %v3600
    %3743 = vmatprep.subr.bf16.mxu0 %v3597
    %3744 = vmatpush2.bf16.msra.mxu0 %v3596
    %3745 = vmatprep.subr.bf16.mxu0 %v3593
    %3746 = vmatpush2.bf16.msra.mxu0 %v3592
    %3747 = vmatprep.subr.bf16.mxu0 %v3589
    %3748 = vmatpush2.bf16.msra.mxu0 %v3588
    %3749 = vmatprep.subr.bf16.mxu0 %v3585
    %3750 = vmatpush2.bf16.msra.mxu0 %v3584
    %3751 = vmatprep.mubr.bf16.mxu0 %v2989
    %3752 = vmatmul.mubr.bf16.gmra.mxu0 %v3293
    %v3753 = vpop.f32.mrf.mxu0
    %v3754 = vadd.f32 %v597, %v3753
    %v3755 = vpop.f32.mrf.mxu0
    %v3756 = vadd.f32 %v601, %v3755
    %v3757 = vpop.f32.mrf.mxu0
    %v3758 = vpop.f32.mrf.mxu0
    %3759 = vdwg.mxu0
    %v3760 = vxor.u32 %v3713, 2147483648
    %v3761 = vxor.u32 %v3715, 2147483648
    %v3762 = vxor.u32 %v3754, 2147483648
    %v3763 = vmul.f32 %v3760, 1.442695
    %v3764 = vpow.pop %v3763
    %v3765 = vmul.f32 %v3761, 1.442695
    %v3766 = vpow.pop %v3765
    %v3767 = vmul.f32 %v3762, 1.442695
    %v3768 = vpow.pop %v3767
    %v3769 = vadd.f32 %v3764, 1.0
    %v3770 = vadd.f32 %v3766, 1.0
    %v3771 = vadd.f32 %v3768, 1.0
    %v3772 = vrcp.pop %v3769
    %v3773 = vmul.f32 1.0, %v3772
    %v3774 = vrcp.pop %v3770
    %v3775 = vmul.f32 1.0, %v3774
    %v3776 = vrcp.pop %v3771
    %v3777 = vmul.f32 1.0, %v3776
    %v3778 = vtanh.pop %v3756
    %v3779 = vmul.f32 %v3775, %v2986
    %v3780 = vmul.f32 %v3773, %v3778
    %v3781 = vadd.f32 %v3779, %v3780
    %v3782 = vtanh.pop %v3781
    %v3783 = vmul.f32 %v3777, %v3782
    %v3784 = vpack.c.bf16 %v3783, %v3783
    %3785 = vst [vmem:[#allocation4 + $0xc] sm:$0xf] %v3784
    %v3786 = vld [vmem:[#allocation12] sm:$0xff]
    %v3787 = vld [vmem:[#allocation12 + $0x8] sm:$0xff]
    %v3788 = vld [vmem:[#allocation12 + $0x10] sm:$0xff]
    %v3789 = vld [vmem:[#allocation12 + $0x18] sm:$0xff]
    %v3790 = vld [vmem:[#allocation12 + $0x20] sm:$0xff]
    %v3791 = vld [vmem:[#allocation12 + $0x28] sm:$0xff]
    %v3792 = vld [vmem:[#allocation12 + $0x30] sm:$0xff]
    %v3793 = vld [vmem:[#allocation12 + $0x38] sm:$0xff]
    %v3794 = vld [vmem:[#allocation12 + $0x40] sm:$0xff]
    %v3795 = vld [vmem:[#allocation12 + $0x48] sm:$0xff]
    %v3796 = vld [vmem:[#allocation12 + $0x50] sm:$0xff]
    %v3797 = vld [vmem:[#allocation12 + $0x58] sm:$0xff]
    %v3798 = vld [vmem:[#allocation12 + $0x60] sm:$0xff]
    %v3799 = vld [vmem:[#allocation12 + $0x68] sm:$0xff]
    %v3800 = vld [vmem:[#allocation12 + $0x70] sm:$0xff]
    %v3801 = vld [vmem:[#allocation12 + $0x78] sm:$0xff]
    %v3802 = vld [vmem:[#allocation12 + $0x80] sm:$0xff]
    %v3803 = vld [vmem:[#allocation12 + $0x88] sm:$0xff]
    %v3804 = vld [vmem:[#allocation12 + $0x90] sm:$0xff]
    %v3805 = vld [vmem:[#allocation12 + $0x98] sm:$0xff]
    %v3806 = vld [vmem:[#allocation12 + $0xa0] sm:$0xff]
    %v3807 = vld [vmem:[#allocation12 + $0xa8] sm:$0xff]
    %v3808 = vld [vmem:[#allocation12 + $0xb0] sm:$0xff]
    %v3809 = vld [vmem:[#allocation12 + $0xb8] sm:$0xff]
    %v3810 = vld [vmem:[#allocation12 + $0xc0] sm:$0xff]
    %v3811 = vld [vmem:[#allocation12 + $0xc8] sm:$0xff]
    %v3812 = vld [vmem:[#allocation12 + $0xd0] sm:$0xff]
    %v3813 = vld [vmem:[#allocation12 + $0xd8] sm:$0xff]
    %v3814 = vld [vmem:[#allocation12 + $0xe0] sm:$0xff]
    %v3815 = vld [vmem:[#allocation12 + $0xe8] sm:$0xff]
    %v3816 = vld [vmem:[#allocation12 + $0xf0] sm:$0xff]
    %v3817 = vld [vmem:[#allocation12 + $0xf8] sm:$0xff]
    %v3818 = vld [vmem:[#allocation3 + $0x80] sm:$0xff]
    %v3819 = vld [vmem:[#allocation3 + $0x88] sm:$0xff]
    %v3820 = vld [vmem:[#allocation3 + $0x90] sm:$0xff]
    %v3821 = vld [vmem:[#allocation3 + $0x98] sm:$0xff]
    %v3854 = vunpack.c.l.b16 %v3786
    %v3855 = vunpack.c.h.b16 %v3786
    %v3856 = vunpack.c.l.b16 %v3787
    %v3857 = vunpack.c.h.b16 %v3787
    %v3858 = vunpack.c.l.b16 %v3788
    %v3859 = vunpack.c.h.b16 %v3788
    %v3860 = vunpack.c.l.b16 %v3789
    %v3861 = vunpack.c.h.b16 %v3789
    %v3862 = vunpack.c.l.b16 %v3790
    %v3863 = vunpack.c.h.b16 %v3790
    %v3864 = vunpack.c.l.b16 %v3791
    %v3865 = vunpack.c.h.b16 %v3791
    %v3866 = vunpack.c.l.b16 %v3792
    %v3867 = vunpack.c.h.b16 %v3792
    %v3868 = vunpack.c.l.b16 %v3793
    %v3869 = vunpack.c.h.b16 %v3793
    %v3870 = vunpack.c.l.b16 %v3794
    %v3871 = vunpack.c.h.b16 %v3794
    %v3872 = vunpack.c.l.b16 %v3795
    %v3873 = vunpack.c.h.b16 %v3795
    %v3874 = vunpack.c.l.b16 %v3796
    %v3875 = vunpack.c.h.b16 %v3796
    %v3876 = vunpack.c.l.b16 %v3797
    %v3877 = vunpack.c.h.b16 %v3797
    %v3878 = vunpack.c.l.b16 %v3798
    %v3879 = vunpack.c.h.b16 %v3798
    %v3880 = vunpack.c.l.b16 %v3799
    %v3881 = vunpack.c.h.b16 %v3799
    %v3882 = vunpack.c.l.b16 %v3800
    %v3883 = vunpack.c.h.b16 %v3800
    %v3884 = vunpack.c.l.b16 %v3801
    %v3885 = vunpack.c.h.b16 %v3801
    %v3886 = vunpack.c.l.b16 %v3802
    %v3887 = vunpack.c.h.b16 %v3802
    %v3888 = vunpack.c.l.b16 %v3803
    %v3889 = vunpack.c.h.b16 %v3803
    %v3890 = vunpack.c.l.b16 %v3804
    %v3891 = vunpack.c.h.b16 %v3804
    %v3892 = vunpack.c.l.b16 %v3805
    %v3893 = vunpack.c.h.b16 %v3805
    %v3894 = vunpack.c.l.b16 %v3806
    %v3895 = vunpack.c.h.b16 %v3806
    %v3896 = vunpack.c.l.b16 %v3807
    %v3897 = vunpack.c.h.b16 %v3807
    %v3898 = vunpack.c.l.b16 %v3808
    %v3899 = vunpack.c.h.b16 %v3808
    %v3900 = vunpack.c.l.b16 %v3809
    %v3901 = vunpack.c.h.b16 %v3809
    %v3902 = vunpack.c.l.b16 %v3810
    %v3903 = vunpack.c.h.b16 %v3810
    %v3904 = vunpack.c.l.b16 %v3811
    %v3905 = vunpack.c.h.b16 %v3811
    %v3906 = vunpack.c.l.b16 %v3812
    %v3907 = vunpack.c.h.b16 %v3812
    %v3908 = vunpack.c.l.b16 %v3813
    %v3909 = vunpack.c.h.b16 %v3813
    %v3910 = vunpack.c.l.b16 %v3814
    %v3911 = vunpack.c.h.b16 %v3814
    %v3912 = vunpack.c.l.b16 %v3815
    %v3913 = vunpack.c.h.b16 %v3815
    %v3914 = vunpack.c.l.b16 %v3816
    %v3915 = vunpack.c.h.b16 %v3816
    %v3916 = vunpack.c.l.b16 %v3817
    %v3917 = vunpack.c.h.b16 %v3817
    %v3918 = vpack.c.b16 %v3858, %v3854
    %v3919 = vpack.c.b16 %v3859, %v3855
    %v3920 = vpack.c.b16 %v3860, %v3856
    %v3921 = vpack.c.b16 %v3861, %v3857
    %v3922 = vpack.c.b16 %v3866, %v3862
    %v3923 = vpack.c.b16 %v3867, %v3863
    %v3924 = vpack.c.b16 %v3868, %v3864
    %v3925 = vpack.c.b16 %v3869, %v3865
    %v3926 = vpack.c.b16 %v3874, %v3870
    %v3927 = vpack.c.b16 %v3875, %v3871
    %v3928 = vpack.c.b16 %v3876, %v3872
    %v3929 = vpack.c.b16 %v3877, %v3873
    %v3930 = vpack.c.b16 %v3882, %v3878
    %v3931 = vpack.c.b16 %v3883, %v3879
    %v3932 = vpack.c.b16 %v3884, %v3880
    %v3933 = vpack.c.b16 %v3885, %v3881
    %v3934 = vpack.c.b16 %v3890, %v3886
    %v3935 = vpack.c.b16 %v3891, %v3887
    %v3936 = vpack.c.b16 %v3892, %v3888
    %v3937 = vpack.c.b16 %v3893, %v3889
    %v3938 = vpack.c.b16 %v3898, %v3894
    %v3939 = vpack.c.b16 %v3899, %v3895
    %v3940 = vpack.c.b16 %v3900, %v3896
    %v3941 = vpack.c.b16 %v3901, %v3897
    %v3942 = vpack.c.b16 %v3906, %v3902
    %v3943 = vpack.c.b16 %v3907, %v3903
    %v3944 = vpack.c.b16 %v3908, %v3904
    %v3945 = vpack.c.b16 %v3909, %v3905
    %v3946 = vpack.c.b16 %v3914, %v3910
    %v3947 = vpack.c.b16 %v3915, %v3911
    %v3948 = vpack.c.b16 %v3916, %v3912
    %v3949 = vpack.c.b16 %v3917, %v3913
    %3982 = vmatprep.subr.bf16.mxu0 %v3947
    %3983 = vmatpush1.bf16.msra.mxu0 %v3946
    %3984 = vmatprep.subr.bf16.mxu0 %v3943
    %3985 = vmatpush1.bf16.msra.mxu0 %v3942
    %3986 = vmatprep.subr.bf16.mxu0 %v3939
    %3987 = vmatpush1.bf16.msra.mxu0 %v3938
    %3988 = vmatprep.subr.bf16.mxu0 %v3935
    %3989 = vmatpush1.bf16.msra.mxu0 %v3934
    %3990 = vmatprep.subr.bf16.mxu0 %v3931
    %3991 = vmatpush1.bf16.msra.mxu0 %v3930
    %3992 = vmatprep.subr.bf16.mxu0 %v3927
    %3993 = vmatpush1.bf16.msra.mxu0 %v3926
    %3994 = vmatprep.subr.bf16.mxu0 %v3923
    %3995 = vmatpush1.bf16.msra.mxu0 %v3922
    %3996 = vmatprep.subr.bf16.mxu0 %v3919
    %3997 = vmatpush1.bf16.msra.mxu0 %v3918
    %3998 = vmatprep.subr.bf16.mxu0 0
    %3999 = vmatpush2.bf16.msra.mxu0 0
    %4000 = vmatprep.subr.bf16.mxu0 0
    %4001 = vmatpush2.bf16.msra.mxu0 0
    %4002 = vmatprep.subr.bf16.mxu0 0
    %4003 = vmatpush2.bf16.msra.mxu0 0
    %4004 = vmatprep.subr.bf16.mxu0 0
    %4005 = vmatpush2.bf16.msra.mxu0 0
    %4006 = vmatprep.subr.bf16.mxu0 0
    %4007 = vmatpush2.bf16.msra.mxu0 0
    %4008 = vmatprep.subr.bf16.mxu0 0
    %4009 = vmatpush2.bf16.msra.mxu0 0
    %4010 = vmatprep.subr.bf16.mxu0 0
    %4011 = vmatpush2.bf16.msra.mxu0 0
    %4012 = vmatprep.subr.bf16.mxu0 0
    %4013 = vmatpush2.bf16.msra.mxu0 0
    %4014 = vmatprep.mubr.bf16.mxu0 0
    %4015 = vmatmul.mubr.bf16.gmra.mxu0 %v3293
    %v4016 = vpop.f32.mrf.mxu0
    %v4017 = vadd.f32 %v3818, %v4016
    %v4018 = vpop.f32.mrf.mxu0
    %v4019 = vadd.f32 %v3819, %v4018
    %v4020 = vpop.f32.mrf.mxu0
    %v4021 = vpop.f32.mrf.mxu0
    %4022 = vdwg.mxu0
    %4023 = vmatprep.subr.bf16.mxu0 %v3949
    %4024 = vmatpush1.bf16.msra.mxu0 %v3948
    %4025 = vmatprep.subr.bf16.mxu0 %v3945
    %4026 = vmatpush1.bf16.msra.mxu0 %v3944
    %4027 = vmatprep.subr.bf16.mxu0 %v3941
    %4028 = vmatpush1.bf16.msra.mxu0 %v3940
    %4029 = vmatprep.subr.bf16.mxu0 %v3937
    %4030 = vmatpush1.bf16.msra.mxu0 %v3936
    %4031 = vmatprep.subr.bf16.mxu0 %v3933
    %4032 = vmatpush1.bf16.msra.mxu0 %v3932
    %4033 = vmatprep.subr.bf16.mxu0 %v3929
    %4034 = vmatpush1.bf16.msra.mxu0 %v3928
    %4035 = vmatprep.subr.bf16.mxu0 %v3925
    %4036 = vmatpush1.bf16.msra.mxu0 %v3924
    %4037 = vmatprep.subr.bf16.mxu0 %v3921
    %4038 = vmatpush1.bf16.msra.mxu0 %v3920
    %4039 = vmatprep.subr.bf16.mxu0 0
    %4040 = vmatpush2.bf16.msra.mxu0 0
    %4041 = vmatprep.subr.bf16.mxu0 0
    %4042 = vmatpush2.bf16.msra.mxu0 0
    %4043 = vmatprep.subr.bf16.mxu0 0
    %4044 = vmatpush2.bf16.msra.mxu0 0
    %4045 = vmatprep.subr.bf16.mxu0 0
    %4046 = vmatpush2.bf16.msra.mxu0 0
    %4047 = vmatprep.subr.bf16.mxu0 0
    %4048 = vmatpush2.bf16.msra.mxu0 0
    %4049 = vmatprep.subr.bf16.mxu0 0
    %4050 = vmatpush2.bf16.msra.mxu0 0
    %4051 = vmatprep.subr.bf16.mxu0 0
    %4052 = vmatpush2.bf16.msra.mxu0 0
    %4053 = vmatprep.subr.bf16.mxu0 0
    %4054 = vmatpush2.bf16.msra.mxu0 0
    %4055 = vmatprep.mubr.bf16.mxu0 0
    %4056 = vmatmul.mubr.bf16.gmra.mxu0 %v3293
    %v4057 = vpop.f32.mrf.mxu0
    %v4058 = vadd.f32 %v3820, %v4057
    %v4059 = vpop.f32.mrf.mxu0
    %v4060 = vadd.f32 %v3821, %v4059
    %v4061 = vpop.f32.mrf.mxu0
    %v4062 = vpop.f32.mrf.mxu0
    %4063 = vdwg.mxu0
    %v4064 = vxor.u32 %v4017, 2147483648
    %v4065 = vxor.u32 %v4019, 2147483648
    %v4066 = vxor.u32 %v4058, 2147483648
    %v4067 = vmul.f32 %v4064, 1.442695
    %v4068 = vpow.pop %v4067
    %v4069 = vmul.f32 %v4065, 1.442695
    %v4070 = vpow.pop %v4069
    %v4071 = vmul.f32 %v4066, 1.442695
    %v4072 = vpow.pop %v4071
    %v4073 = vadd.f32 %v4068, 1.0
    %v4074 = vadd.f32 %v4070, 1.0
    %v4075 = vadd.f32 %v4072, 1.0
    %v4076 = vrcp.pop %v4073
    %v4077 = vmul.f32 1.0, %v4076
    %v4078 = vrcp.pop %v4074
    %v4079 = vmul.f32 1.0, %v4078
    %v4080 = vrcp.pop %v4075
    %v4081 = vmul.f32 1.0, %v4080
    %v4082 = vtanh.pop %v4060
    %v4083 = vmul.f32 %v4079, %v3290
    %v4084 = vmul.f32 %v4077, %v4082
    %v4085 = vadd.f32 %v4083, %v4084
    %v4086 = vtanh.pop %v4085
    %v4087 = vmul.f32 %v4081, %v4086
    %v4088 = vpack.c.bf16 %v4087, %v4087
    %v4089 = vld [vmem:[#allocation13] sm:$0xff]
    %v4090 = vld [vmem:[#allocation13 + $0x8] sm:$0xff]
    %v4091 = vld [vmem:[#allocation13 + $0x10] sm:$0xff]
    %v4092 = vld [vmem:[#allocation13 + $0x18] sm:$0xff]
    %v4093 = vld [vmem:[#allocation13 + $0x20] sm:$0xff]
    %v4094 = vld [vmem:[#allocation13 + $0x28] sm:$0xff]
    %v4095 = vld [vmem:[#allocation13 + $0x30] sm:$0xff]
    %v4096 = vld [vmem:[#allocation13 + $0x38] sm:$0xff]
    %v4097 = vld [vmem:[#allocation13 + $0x40] sm:$0xff]
    %v4098 = vld [vmem:[#allocation13 + $0x48] sm:$0xff]
    %v4099 = vld [vmem:[#allocation13 + $0x50] sm:$0xff]
    %v4100 = vld [vmem:[#allocation13 + $0x58] sm:$0xff]
    %v4101 = vld [vmem:[#allocation13 + $0x60] sm:$0xff]
    %v4102 = vld [vmem:[#allocation13 + $0x68] sm:$0xff]
    %v4103 = vld [vmem:[#allocation13 + $0x70] sm:$0xff]
    %v4104 = vld [vmem:[#allocation13 + $0x78] sm:$0xff]
    %v4105 = vld [vmem:[#allocation13 + $0x80] sm:$0xff]
    %v4106 = vld [vmem:[#allocation13 + $0x88] sm:$0xff]
    %v4107 = vld [vmem:[#allocation13 + $0x90] sm:$0xff]
    %v4108 = vld [vmem:[#allocation13 + $0x98] sm:$0xff]
    %v4109 = vld [vmem:[#allocation13 + $0xa0] sm:$0xff]
    %v4110 = vld [vmem:[#allocation13 + $0xa8] sm:$0xff]
    %v4111 = vld [vmem:[#allocation13 + $0xb0] sm:$0xff]
    %v4112 = vld [vmem:[#allocation13 + $0xb8] sm:$0xff]
    %v4113 = vld [vmem:[#allocation13 + $0xc0] sm:$0xff]
    %v4114 = vld [vmem:[#allocation13 + $0xc8] sm:$0xff]
    %v4115 = vld [vmem:[#allocation13 + $0xd0] sm:$0xff]
    %v4116 = vld [vmem:[#allocation13 + $0xd8] sm:$0xff]
    %v4117 = vld [vmem:[#allocation13 + $0xe0] sm:$0xff]
    %v4118 = vld [vmem:[#allocation13 + $0xe8] sm:$0xff]
    %v4119 = vld [vmem:[#allocation13 + $0xf0] sm:$0xff]
    %v4120 = vld [vmem:[#allocation13 + $0xf8] sm:$0xff]
    %v4121 = vld [vmem:[#allocation13 + $0x100] sm:$0xff]
    %v4122 = vld [vmem:[#allocation13 + $0x108] sm:$0xff]
    %v4123 = vld [vmem:[#allocation13 + $0x110] sm:$0xff]
    %v4124 = vld [vmem:[#allocation13 + $0x118] sm:$0xff]
    %v4125 = vld [vmem:[#allocation13 + $0x120] sm:$0xff]
    %v4126 = vld [vmem:[#allocation13 + $0x128] sm:$0xff]
    %v4127 = vld [vmem:[#allocation13 + $0x130] sm:$0xff]
    %v4128 = vld [vmem:[#allocation13 + $0x138] sm:$0xff]
    %v4129 = vld [vmem:[#allocation13 + $0x140] sm:$0xff]
    %v4130 = vld [vmem:[#allocation13 + $0x148] sm:$0xff]
    %v4131 = vld [vmem:[#allocation13 + $0x150] sm:$0xff]
    %v4132 = vld [vmem:[#allocation13 + $0x158] sm:$0xff]
    %v4133 = vld [vmem:[#allocation13 + $0x160] sm:$0xff]
    %v4134 = vld [vmem:[#allocation13 + $0x168] sm:$0xff]
    %v4135 = vld [vmem:[#allocation13 + $0x170] sm:$0xff]
    %v4136 = vld [vmem:[#allocation13 + $0x178] sm:$0xff]
    %v4137 = vld [vmem:[#allocation13 + $0x180] sm:$0xff]
    %v4138 = vld [vmem:[#allocation13 + $0x188] sm:$0xff]
    %v4139 = vld [vmem:[#allocation13 + $0x190] sm:$0xff]
    %v4140 = vld [vmem:[#allocation13 + $0x198] sm:$0xff]
    %v4141 = vld [vmem:[#allocation13 + $0x1a0] sm:$0xff]
    %v4142 = vld [vmem:[#allocation13 + $0x1a8] sm:$0xff]
    %v4143 = vld [vmem:[#allocation13 + $0x1b0] sm:$0xff]
    %v4144 = vld [vmem:[#allocation13 + $0x1b8] sm:$0xff]
    %v4145 = vld [vmem:[#allocation13 + $0x1c0] sm:$0xff]
    %v4146 = vld [vmem:[#allocation13 + $0x1c8] sm:$0xff]
    %v4147 = vld [vmem:[#allocation13 + $0x1d0] sm:$0xff]
    %v4148 = vld [vmem:[#allocation13 + $0x1d8] sm:$0xff]
    %v4149 = vld [vmem:[#allocation13 + $0x1e0] sm:$0xff]
    %v4150 = vld [vmem:[#allocation13 + $0x1e8] sm:$0xff]
    %v4151 = vld [vmem:[#allocation13 + $0x1f0] sm:$0xff]
    %v4152 = vld [vmem:[#allocation13 + $0x1f8] sm:$0xff]
    %v4217 = vunpack.c.l.b16 %v4089
    %v4218 = vunpack.c.h.b16 %v4089
    %v4219 = vunpack.c.l.b16 %v4090
    %v4220 = vunpack.c.h.b16 %v4090
    %v4221 = vunpack.c.l.b16 %v4091
    %v4222 = vunpack.c.h.b16 %v4091
    %v4223 = vunpack.c.l.b16 %v4092
    %v4224 = vunpack.c.h.b16 %v4092
    %v4225 = vunpack.c.l.b16 %v4093
    %v4226 = vunpack.c.h.b16 %v4093
    %v4227 = vunpack.c.l.b16 %v4094
    %v4228 = vunpack.c.h.b16 %v4094
    %v4229 = vunpack.c.l.b16 %v4095
    %v4230 = vunpack.c.h.b16 %v4095
    %v4231 = vunpack.c.l.b16 %v4096
    %v4232 = vunpack.c.h.b16 %v4096
    %v4233 = vunpack.c.l.b16 %v4097
    %v4234 = vunpack.c.h.b16 %v4097
    %v4235 = vunpack.c.l.b16 %v4098
    %v4236 = vunpack.c.h.b16 %v4098
    %v4237 = vunpack.c.l.b16 %v4099
    %v4238 = vunpack.c.h.b16 %v4099
    %v4239 = vunpack.c.l.b16 %v4100
    %v4240 = vunpack.c.h.b16 %v4100
    %v4241 = vunpack.c.l.b16 %v4101
    %v4242 = vunpack.c.h.b16 %v4101
    %v4243 = vunpack.c.l.b16 %v4102
    %v4244 = vunpack.c.h.b16 %v4102
    %v4245 = vunpack.c.l.b16 %v4103
    %v4246 = vunpack.c.h.b16 %v4103
    %v4247 = vunpack.c.l.b16 %v4104
    %v4248 = vunpack.c.h.b16 %v4104
    %v4249 = vunpack.c.l.b16 %v4105
    %v4250 = vunpack.c.h.b16 %v4105
    %v4251 = vunpack.c.l.b16 %v4106
    %v4252 = vunpack.c.h.b16 %v4106
    %v4253 = vunpack.c.l.b16 %v4107
    %v4254 = vunpack.c.h.b16 %v4107
    %v4255 = vunpack.c.l.b16 %v4108
    %v4256 = vunpack.c.h.b16 %v4108
    %v4257 = vunpack.c.l.b16 %v4109
    %v4258 = vunpack.c.h.b16 %v4109
    %v4259 = vunpack.c.l.b16 %v4110
    %v4260 = vunpack.c.h.b16 %v4110
    %v4261 = vunpack.c.l.b16 %v4111
    %v4262 = vunpack.c.h.b16 %v4111
    %v4263 = vunpack.c.l.b16 %v4112
    %v4264 = vunpack.c.h.b16 %v4112
    %v4265 = vunpack.c.l.b16 %v4113
    %v4266 = vunpack.c.h.b16 %v4113
    %v4267 = vunpack.c.l.b16 %v4114
    %v4268 = vunpack.c.h.b16 %v4114
    %v4269 = vunpack.c.l.b16 %v4115
    %v4270 = vunpack.c.h.b16 %v4115
    %v4271 = vunpack.c.l.b16 %v4116
    %v4272 = vunpack.c.h.b16 %v4116
    %v4273 = vunpack.c.l.b16 %v4117
    %v4274 = vunpack.c.h.b16 %v4117
    %v4275 = vunpack.c.l.b16 %v4118
    %v4276 = vunpack.c.h.b16 %v4118
    %v4277 = vunpack.c.l.b16 %v4119
    %v4278 = vunpack.c.h.b16 %v4119
    %v4279 = vunpack.c.l.b16 %v4120
    %v4280 = vunpack.c.h.b16 %v4120
    %v4281 = vunpack.c.l.b16 %v4121
    %v4282 = vunpack.c.h.b16 %v4121
    %v4283 = vunpack.c.l.b16 %v4122
    %v4284 = vunpack.c.h.b16 %v4122
    %v4285 = vunpack.c.l.b16 %v4123
    %v4286 = vunpack.c.h.b16 %v4123
    %v4287 = vunpack.c.l.b16 %v4124
    %v4288 = vunpack.c.h.b16 %v4124
    %v4289 = vunpack.c.l.b16 %v4125
    %v4290 = vunpack.c.h.b16 %v4125
    %v4291 = vunpack.c.l.b16 %v4126
    %v4292 = vunpack.c.h.b16 %v4126
    %v4293 = vunpack.c.l.b16 %v4127
    %v4294 = vunpack.c.h.b16 %v4127
    %v4295 = vunpack.c.l.b16 %v4128
    %v4296 = vunpack.c.h.b16 %v4128
    %v4297 = vunpack.c.l.b16 %v4129
    %v4298 = vunpack.c.h.b16 %v4129
    %v4299 = vunpack.c.l.b16 %v4130
    %v4300 = vunpack.c.h.b16 %v4130
    %v4301 = vunpack.c.l.b16 %v4131
    %v4302 = vunpack.c.h.b16 %v4131
    %v4303 = vunpack.c.l.b16 %v4132
    %v4304 = vunpack.c.h.b16 %v4132
    %v4305 = vunpack.c.l.b16 %v4133
    %v4306 = vunpack.c.h.b16 %v4133
    %v4307 = vunpack.c.l.b16 %v4134
    %v4308 = vunpack.c.h.b16 %v4134
    %v4309 = vunpack.c.l.b16 %v4135
    %v4310 = vunpack.c.h.b16 %v4135
    %v4311 = vunpack.c.l.b16 %v4136
    %v4312 = vunpack.c.h.b16 %v4136
    %v4313 = vunpack.c.l.b16 %v4137
    %v4314 = vunpack.c.h.b16 %v4137
    %v4315 = vunpack.c.l.b16 %v4138
    %v4316 = vunpack.c.h.b16 %v4138
    %v4317 = vunpack.c.l.b16 %v4139
    %v4318 = vunpack.c.h.b16 %v4139
    %v4319 = vunpack.c.l.b16 %v4140
    %v4320 = vunpack.c.h.b16 %v4140
    %v4321 = vunpack.c.l.b16 %v4141
    %v4322 = vunpack.c.h.b16 %v4141
    %v4323 = vunpack.c.l.b16 %v4142
    %v4324 = vunpack.c.h.b16 %v4142
    %v4325 = vunpack.c.l.b16 %v4143
    %v4326 = vunpack.c.h.b16 %v4143
    %v4327 = vunpack.c.l.b16 %v4144
    %v4328 = vunpack.c.h.b16 %v4144
    %v4329 = vunpack.c.l.b16 %v4145
    %v4330 = vunpack.c.h.b16 %v4145
    %v4331 = vunpack.c.l.b16 %v4146
    %v4332 = vunpack.c.h.b16 %v4146
    %v4333 = vunpack.c.l.b16 %v4147
    %v4334 = vunpack.c.h.b16 %v4147
    %v4335 = vunpack.c.l.b16 %v4148
    %v4336 = vunpack.c.h.b16 %v4148
    %v4337 = vunpack.c.l.b16 %v4149
    %v4338 = vunpack.c.h.b16 %v4149
    %v4339 = vunpack.c.l.b16 %v4150
    %v4340 = vunpack.c.h.b16 %v4150
    %v4341 = vunpack.c.l.b16 %v4151
    %v4342 = vunpack.c.h.b16 %v4151
    %v4343 = vunpack.c.l.b16 %v4152
    %v4344 = vunpack.c.h.b16 %v4152
    %v4345 = vpack.c.b16 %v4221, %v4217
    %v4346 = vpack.c.b16 %v4222, %v4218
    %v4347 = vpack.c.b16 %v4223, %v4219
    %v4348 = vpack.c.b16 %v4224, %v4220
    %v4349 = vpack.c.b16 %v4229, %v4225
    %v4350 = vpack.c.b16 %v4230, %v4226
    %v4351 = vpack.c.b16 %v4231, %v4227
    %v4352 = vpack.c.b16 %v4232, %v4228
    %v4353 = vpack.c.b16 %v4237, %v4233
    %v4354 = vpack.c.b16 %v4238, %v4234
    %v4355 = vpack.c.b16 %v4239, %v4235
    %v4356 = vpack.c.b16 %v4240, %v4236
    %v4357 = vpack.c.b16 %v4245, %v4241
    %v4358 = vpack.c.b16 %v4246, %v4242
    %v4359 = vpack.c.b16 %v4247, %v4243
    %v4360 = vpack.c.b16 %v4248, %v4244
    %v4361 = vpack.c.b16 %v4253, %v4249
    %v4362 = vpack.c.b16 %v4254, %v4250
    %v4363 = vpack.c.b16 %v4255, %v4251
    %v4364 = vpack.c.b16 %v4256, %v4252
    %v4365 = vpack.c.b16 %v4261, %v4257
    %v4366 = vpack.c.b16 %v4262, %v4258
    %v4367 = vpack.c.b16 %v4263, %v4259
    %v4368 = vpack.c.b16 %v4264, %v4260
    %v4369 = vpack.c.b16 %v4269, %v4265
    %v4370 = vpack.c.b16 %v4270, %v4266
    %v4371 = vpack.c.b16 %v4271, %v4267
    %v4372 = vpack.c.b16 %v4272, %v4268
    %v4373 = vpack.c.b16 %v4277, %v4273
    %v4374 = vpack.c.b16 %v4278, %v4274
    %v4375 = vpack.c.b16 %v4279, %v4275
    %v4376 = vpack.c.b16 %v4280, %v4276
    %v4377 = vpack.c.b16 %v4285, %v4281
    %v4378 = vpack.c.b16 %v4286, %v4282
    %v4379 = vpack.c.b16 %v4287, %v4283
    %v4380 = vpack.c.b16 %v4288, %v4284
    %v4381 = vpack.c.b16 %v4293, %v4289
    %v4382 = vpack.c.b16 %v4294, %v4290
    %v4383 = vpack.c.b16 %v4295, %v4291
    %v4384 = vpack.c.b16 %v4296, %v4292
    %v4385 = vpack.c.b16 %v4301, %v4297
    %v4386 = vpack.c.b16 %v4302, %v4298
    %v4387 = vpack.c.b16 %v4303, %v4299
    %v4388 = vpack.c.b16 %v4304, %v4300
    %v4389 = vpack.c.b16 %v4309, %v4305
    %v4390 = vpack.c.b16 %v4310, %v4306
    %v4391 = vpack.c.b16 %v4311, %v4307
    %v4392 = vpack.c.b16 %v4312, %v4308
    %v4393 = vpack.c.b16 %v4317, %v4313
    %v4394 = vpack.c.b16 %v4318, %v4314
    %v4395 = vpack.c.b16 %v4319, %v4315
    %v4396 = vpack.c.b16 %v4320, %v4316
    %v4397 = vpack.c.b16 %v4325, %v4321
    %v4398 = vpack.c.b16 %v4326, %v4322
    %v4399 = vpack.c.b16 %v4327, %v4323
    %v4400 = vpack.c.b16 %v4328, %v4324
    %v4401 = vpack.c.b16 %v4333, %v4329
    %v4402 = vpack.c.b16 %v4334, %v4330
    %v4403 = vpack.c.b16 %v4335, %v4331
    %v4404 = vpack.c.b16 %v4336, %v4332
    %v4405 = vpack.c.b16 %v4341, %v4337
    %v4406 = vpack.c.b16 %v4342, %v4338
    %v4407 = vpack.c.b16 %v4343, %v4339
    %v4408 = vpack.c.b16 %v4344, %v4340
    %4473 = vmatprep.subr.bf16.mxu0 %v4374
    %4474 = vmatpush1.bf16.msra.mxu0 %v4373
    %4475 = vmatprep.subr.bf16.mxu0 %v4370
    %4476 = vmatpush1.bf16.msra.mxu0 %v4369
    %4477 = vmatprep.subr.bf16.mxu0 %v4366
    %4478 = vmatpush1.bf16.msra.mxu0 %v4365
    %4479 = vmatprep.subr.bf16.mxu0 %v4362
    %4480 = vmatpush1.bf16.msra.mxu0 %v4361
    %4481 = vmatprep.subr.bf16.mxu0 %v4358
    %4482 = vmatpush1.bf16.msra.mxu0 %v4357
    %4483 = vmatprep.subr.bf16.mxu0 %v4354
    %4484 = vmatpush1.bf16.msra.mxu0 %v4353
    %4485 = vmatprep.subr.bf16.mxu0 %v4350
    %4486 = vmatpush1.bf16.msra.mxu0 %v4349
    %4487 = vmatprep.subr.bf16.mxu0 %v4346
    %4488 = vmatpush1.bf16.msra.mxu0 %v4345
    %4489 = vmatprep.subr.bf16.mxu0 %v4406
    %4490 = vmatpush2.bf16.msra.mxu0 %v4405
    %4491 = vmatprep.subr.bf16.mxu0 %v4402
    %4492 = vmatpush2.bf16.msra.mxu0 %v4401
    %4493 = vmatprep.subr.bf16.mxu0 %v4398
    %4494 = vmatpush2.bf16.msra.mxu0 %v4397
    %4495 = vmatprep.subr.bf16.mxu0 %v4394
    %4496 = vmatpush2.bf16.msra.mxu0 %v4393
    %4497 = vmatprep.subr.bf16.mxu0 %v4390
    %4498 = vmatpush2.bf16.msra.mxu0 %v4389
    %4499 = vmatprep.subr.bf16.mxu0 %v4386
    %4500 = vmatpush2.bf16.msra.mxu0 %v4385
    %4501 = vmatprep.subr.bf16.mxu0 %v4382
    %4502 = vmatpush2.bf16.msra.mxu0 %v4381
    %4503 = vmatprep.subr.bf16.mxu0 %v4378
    %4504 = vmatpush2.bf16.msra.mxu0 %v4377
    %4505 = vmatprep.mubr.bf16.mxu0 %v3784
    %4506 = vmatmul.mubr.bf16.gmra.mxu0 %v4088
    %v4507 = vpop.f32.mrf.mxu0
    %v4508 = vadd.f32 %v589, %v4507
    %v4509 = vpop.f32.mrf.mxu0
    %v4510 = vadd.f32 %v593, %v4509
    %v4511 = vpop.f32.mrf.mxu0
    %v4512 = vpop.f32.mrf.mxu0
    %4513 = vdwg.mxu0
    %4514 = vmatprep.subr.bf16.mxu0 %v4376
    %4515 = vmatpush1.bf16.msra.mxu0 %v4375
    %4516 = vmatprep.subr.bf16.mxu0 %v4372
    %4517 = vmatpush1.bf16.msra.mxu0 %v4371
    %4518 = vmatprep.subr.bf16.mxu0 %v4368
    %4519 = vmatpush1.bf16.msra.mxu0 %v4367
    %4520 = vmatprep.subr.bf16.mxu0 %v4364
    %4521 = vmatpush1.bf16.msra.mxu0 %v4363
    %4522 = vmatprep.subr.bf16.mxu0 %v4360
    %4523 = vmatpush1.bf16.msra.mxu0 %v4359
    %4524 = vmatprep.subr.bf16.mxu0 %v4356
    %4525 = vmatpush1.bf16.msra.mxu0 %v4355
    %4526 = vmatprep.subr.bf16.mxu0 %v4352
    %4527 = vmatpush1.bf16.msra.mxu0 %v4351
    %4528 = vmatprep.subr.bf16.mxu0 %v4348
    %4529 = vmatpush1.bf16.msra.mxu0 %v4347
    %4530 = vmatprep.subr.bf16.mxu0 %v4408
    %4531 = vmatpush2.bf16.msra.mxu0 %v4407
    %4532 = vmatprep.subr.bf16.mxu0 %v4404
    %4533 = vmatpush2.bf16.msra.mxu0 %v4403
    %4534 = vmatprep.subr.bf16.mxu0 %v4400
    %4535 = vmatpush2.bf16.msra.mxu0 %v4399
    %4536 = vmatprep.subr.bf16.mxu0 %v4396
    %4537 = vmatpush2.bf16.msra.mxu0 %v4395
    %4538 = vmatprep.subr.bf16.mxu0 %v4392
    %4539 = vmatpush2.bf16.msra.mxu0 %v4391
    %4540 = vmatprep.subr.bf16.mxu0 %v4388
    %4541 = vmatpush2.bf16.msra.mxu0 %v4387
    %4542 = vmatprep.subr.bf16.mxu0 %v4384
    %4543 = vmatpush2.bf16.msra.mxu0 %v4383
    %4544 = vmatprep.subr.bf16.mxu0 %v4380
    %4545 = vmatpush2.bf16.msra.mxu0 %v4379
    %4546 = vmatprep.mubr.bf16.mxu0 %v3784
    %4547 = vmatmul.mubr.bf16.gmra.mxu0 %v4088
    %v4548 = vpop.f32.mrf.mxu0
    %v4549 = vadd.f32 %v597, %v4548
    %v4550 = vpop.f32.mrf.mxu0
    %v4551 = vadd.f32 %v601, %v4550
    %v4552 = vpop.f32.mrf.mxu0
    %v4553 = vpop.f32.mrf.mxu0
    %4554 = vdwg.mxu0
    %v4555 = vxor.u32 %v4508, 2147483648
    %v4556 = vxor.u32 %v4510, 2147483648
    %v4557 = vxor.u32 %v4549, 2147483648
    %v4558 = vmul.f32 %v4555, 1.442695
    %v4559 = vpow.pop %v4558
    %v4560 = vmul.f32 %v4556, 1.442695
    %v4561 = vpow.pop %v4560
    %v4562 = vmul.f32 %v4557, 1.442695
    %v4563 = vpow.pop %v4562
    %v4564 = vadd.f32 %v4559, 1.0
    %v4565 = vadd.f32 %v4561, 1.0
    %v4566 = vadd.f32 %v4563, 1.0
    %v4567 = vrcp.pop %v4564
    %v4568 = vmul.f32 1.0, %v4567
    %v4569 = vrcp.pop %v4565
    %v4570 = vmul.f32 1.0, %v4569
    %v4571 = vrcp.pop %v4566
    %v4572 = vmul.f32 1.0, %v4571
    %v4573 = vtanh.pop %v4551
    %v4574 = vmul.f32 %v4570, %v3781
    %v4575 = vmul.f32 %v4568, %v4573
    %v4576 = vadd.f32 %v4574, %v4575
    %v4577 = vtanh.pop %v4576
    %v4578 = vmul.f32 %v4572, %v4577
    %v4579 = vpack.c.bf16 %v4578, %v4578
    %4580 = vst [vmem:[#allocation4 + $0x10] sm:$0xf] %v4579
    %v4581 = vld [vmem:[#allocation12] sm:$0xff]
    %v4582 = vld [vmem:[#allocation12 + $0x8] sm:$0xff]
    %v4583 = vld [vmem:[#allocation12 + $0x10] sm:$0xff]
    %v4584 = vld [vmem:[#allocation12 + $0x18] sm:$0xff]
    %v4585 = vld [vmem:[#allocation12 + $0x20] sm:$0xff]
    %v4586 = vld [vmem:[#allocation12 + $0x28] sm:$0xff]
    %v4587 = vld [vmem:[#allocation12 + $0x30] sm:$0xff]
    %v4588 = vld [vmem:[#allocation12 + $0x38] sm:$0xff]
    %v4589 = vld [vmem:[#allocation12 + $0x40] sm:$0xff]
    %v4590 = vld [vmem:[#allocation12 + $0x48] sm:$0xff]
    %v4591 = vld [vmem:[#allocation12 + $0x50] sm:$0xff]
    %v4592 = vld [vmem:[#allocation12 + $0x58] sm:$0xff]
    %v4593 = vld [vmem:[#allocation12 + $0x60] sm:$0xff]
    %v4594 = vld [vmem:[#allocation12 + $0x68] sm:$0xff]
    %v4595 = vld [vmem:[#allocation12 + $0x70] sm:$0xff]
    %v4596 = vld [vmem:[#allocation12 + $0x78] sm:$0xff]
    %v4597 = vld [vmem:[#allocation12 + $0x80] sm:$0xff]
    %v4598 = vld [vmem:[#allocation12 + $0x88] sm:$0xff]
    %v4599 = vld [vmem:[#allocation12 + $0x90] sm:$0xff]
    %v4600 = vld [vmem:[#allocation12 + $0x98] sm:$0xff]
    %v4601 = vld [vmem:[#allocation12 + $0xa0] sm:$0xff]
    %v4602 = vld [vmem:[#allocation12 + $0xa8] sm:$0xff]
    %v4603 = vld [vmem:[#allocation12 + $0xb0] sm:$0xff]
    %v4604 = vld [vmem:[#allocation12 + $0xb8] sm:$0xff]
    %v4605 = vld [vmem:[#allocation12 + $0xc0] sm:$0xff]
    %v4606 = vld [vmem:[#allocation12 + $0xc8] sm:$0xff]
    %v4607 = vld [vmem:[#allocation12 + $0xd0] sm:$0xff]
    %v4608 = vld [vmem:[#allocation12 + $0xd8] sm:$0xff]
    %v4609 = vld [vmem:[#allocation12 + $0xe0] sm:$0xff]
    %v4610 = vld [vmem:[#allocation12 + $0xe8] sm:$0xff]
    %v4611 = vld [vmem:[#allocation12 + $0xf0] sm:$0xff]
    %v4612 = vld [vmem:[#allocation12 + $0xf8] sm:$0xff]
    %v4613 = vld [vmem:[#allocation3 + $0xa0] sm:$0xff]
    %v4614 = vld [vmem:[#allocation3 + $0xa8] sm:$0xff]
    %v4615 = vld [vmem:[#allocation3 + $0xb0] sm:$0xff]
    %v4616 = vld [vmem:[#allocation3 + $0xb8] sm:$0xff]
    %v4649 = vunpack.c.l.b16 %v4581
    %v4650 = vunpack.c.h.b16 %v4581
    %v4651 = vunpack.c.l.b16 %v4582
    %v4652 = vunpack.c.h.b16 %v4582
    %v4653 = vunpack.c.l.b16 %v4583
    %v4654 = vunpack.c.h.b16 %v4583
    %v4655 = vunpack.c.l.b16 %v4584
    %v4656 = vunpack.c.h.b16 %v4584
    %v4657 = vunpack.c.l.b16 %v4585
    %v4658 = vunpack.c.h.b16 %v4585
    %v4659 = vunpack.c.l.b16 %v4586
    %v4660 = vunpack.c.h.b16 %v4586
    %v4661 = vunpack.c.l.b16 %v4587
    %v4662 = vunpack.c.h.b16 %v4587
    %v4663 = vunpack.c.l.b16 %v4588
    %v4664 = vunpack.c.h.b16 %v4588
    %v4665 = vunpack.c.l.b16 %v4589
    %v4666 = vunpack.c.h.b16 %v4589
    %v4667 = vunpack.c.l.b16 %v4590
    %v4668 = vunpack.c.h.b16 %v4590
    %v4669 = vunpack.c.l.b16 %v4591
    %v4670 = vunpack.c.h.b16 %v4591
    %v4671 = vunpack.c.l.b16 %v4592
    %v4672 = vunpack.c.h.b16 %v4592
    %v4673 = vunpack.c.l.b16 %v4593
    %v4674 = vunpack.c.h.b16 %v4593
    %v4675 = vunpack.c.l.b16 %v4594
    %v4676 = vunpack.c.h.b16 %v4594
    %v4677 = vunpack.c.l.b16 %v4595
    %v4678 = vunpack.c.h.b16 %v4595
    %v4679 = vunpack.c.l.b16 %v4596
    %v4680 = vunpack.c.h.b16 %v4596
    %v4681 = vunpack.c.l.b16 %v4597
    %v4682 = vunpack.c.h.b16 %v4597
    %v4683 = vunpack.c.l.b16 %v4598
    %v4684 = vunpack.c.h.b16 %v4598
    %v4685 = vunpack.c.l.b16 %v4599
    %v4686 = vunpack.c.h.b16 %v4599
    %v4687 = vunpack.c.l.b16 %v4600
    %v4688 = vunpack.c.h.b16 %v4600
    %v4689 = vunpack.c.l.b16 %v4601
    %v4690 = vunpack.c.h.b16 %v4601
    %v4691 = vunpack.c.l.b16 %v4602
    %v4692 = vunpack.c.h.b16 %v4602
    %v4693 = vunpack.c.l.b16 %v4603
    %v4694 = vunpack.c.h.b16 %v4603
    %v4695 = vunpack.c.l.b16 %v4604
    %v4696 = vunpack.c.h.b16 %v4604
    %v4697 = vunpack.c.l.b16 %v4605
    %v4698 = vunpack.c.h.b16 %v4605
    %v4699 = vunpack.c.l.b16 %v4606
    %v4700 = vunpack.c.h.b16 %v4606
    %v4701 = vunpack.c.l.b16 %v4607
    %v4702 = vunpack.c.h.b16 %v4607
    %v4703 = vunpack.c.l.b16 %v4608
    %v4704 = vunpack.c.h.b16 %v4608
    %v4705 = vunpack.c.l.b16 %v4609
    %v4706 = vunpack.c.h.b16 %v4609
    %v4707 = vunpack.c.l.b16 %v4610
    %v4708 = vunpack.c.h.b16 %v4610
    %v4709 = vunpack.c.l.b16 %v4611
    %v4710 = vunpack.c.h.b16 %v4611
    %v4711 = vunpack.c.l.b16 %v4612
    %v4712 = vunpack.c.h.b16 %v4612
    %v4713 = vpack.c.b16 %v4653, %v4649
    %v4714 = vpack.c.b16 %v4654, %v4650
    %v4715 = vpack.c.b16 %v4655, %v4651
    %v4716 = vpack.c.b16 %v4656, %v4652
    %v4717 = vpack.c.b16 %v4661, %v4657
    %v4718 = vpack.c.b16 %v4662, %v4658
    %v4719 = vpack.c.b16 %v4663, %v4659
    %v4720 = vpack.c.b16 %v4664, %v4660
    %v4721 = vpack.c.b16 %v4669, %v4665
    %v4722 = vpack.c.b16 %v4670, %v4666
    %v4723 = vpack.c.b16 %v4671, %v4667
    %v4724 = vpack.c.b16 %v4672, %v4668
    %v4725 = vpack.c.b16 %v4677, %v4673
    %v4726 = vpack.c.b16 %v4678, %v4674
    %v4727 = vpack.c.b16 %v4679, %v4675
    %v4728 = vpack.c.b16 %v4680, %v4676
    %v4729 = vpack.c.b16 %v4685, %v4681
    %v4730 = vpack.c.b16 %v4686, %v4682
    %v4731 = vpack.c.b16 %v4687, %v4683
    %v4732 = vpack.c.b16 %v4688, %v4684
    %v4733 = vpack.c.b16 %v4693, %v4689
    %v4734 = vpack.c.b16 %v4694, %v4690
    %v4735 = vpack.c.b16 %v4695, %v4691
    %v4736 = vpack.c.b16 %v4696, %v4692
    %v4737 = vpack.c.b16 %v4701, %v4697
    %v4738 = vpack.c.b16 %v4702, %v4698
    %v4739 = vpack.c.b16 %v4703, %v4699
    %v4740 = vpack.c.b16 %v4704, %v4700
    %v4741 = vpack.c.b16 %v4709, %v4705
    %v4742 = vpack.c.b16 %v4710, %v4706
    %v4743 = vpack.c.b16 %v4711, %v4707
    %v4744 = vpack.c.b16 %v4712, %v4708
    %4777 = vmatprep.subr.bf16.mxu0 %v4742
    %4778 = vmatpush1.bf16.msra.mxu0 %v4741
    %4779 = vmatprep.subr.bf16.mxu0 %v4738
    %4780 = vmatpush1.bf16.msra.mxu0 %v4737
    %4781 = vmatprep.subr.bf16.mxu0 %v4734
    %4782 = vmatpush1.bf16.msra.mxu0 %v4733
    %4783 = vmatprep.subr.bf16.mxu0 %v4730
    %4784 = vmatpush1.bf16.msra.mxu0 %v4729
    %4785 = vmatprep.subr.bf16.mxu0 %v4726
    %4786 = vmatpush1.bf16.msra.mxu0 %v4725
    %4787 = vmatprep.subr.bf16.mxu0 %v4722
    %4788 = vmatpush1.bf16.msra.mxu0 %v4721
    %4789 = vmatprep.subr.bf16.mxu0 %v4718
    %4790 = vmatpush1.bf16.msra.mxu0 %v4717
    %4791 = vmatprep.subr.bf16.mxu0 %v4714
    %4792 = vmatpush1.bf16.msra.mxu0 %v4713
    %4793 = vmatprep.subr.bf16.mxu0 0
    %4794 = vmatpush2.bf16.msra.mxu0 0
    %4795 = vmatprep.subr.bf16.mxu0 0
    %4796 = vmatpush2.bf16.msra.mxu0 0
    %4797 = vmatprep.subr.bf16.mxu0 0
    %4798 = vmatpush2.bf16.msra.mxu0 0
    %4799 = vmatprep.subr.bf16.mxu0 0
    %4800 = vmatpush2.bf16.msra.mxu0 0
    %4801 = vmatprep.subr.bf16.mxu0 0
    %4802 = vmatpush2.bf16.msra.mxu0 0
    %4803 = vmatprep.subr.bf16.mxu0 0
    %4804 = vmatpush2.bf16.msra.mxu0 0
    %4805 = vmatprep.subr.bf16.mxu0 0
    %4806 = vmatpush2.bf16.msra.mxu0 0
    %4807 = vmatprep.subr.bf16.mxu0 0
    %4808 = vmatpush2.bf16.msra.mxu0 0
    %4809 = vmatprep.mubr.bf16.mxu0 0
    %4810 = vmatmul.mubr.bf16.gmra.mxu0 %v4088
    %v4811 = vpop.f32.mrf.mxu0
    %v4812 = vadd.f32 %v4613, %v4811
    %v4813 = vpop.f32.mrf.mxu0
    %v4814 = vadd.f32 %v4614, %v4813
    %v4815 = vpop.f32.mrf.mxu0
    %v4816 = vpop.f32.mrf.mxu0
    %4817 = vdwg.mxu0
    %4818 = vmatprep.subr.bf16.mxu0 %v4744
    %4819 = vmatpush1.bf16.msra.mxu0 %v4743
    %4820 = vmatprep.subr.bf16.mxu0 %v4740
    %4821 = vmatpush1.bf16.msra.mxu0 %v4739
    %4822 = vmatprep.subr.bf16.mxu0 %v4736
    %4823 = vmatpush1.bf16.msra.mxu0 %v4735
    %4824 = vmatprep.subr.bf16.mxu0 %v4732
    %4825 = vmatpush1.bf16.msra.mxu0 %v4731
    %4826 = vmatprep.subr.bf16.mxu0 %v4728
    %4827 = vmatpush1.bf16.msra.mxu0 %v4727
    %4828 = vmatprep.subr.bf16.mxu0 %v4724
    %4829 = vmatpush1.bf16.msra.mxu0 %v4723
    %4830 = vmatprep.subr.bf16.mxu0 %v4720
    %4831 = vmatpush1.bf16.msra.mxu0 %v4719
    %4832 = vmatprep.subr.bf16.mxu0 %v4716
    %4833 = vmatpush1.bf16.msra.mxu0 %v4715
    %4834 = vmatprep.subr.bf16.mxu0 0
    %4835 = vmatpush2.bf16.msra.mxu0 0
    %4836 = vmatprep.subr.bf16.mxu0 0
    %4837 = vmatpush2.bf16.msra.mxu0 0
    %4838 = vmatprep.subr.bf16.mxu0 0
    %4839 = vmatpush2.bf16.msra.mxu0 0
    %4840 = vmatprep.subr.bf16.mxu0 0
    %4841 = vmatpush2.bf16.msra.mxu0 0
    %4842 = vmatprep.subr.bf16.mxu0 0
    %4843 = vmatpush2.bf16.msra.mxu0 0
    %4844 = vmatprep.subr.bf16.mxu0 0
    %4845 = vmatpush2.bf16.msra.mxu0 0
    %4846 = vmatprep.subr.bf16.mxu0 0
    %4847 = vmatpush2.bf16.msra.mxu0 0
    %4848 = vmatprep.subr.bf16.mxu0 0
    %4849 = vmatpush2.bf16.msra.mxu0 0
    %4850 = vmatprep.mubr.bf16.mxu0 0
    %4851 = vmatmul.mubr.bf16.gmra.mxu0 %v4088
    %v4852 = vpop.f32.mrf.mxu0
    %v4853 = vadd.f32 %v4615, %v4852
    %v4854 = vpop.f32.mrf.mxu0
    %v4855 = vadd.f32 %v4616, %v4854
    %v4856 = vpop.f32.mrf.mxu0
    %v4857 = vpop.f32.mrf.mxu0
    %4858 = vdwg.mxu0
    %v4859 = vxor.u32 %v4812, 2147483648
    %v4860 = vxor.u32 %v4814, 2147483648
    %v4861 = vxor.u32 %v4853, 2147483648
    %v4862 = vmul.f32 %v4859, 1.442695
    %v4863 = vpow.pop %v4862
    %v4864 = vmul.f32 %v4860, 1.442695
    %v4865 = vpow.pop %v4864
    %v4866 = vmul.f32 %v4861, 1.442695
    %v4867 = vpow.pop %v4866
    %v4868 = vadd.f32 %v4863, 1.0
    %v4869 = vadd.f32 %v4865, 1.0
    %v4870 = vadd.f32 %v4867, 1.0
    %v4871 = vrcp.pop %v4868
    %v4872 = vmul.f32 1.0, %v4871
    %v4873 = vrcp.pop %v4869
    %v4874 = vmul.f32 1.0, %v4873
    %v4875 = vrcp.pop %v4870
    %v4876 = vmul.f32 1.0, %v4875
    %v4877 = vtanh.pop %v4855
    %v4878 = vmul.f32 %v4874, %v4085
    %v4879 = vmul.f32 %v4872, %v4877
    %v4880 = vadd.f32 %v4878, %v4879
    %v4881 = vtanh.pop %v4880
    %v4882 = vmul.f32 %v4876, %v4881
    %v4883 = vpack.c.bf16 %v4882, %v4882
    %v4884 = vld [vmem:[#allocation13] sm:$0xff]
    %v4885 = vld [vmem:[#allocation13 + $0x8] sm:$0xff]
    %v4886 = vld [vmem:[#allocation13 + $0x10] sm:$0xff]
    %v4887 = vld [vmem:[#allocation13 + $0x18] sm:$0xff]
    %v4888 = vld [vmem:[#allocation13 + $0x20] sm:$0xff]
    %v4889 = vld [vmem:[#allocation13 + $0x28] sm:$0xff]
    %v4890 = vld [vmem:[#allocation13 + $0x30] sm:$0xff]
    %v4891 = vld [vmem:[#allocation13 + $0x38] sm:$0xff]
    %v4892 = vld [vmem:[#allocation13 + $0x40] sm:$0xff]
    %v4893 = vld [vmem:[#allocation13 + $0x48] sm:$0xff]
    %v4894 = vld [vmem:[#allocation13 + $0x50] sm:$0xff]
    %v4895 = vld [vmem:[#allocation13 + $0x58] sm:$0xff]
    %v4896 = vld [vmem:[#allocation13 + $0x60] sm:$0xff]
    %v4897 = vld [vmem:[#allocation13 + $0x68] sm:$0xff]
    %v4898 = vld [vmem:[#allocation13 + $0x70] sm:$0xff]
    %v4899 = vld [vmem:[#allocation13 + $0x78] sm:$0xff]
    %v4900 = vld [vmem:[#allocation13 + $0x80] sm:$0xff]
    %v4901 = vld [vmem:[#allocation13 + $0x88] sm:$0xff]
    %v4902 = vld [vmem:[#allocation13 + $0x90] sm:$0xff]
    %v4903 = vld [vmem:[#allocation13 + $0x98] sm:$0xff]
    %v4904 = vld [vmem:[#allocation13 + $0xa0] sm:$0xff]
    %v4905 = vld [vmem:[#allocation13 + $0xa8] sm:$0xff]
    %v4906 = vld [vmem:[#allocation13 + $0xb0] sm:$0xff]
    %v4907 = vld [vmem:[#allocation13 + $0xb8] sm:$0xff]
    %v4908 = vld [vmem:[#allocation13 + $0xc0] sm:$0xff]
    %v4909 = vld [vmem:[#allocation13 + $0xc8] sm:$0xff]
    %v4910 = vld [vmem:[#allocation13 + $0xd0] sm:$0xff]
    %v4911 = vld [vmem:[#allocation13 + $0xd8] sm:$0xff]
    %v4912 = vld [vmem:[#allocation13 + $0xe0] sm:$0xff]
    %v4913 = vld [vmem:[#allocation13 + $0xe8] sm:$0xff]
    %v4914 = vld [vmem:[#allocation13 + $0xf0] sm:$0xff]
    %v4915 = vld [vmem:[#allocation13 + $0xf8] sm:$0xff]
    %v4916 = vld [vmem:[#allocation13 + $0x100] sm:$0xff]
    %v4917 = vld [vmem:[#allocation13 + $0x108] sm:$0xff]
    %v4918 = vld [vmem:[#allocation13 + $0x110] sm:$0xff]
    %v4919 = vld [vmem:[#allocation13 + $0x118] sm:$0xff]
    %v4920 = vld [vmem:[#allocation13 + $0x120] sm:$0xff]
    %v4921 = vld [vmem:[#allocation13 + $0x128] sm:$0xff]
    %v4922 = vld [vmem:[#allocation13 + $0x130] sm:$0xff]
    %v4923 = vld [vmem:[#allocation13 + $0x138] sm:$0xff]
    %v4924 = vld [vmem:[#allocation13 + $0x140] sm:$0xff]
    %v4925 = vld [vmem:[#allocation13 + $0x148] sm:$0xff]
    %v4926 = vld [vmem:[#allocation13 + $0x150] sm:$0xff]
    %v4927 = vld [vmem:[#allocation13 + $0x158] sm:$0xff]
    %v4928 = vld [vmem:[#allocation13 + $0x160] sm:$0xff]
    %v4929 = vld [vmem:[#allocation13 + $0x168] sm:$0xff]
    %v4930 = vld [vmem:[#allocation13 + $0x170] sm:$0xff]
    %v4931 = vld [vmem:[#allocation13 + $0x178] sm:$0xff]
    %v4932 = vld [vmem:[#allocation13 + $0x180] sm:$0xff]
    %v4933 = vld [vmem:[#allocation13 + $0x188] sm:$0xff]
    %v4934 = vld [vmem:[#allocation13 + $0x190] sm:$0xff]
    %v4935 = vld [vmem:[#allocation13 + $0x198] sm:$0xff]
    %v4936 = vld [vmem:[#allocation13 + $0x1a0] sm:$0xff]
    %v4937 = vld [vmem:[#allocation13 + $0x1a8] sm:$0xff]
    %v4938 = vld [vmem:[#allocation13 + $0x1b0] sm:$0xff]
    %v4939 = vld [vmem:[#allocation13 + $0x1b8] sm:$0xff]
    %v4940 = vld [vmem:[#allocation13 + $0x1c0] sm:$0xff]
    %v4941 = vld [vmem:[#allocation13 + $0x1c8] sm:$0xff]
    %v4942 = vld [vmem:[#allocation13 + $0x1d0] sm:$0xff]
    %v4943 = vld [vmem:[#allocation13 + $0x1d8] sm:$0xff]
    %v4944 = vld [vmem:[#allocation13 + $0x1e0] sm:$0xff]
    %v4945 = vld [vmem:[#allocation13 + $0x1e8] sm:$0xff]
    %v4946 = vld [vmem:[#allocation13 + $0x1f0] sm:$0xff]
    %v4947 = vld [vmem:[#allocation13 + $0x1f8] sm:$0xff]
    %v5012 = vunpack.c.l.b16 %v4884
    %v5013 = vunpack.c.h.b16 %v4884
    %v5014 = vunpack.c.l.b16 %v4885
    %v5015 = vunpack.c.h.b16 %v4885
    %v5016 = vunpack.c.l.b16 %v4886
    %v5017 = vunpack.c.h.b16 %v4886
    %v5018 = vunpack.c.l.b16 %v4887
    %v5019 = vunpack.c.h.b16 %v4887
    %v5020 = vunpack.c.l.b16 %v4888
    %v5021 = vunpack.c.h.b16 %v4888
    %v5022 = vunpack.c.l.b16 %v4889
    %v5023 = vunpack.c.h.b16 %v4889
    %v5024 = vunpack.c.l.b16 %v4890
    %v5025 = vunpack.c.h.b16 %v4890
    %v5026 = vunpack.c.l.b16 %v4891
    %v5027 = vunpack.c.h.b16 %v4891
    %v5028 = vunpack.c.l.b16 %v4892
    %v5029 = vunpack.c.h.b16 %v4892
    %v5030 = vunpack.c.l.b16 %v4893
    %v5031 = vunpack.c.h.b16 %v4893
    %v5032 = vunpack.c.l.b16 %v4894
    %v5033 = vunpack.c.h.b16 %v4894
    %v5034 = vunpack.c.l.b16 %v4895
    %v5035 = vunpack.c.h.b16 %v4895
    %v5036 = vunpack.c.l.b16 %v4896
    %v5037 = vunpack.c.h.b16 %v4896
    %v5038 = vunpack.c.l.b16 %v4897
    %v5039 = vunpack.c.h.b16 %v4897
    %v5040 = vunpack.c.l.b16 %v4898
    %v5041 = vunpack.c.h.b16 %v4898
    %v5042 = vunpack.c.l.b16 %v4899
    %v5043 = vunpack.c.h.b16 %v4899
    %v5044 = vunpack.c.l.b16 %v4900
    %v5045 = vunpack.c.h.b16 %v4900
    %v5046 = vunpack.c.l.b16 %v4901
    %v5047 = vunpack.c.h.b16 %v4901
    %v5048 = vunpack.c.l.b16 %v4902
    %v5049 = vunpack.c.h.b16 %v4902
    %v5050 = vunpack.c.l.b16 %v4903
    %v5051 = vunpack.c.h.b16 %v4903
    %v5052 = vunpack.c.l.b16 %v4904
    %v5053 = vunpack.c.h.b16 %v4904
    %v5054 = vunpack.c.l.b16 %v4905
    %v5055 = vunpack.c.h.b16 %v4905
    %v5056 = vunpack.c.l.b16 %v4906
    %v5057 = vunpack.c.h.b16 %v4906
    %v5058 = vunpack.c.l.b16 %v4907
    %v5059 = vunpack.c.h.b16 %v4907
    %v5060 = vunpack.c.l.b16 %v4908
    %v5061 = vunpack.c.h.b16 %v4908
    %v5062 = vunpack.c.l.b16 %v4909
    %v5063 = vunpack.c.h.b16 %v4909
    %v5064 = vunpack.c.l.b16 %v4910
    %v5065 = vunpack.c.h.b16 %v4910
    %v5066 = vunpack.c.l.b16 %v4911
    %v5067 = vunpack.c.h.b16 %v4911
    %v5068 = vunpack.c.l.b16 %v4912
    %v5069 = vunpack.c.h.b16 %v4912
    %v5070 = vunpack.c.l.b16 %v4913
    %v5071 = vunpack.c.h.b16 %v4913
    %v5072 = vunpack.c.l.b16 %v4914
    %v5073 = vunpack.c.h.b16 %v4914
    %v5074 = vunpack.c.l.b16 %v4915
    %v5075 = vunpack.c.h.b16 %v4915
    %v5076 = vunpack.c.l.b16 %v4916
    %v5077 = vunpack.c.h.b16 %v4916
    %v5078 = vunpack.c.l.b16 %v4917
    %v5079 = vunpack.c.h.b16 %v4917
    %v5080 = vunpack.c.l.b16 %v4918
    %v5081 = vunpack.c.h.b16 %v4918
    %v5082 = vunpack.c.l.b16 %v4919
    %v5083 = vunpack.c.h.b16 %v4919
    %v5084 = vunpack.c.l.b16 %v4920
    %v5085 = vunpack.c.h.b16 %v4920
    %v5086 = vunpack.c.l.b16 %v4921
    %v5087 = vunpack.c.h.b16 %v4921
    %v5088 = vunpack.c.l.b16 %v4922
    %v5089 = vunpack.c.h.b16 %v4922
    %v5090 = vunpack.c.l.b16 %v4923
    %v5091 = vunpack.c.h.b16 %v4923
    %v5092 = vunpack.c.l.b16 %v4924
    %v5093 = vunpack.c.h.b16 %v4924
    %v5094 = vunpack.c.l.b16 %v4925
    %v5095 = vunpack.c.h.b16 %v4925
    %v5096 = vunpack.c.l.b16 %v4926
    %v5097 = vunpack.c.h.b16 %v4926
    %v5098 = vunpack.c.l.b16 %v4927
    %v5099 = vunpack.c.h.b16 %v4927
    %v5100 = vunpack.c.l.b16 %v4928
    %v5101 = vunpack.c.h.b16 %v4928
    %v5102 = vunpack.c.l.b16 %v4929
    %v5103 = vunpack.c.h.b16 %v4929
    %v5104 = vunpack.c.l.b16 %v4930
    %v5105 = vunpack.c.h.b16 %v4930
    %v5106 = vunpack.c.l.b16 %v4931
    %v5107 = vunpack.c.h.b16 %v4931
    %v5108 = vunpack.c.l.b16 %v4932
    %v5109 = vunpack.c.h.b16 %v4932
    %v5110 = vunpack.c.l.b16 %v4933
    %v5111 = vunpack.c.h.b16 %v4933
    %v5112 = vunpack.c.l.b16 %v4934
    %v5113 = vunpack.c.h.b16 %v4934
    %v5114 = vunpack.c.l.b16 %v4935
    %v5115 = vunpack.c.h.b16 %v4935
    %v5116 = vunpack.c.l.b16 %v4936
    %v5117 = vunpack.c.h.b16 %v4936
    %v5118 = vunpack.c.l.b16 %v4937
    %v5119 = vunpack.c.h.b16 %v4937
    %v5120 = vunpack.c.l.b16 %v4938
    %v5121 = vunpack.c.h.b16 %v4938
    %v5122 = vunpack.c.l.b16 %v4939
    %v5123 = vunpack.c.h.b16 %v4939
    %v5124 = vunpack.c.l.b16 %v4940
    %v5125 = vunpack.c.h.b16 %v4940
    %v5126 = vunpack.c.l.b16 %v4941
    %v5127 = vunpack.c.h.b16 %v4941
    %v5128 = vunpack.c.l.b16 %v4942
    %v5129 = vunpack.c.h.b16 %v4942
    %v5130 = vunpack.c.l.b16 %v4943
    %v5131 = vunpack.c.h.b16 %v4943
    %v5132 = vunpack.c.l.b16 %v4944
    %v5133 = vunpack.c.h.b16 %v4944
    %v5134 = vunpack.c.l.b16 %v4945
    %v5135 = vunpack.c.h.b16 %v4945
    %v5136 = vunpack.c.l.b16 %v4946
    %v5137 = vunpack.c.h.b16 %v4946
    %v5138 = vunpack.c.l.b16 %v4947
    %v5139 = vunpack.c.h.b16 %v4947
    %v5140 = vpack.c.b16 %v5016, %v5012
    %v5141 = vpack.c.b16 %v5017, %v5013
    %v5142 = vpack.c.b16 %v5018, %v5014
    %v5143 = vpack.c.b16 %v5019, %v5015
    %v5144 = vpack.c.b16 %v5024, %v5020
    %v5145 = vpack.c.b16 %v5025, %v5021
    %v5146 = vpack.c.b16 %v5026, %v5022
    %v5147 = vpack.c.b16 %v5027, %v5023
    %v5148 = vpack.c.b16 %v5032, %v5028
    %v5149 = vpack.c.b16 %v5033, %v5029
    %v5150 = vpack.c.b16 %v5034, %v5030
    %v5151 = vpack.c.b16 %v5035, %v5031
    %v5152 = vpack.c.b16 %v5040, %v5036
    %v5153 = vpack.c.b16 %v5041, %v5037
    %v5154 = vpack.c.b16 %v5042, %v5038
    %v5155 = vpack.c.b16 %v5043, %v5039
    %v5156 = vpack.c.b16 %v5048, %v5044
    %v5157 = vpack.c.b16 %v5049, %v5045
    %v5158 = vpack.c.b16 %v5050, %v5046
    %v5159 = vpack.c.b16 %v5051, %v5047
    %v5160 = vpack.c.b16 %v5056, %v5052
    %v5161 = vpack.c.b16 %v5057, %v5053
    %v5162 = vpack.c.b16 %v5058, %v5054
    %v5163 = vpack.c.b16 %v5059, %v5055
    %v5164 = vpack.c.b16 %v5064, %v5060
    %v5165 = vpack.c.b16 %v5065, %v5061
    %v5166 = vpack.c.b16 %v5066, %v5062
    %v5167 = vpack.c.b16 %v5067, %v5063
    %v5168 = vpack.c.b16 %v5072, %v5068
    %v5169 = vpack.c.b16 %v5073, %v5069
    %v5170 = vpack.c.b16 %v5074, %v5070
    %v5171 = vpack.c.b16 %v5075, %v5071
    %v5172 = vpack.c.b16 %v5080, %v5076
    %v5173 = vpack.c.b16 %v5081, %v5077
    %v5174 = vpack.c.b16 %v5082, %v5078
    %v5175 = vpack.c.b16 %v5083, %v5079
    %v5176 = vpack.c.b16 %v5088, %v5084
    %v5177 = vpack.c.b16 %v5089, %v5085
    %v5178 = vpack.c.b16 %v5090, %v5086
    %v5179 = vpack.c.b16 %v5091, %v5087
    %v5180 = vpack.c.b16 %v5096, %v5092
    %v5181 = vpack.c.b16 %v5097, %v5093
    %v5182 = vpack.c.b16 %v5098, %v5094
    %v5183 = vpack.c.b16 %v5099, %v5095
    %v5184 = vpack.c.b16 %v5104, %v5100
    %v5185 = vpack.c.b16 %v5105, %v5101
    %v5186 = vpack.c.b16 %v5106, %v5102
    %v5187 = vpack.c.b16 %v5107, %v5103
    %v5188 = vpack.c.b16 %v5112, %v5108
    %v5189 = vpack.c.b16 %v5113, %v5109
    %v5190 = vpack.c.b16 %v5114, %v5110
    %v5191 = vpack.c.b16 %v5115, %v5111
    %v5192 = vpack.c.b16 %v5120, %v5116
    %v5193 = vpack.c.b16 %v5121, %v5117
    %v5194 = vpack.c.b16 %v5122, %v5118
    %v5195 = vpack.c.b16 %v5123, %v5119
    %v5196 = vpack.c.b16 %v5128, %v5124
    %v5197 = vpack.c.b16 %v5129, %v5125
    %v5198 = vpack.c.b16 %v5130, %v5126
    %v5199 = vpack.c.b16 %v5131, %v5127
    %v5200 = vpack.c.b16 %v5136, %v5132
    %v5201 = vpack.c.b16 %v5137, %v5133
    %v5202 = vpack.c.b16 %v5138, %v5134
    %v5203 = vpack.c.b16 %v5139, %v5135
    %5268 = vmatprep.subr.bf16.mxu0 %v5169
    %5269 = vmatpush1.bf16.msra.mxu0 %v5168
    %5270 = vmatprep.subr.bf16.mxu0 %v5165
    %5271 = vmatpush1.bf16.msra.mxu0 %v5164
    %5272 = vmatprep.subr.bf16.mxu0 %v5161
    %5273 = vmatpush1.bf16.msra.mxu0 %v5160
    %5274 = vmatprep.subr.bf16.mxu0 %v5157
    %5275 = vmatpush1.bf16.msra.mxu0 %v5156
    %5276 = vmatprep.subr.bf16.mxu0 %v5153
    %5277 = vmatpush1.bf16.msra.mxu0 %v5152
    %5278 = vmatprep.subr.bf16.mxu0 %v5149
    %5279 = vmatpush1.bf16.msra.mxu0 %v5148
    %5280 = vmatprep.subr.bf16.mxu0 %v5145
    %5281 = vmatpush1.bf16.msra.mxu0 %v5144
    %5282 = vmatprep.subr.bf16.mxu0 %v5141
    %5283 = vmatpush1.bf16.msra.mxu0 %v5140
    %5284 = vmatprep.subr.bf16.mxu0 %v5201
    %5285 = vmatpush2.bf16.msra.mxu0 %v5200
    %5286 = vmatprep.subr.bf16.mxu0 %v5197
    %5287 = vmatpush2.bf16.msra.mxu0 %v5196
    %5288 = vmatprep.subr.bf16.mxu0 %v5193
    %5289 = vmatpush2.bf16.msra.mxu0 %v5192
    %5290 = vmatprep.subr.bf16.mxu0 %v5189
    %5291 = vmatpush2.bf16.msra.mxu0 %v5188
    %5292 = vmatprep.subr.bf16.mxu0 %v5185
    %5293 = vmatpush2.bf16.msra.mxu0 %v5184
    %5294 = vmatprep.subr.bf16.mxu0 %v5181
    %5295 = vmatpush2.bf16.msra.mxu0 %v5180
    %5296 = vmatprep.subr.bf16.mxu0 %v5177
    %5297 = vmatpush2.bf16.msra.mxu0 %v5176
    %5298 = vmatprep.subr.bf16.mxu0 %v5173
    %5299 = vmatpush2.bf16.msra.mxu0 %v5172
    %5300 = vmatprep.mubr.bf16.mxu0 %v4579
    %5301 = vmatmul.mubr.bf16.gmra.mxu0 %v4883
    %v5302 = vpop.f32.mrf.mxu0
    %v5303 = vadd.f32 %v589, %v5302
    %v5304 = vpop.f32.mrf.mxu0
    %v5305 = vadd.f32 %v593, %v5304
    %v5306 = vpop.f32.mrf.mxu0
    %v5307 = vpop.f32.mrf.mxu0
    %5308 = vdwg.mxu0
    %5309 = vmatprep.subr.bf16.mxu0 %v5171
    %5310 = vmatpush1.bf16.msra.mxu0 %v5170
    %5311 = vmatprep.subr.bf16.mxu0 %v5167
    %5312 = vmatpush1.bf16.msra.mxu0 %v5166
    %5313 = vmatprep.subr.bf16.mxu0 %v5163
    %5314 = vmatpush1.bf16.msra.mxu0 %v5162
    %5315 = vmatprep.subr.bf16.mxu0 %v5159
    %5316 = vmatpush1.bf16.msra.mxu0 %v5158
    %5317 = vmatprep.subr.bf16.mxu0 %v5155
    %5318 = vmatpush1.bf16.msra.mxu0 %v5154
    %5319 = vmatprep.subr.bf16.mxu0 %v5151
    %5320 = vmatpush1.bf16.msra.mxu0 %v5150
    %5321 = vmatprep.subr.bf16.mxu0 %v5147
    %5322 = vmatpush1.bf16.msra.mxu0 %v5146
    %5323 = vmatprep.subr.bf16.mxu0 %v5143
    %5324 = vmatpush1.bf16.msra.mxu0 %v5142
    %5325 = vmatprep.subr.bf16.mxu0 %v5203
    %5326 = vmatpush2.bf16.msra.mxu0 %v5202
    %5327 = vmatprep.subr.bf16.mxu0 %v5199
    %5328 = vmatpush2.bf16.msra.mxu0 %v5198
    %5329 = vmatprep.subr.bf16.mxu0 %v5195
    %5330 = vmatpush2.bf16.msra.mxu0 %v5194
    %5331 = vmatprep.subr.bf16.mxu0 %v5191
    %5332 = vmatpush2.bf16.msra.mxu0 %v5190
    %5333 = vmatprep.subr.bf16.mxu0 %v5187
    %5334 = vmatpush2.bf16.msra.mxu0 %v5186
    %5335 = vmatprep.subr.bf16.mxu0 %v5183
    %5336 = vmatpush2.bf16.msra.mxu0 %v5182
    %5337 = vmatprep.subr.bf16.mxu0 %v5179
    %5338 = vmatpush2.bf16.msra.mxu0 %v5178
    %5339 = vmatprep.subr.bf16.mxu0 %v5175
    %5340 = vmatpush2.bf16.msra.mxu0 %v5174
    %5341 = vmatprep.mubr.bf16.mxu0 %v4579
    %5342 = vmatmul.mubr.bf16.gmra.mxu0 %v4883
    %v5343 = vpop.f32.mrf.mxu0
    %v5344 = vadd.f32 %v597, %v5343
    %v5345 = vpop.f32.mrf.mxu0
    %v5346 = vadd.f32 %v601, %v5345
    %v5347 = vpop.f32.mrf.mxu0
    %v5348 = vpop.f32.mrf.mxu0
    %5349 = vdwg.mxu0
    %v5350 = vxor.u32 %v5303, 2147483648
    %v5351 = vxor.u32 %v5305, 2147483648
    %v5352 = vxor.u32 %v5344, 2147483648
    %v5353 = vmul.f32 %v5350, 1.442695
    %v5354 = vpow.pop %v5353
    %v5355 = vmul.f32 %v5351, 1.442695
    %v5356 = vpow.pop %v5355
    %v5357 = vmul.f32 %v5352, 1.442695
    %v5358 = vpow.pop %v5357
    %v5359 = vadd.f32 %v5354, 1.0
    %v5360 = vadd.f32 %v5356, 1.0
    %v5361 = vadd.f32 %v5358, 1.0
    %v5362 = vrcp.pop %v5359
    %v5363 = vmul.f32 1.0, %v5362
    %v5364 = vrcp.pop %v5360
    %v5365 = vmul.f32 1.0, %v5364
    %v5366 = vrcp.pop %v5361
    %v5367 = vmul.f32 1.0, %v5366
    %v5368 = vtanh.pop %v5346
    %v5369 = vmul.f32 %v5365, %v4576
    %v5370 = vmul.f32 %v5363, %v5368
    %v5371 = vadd.f32 %v5369, %v5370
    %v5372 = vtanh.pop %v5371
    %v5373 = vmul.f32 %v5367, %v5372
    %v5374 = vpack.c.bf16 %v5373, %v5373
    %5375 = vst [vmem:[#allocation4 + $0x14] sm:$0xf] %v5374
    %v5376 = vld [vmem:[#allocation12] sm:$0xff]
    %v5377 = vld [vmem:[#allocation12 + $0x8] sm:$0xff]
    %v5378 = vld [vmem:[#allocation12 + $0x10] sm:$0xff]
    %v5379 = vld [vmem:[#allocation12 + $0x18] sm:$0xff]
    %v5380 = vld [vmem:[#allocation12 + $0x20] sm:$0xff]
    %v5381 = vld [vmem:[#allocation12 + $0x28] sm:$0xff]
    %v5382 = vld [vmem:[#allocation12 + $0x30] sm:$0xff]
    %v5383 = vld [vmem:[#allocation12 + $0x38] sm:$0xff]
    %v5384 = vld [vmem:[#allocation12 + $0x40] sm:$0xff]
    %v5385 = vld [vmem:[#allocation12 + $0x48] sm:$0xff]
    %v5386 = vld [vmem:[#allocation12 + $0x50] sm:$0xff]
    %v5387 = vld [vmem:[#allocation12 + $0x58] sm:$0xff]
    %v5388 = vld [vmem:[#allocation12 + $0x60] sm:$0xff]
    %v5389 = vld [vmem:[#allocation12 + $0x68] sm:$0xff]
    %v5390 = vld [vmem:[#allocation12 + $0x70] sm:$0xff]
    %v5391 = vld [vmem:[#allocation12 + $0x78] sm:$0xff]
    %v5392 = vld [vmem:[#allocation12 + $0x80] sm:$0xff]
    %v5393 = vld [vmem:[#allocation12 + $0x88] sm:$0xff]
    %v5394 = vld [vmem:[#allocation12 + $0x90] sm:$0xff]
    %v5395 = vld [vmem:[#allocation12 + $0x98] sm:$0xff]
    %v5396 = vld [vmem:[#allocation12 + $0xa0] sm:$0xff]
    %v5397 = vld [vmem:[#allocation12 + $0xa8] sm:$0xff]
    %v5398 = vld [vmem:[#allocation12 + $0xb0] sm:$0xff]
    %v5399 = vld [vmem:[#allocation12 + $0xb8] sm:$0xff]
    %v5400 = vld [vmem:[#allocation12 + $0xc0] sm:$0xff]
    %v5401 = vld [vmem:[#allocation12 + $0xc8] sm:$0xff]
    %v5402 = vld [vmem:[#allocation12 + $0xd0] sm:$0xff]
    %v5403 = vld [vmem:[#allocation12 + $0xd8] sm:$0xff]
    %v5404 = vld [vmem:[#allocation12 + $0xe0] sm:$0xff]
    %v5405 = vld [vmem:[#allocation12 + $0xe8] sm:$0xff]
    %v5406 = vld [vmem:[#allocation12 + $0xf0] sm:$0xff]
    %v5407 = vld [vmem:[#allocation12 + $0xf8] sm:$0xff]
    %v5408 = vld [vmem:[#allocation3 + $0xc0] sm:$0xff]
    %v5409 = vld [vmem:[#allocation3 + $0xc8] sm:$0xff]
    %v5410 = vld [vmem:[#allocation3 + $0xd0] sm:$0xff]
    %v5411 = vld [vmem:[#allocation3 + $0xd8] sm:$0xff]
    %v5444 = vunpack.c.l.b16 %v5376
    %v5445 = vunpack.c.h.b16 %v5376
    %v5446 = vunpack.c.l.b16 %v5377
    %v5447 = vunpack.c.h.b16 %v5377
    %v5448 = vunpack.c.l.b16 %v5378
    %v5449 = vunpack.c.h.b16 %v5378
    %v5450 = vunpack.c.l.b16 %v5379
    %v5451 = vunpack.c.h.b16 %v5379
    %v5452 = vunpack.c.l.b16 %v5380
    %v5453 = vunpack.c.h.b16 %v5380
    %v5454 = vunpack.c.l.b16 %v5381
    %v5455 = vunpack.c.h.b16 %v5381
    %v5456 = vunpack.c.l.b16 %v5382
    %v5457 = vunpack.c.h.b16 %v5382
    %v5458 = vunpack.c.l.b16 %v5383
    %v5459 = vunpack.c.h.b16 %v5383
    %v5460 = vunpack.c.l.b16 %v5384
    %v5461 = vunpack.c.h.b16 %v5384
    %v5462 = vunpack.c.l.b16 %v5385
    %v5463 = vunpack.c.h.b16 %v5385
    %v5464 = vunpack.c.l.b16 %v5386
    %v5465 = vunpack.c.h.b16 %v5386
    %v5466 = vunpack.c.l.b16 %v5387
    %v5467 = vunpack.c.h.b16 %v5387
    %v5468 = vunpack.c.l.b16 %v5388
    %v5469 = vunpack.c.h.b16 %v5388
    %v5470 = vunpack.c.l.b16 %v5389
    %v5471 = vunpack.c.h.b16 %v5389
    %v5472 = vunpack.c.l.b16 %v5390
    %v5473 = vunpack.c.h.b16 %v5390
    %v5474 = vunpack.c.l.b16 %v5391
    %v5475 = vunpack.c.h.b16 %v5391
    %v5476 = vunpack.c.l.b16 %v5392
    %v5477 = vunpack.c.h.b16 %v5392
    %v5478 = vunpack.c.l.b16 %v5393
    %v5479 = vunpack.c.h.b16 %v5393
    %v5480 = vunpack.c.l.b16 %v5394
    %v5481 = vunpack.c.h.b16 %v5394
    %v5482 = vunpack.c.l.b16 %v5395
    %v5483 = vunpack.c.h.b16 %v5395
    %v5484 = vunpack.c.l.b16 %v5396
    %v5485 = vunpack.c.h.b16 %v5396
    %v5486 = vunpack.c.l.b16 %v5397
    %v5487 = vunpack.c.h.b16 %v5397
    %v5488 = vunpack.c.l.b16 %v5398
    %v5489 = vunpack.c.h.b16 %v5398
    %v5490 = vunpack.c.l.b16 %v5399
    %v5491 = vunpack.c.h.b16 %v5399
    %v5492 = vunpack.c.l.b16 %v5400
    %v5493 = vunpack.c.h.b16 %v5400
    %v5494 = vunpack.c.l.b16 %v5401
    %v5495 = vunpack.c.h.b16 %v5401
    %v5496 = vunpack.c.l.b16 %v5402
    %v5497 = vunpack.c.h.b16 %v5402
    %v5498 = vunpack.c.l.b16 %v5403
    %v5499 = vunpack.c.h.b16 %v5403
    %v5500 = vunpack.c.l.b16 %v5404
    %v5501 = vunpack.c.h.b16 %v5404
    %v5502 = vunpack.c.l.b16 %v5405
    %v5503 = vunpack.c.h.b16 %v5405
    %v5504 = vunpack.c.l.b16 %v5406
    %v5505 = vunpack.c.h.b16 %v5406
    %v5506 = vunpack.c.l.b16 %v5407
    %v5507 = vunpack.c.h.b16 %v5407
    %v5508 = vpack.c.b16 %v5448, %v5444
    %v5509 = vpack.c.b16 %v5449, %v5445
    %v5510 = vpack.c.b16 %v5450, %v5446
    %v5511 = vpack.c.b16 %v5451, %v5447
    %v5512 = vpack.c.b16 %v5456, %v5452
    %v5513 = vpack.c.b16 %v5457, %v5453
    %v5514 = vpack.c.b16 %v5458, %v5454
    %v5515 = vpack.c.b16 %v5459, %v5455
    %v5516 = vpack.c.b16 %v5464, %v5460
    %v5517 = vpack.c.b16 %v5465, %v5461
    %v5518 = vpack.c.b16 %v5466, %v5462
    %v5519 = vpack.c.b16 %v5467, %v5463
    %v5520 = vpack.c.b16 %v5472, %v5468
    %v5521 = vpack.c.b16 %v5473, %v5469
    %v5522 = vpack.c.b16 %v5474, %v5470
    %v5523 = vpack.c.b16 %v5475, %v5471
    %v5524 = vpack.c.b16 %v5480, %v5476
    %v5525 = vpack.c.b16 %v5481, %v5477
    %v5526 = vpack.c.b16 %v5482, %v5478
    %v5527 = vpack.c.b16 %v5483, %v5479
    %v5528 = vpack.c.b16 %v5488, %v5484
    %v5529 = vpack.c.b16 %v5489, %v5485
    %v5530 = vpack.c.b16 %v5490, %v5486
    %v5531 = vpack.c.b16 %v5491, %v5487
    %v5532 = vpack.c.b16 %v5496, %v5492
    %v5533 = vpack.c.b16 %v5497, %v5493
    %v5534 = vpack.c.b16 %v5498, %v5494
    %v5535 = vpack.c.b16 %v5499, %v5495
    %v5536 = vpack.c.b16 %v5504, %v5500
    %v5537 = vpack.c.b16 %v5505, %v5501
    %v5538 = vpack.c.b16 %v5506, %v5502
    %v5539 = vpack.c.b16 %v5507, %v5503
    %5572 = vmatprep.subr.bf16.mxu0 %v5537
    %5573 = vmatpush1.bf16.msra.mxu0 %v5536
    %5574 = vmatprep.subr.bf16.mxu0 %v5533
    %5575 = vmatpush1.bf16.msra.mxu0 %v5532
    %5576 = vmatprep.subr.bf16.mxu0 %v5529
    %5577 = vmatpush1.bf16.msra.mxu0 %v5528
    %5578 = vmatprep.subr.bf16.mxu0 %v5525
    %5579 = vmatpush1.bf16.msra.mxu0 %v5524
    %5580 = vmatprep.subr.bf16.mxu0 %v5521
    %5581 = vmatpush1.bf16.msra.mxu0 %v5520
    %5582 = vmatprep.subr.bf16.mxu0 %v5517
    %5583 = vmatpush1.bf16.msra.mxu0 %v5516
    %5584 = vmatprep.subr.bf16.mxu0 %v5513
    %5585 = vmatpush1.bf16.msra.mxu0 %v5512
    %5586 = vmatprep.subr.bf16.mxu0 %v5509
    %5587 = vmatpush1.bf16.msra.mxu0 %v5508
    %5588 = vmatprep.subr.bf16.mxu0 0
    %5589 = vmatpush2.bf16.msra.mxu0 0
    %5590 = vmatprep.subr.bf16.mxu0 0
    %5591 = vmatpush2.bf16.msra.mxu0 0
    %5592 = vmatprep.subr.bf16.mxu0 0
    %5593 = vmatpush2.bf16.msra.mxu0 0
    %5594 = vmatprep.subr.bf16.mxu0 0
    %5595 = vmatpush2.bf16.msra.mxu0 0
    %5596 = vmatprep.subr.bf16.mxu0 0
    %5597 = vmatpush2.bf16.msra.mxu0 0
    %5598 = vmatprep.subr.bf16.mxu0 0
    %5599 = vmatpush2.bf16.msra.mxu0 0
    %5600 = vmatprep.subr.bf16.mxu0 0
    %5601 = vmatpush2.bf16.msra.mxu0 0
    %5602 = vmatprep.subr.bf16.mxu0 0
    %5603 = vmatpush2.bf16.msra.mxu0 0
    %5604 = vmatprep.mubr.bf16.mxu0 0
    %5605 = vmatmul.mubr.bf16.gmra.mxu0 %v4883
    %v5606 = vpop.f32.mrf.mxu0
    %v5607 = vadd.f32 %v5408, %v5606
    %v5608 = vpop.f32.mrf.mxu0
    %v5609 = vadd.f32 %v5409, %v5608
    %v5610 = vpop.f32.mrf.mxu0
    %v5611 = vpop.f32.mrf.mxu0
    %5612 = vdwg.mxu0
    %5613 = vmatprep.subr.bf16.mxu0 %v5539
    %5614 = vmatpush1.bf16.msra.mxu0 %v5538
    %5615 = vmatprep.subr.bf16.mxu0 %v5535
    %5616 = vmatpush1.bf16.msra.mxu0 %v5534
    %5617 = vmatprep.subr.bf16.mxu0 %v5531
    %5618 = vmatpush1.bf16.msra.mxu0 %v5530
    %5619 = vmatprep.subr.bf16.mxu0 %v5527
    %5620 = vmatpush1.bf16.msra.mxu0 %v5526
    %5621 = vmatprep.subr.bf16.mxu0 %v5523
    %5622 = vmatpush1.bf16.msra.mxu0 %v5522
    %5623 = vmatprep.subr.bf16.mxu0 %v5519
    %5624 = vmatpush1.bf16.msra.mxu0 %v5518
    %5625 = vmatprep.subr.bf16.mxu0 %v5515
    %5626 = vmatpush1.bf16.msra.mxu0 %v5514
    %5627 = vmatprep.subr.bf16.mxu0 %v5511
    %5628 = vmatpush1.bf16.msra.mxu0 %v5510
    %5629 = vmatprep.subr.bf16.mxu0 0
    %5630 = vmatpush2.bf16.msra.mxu0 0
    %5631 = vmatprep.subr.bf16.mxu0 0
    %5632 = vmatpush2.bf16.msra.mxu0 0
    %5633 = vmatprep.subr.bf16.mxu0 0
    %5634 = vmatpush2.bf16.msra.mxu0 0
    %5635 = vmatprep.subr.bf16.mxu0 0
    %5636 = vmatpush2.bf16.msra.mxu0 0
    %5637 = vmatprep.subr.bf16.mxu0 0
    %5638 = vmatpush2.bf16.msra.mxu0 0
    %5639 = vmatprep.subr.bf16.mxu0 0
    %5640 = vmatpush2.bf16.msra.mxu0 0
    %5641 = vmatprep.subr.bf16.mxu0 0
    %5642 = vmatpush2.bf16.msra.mxu0 0
    %5643 = vmatprep.subr.bf16.mxu0 0
    %5644 = vmatpush2.bf16.msra.mxu0 0
    %5645 = vmatprep.mubr.bf16.mxu0 0
    %5646 = vmatmul.mubr.bf16.gmra.mxu0 %v4883
    %v5647 = vpop.f32.mrf.mxu0
    %v5648 = vadd.f32 %v5410, %v5647
    %v5649 = vpop.f32.mrf.mxu0
    %v5650 = vadd.f32 %v5411, %v5649
    %v5651 = vpop.f32.mrf.mxu0
    %v5652 = vpop.f32.mrf.mxu0
    %5653 = vdwg.mxu0
    %v5654 = vxor.u32 %v5607, 2147483648
    %v5655 = vxor.u32 %v5609, 2147483648
    %v5656 = vxor.u32 %v5648, 2147483648
    %v5657 = vmul.f32 %v5654, 1.442695
    %v5658 = vpow.pop %v5657
    %v5659 = vmul.f32 %v5655, 1.442695
    %v5660 = vpow.pop %v5659
    %v5661 = vmul.f32 %v5656, 1.442695
    %v5662 = vpow.pop %v5661
    %v5663 = vadd.f32 %v5658, 1.0
    %v5664 = vadd.f32 %v5660, 1.0
    %v5665 = vadd.f32 %v5662, 1.0
    %v5666 = vrcp.pop %v5663
    %v5667 = vmul.f32 1.0, %v5666
    %v5668 = vrcp.pop %v5664
    %v5669 = vmul.f32 1.0, %v5668
    %v5670 = vrcp.pop %v5665
    %v5671 = vmul.f32 1.0, %v5670
    %v5672 = vtanh.pop %v5650
    %v5673 = vmul.f32 %v5669, %v4880
    %v5674 = vmul.f32 %v5667, %v5672
    %v5675 = vadd.f32 %v5673, %v5674
    %v5676 = vtanh.pop %v5675
    %v5677 = vmul.f32 %v5671, %v5676
    %v5678 = vpack.c.bf16 %v5677, %v5677
    %v5679 = vld [vmem:[#allocation13] sm:$0xff]
    %v5680 = vld [vmem:[#allocation13 + $0x8] sm:$0xff]
    %v5681 = vld [vmem:[#allocation13 + $0x10] sm:$0xff]
    %v5682 = vld [vmem:[#allocation13 + $0x18] sm:$0xff]
    %v5683 = vld [vmem:[#allocation13 + $0x20] sm:$0xff]
    %v5684 = vld [vmem:[#allocation13 + $0x28] sm:$0xff]
    %v5685 = vld [vmem:[#allocation13 + $0x30] sm:$0xff]
    %v5686 = vld [vmem:[#allocation13 + $0x38] sm:$0xff]
    %v5687 = vld [vmem:[#allocation13 + $0x40] sm:$0xff]
    %v5688 = vld [vmem:[#allocation13 + $0x48] sm:$0xff]
    %v5689 = vld [vmem:[#allocation13 + $0x50] sm:$0xff]
    %v5690 = vld [vmem:[#allocation13 + $0x58] sm:$0xff]
    %v5691 = vld [vmem:[#allocation13 + $0x60] sm:$0xff]
    %v5692 = vld [vmem:[#allocation13 + $0x68] sm:$0xff]
    %v5693 = vld [vmem:[#allocation13 + $0x70] sm:$0xff]
    %v5694 = vld [vmem:[#allocation13 + $0x78] sm:$0xff]
    %v5695 = vld [vmem:[#allocation13 + $0x80] sm:$0xff]
    %v5696 = vld [vmem:[#allocation13 + $0x88] sm:$0xff]
    %v5697 = vld [vmem:[#allocation13 + $0x90] sm:$0xff]
    %v5698 = vld [vmem:[#allocation13 + $0x98] sm:$0xff]
    %v5699 = vld [vmem:[#allocation13 + $0xa0] sm:$0xff]
    %v5700 = vld [vmem:[#allocation13 + $0xa8] sm:$0xff]
    %v5701 = vld [vmem:[#allocation13 + $0xb0] sm:$0xff]
    %v5702 = vld [vmem:[#allocation13 + $0xb8] sm:$0xff]
    %v5703 = vld [vmem:[#allocation13 + $0xc0] sm:$0xff]
    %v5704 = vld [vmem:[#allocation13 + $0xc8] sm:$0xff]
    %v5705 = vld [vmem:[#allocation13 + $0xd0] sm:$0xff]
    %v5706 = vld [vmem:[#allocation13 + $0xd8] sm:$0xff]
    %v5707 = vld [vmem:[#allocation13 + $0xe0] sm:$0xff]
    %v5708 = vld [vmem:[#allocation13 + $0xe8] sm:$0xff]
    %v5709 = vld [vmem:[#allocation13 + $0xf0] sm:$0xff]
    %v5710 = vld [vmem:[#allocation13 + $0xf8] sm:$0xff]
    %v5711 = vld [vmem:[#allocation13 + $0x100] sm:$0xff]
    %v5712 = vld [vmem:[#allocation13 + $0x108] sm:$0xff]
    %v5713 = vld [vmem:[#allocation13 + $0x110] sm:$0xff]
    %v5714 = vld [vmem:[#allocation13 + $0x118] sm:$0xff]
    %v5715 = vld [vmem:[#allocation13 + $0x120] sm:$0xff]
    %v5716 = vld [vmem:[#allocation13 + $0x128] sm:$0xff]
    %v5717 = vld [vmem:[#allocation13 + $0x130] sm:$0xff]
    %v5718 = vld [vmem:[#allocation13 + $0x138] sm:$0xff]
    %v5719 = vld [vmem:[#allocation13 + $0x140] sm:$0xff]
    %v5720 = vld [vmem:[#allocation13 + $0x148] sm:$0xff]
    %v5721 = vld [vmem:[#allocation13 + $0x150] sm:$0xff]
    %v5722 = vld [vmem:[#allocation13 + $0x158] sm:$0xff]
    %v5723 = vld [vmem:[#allocation13 + $0x160] sm:$0xff]
    %v5724 = vld [vmem:[#allocation13 + $0x168] sm:$0xff]
    %v5725 = vld [vmem:[#allocation13 + $0x170] sm:$0xff]
    %v5726 = vld [vmem:[#allocation13 + $0x178] sm:$0xff]
    %v5727 = vld [vmem:[#allocation13 + $0x180] sm:$0xff]
    %v5728 = vld [vmem:[#allocation13 + $0x188] sm:$0xff]
    %v5729 = vld [vmem:[#allocation13 + $0x190] sm:$0xff]
    %v5730 = vld [vmem:[#allocation13 + $0x198] sm:$0xff]
    %v5731 = vld [vmem:[#allocation13 + $0x1a0] sm:$0xff]
    %v5732 = vld [vmem:[#allocation13 + $0x1a8] sm:$0xff]
    %v5733 = vld [vmem:[#allocation13 + $0x1b0] sm:$0xff]
    %v5734 = vld [vmem:[#allocation13 + $0x1b8] sm:$0xff]
    %v5735 = vld [vmem:[#allocation13 + $0x1c0] sm:$0xff]
    %v5736 = vld [vmem:[#allocation13 + $0x1c8] sm:$0xff]
    %v5737 = vld [vmem:[#allocation13 + $0x1d0] sm:$0xff]
    %v5738 = vld [vmem:[#allocation13 + $0x1d8] sm:$0xff]
    %v5739 = vld [vmem:[#allocation13 + $0x1e0] sm:$0xff]
    %v5740 = vld [vmem:[#allocation13 + $0x1e8] sm:$0xff]
    %v5741 = vld [vmem:[#allocation13 + $0x1f0] sm:$0xff]
    %v5742 = vld [vmem:[#allocation13 + $0x1f8] sm:$0xff]
    %v5807 = vunpack.c.l.b16 %v5679
    %v5808 = vunpack.c.h.b16 %v5679
    %v5809 = vunpack.c.l.b16 %v5680
    %v5810 = vunpack.c.h.b16 %v5680
    %v5811 = vunpack.c.l.b16 %v5681
    %v5812 = vunpack.c.h.b16 %v5681
    %v5813 = vunpack.c.l.b16 %v5682
    %v5814 = vunpack.c.h.b16 %v5682
    %v5815 = vunpack.c.l.b16 %v5683
    %v5816 = vunpack.c.h.b16 %v5683
    %v5817 = vunpack.c.l.b16 %v5684
    %v5818 = vunpack.c.h.b16 %v5684
    %v5819 = vunpack.c.l.b16 %v5685
    %v5820 = vunpack.c.h.b16 %v5685
    %v5821 = vunpack.c.l.b16 %v5686
    %v5822 = vunpack.c.h.b16 %v5686
    %v5823 = vunpack.c.l.b16 %v5687
    %v5824 = vunpack.c.h.b16 %v5687
    %v5825 = vunpack.c.l.b16 %v5688
    %v5826 = vunpack.c.h.b16 %v5688
    %v5827 = vunpack.c.l.b16 %v5689
    %v5828 = vunpack.c.h.b16 %v5689
    %v5829 = vunpack.c.l.b16 %v5690
    %v5830 = vunpack.c.h.b16 %v5690
    %v5831 = vunpack.c.l.b16 %v5691
    %v5832 = vunpack.c.h.b16 %v5691
    %v5833 = vunpack.c.l.b16 %v5692
    %v5834 = vunpack.c.h.b16 %v5692
    %v5835 = vunpack.c.l.b16 %v5693
    %v5836 = vunpack.c.h.b16 %v5693
    %v5837 = vunpack.c.l.b16 %v5694
    %v5838 = vunpack.c.h.b16 %v5694
    %v5839 = vunpack.c.l.b16 %v5695
    %v5840 = vunpack.c.h.b16 %v5695
    %v5841 = vunpack.c.l.b16 %v5696
    %v5842 = vunpack.c.h.b16 %v5696
    %v5843 = vunpack.c.l.b16 %v5697
    %v5844 = vunpack.c.h.b16 %v5697
    %v5845 = vunpack.c.l.b16 %v5698
    %v5846 = vunpack.c.h.b16 %v5698
    %v5847 = vunpack.c.l.b16 %v5699
    %v5848 = vunpack.c.h.b16 %v5699
    %v5849 = vunpack.c.l.b16 %v5700
    %v5850 = vunpack.c.h.b16 %v5700
    %v5851 = vunpack.c.l.b16 %v5701
    %v5852 = vunpack.c.h.b16 %v5701
    %v5853 = vunpack.c.l.b16 %v5702
    %v5854 = vunpack.c.h.b16 %v5702
    %v5855 = vunpack.c.l.b16 %v5703
    %v5856 = vunpack.c.h.b16 %v5703
    %v5857 = vunpack.c.l.b16 %v5704
    %v5858 = vunpack.c.h.b16 %v5704
    %v5859 = vunpack.c.l.b16 %v5705
    %v5860 = vunpack.c.h.b16 %v5705
    %v5861 = vunpack.c.l.b16 %v5706
    %v5862 = vunpack.c.h.b16 %v5706
    %v5863 = vunpack.c.l.b16 %v5707
    %v5864 = vunpack.c.h.b16 %v5707
    %v5865 = vunpack.c.l.b16 %v5708
    %v5866 = vunpack.c.h.b16 %v5708
    %v5867 = vunpack.c.l.b16 %v5709
    %v5868 = vunpack.c.h.b16 %v5709
    %v5869 = vunpack.c.l.b16 %v5710
    %v5870 = vunpack.c.h.b16 %v5710
    %v5871 = vunpack.c.l.b16 %v5711
    %v5872 = vunpack.c.h.b16 %v5711
    %v5873 = vunpack.c.l.b16 %v5712
    %v5874 = vunpack.c.h.b16 %v5712
    %v5875 = vunpack.c.l.b16 %v5713
    %v5876 = vunpack.c.h.b16 %v5713
    %v5877 = vunpack.c.l.b16 %v5714
    %v5878 = vunpack.c.h.b16 %v5714
    %v5879 = vunpack.c.l.b16 %v5715
    %v5880 = vunpack.c.h.b16 %v5715
    %v5881 = vunpack.c.l.b16 %v5716
    %v5882 = vunpack.c.h.b16 %v5716
    %v5883 = vunpack.c.l.b16 %v5717
    %v5884 = vunpack.c.h.b16 %v5717
    %v5885 = vunpack.c.l.b16 %v5718
    %v5886 = vunpack.c.h.b16 %v5718
    %v5887 = vunpack.c.l.b16 %v5719
    %v5888 = vunpack.c.h.b16 %v5719
    %v5889 = vunpack.c.l.b16 %v5720
    %v5890 = vunpack.c.h.b16 %v5720
    %v5891 = vunpack.c.l.b16 %v5721
    %v5892 = vunpack.c.h.b16 %v5721
    %v5893 = vunpack.c.l.b16 %v5722
    %v5894 = vunpack.c.h.b16 %v5722
    %v5895 = vunpack.c.l.b16 %v5723
    %v5896 = vunpack.c.h.b16 %v5723
    %v5897 = vunpack.c.l.b16 %v5724
    %v5898 = vunpack.c.h.b16 %v5724
    %v5899 = vunpack.c.l.b16 %v5725
    %v5900 = vunpack.c.h.b16 %v5725
    %v5901 = vunpack.c.l.b16 %v5726
    %v5902 = vunpack.c.h.b16 %v5726
    %v5903 = vunpack.c.l.b16 %v5727
    %v5904 = vunpack.c.h.b16 %v5727
    %v5905 = vunpack.c.l.b16 %v5728
    %v5906 = vunpack.c.h.b16 %v5728
    %v5907 = vunpack.c.l.b16 %v5729
    %v5908 = vunpack.c.h.b16 %v5729
    %v5909 = vunpack.c.l.b16 %v5730
    %v5910 = vunpack.c.h.b16 %v5730
    %v5911 = vunpack.c.l.b16 %v5731
    %v5912 = vunpack.c.h.b16 %v5731
    %v5913 = vunpack.c.l.b16 %v5732
    %v5914 = vunpack.c.h.b16 %v5732
    %v5915 = vunpack.c.l.b16 %v5733
    %v5916 = vunpack.c.h.b16 %v5733
    %v5917 = vunpack.c.l.b16 %v5734
    %v5918 = vunpack.c.h.b16 %v5734
    %v5919 = vunpack.c.l.b16 %v5735
    %v5920 = vunpack.c.h.b16 %v5735
    %v5921 = vunpack.c.l.b16 %v5736
    %v5922 = vunpack.c.h.b16 %v5736
    %v5923 = vunpack.c.l.b16 %v5737
    %v5924 = vunpack.c.h.b16 %v5737
    %v5925 = vunpack.c.l.b16 %v5738
    %v5926 = vunpack.c.h.b16 %v5738
    %v5927 = vunpack.c.l.b16 %v5739
    %v5928 = vunpack.c.h.b16 %v5739
    %v5929 = vunpack.c.l.b16 %v5740
    %v5930 = vunpack.c.h.b16 %v5740
    %v5931 = vunpack.c.l.b16 %v5741
    %v5932 = vunpack.c.h.b16 %v5741
    %v5933 = vunpack.c.l.b16 %v5742
    %v5934 = vunpack.c.h.b16 %v5742
    %v5935 = vpack.c.b16 %v5811, %v5807
    %v5936 = vpack.c.b16 %v5812, %v5808
    %v5937 = vpack.c.b16 %v5813, %v5809
    %v5938 = vpack.c.b16 %v5814, %v5810
    %v5939 = vpack.c.b16 %v5819, %v5815
    %v5940 = vpack.c.b16 %v5820, %v5816
    %v5941 = vpack.c.b16 %v5821, %v5817
    %v5942 = vpack.c.b16 %v5822, %v5818
    %v5943 = vpack.c.b16 %v5827, %v5823
    %v5944 = vpack.c.b16 %v5828, %v5824
    %v5945 = vpack.c.b16 %v5829, %v5825
    %v5946 = vpack.c.b16 %v5830, %v5826
    %v5947 = vpack.c.b16 %v5835, %v5831
    %v5948 = vpack.c.b16 %v5836, %v5832
    %v5949 = vpack.c.b16 %v5837, %v5833
    %v5950 = vpack.c.b16 %v5838, %v5834
    %v5951 = vpack.c.b16 %v5843, %v5839
    %v5952 = vpack.c.b16 %v5844, %v5840
    %v5953 = vpack.c.b16 %v5845, %v5841
    %v5954 = vpack.c.b16 %v5846, %v5842
    %v5955 = vpack.c.b16 %v5851, %v5847
    %v5956 = vpack.c.b16 %v5852, %v5848
    %v5957 = vpack.c.b16 %v5853, %v5849
    %v5958 = vpack.c.b16 %v5854, %v5850
    %v5959 = vpack.c.b16 %v5859, %v5855
    %v5960 = vpack.c.b16 %v5860, %v5856
    %v5961 = vpack.c.b16 %v5861, %v5857
    %v5962 = vpack.c.b16 %v5862, %v5858
    %v5963 = vpack.c.b16 %v5867, %v5863
    %v5964 = vpack.c.b16 %v5868, %v5864
    %v5965 = vpack.c.b16 %v5869, %v5865
    %v5966 = vpack.c.b16 %v5870, %v5866
    %v5967 = vpack.c.b16 %v5875, %v5871
    %v5968 = vpack.c.b16 %v5876, %v5872
    %v5969 = vpack.c.b16 %v5877, %v5873
    %v5970 = vpack.c.b16 %v5878, %v5874
    %v5971 = vpack.c.b16 %v5883, %v5879
    %v5972 = vpack.c.b16 %v5884, %v5880
    %v5973 = vpack.c.b16 %v5885, %v5881
    %v5974 = vpack.c.b16 %v5886, %v5882
    %v5975 = vpack.c.b16 %v5891, %v5887
    %v5976 = vpack.c.b16 %v5892, %v5888
    %v5977 = vpack.c.b16 %v5893, %v5889
    %v5978 = vpack.c.b16 %v5894, %v5890
    %v5979 = vpack.c.b16 %v5899, %v5895
    %v5980 = vpack.c.b16 %v5900, %v5896
    %v5981 = vpack.c.b16 %v5901, %v5897
    %v5982 = vpack.c.b16 %v5902, %v5898
    %v5983 = vpack.c.b16 %v5907, %v5903
    %v5984 = vpack.c.b16 %v5908, %v5904
    %v5985 = vpack.c.b16 %v5909, %v5905
    %v5986 = vpack.c.b16 %v5910, %v5906
    %v5987 = vpack.c.b16 %v5915, %v5911
    %v5988 = vpack.c.b16 %v5916, %v5912
    %v5989 = vpack.c.b16 %v5917, %v5913
    %v5990 = vpack.c.b16 %v5918, %v5914
    %v5991 = vpack.c.b16 %v5923, %v5919
    %v5992 = vpack.c.b16 %v5924, %v5920
    %v5993 = vpack.c.b16 %v5925, %v5921
    %v5994 = vpack.c.b16 %v5926, %v5922
    %v5995 = vpack.c.b16 %v5931, %v5927
    %v5996 = vpack.c.b16 %v5932, %v5928
    %v5997 = vpack.c.b16 %v5933, %v5929
    %v5998 = vpack.c.b16 %v5934, %v5930
    %6063 = vmatprep.subr.bf16.mxu0 %v5964
    %6064 = vmatpush1.bf16.msra.mxu0 %v5963
    %6065 = vmatprep.subr.bf16.mxu0 %v5960
    %6066 = vmatpush1.bf16.msra.mxu0 %v5959
    %6067 = vmatprep.subr.bf16.mxu0 %v5956
    %6068 = vmatpush1.bf16.msra.mxu0 %v5955
    %6069 = vmatprep.subr.bf16.mxu0 %v5952
    %6070 = vmatpush1.bf16.msra.mxu0 %v5951
    %6071 = vmatprep.subr.bf16.mxu0 %v5948
    %6072 = vmatpush1.bf16.msra.mxu0 %v5947
    %6073 = vmatprep.subr.bf16.mxu0 %v5944
    %6074 = vmatpush1.bf16.msra.mxu0 %v5943
    %6075 = vmatprep.subr.bf16.mxu0 %v5940
    %6076 = vmatpush1.bf16.msra.mxu0 %v5939
    %6077 = vmatprep.subr.bf16.mxu0 %v5936
    %6078 = vmatpush1.bf16.msra.mxu0 %v5935
    %6079 = vmatprep.subr.bf16.mxu0 %v5996
    %6080 = vmatpush2.bf16.msra.mxu0 %v5995
    %6081 = vmatprep.subr.bf16.mxu0 %v5992
    %6082 = vmatpush2.bf16.msra.mxu0 %v5991
    %6083 = vmatprep.subr.bf16.mxu0 %v5988
    %6084 = vmatpush2.bf16.msra.mxu0 %v5987
    %6085 = vmatprep.subr.bf16.mxu0 %v5984
    %6086 = vmatpush2.bf16.msra.mxu0 %v5983
    %6087 = vmatprep.subr.bf16.mxu0 %v5980
    %6088 = vmatpush2.bf16.msra.mxu0 %v5979
    %6089 = vmatprep.subr.bf16.mxu0 %v5976
    %6090 = vmatpush2.bf16.msra.mxu0 %v5975
    %6091 = vmatprep.subr.bf16.mxu0 %v5972
    %6092 = vmatpush2.bf16.msra.mxu0 %v5971
    %6093 = vmatprep.subr.bf16.mxu0 %v5968
    %6094 = vmatpush2.bf16.msra.mxu0 %v5967
    %6095 = vmatprep.mubr.bf16.mxu0 %v5374
    %6096 = vmatmul.mubr.bf16.gmra.mxu0 %v5678
    %v6097 = vpop.f32.mrf.mxu0
    %v6098 = vadd.f32 %v589, %v6097
    %v6099 = vpop.f32.mrf.mxu0
    %v6100 = vadd.f32 %v593, %v6099
    %v6101 = vpop.f32.mrf.mxu0
    %v6102 = vpop.f32.mrf.mxu0
    %6103 = vdwg.mxu0
    %6104 = vmatprep.subr.bf16.mxu0 %v5966
    %6105 = vmatpush1.bf16.msra.mxu0 %v5965
    %6106 = vmatprep.subr.bf16.mxu0 %v5962
    %6107 = vmatpush1.bf16.msra.mxu0 %v5961
    %6108 = vmatprep.subr.bf16.mxu0 %v5958
    %6109 = vmatpush1.bf16.msra.mxu0 %v5957
    %6110 = vmatprep.subr.bf16.mxu0 %v5954
    %6111 = vmatpush1.bf16.msra.mxu0 %v5953
    %6112 = vmatprep.subr.bf16.mxu0 %v5950
    %6113 = vmatpush1.bf16.msra.mxu0 %v5949
    %6114 = vmatprep.subr.bf16.mxu0 %v5946
    %6115 = vmatpush1.bf16.msra.mxu0 %v5945
    %6116 = vmatprep.subr.bf16.mxu0 %v5942
    %6117 = vmatpush1.bf16.msra.mxu0 %v5941
    %6118 = vmatprep.subr.bf16.mxu0 %v5938
    %6119 = vmatpush1.bf16.msra.mxu0 %v5937
    %6120 = vmatprep.subr.bf16.mxu0 %v5998
    %6121 = vmatpush2.bf16.msra.mxu0 %v5997
    %6122 = vmatprep.subr.bf16.mxu0 %v5994
    %6123 = vmatpush2.bf16.msra.mxu0 %v5993
    %6124 = vmatprep.subr.bf16.mxu0 %v5990
    %6125 = vmatpush2.bf16.msra.mxu0 %v5989
    %6126 = vmatprep.subr.bf16.mxu0 %v5986
    %6127 = vmatpush2.bf16.msra.mxu0 %v5985
    %6128 = vmatprep.subr.bf16.mxu0 %v5982
    %6129 = vmatpush2.bf16.msra.mxu0 %v5981
    %6130 = vmatprep.subr.bf16.mxu0 %v5978
    %6131 = vmatpush2.bf16.msra.mxu0 %v5977
    %6132 = vmatprep.subr.bf16.mxu0 %v5974
    %6133 = vmatpush2.bf16.msra.mxu0 %v5973
    %6134 = vmatprep.subr.bf16.mxu0 %v5970
    %6135 = vmatpush2.bf16.msra.mxu0 %v5969
    %6136 = vmatprep.mubr.bf16.mxu0 %v5374
    %6137 = vmatmul.mubr.bf16.gmra.mxu0 %v5678
    %v6138 = vpop.f32.mrf.mxu0
    %v6139 = vadd.f32 %v597, %v6138
    %v6140 = vpop.f32.mrf.mxu0
    %v6141 = vadd.f32 %v601, %v6140
    %v6142 = vpop.f32.mrf.mxu0
    %v6143 = vpop.f32.mrf.mxu0
    %6144 = vdwg.mxu0
    %v6145 = vxor.u32 %v6098, 2147483648
    %v6146 = vxor.u32 %v6100, 2147483648
    %v6147 = vxor.u32 %v6139, 2147483648
    %v6148 = vmul.f32 %v6145, 1.442695
    %v6149 = vpow.pop %v6148
    %v6150 = vmul.f32 %v6146, 1.442695
    %v6151 = vpow.pop %v6150
    %v6152 = vmul.f32 %v6147, 1.442695
    %v6153 = vpow.pop %v6152
    %v6154 = vadd.f32 %v6149, 1.0
    %v6155 = vadd.f32 %v6151, 1.0
    %v6156 = vadd.f32 %v6153, 1.0
    %v6157 = vrcp.pop %v6154
    %v6158 = vmul.f32 1.0, %v6157
    %v6159 = vrcp.pop %v6155
    %v6160 = vmul.f32 1.0, %v6159
    %v6161 = vrcp.pop %v6156
    %v6162 = vmul.f32 1.0, %v6161
    %v6163 = vtanh.pop %v6141
    %v6164 = vmul.f32 %v6160, %v5371
    %v6165 = vmul.f32 %v6158, %v6163
    %v6166 = vadd.f32 %v6164, %v6165
    %v6167 = vtanh.pop %v6166
    %v6168 = vmul.f32 %v6162, %v6167
    %v6169 = vpack.c.bf16 %v6168, %v6168
    %6170 = vst [vmem:[#allocation4 + $0x18] sm:$0xf] %v6169
    %v6171 = vld [vmem:[#allocation12] sm:$0xff]
    %v6172 = vld [vmem:[#allocation12 + $0x8] sm:$0xff]
    %v6173 = vld [vmem:[#allocation12 + $0x10] sm:$0xff]
    %v6174 = vld [vmem:[#allocation12 + $0x18] sm:$0xff]
    %v6175 = vld [vmem:[#allocation12 + $0x20] sm:$0xff]
    %v6176 = vld [vmem:[#allocation12 + $0x28] sm:$0xff]
    %v6177 = vld [vmem:[#allocation12 + $0x30] sm:$0xff]
    %v6178 = vld [vmem:[#allocation12 + $0x38] sm:$0xff]
    %v6179 = vld [vmem:[#allocation12 + $0x40] sm:$0xff]
    %v6180 = vld [vmem:[#allocation12 + $0x48] sm:$0xff]
    %v6181 = vld [vmem:[#allocation12 + $0x50] sm:$0xff]
    %v6182 = vld [vmem:[#allocation12 + $0x58] sm:$0xff]
    %v6183 = vld [vmem:[#allocation12 + $0x60] sm:$0xff]
    %v6184 = vld [vmem:[#allocation12 + $0x68] sm:$0xff]
    %v6185 = vld [vmem:[#allocation12 + $0x70] sm:$0xff]
    %v6186 = vld [vmem:[#allocation12 + $0x78] sm:$0xff]
    %v6187 = vld [vmem:[#allocation12 + $0x80] sm:$0xff]
    %v6188 = vld [vmem:[#allocation12 + $0x88] sm:$0xff]
    %v6189 = vld [vmem:[#allocation12 + $0x90] sm:$0xff]
    %v6190 = vld [vmem:[#allocation12 + $0x98] sm:$0xff]
    %v6191 = vld [vmem:[#allocation12 + $0xa0] sm:$0xff]
    %v6192 = vld [vmem:[#allocation12 + $0xa8] sm:$0xff]
    %v6193 = vld [vmem:[#allocation12 + $0xb0] sm:$0xff]
    %v6194 = vld [vmem:[#allocation12 + $0xb8] sm:$0xff]
    %v6195 = vld [vmem:[#allocation12 + $0xc0] sm:$0xff]
    %v6196 = vld [vmem:[#allocation12 + $0xc8] sm:$0xff]
    %v6197 = vld [vmem:[#allocation12 + $0xd0] sm:$0xff]
    %v6198 = vld [vmem:[#allocation12 + $0xd8] sm:$0xff]
    %v6199 = vld [vmem:[#allocation12 + $0xe0] sm:$0xff]
    %v6200 = vld [vmem:[#allocation12 + $0xe8] sm:$0xff]
    %v6201 = vld [vmem:[#allocation12 + $0xf0] sm:$0xff]
    %v6202 = vld [vmem:[#allocation12 + $0xf8] sm:$0xff]
    %v6203 = vld [vmem:[#allocation3 + $0xe0] sm:$0xff]
    %v6204 = vld [vmem:[#allocation3 + $0xe8] sm:$0xff]
    %v6205 = vld [vmem:[#allocation3 + $0xf0] sm:$0xff]
    %v6206 = vld [vmem:[#allocation3 + $0xf8] sm:$0xff]
    %v6239 = vunpack.c.l.b16 %v6171
    %v6240 = vunpack.c.h.b16 %v6171
    %v6241 = vunpack.c.l.b16 %v6172
    %v6242 = vunpack.c.h.b16 %v6172
    %v6243 = vunpack.c.l.b16 %v6173
    %v6244 = vunpack.c.h.b16 %v6173
    %v6245 = vunpack.c.l.b16 %v6174
    %v6246 = vunpack.c.h.b16 %v6174
    %v6247 = vunpack.c.l.b16 %v6175
    %v6248 = vunpack.c.h.b16 %v6175
    %v6249 = vunpack.c.l.b16 %v6176
    %v6250 = vunpack.c.h.b16 %v6176
    %v6251 = vunpack.c.l.b16 %v6177
    %v6252 = vunpack.c.h.b16 %v6177
    %v6253 = vunpack.c.l.b16 %v6178
    %v6254 = vunpack.c.h.b16 %v6178
    %v6255 = vunpack.c.l.b16 %v6179
    %v6256 = vunpack.c.h.b16 %v6179
    %v6257 = vunpack.c.l.b16 %v6180
    %v6258 = vunpack.c.h.b16 %v6180
    %v6259 = vunpack.c.l.b16 %v6181
    %v6260 = vunpack.c.h.b16 %v6181
    %v6261 = vunpack.c.l.b16 %v6182
    %v6262 = vunpack.c.h.b16 %v6182
    %v6263 = vunpack.c.l.b16 %v6183
    %v6264 = vunpack.c.h.b16 %v6183
    %v6265 = vunpack.c.l.b16 %v6184
    %v6266 = vunpack.c.h.b16 %v6184
    %v6267 = vunpack.c.l.b16 %v6185
    %v6268 = vunpack.c.h.b16 %v6185
    %v6269 = vunpack.c.l.b16 %v6186
    %v6270 = vunpack.c.h.b16 %v6186
    %v6271 = vunpack.c.l.b16 %v6187
    %v6272 = vunpack.c.h.b16 %v6187
    %v6273 = vunpack.c.l.b16 %v6188
    %v6274 = vunpack.c.h.b16 %v6188
    %v6275 = vunpack.c.l.b16 %v6189
    %v6276 = vunpack.c.h.b16 %v6189
    %v6277 = vunpack.c.l.b16 %v6190
    %v6278 = vunpack.c.h.b16 %v6190
    %v6279 = vunpack.c.l.b16 %v6191
    %v6280 = vunpack.c.h.b16 %v6191
    %v6281 = vunpack.c.l.b16 %v6192
    %v6282 = vunpack.c.h.b16 %v6192
    %v6283 = vunpack.c.l.b16 %v6193
    %v6284 = vunpack.c.h.b16 %v6193
    %v6285 = vunpack.c.l.b16 %v6194
    %v6286 = vunpack.c.h.b16 %v6194
    %v6287 = vunpack.c.l.b16 %v6195
    %v6288 = vunpack.c.h.b16 %v6195
    %v6289 = vunpack.c.l.b16 %v6196
    %v6290 = vunpack.c.h.b16 %v6196
    %v6291 = vunpack.c.l.b16 %v6197
    %v6292 = vunpack.c.h.b16 %v6197
    %v6293 = vunpack.c.l.b16 %v6198
    %v6294 = vunpack.c.h.b16 %v6198
    %v6295 = vunpack.c.l.b16 %v6199
    %v6296 = vunpack.c.h.b16 %v6199
    %v6297 = vunpack.c.l.b16 %v6200
    %v6298 = vunpack.c.h.b16 %v6200
    %v6299 = vunpack.c.l.b16 %v6201
    %v6300 = vunpack.c.h.b16 %v6201
    %v6301 = vunpack.c.l.b16 %v6202
    %v6302 = vunpack.c.h.b16 %v6202
    %v6303 = vpack.c.b16 %v6243, %v6239
    %v6304 = vpack.c.b16 %v6244, %v6240
    %v6305 = vpack.c.b16 %v6245, %v6241
    %v6306 = vpack.c.b16 %v6246, %v6242
    %v6307 = vpack.c.b16 %v6251, %v6247
    %v6308 = vpack.c.b16 %v6252, %v6248
    %v6309 = vpack.c.b16 %v6253, %v6249
    %v6310 = vpack.c.b16 %v6254, %v6250
    %v6311 = vpack.c.b16 %v6259, %v6255
    %v6312 = vpack.c.b16 %v6260, %v6256
    %v6313 = vpack.c.b16 %v6261, %v6257
    %v6314 = vpack.c.b16 %v6262, %v6258
    %v6315 = vpack.c.b16 %v6267, %v6263
    %v6316 = vpack.c.b16 %v6268, %v6264
    %v6317 = vpack.c.b16 %v6269, %v6265
    %v6318 = vpack.c.b16 %v6270, %v6266
    %v6319 = vpack.c.b16 %v6275, %v6271
    %v6320 = vpack.c.b16 %v6276, %v6272
    %v6321 = vpack.c.b16 %v6277, %v6273
    %v6322 = vpack.c.b16 %v6278, %v6274
    %v6323 = vpack.c.b16 %v6283, %v6279
    %v6324 = vpack.c.b16 %v6284, %v6280
    %v6325 = vpack.c.b16 %v6285, %v6281
    %v6326 = vpack.c.b16 %v6286, %v6282
    %v6327 = vpack.c.b16 %v6291, %v6287
    %v6328 = vpack.c.b16 %v6292, %v6288
    %v6329 = vpack.c.b16 %v6293, %v6289
    %v6330 = vpack.c.b16 %v6294, %v6290
    %v6331 = vpack.c.b16 %v6299, %v6295
    %v6332 = vpack.c.b16 %v6300, %v6296
    %v6333 = vpack.c.b16 %v6301, %v6297
    %v6334 = vpack.c.b16 %v6302, %v6298
    %6367 = vmatprep.subr.bf16.mxu0 %v6332
    %6368 = vmatpush1.bf16.msra.mxu0 %v6331
    %6369 = vmatprep.subr.bf16.mxu0 %v6328
    %6370 = vmatpush1.bf16.msra.mxu0 %v6327
    %6371 = vmatprep.subr.bf16.mxu0 %v6324
    %6372 = vmatpush1.bf16.msra.mxu0 %v6323
    %6373 = vmatprep.subr.bf16.mxu0 %v6320
    %6374 = vmatpush1.bf16.msra.mxu0 %v6319
    %6375 = vmatprep.subr.bf16.mxu0 %v6316
    %6376 = vmatpush1.bf16.msra.mxu0 %v6315
    %6377 = vmatprep.subr.bf16.mxu0 %v6312
    %6378 = vmatpush1.bf16.msra.mxu0 %v6311
    %6379 = vmatprep.subr.bf16.mxu0 %v6308
    %6380 = vmatpush1.bf16.msra.mxu0 %v6307
    %6381 = vmatprep.subr.bf16.mxu0 %v6304
    %6382 = vmatpush1.bf16.msra.mxu0 %v6303
    %6383 = vmatprep.subr.bf16.mxu0 0
    %6384 = vmatpush2.bf16.msra.mxu0 0
    %6385 = vmatprep.subr.bf16.mxu0 0
    %6386 = vmatpush2.bf16.msra.mxu0 0
    %6387 = vmatprep.subr.bf16.mxu0 0
    %6388 = vmatpush2.bf16.msra.mxu0 0
    %6389 = vmatprep.subr.bf16.mxu0 0
    %6390 = vmatpush2.bf16.msra.mxu0 0
    %6391 = vmatprep.subr.bf16.mxu0 0
    %6392 = vmatpush2.bf16.msra.mxu0 0
    %6393 = vmatprep.subr.bf16.mxu0 0
    %6394 = vmatpush2.bf16.msra.mxu0 0
    %6395 = vmatprep.subr.bf16.mxu0 0
    %6396 = vmatpush2.bf16.msra.mxu0 0
    %6397 = vmatprep.subr.bf16.mxu0 0
    %6398 = vmatpush2.bf16.msra.mxu0 0
    %6399 = vmatprep.mubr.bf16.mxu0 0
    %6400 = vmatmul.mubr.bf16.gmra.mxu0 %v5678
    %v6401 = vpop.f32.mrf.mxu0
    %v6402 = vadd.f32 %v6203, %v6401
    %v6403 = vpop.f32.mrf.mxu0
    %v6404 = vadd.f32 %v6204, %v6403
    %v6405 = vpop.f32.mrf.mxu0
    %v6406 = vpop.f32.mrf.mxu0
    %6407 = vdwg.mxu0
    %6408 = vmatprep.subr.bf16.mxu0 %v6334
    %6409 = vmatpush1.bf16.msra.mxu0 %v6333
    %6410 = vmatprep.subr.bf16.mxu0 %v6330
    %6411 = vmatpush1.bf16.msra.mxu0 %v6329
    %6412 = vmatprep.subr.bf16.mxu0 %v6326
    %6413 = vmatpush1.bf16.msra.mxu0 %v6325
    %6414 = vmatprep.subr.bf16.mxu0 %v6322
    %6415 = vmatpush1.bf16.msra.mxu0 %v6321
    %6416 = vmatprep.subr.bf16.mxu0 %v6318
    %6417 = vmatpush1.bf16.msra.mxu0 %v6317
    %6418 = vmatprep.subr.bf16.mxu0 %v6314
    %6419 = vmatpush1.bf16.msra.mxu0 %v6313
    %6420 = vmatprep.subr.bf16.mxu0 %v6310
    %6421 = vmatpush1.bf16.msra.mxu0 %v6309
    %6422 = vmatprep.subr.bf16.mxu0 %v6306
    %6423 = vmatpush1.bf16.msra.mxu0 %v6305
    %6424 = vmatprep.subr.bf16.mxu0 0
    %6425 = vmatpush2.bf16.msra.mxu0 0
    %6426 = vmatprep.subr.bf16.mxu0 0
    %6427 = vmatpush2.bf16.msra.mxu0 0
    %6428 = vmatprep.subr.bf16.mxu0 0
    %6429 = vmatpush2.bf16.msra.mxu0 0
    %6430 = vmatprep.subr.bf16.mxu0 0
    %6431 = vmatpush2.bf16.msra.mxu0 0
    %6432 = vmatprep.subr.bf16.mxu0 0
    %6433 = vmatpush2.bf16.msra.mxu0 0
    %6434 = vmatprep.subr.bf16.mxu0 0
    %6435 = vmatpush2.bf16.msra.mxu0 0
    %6436 = vmatprep.subr.bf16.mxu0 0
    %6437 = vmatpush2.bf16.msra.mxu0 0
    %6438 = vmatprep.subr.bf16.mxu0 0
    %6439 = vmatpush2.bf16.msra.mxu0 0
    %6440 = vmatprep.mubr.bf16.mxu0 0
    %6441 = vmatmul.mubr.bf16.gmra.mxu0 %v5678
    %v6442 = vpop.f32.mrf.mxu0
    %v6443 = vadd.f32 %v6205, %v6442
    %v6444 = vpop.f32.mrf.mxu0
    %v6445 = vadd.f32 %v6206, %v6444
    %v6446 = vpop.f32.mrf.mxu0
    %v6447 = vpop.f32.mrf.mxu0
    %6448 = vdwg.mxu0
    %v6449 = vxor.u32 %v6402, 2147483648
    %v6450 = vxor.u32 %v6404, 2147483648
    %v6451 = vxor.u32 %v6443, 2147483648
    %v6452 = vmul.f32 %v6449, 1.442695
    %v6453 = vpow.pop %v6452
    %v6454 = vmul.f32 %v6450, 1.442695
    %v6455 = vpow.pop %v6454
    %v6456 = vmul.f32 %v6451, 1.442695
    %v6457 = vpow.pop %v6456
    %v6458 = vadd.f32 %v6453, 1.0
    %v6459 = vadd.f32 %v6455, 1.0
    %v6460 = vadd.f32 %v6457, 1.0
    %v6461 = vrcp.pop %v6458
    %v6462 = vmul.f32 1.0, %v6461
    %v6463 = vrcp.pop %v6459
    %v6464 = vmul.f32 1.0, %v6463
    %v6465 = vrcp.pop %v6460
    %v6466 = vmul.f32 1.0, %v6465
    %v6467 = vtanh.pop %v6445
    %v6468 = vmul.f32 %v6464, %v5675
    %v6469 = vmul.f32 %v6462, %v6467
    %v6470 = vadd.f32 %v6468, %v6469
    %v6471 = vtanh.pop %v6470
    %v6472 = vmul.f32 %v6466, %v6471
    %v6473 = vpack.c.bf16 %v6472, %v6472
    %v6474 = vld [vmem:[#allocation13] sm:$0xff]
    %v6475 = vld [vmem:[#allocation13 + $0x8] sm:$0xff]
    %v6476 = vld [vmem:[#allocation13 + $0x10] sm:$0xff]
    %v6477 = vld [vmem:[#allocation13 + $0x18] sm:$0xff]
    %v6478 = vld [vmem:[#allocation13 + $0x20] sm:$0xff]
    %v6479 = vld [vmem:[#allocation13 + $0x28] sm:$0xff]
    %v6480 = vld [vmem:[#allocation13 + $0x30] sm:$0xff]
    %v6481 = vld [vmem:[#allocation13 + $0x38] sm:$0xff]
    %v6482 = vld [vmem:[#allocation13 + $0x40] sm:$0xff]
    %v6483 = vld [vmem:[#allocation13 + $0x48] sm:$0xff]
    %v6484 = vld [vmem:[#allocation13 + $0x50] sm:$0xff]
    %v6485 = vld [vmem:[#allocation13 + $0x58] sm:$0xff]
    %v6486 = vld [vmem:[#allocation13 + $0x60] sm:$0xff]
    %v6487 = vld [vmem:[#allocation13 + $0x68] sm:$0xff]
    %v6488 = vld [vmem:[#allocation13 + $0x70] sm:$0xff]
    %v6489 = vld [vmem:[#allocation13 + $0x78] sm:$0xff]
    %v6490 = vld [vmem:[#allocation13 + $0x80] sm:$0xff]
    %v6491 = vld [vmem:[#allocation13 + $0x88] sm:$0xff]
    %v6492 = vld [vmem:[#allocation13 + $0x90] sm:$0xff]
    %v6493 = vld [vmem:[#allocation13 + $0x98] sm:$0xff]
    %v6494 = vld [vmem:[#allocation13 + $0xa0] sm:$0xff]
    %v6495 = vld [vmem:[#allocation13 + $0xa8] sm:$0xff]
    %v6496 = vld [vmem:[#allocation13 + $0xb0] sm:$0xff]
    %v6497 = vld [vmem:[#allocation13 + $0xb8] sm:$0xff]
    %v6498 = vld [vmem:[#allocation13 + $0xc0] sm:$0xff]
    %v6499 = vld [vmem:[#allocation13 + $0xc8] sm:$0xff]
    %v6500 = vld [vmem:[#allocation13 + $0xd0] sm:$0xff]
    %v6501 = vld [vmem:[#allocation13 + $0xd8] sm:$0xff]
    %v6502 = vld [vmem:[#allocation13 + $0xe0] sm:$0xff]
    %v6503 = vld [vmem:[#allocation13 + $0xe8] sm:$0xff]
    %v6504 = vld [vmem:[#allocation13 + $0xf0] sm:$0xff]
    %v6505 = vld [vmem:[#allocation13 + $0xf8] sm:$0xff]
    %v6506 = vld [vmem:[#allocation13 + $0x100] sm:$0xff]
    %v6507 = vld [vmem:[#allocation13 + $0x108] sm:$0xff]
    %v6508 = vld [vmem:[#allocation13 + $0x110] sm:$0xff]
    %v6509 = vld [vmem:[#allocation13 + $0x118] sm:$0xff]
    %v6510 = vld [vmem:[#allocation13 + $0x120] sm:$0xff]
    %v6511 = vld [vmem:[#allocation13 + $0x128] sm:$0xff]
    %v6512 = vld [vmem:[#allocation13 + $0x130] sm:$0xff]
    %v6513 = vld [vmem:[#allocation13 + $0x138] sm:$0xff]
    %v6514 = vld [vmem:[#allocation13 + $0x140] sm:$0xff]
    %v6515 = vld [vmem:[#allocation13 + $0x148] sm:$0xff]
    %v6516 = vld [vmem:[#allocation13 + $0x150] sm:$0xff]
    %v6517 = vld [vmem:[#allocation13 + $0x158] sm:$0xff]
    %v6518 = vld [vmem:[#allocation13 + $0x160] sm:$0xff]
    %v6519 = vld [vmem:[#allocation13 + $0x168] sm:$0xff]
    %v6520 = vld [vmem:[#allocation13 + $0x170] sm:$0xff]
    %v6521 = vld [vmem:[#allocation13 + $0x178] sm:$0xff]
    %v6522 = vld [vmem:[#allocation13 + $0x180] sm:$0xff]
    %v6523 = vld [vmem:[#allocation13 + $0x188] sm:$0xff]
    %v6524 = vld [vmem:[#allocation13 + $0x190] sm:$0xff]
    %v6525 = vld [vmem:[#allocation13 + $0x198] sm:$0xff]
    %v6526 = vld [vmem:[#allocation13 + $0x1a0] sm:$0xff]
    %v6527 = vld [vmem:[#allocation13 + $0x1a8] sm:$0xff]
    %v6528 = vld [vmem:[#allocation13 + $0x1b0] sm:$0xff]
    %v6529 = vld [vmem:[#allocation13 + $0x1b8] sm:$0xff]
    %v6530 = vld [vmem:[#allocation13 + $0x1c0] sm:$0xff]
    %v6531 = vld [vmem:[#allocation13 + $0x1c8] sm:$0xff]
    %v6532 = vld [vmem:[#allocation13 + $0x1d0] sm:$0xff]
    %v6533 = vld [vmem:[#allocation13 + $0x1d8] sm:$0xff]
    %v6534 = vld [vmem:[#allocation13 + $0x1e0] sm:$0xff]
    %v6535 = vld [vmem:[#allocation13 + $0x1e8] sm:$0xff]
    %v6536 = vld [vmem:[#allocation13 + $0x1f0] sm:$0xff]
    %v6537 = vld [vmem:[#allocation13 + $0x1f8] sm:$0xff]
    %v6602 = vunpack.c.l.b16 %v6474
    %v6603 = vunpack.c.h.b16 %v6474
    %v6604 = vunpack.c.l.b16 %v6475
    %v6605 = vunpack.c.h.b16 %v6475
    %v6606 = vunpack.c.l.b16 %v6476
    %v6607 = vunpack.c.h.b16 %v6476
    %v6608 = vunpack.c.l.b16 %v6477
    %v6609 = vunpack.c.h.b16 %v6477
    %v6610 = vunpack.c.l.b16 %v6478
    %v6611 = vunpack.c.h.b16 %v6478
    %v6612 = vunpack.c.l.b16 %v6479
    %v6613 = vunpack.c.h.b16 %v6479
    %v6614 = vunpack.c.l.b16 %v6480
    %v6615 = vunpack.c.h.b16 %v6480
    %v6616 = vunpack.c.l.b16 %v6481
    %v6617 = vunpack.c.h.b16 %v6481
    %v6618 = vunpack.c.l.b16 %v6482
    %v6619 = vunpack.c.h.b16 %v6482
    %v6620 = vunpack.c.l.b16 %v6483
    %v6621 = vunpack.c.h.b16 %v6483
    %v6622 = vunpack.c.l.b16 %v6484
    %v6623 = vunpack.c.h.b16 %v6484
    %v6624 = vunpack.c.l.b16 %v6485
    %v6625 = vunpack.c.h.b16 %v6485
    %v6626 = vunpack.c.l.b16 %v6486
    %v6627 = vunpack.c.h.b16 %v6486
    %v6628 = vunpack.c.l.b16 %v6487
    %v6629 = vunpack.c.h.b16 %v6487
    %v6630 = vunpack.c.l.b16 %v6488
    %v6631 = vunpack.c.h.b16 %v6488
    %v6632 = vunpack.c.l.b16 %v6489
    %v6633 = vunpack.c.h.b16 %v6489
    %v6634 = vunpack.c.l.b16 %v6490
    %v6635 = vunpack.c.h.b16 %v6490
    %v6636 = vunpack.c.l.b16 %v6491
    %v6637 = vunpack.c.h.b16 %v6491
    %v6638 = vunpack.c.l.b16 %v6492
    %v6639 = vunpack.c.h.b16 %v6492
    %v6640 = vunpack.c.l.b16 %v6493
    %v6641 = vunpack.c.h.b16 %v6493
    %v6642 = vunpack.c.l.b16 %v6494
    %v6643 = vunpack.c.h.b16 %v6494
    %v6644 = vunpack.c.l.b16 %v6495
    %v6645 = vunpack.c.h.b16 %v6495
    %v6646 = vunpack.c.l.b16 %v6496
    %v6647 = vunpack.c.h.b16 %v6496
    %v6648 = vunpack.c.l.b16 %v6497
    %v6649 = vunpack.c.h.b16 %v6497
    %v6650 = vunpack.c.l.b16 %v6498
    %v6651 = vunpack.c.h.b16 %v6498
    %v6652 = vunpack.c.l.b16 %v6499
    %v6653 = vunpack.c.h.b16 %v6499
    %v6654 = vunpack.c.l.b16 %v6500
    %v6655 = vunpack.c.h.b16 %v6500
    %v6656 = vunpack.c.l.b16 %v6501
    %v6657 = vunpack.c.h.b16 %v6501
    %v6658 = vunpack.c.l.b16 %v6502
    %v6659 = vunpack.c.h.b16 %v6502
    %v6660 = vunpack.c.l.b16 %v6503
    %v6661 = vunpack.c.h.b16 %v6503
    %v6662 = vunpack.c.l.b16 %v6504
    %v6663 = vunpack.c.h.b16 %v6504
    %v6664 = vunpack.c.l.b16 %v6505
    %v6665 = vunpack.c.h.b16 %v6505
    %v6666 = vunpack.c.l.b16 %v6506
    %v6667 = vunpack.c.h.b16 %v6506
    %v6668 = vunpack.c.l.b16 %v6507
    %v6669 = vunpack.c.h.b16 %v6507
    %v6670 = vunpack.c.l.b16 %v6508
    %v6671 = vunpack.c.h.b16 %v6508
    %v6672 = vunpack.c.l.b16 %v6509
    %v6673 = vunpack.c.h.b16 %v6509
    %v6674 = vunpack.c.l.b16 %v6510
    %v6675 = vunpack.c.h.b16 %v6510
    %v6676 = vunpack.c.l.b16 %v6511
    %v6677 = vunpack.c.h.b16 %v6511
    %v6678 = vunpack.c.l.b16 %v6512
    %v6679 = vunpack.c.h.b16 %v6512
    %v6680 = vunpack.c.l.b16 %v6513
    %v6681 = vunpack.c.h.b16 %v6513
    %v6682 = vunpack.c.l.b16 %v6514
    %v6683 = vunpack.c.h.b16 %v6514
    %v6684 = vunpack.c.l.b16 %v6515
    %v6685 = vunpack.c.h.b16 %v6515
    %v6686 = vunpack.c.l.b16 %v6516
    %v6687 = vunpack.c.h.b16 %v6516
    %v6688 = vunpack.c.l.b16 %v6517
    %v6689 = vunpack.c.h.b16 %v6517
    %v6690 = vunpack.c.l.b16 %v6518
    %v6691 = vunpack.c.h.b16 %v6518
    %v6692 = vunpack.c.l.b16 %v6519
    %v6693 = vunpack.c.h.b16 %v6519
    %v6694 = vunpack.c.l.b16 %v6520
    %v6695 = vunpack.c.h.b16 %v6520
    %v6696 = vunpack.c.l.b16 %v6521
    %v6697 = vunpack.c.h.b16 %v6521
    %v6698 = vunpack.c.l.b16 %v6522
    %v6699 = vunpack.c.h.b16 %v6522
    %v6700 = vunpack.c.l.b16 %v6523
    %v6701 = vunpack.c.h.b16 %v6523
    %v6702 = vunpack.c.l.b16 %v6524
    %v6703 = vunpack.c.h.b16 %v6524
    %v6704 = vunpack.c.l.b16 %v6525
    %v6705 = vunpack.c.h.b16 %v6525
    %v6706 = vunpack.c.l.b16 %v6526
    %v6707 = vunpack.c.h.b16 %v6526
    %v6708 = vunpack.c.l.b16 %v6527
    %v6709 = vunpack.c.h.b16 %v6527
    %v6710 = vunpack.c.l.b16 %v6528
    %v6711 = vunpack.c.h.b16 %v6528
    %v6712 = vunpack.c.l.b16 %v6529
    %v6713 = vunpack.c.h.b16 %v6529
    %v6714 = vunpack.c.l.b16 %v6530
    %v6715 = vunpack.c.h.b16 %v6530
    %v6716 = vunpack.c.l.b16 %v6531
    %v6717 = vunpack.c.h.b16 %v6531
    %v6718 = vunpack.c.l.b16 %v6532
    %v6719 = vunpack.c.h.b16 %v6532
    %v6720 = vunpack.c.l.b16 %v6533
    %v6721 = vunpack.c.h.b16 %v6533
    %v6722 = vunpack.c.l.b16 %v6534
    %v6723 = vunpack.c.h.b16 %v6534
    %v6724 = vunpack.c.l.b16 %v6535
    %v6725 = vunpack.c.h.b16 %v6535
    %v6726 = vunpack.c.l.b16 %v6536
    %v6727 = vunpack.c.h.b16 %v6536
    %v6728 = vunpack.c.l.b16 %v6537
    %v6729 = vunpack.c.h.b16 %v6537
    %v6730 = vpack.c.b16 %v6606, %v6602
    %v6731 = vpack.c.b16 %v6607, %v6603
    %v6732 = vpack.c.b16 %v6608, %v6604
    %v6733 = vpack.c.b16 %v6609, %v6605
    %v6734 = vpack.c.b16 %v6614, %v6610
    %v6735 = vpack.c.b16 %v6615, %v6611
    %v6736 = vpack.c.b16 %v6616, %v6612
    %v6737 = vpack.c.b16 %v6617, %v6613
    %v6738 = vpack.c.b16 %v6622, %v6618
    %v6739 = vpack.c.b16 %v6623, %v6619
    %v6740 = vpack.c.b16 %v6624, %v6620
    %v6741 = vpack.c.b16 %v6625, %v6621
    %v6742 = vpack.c.b16 %v6630, %v6626
    %v6743 = vpack.c.b16 %v6631, %v6627
    %v6744 = vpack.c.b16 %v6632, %v6628
    %v6745 = vpack.c.b16 %v6633, %v6629
    %v6746 = vpack.c.b16 %v6638, %v6634
    %v6747 = vpack.c.b16 %v6639, %v6635
    %v6748 = vpack.c.b16 %v6640, %v6636
    %v6749 = vpack.c.b16 %v6641, %v6637
    %v6750 = vpack.c.b16 %v6646, %v6642
    %v6751 = vpack.c.b16 %v6647, %v6643
    %v6752 = vpack.c.b16 %v6648, %v6644
    %v6753 = vpack.c.b16 %v6649, %v6645
    %v6754 = vpack.c.b16 %v6654, %v6650
    %v6755 = vpack.c.b16 %v6655, %v6651
    %v6756 = vpack.c.b16 %v6656, %v6652
    %v6757 = vpack.c.b16 %v6657, %v6653
    %v6758 = vpack.c.b16 %v6662, %v6658
    %v6759 = vpack.c.b16 %v6663, %v6659
    %v6760 = vpack.c.b16 %v6664, %v6660
    %v6761 = vpack.c.b16 %v6665, %v6661
    %v6762 = vpack.c.b16 %v6670, %v6666
    %v6763 = vpack.c.b16 %v6671, %v6667
    %v6764 = vpack.c.b16 %v6672, %v6668
    %v6765 = vpack.c.b16 %v6673, %v6669
    %v6766 = vpack.c.b16 %v6678, %v6674
    %v6767 = vpack.c.b16 %v6679, %v6675
    %v6768 = vpack.c.b16 %v6680, %v6676
    %v6769 = vpack.c.b16 %v6681, %v6677
    %v6770 = vpack.c.b16 %v6686, %v6682
    %v6771 = vpack.c.b16 %v6687, %v6683
    %v6772 = vpack.c.b16 %v6688, %v6684
    %v6773 = vpack.c.b16 %v6689, %v6685
    %v6774 = vpack.c.b16 %v6694, %v6690
    %v6775 = vpack.c.b16 %v6695, %v6691
    %v6776 = vpack.c.b16 %v6696, %v6692
    %v6777 = vpack.c.b16 %v6697, %v6693
    %v6778 = vpack.c.b16 %v6702, %v6698
    %v6779 = vpack.c.b16 %v6703, %v6699
    %v6780 = vpack.c.b16 %v6704, %v6700
    %v6781 = vpack.c.b16 %v6705, %v6701
    %v6782 = vpack.c.b16 %v6710, %v6706
    %v6783 = vpack.c.b16 %v6711, %v6707
    %v6784 = vpack.c.b16 %v6712, %v6708
    %v6785 = vpack.c.b16 %v6713, %v6709
    %v6786 = vpack.c.b16 %v6718, %v6714
    %v6787 = vpack.c.b16 %v6719, %v6715
    %v6788 = vpack.c.b16 %v6720, %v6716
    %v6789 = vpack.c.b16 %v6721, %v6717
    %v6790 = vpack.c.b16 %v6726, %v6722
    %v6791 = vpack.c.b16 %v6727, %v6723
    %v6792 = vpack.c.b16 %v6728, %v6724
    %v6793 = vpack.c.b16 %v6729, %v6725
    %6858 = vmatprep.subr.bf16.mxu0 %v6759
    %6859 = vmatpush1.bf16.msra.mxu0 %v6758
    %6860 = vmatprep.subr.bf16.mxu0 %v6755
    %6861 = vmatpush1.bf16.msra.mxu0 %v6754
    %6862 = vmatprep.subr.bf16.mxu0 %v6751
    %6863 = vmatpush1.bf16.msra.mxu0 %v6750
    %6864 = vmatprep.subr.bf16.mxu0 %v6747
    %6865 = vmatpush1.bf16.msra.mxu0 %v6746
    %6866 = vmatprep.subr.bf16.mxu0 %v6743
    %6867 = vmatpush1.bf16.msra.mxu0 %v6742
    %6868 = vmatprep.subr.bf16.mxu0 %v6739
    %6869 = vmatpush1.bf16.msra.mxu0 %v6738
    %6870 = vmatprep.subr.bf16.mxu0 %v6735
    %6871 = vmatpush1.bf16.msra.mxu0 %v6734
    %6872 = vmatprep.subr.bf16.mxu0 %v6731
    %6873 = vmatpush1.bf16.msra.mxu0 %v6730
    %6874 = vmatprep.subr.bf16.mxu0 %v6791
    %6875 = vmatpush2.bf16.msra.mxu0 %v6790
    %6876 = vmatprep.subr.bf16.mxu0 %v6787
    %6877 = vmatpush2.bf16.msra.mxu0 %v6786
    %6878 = vmatprep.subr.bf16.mxu0 %v6783
    %6879 = vmatpush2.bf16.msra.mxu0 %v6782
    %6880 = vmatprep.subr.bf16.mxu0 %v6779
    %6881 = vmatpush2.bf16.msra.mxu0 %v6778
    %6882 = vmatprep.subr.bf16.mxu0 %v6775
    %6883 = vmatpush2.bf16.msra.mxu0 %v6774
    %6884 = vmatprep.subr.bf16.mxu0 %v6771
    %6885 = vmatpush2.bf16.msra.mxu0 %v6770
    %6886 = vmatprep.subr.bf16.mxu0 %v6767
    %6887 = vmatpush2.bf16.msra.mxu0 %v6766
    %6888 = vmatprep.subr.bf16.mxu0 %v6763
    %6889 = vmatpush2.bf16.msra.mxu0 %v6762
    %6890 = vmatprep.mubr.bf16.mxu0 %v6169
    %6891 = vmatmul.mubr.bf16.gmra.mxu0 %v6473
    %v6892 = vpop.f32.mrf.mxu0
    %v6893 = vadd.f32 %v589, %v6892
    %v6894 = vpop.f32.mrf.mxu0
    %v6895 = vadd.f32 %v593, %v6894
    %v6896 = vpop.f32.mrf.mxu0
    %v6897 = vpop.f32.mrf.mxu0
    %6898 = vdwg.mxu0
    %6899 = vmatprep.subr.bf16.mxu0 %v6761
    %6900 = vmatpush1.bf16.msra.mxu0 %v6760
    %6901 = vmatprep.subr.bf16.mxu0 %v6757
    %6902 = vmatpush1.bf16.msra.mxu0 %v6756
    %6903 = vmatprep.subr.bf16.mxu0 %v6753
    %6904 = vmatpush1.bf16.msra.mxu0 %v6752
    %6905 = vmatprep.subr.bf16.mxu0 %v6749
    %6906 = vmatpush1.bf16.msra.mxu0 %v6748
    %6907 = vmatprep.subr.bf16.mxu0 %v6745
    %6908 = vmatpush1.bf16.msra.mxu0 %v6744
    %6909 = vmatprep.subr.bf16.mxu0 %v6741
    %6910 = vmatpush1.bf16.msra.mxu0 %v6740
    %6911 = vmatprep.subr.bf16.mxu0 %v6737
    %6912 = vmatpush1.bf16.msra.mxu0 %v6736
    %6913 = vmatprep.subr.bf16.mxu0 %v6733
    %6914 = vmatpush1.bf16.msra.mxu0 %v6732
    %6915 = vmatprep.subr.bf16.mxu0 %v6793
    %6916 = vmatpush2.bf16.msra.mxu0 %v6792
    %6917 = vmatprep.subr.bf16.mxu0 %v6789
    %6918 = vmatpush2.bf16.msra.mxu0 %v6788
    %6919 = vmatprep.subr.bf16.mxu0 %v6785
    %6920 = vmatpush2.bf16.msra.mxu0 %v6784
    %6921 = vmatprep.subr.bf16.mxu0 %v6781
    %6922 = vmatpush2.bf16.msra.mxu0 %v6780
    %6923 = vmatprep.subr.bf16.mxu0 %v6777
    %6924 = vmatpush2.bf16.msra.mxu0 %v6776
    %6925 = vmatprep.subr.bf16.mxu0 %v6773
    %6926 = vmatpush2.bf16.msra.mxu0 %v6772
    %6927 = vmatprep.subr.bf16.mxu0 %v6769
    %6928 = vmatpush2.bf16.msra.mxu0 %v6768
    %6929 = vmatprep.subr.bf16.mxu0 %v6765
    %6930 = vmatpush2.bf16.msra.mxu0 %v6764
    %6931 = vmatprep.mubr.bf16.mxu0 %v6169
    %6932 = vmatmul.mubr.bf16.gmra.mxu0 %v6473
    %v6933 = vpop.f32.mrf.mxu0
    %v6934 = vadd.f32 %v597, %v6933
    %v6935 = vpop.f32.mrf.mxu0
    %v6936 = vadd.f32 %v601, %v6935
    %v6937 = vpop.f32.mrf.mxu0
    %v6938 = vpop.f32.mrf.mxu0
    %6939 = vdwg.mxu0
    %v6940 = vxor.u32 %v6893, 2147483648
    %v6941 = vxor.u32 %v6895, 2147483648
    %v6942 = vxor.u32 %v6934, 2147483648
    %v6943 = vmul.f32 %v6940, 1.442695
    %v6944 = vpow.pop %v6943
    %v6945 = vmul.f32 %v6941, 1.442695
    %v6946 = vpow.pop %v6945
    %v6947 = vmul.f32 %v6942, 1.442695
    %v6948 = vpow.pop %v6947
    %v6949 = vadd.f32 %v6944, 1.0
    %v6950 = vadd.f32 %v6946, 1.0
    %v6951 = vadd.f32 %v6948, 1.0
    %v6952 = vrcp.pop %v6949
    %v6953 = vmul.f32 1.0, %v6952
    %v6954 = vrcp.pop %v6950
    %v6955 = vmul.f32 1.0, %v6954
    %v6956 = vrcp.pop %v6951
    %v6957 = vmul.f32 1.0, %v6956
    %v6958 = vtanh.pop %v6936
    %v6959 = vmul.f32 %v6955, %v6166
    %v6960 = vmul.f32 %v6953, %v6958
    %v6961 = vadd.f32 %v6959, %v6960
    %v6962 = vtanh.pop %v6961
    %v6963 = vmul.f32 %v6957, %v6962
    %v6964 = vpack.c.bf16 %v6963, %v6963
    %6965 = vst [vmem:[#allocation4 + $0x1c] sm:$0xf] %v6964
    %v6966 = vunpack.c.l.bf16 %v6473
    %6967 = vst [vmem:[#allocation17] sm:$0xff] %v6966
    %v6968 = vunpack.c.l.bf16 %v6964
    %s6969 = scalar_lea.vmem [#allocation17], 8
    %6970 = vst [vmem:[%s6969] sm:$0xff] %v6968
    %6971 = vst [vmem:[#allocation19] sm:$0xff] %v6470
    %s6972 = scalar_lea.vmem [#allocation19], 8
    %6973 = vst [vmem:[%s6972] sm:$0xff] %v6961
    %v6974 = vld [vmem:[#allocation4] sm:$0xf]
    %v6975 = vld [vmem:[#allocation4 + $0x4] sm:$0xf]
    %v6976 = vld [vmem:[#allocation4 + $0x8] sm:$0xf]
    %v6977 = vld [vmem:[#allocation4 + $0xc] sm:$0xf]
    %v6978 = vld [vmem:[#allocation4 + $0x10] sm:$0xf]
    %v6979 = vld [vmem:[#allocation4 + $0x14] sm:$0xf]
    %v6980 = vld [vmem:[#allocation4 + $0x18] sm:$0xf]
    %v6981 = vld [vmem:[#allocation4 + $0x1c] sm:$0xf]
    %v6982 = vld [vmem:[#allocation15] sm:$0xf]
    %v6983 = vld [vmem:[#allocation15 + $0x4] sm:$0xf]
    %v6984 = vld [vmem:[#allocation15 + $0x8] sm:$0xf]
    %v6985 = vld [vmem:[#allocation15 + $0xc] sm:$0xf]
    %v6986 = vld [vmem:[#allocation15 + $0x10] sm:$0xf]
    %v6987 = vld [vmem:[#allocation15 + $0x14] sm:$0xf]
    %v6988 = vld [vmem:[#allocation15 + $0x18] sm:$0xf]
    %v6989 = vld [vmem:[#allocation15 + $0x1c] sm:$0xf]
    %v6990 = vld [vmem:[#allocation15 + $0x20] sm:$0xf]
    %v6991 = vld [vmem:[#allocation15 + $0x24] sm:$0xf]
    %v6992 = vld [vmem:[#allocation15 + $0x28] sm:$0xf]
    %v6993 = vld [vmem:[#allocation15 + $0x2c] sm:$0xf]
    %v6994 = vld [vmem:[#allocation15 + $0x30] sm:$0xf]
    %v6995 = vld [vmem:[#allocation15 + $0x34] sm:$0xf]
    %v6996 = vld [vmem:[#allocation15 + $0x38] sm:$0xf]
    %v6997 = vld [vmem:[#allocation15 + $0x3c] sm:$0xf]
    %v6998 = vld [vmem:[%s8] sm:$0x1]
    %v7000 = vlaneseq
    %v7001 = vshrl.u32 %v7000, 7
    %v7002 = vsub.s32 0, %v7001
    %v7003 = vrot.slane %v6998, %v7002
    %v7013 = vunpack.c.l.b16 %v6974
    %v7014 = vunpack.c.l.b16 %v6975
    %v7015 = vunpack.c.l.b16 %v6976
    %v7016 = vunpack.c.l.b16 %v6977
    %v7017 = vunpack.c.l.b16 %v6978
    %v7018 = vunpack.c.l.b16 %v6979
    %v7019 = vunpack.c.l.b16 %v6980
    %v7020 = vunpack.c.l.b16 %v6981
    %v7021 = vpack.c.b16 %v7014, %v7013
    %v7022 = vpack.c.b16 %v7016, %v7015
    %v7023 = vpack.c.b16 %v7018, %v7017
    %v7024 = vpack.c.b16 %v7020, %v7019
    %v7045 = vunpack.c.l.b16 %v6982
    %v7046 = vunpack.c.l.b16 %v6983
    %v7047 = vunpack.c.l.b16 %v6984
    %v7048 = vunpack.c.l.b16 %v6985
    %v7049 = vunpack.c.l.b16 %v6986
    %v7050 = vunpack.c.l.b16 %v6987
    %v7051 = vunpack.c.l.b16 %v6988
    %v7052 = vunpack.c.l.b16 %v6989
    %v7053 = vunpack.c.l.b16 %v6990
    %v7054 = vunpack.c.l.b16 %v6991
    %v7055 = vunpack.c.l.b16 %v6992
    %v7056 = vunpack.c.l.b16 %v6993
    %v7057 = vunpack.c.l.b16 %v6994
    %v7058 = vunpack.c.l.b16 %v6995
    %v7059 = vunpack.c.l.b16 %v6996
    %v7060 = vunpack.c.l.b16 %v6997
    %v7061 = vpack.c.b16 %v7046, %v7045
    %v7062 = vpack.c.b16 %v7048, %v7047
    %v7063 = vpack.c.b16 %v7050, %v7049
    %v7064 = vpack.c.b16 %v7052, %v7051
    %v7065 = vpack.c.b16 %v7054, %v7053
    %v7066 = vpack.c.b16 %v7056, %v7055
    %v7067 = vpack.c.b16 %v7058, %v7057
    %v7068 = vpack.c.b16 %v7060, %v7059
    %7077 = vmatprep.subr.bf16.mxu0 0
    %7078 = vmatpush1.bf16.msra.mxu0 %v7068
    %7079 = vmatprep.subr.bf16.mxu0 0
    %7080 = vmatpush1.bf16.msra.mxu0 %v7067
    %7081 = vmatprep.subr.bf16.mxu0 0
    %7082 = vmatpush1.bf16.msra.mxu0 %v7066
    %7083 = vmatprep.subr.bf16.mxu0 0
    %7084 = vmatpush1.bf16.msra.mxu0 %v7065
    %7085 = vmatprep.subr.bf16.mxu0 0
    %7086 = vmatpush1.bf16.msra.mxu0 %v7064
    %7087 = vmatprep.subr.bf16.mxu0 0
    %7088 = vmatpush1.bf16.msra.mxu0 %v7063
    %7089 = vmatprep.subr.bf16.mxu0 0
    %7090 = vmatpush1.bf16.msra.mxu0 %v7062
    %7091 = vmatprep.subr.bf16.mxu0 0
    %7092 = vmatpush1.bf16.msra.mxu0 %v7061
    %7093 = vmatprep.subr.bf16.mxu0 0
    %7094 = vmatpush2.bf16.msra.mxu0 0
    %7095 = vmatprep.subr.bf16.mxu0 0
    %7096 = vmatpush2.bf16.msra.mxu0 0
    %7097 = vmatprep.subr.bf16.mxu0 0
    %7098 = vmatpush2.bf16.msra.mxu0 0
    %7099 = vmatprep.subr.bf16.mxu0 0
    %7100 = vmatpush2.bf16.msra.mxu0 0
    %7101 = vmatprep.subr.bf16.mxu0 0
    %7102 = vmatpush2.bf16.msra.mxu0 0
    %7103 = vmatprep.subr.bf16.mxu0 0
    %7104 = vmatpush2.bf16.msra.mxu0 0
    %7105 = vmatprep.subr.bf16.mxu0 0
    %7106 = vmatpush2.bf16.msra.mxu0 0
    %7107 = vmatprep.subr.bf16.mxu0 0
    %7108 = vmatpush2.bf16.msra.mxu0 0
    %7109 = vmatprep.mubr.bf16.mxu0 0
    %7110 = vmatmul.mubr.bf16.gmra.mxu0 %v7021
    %v7111 = vpop.f32.mrf.mxu0
    %v7112 = vadd.f32 %v7003, %v7111
    %v7113 = vpop.f32.mrf.mxu0
    %v7114 = vpop.f32.mrf.mxu0
    %v7115 = vadd.f32 %v7003, %v7114
    %v7116 = vpop.f32.mrf.mxu0
    %7117 = vmatprep.mubr.bf16.mxu0 0
    %7118 = vmatmul.mubr.bf16.gmra.mxu0 %v7022
    %v7119 = vpop.f32.mrf.mxu0
    %v7120 = vadd.f32 %v7003, %v7119
    %v7121 = vpop.f32.mrf.mxu0
    %v7122 = vpop.f32.mrf.mxu0
    %v7123 = vadd.f32 %v7003, %v7122
    %v7124 = vpop.f32.mrf.mxu0
    %7125 = vmatprep.mubr.bf16.mxu0 0
    %7126 = vmatmul.mubr.bf16.gmra.mxu0 %v7023
    %v7127 = vpop.f32.mrf.mxu0
    %v7128 = vadd.f32 %v7003, %v7127
    %v7129 = vpop.f32.mrf.mxu0
    %v7130 = vpop.f32.mrf.mxu0
    %v7131 = vadd.f32 %v7003, %v7130
    %v7132 = vpop.f32.mrf.mxu0
    %7133 = vmatprep.mubr.bf16.mxu0 0
    %7134 = vmatmul.mubr.bf16.gmra.mxu0 %v7024
    %v7135 = vpop.f32.mrf.mxu0
    %v7136 = vadd.f32 %v7003, %v7135
    %v7137 = vpop.f32.mrf.mxu0
    %v7138 = vpop.f32.mrf.mxu0
    %v7139 = vadd.f32 %v7003, %v7138
    %v7140 = vpop.f32.mrf.mxu0
    %7141 = vdwg.mxu0
    %7142 = vst [vmem:[#allocation16] sm:$0xff] %v7112
    %7143 = vst [vmem:[#allocation16 + $0x8] sm:$0xff] %v7115
    %7144 = vst [vmem:[#allocation16 + $0x10] sm:$0xff] %v7120
    %7145 = vst [vmem:[#allocation16 + $0x18] sm:$0xff] %v7123
    %7146 = vst [vmem:[#allocation16 + $0x20] sm:$0xff] %v7128
    %7147 = vst [vmem:[#allocation16 + $0x28] sm:$0xff] %v7131
    %7148 = vst [vmem:[#allocation16 + $0x30] sm:$0xff] %v7136
    %7149 = vst [vmem:[#allocation16 + $0x38] sm:$0xff] %v7139
    // Predicated region
    $region54: #{tpu_custom_call.1} parent=1 // pred_check
      _
    $region55: #{tpu_custom_call.1} parent=1 // pred_check_branch
      %7151 = sbr.rel (0) target = $region57
    $region56: #{tpu_custom_call.1} parent=1 // pred_region
      %s7153 = ssub.s32 1024, 1024
      %7154 = vsyncadd [#allocation9], %s7153
      %s7155 = sshll.u32 [#allocation16], 4
      %s7156 = int_to_ptr.vmem [resolvable:$true] %s7155
      %7161 = dma.vmem_to_hbm [thread:$0]  %s7156, 1024, %s9, [#allocation9], 128, 128, 8
    $region57: #{tpu_custom_call.1} parent=1 // pred_fallthru
      _
    // Predicated region
    $region58: #{tpu_custom_call.1} parent=1 // pred_check
      _
    $region59: #{tpu_custom_call.1} parent=1 // pred_check_branch
      %7163 = sbr.rel (0) target = $region61
    $region60: #{tpu_custom_call.1} parent=1 // pred_region
      %s7165 = ssub.s32 256, 256
      %7166 = vsyncadd [#allocation18], %s7165
      %s7167 = sshll.u32 [#allocation17], 4
      %s7168 = int_to_ptr.vmem [resolvable:$true] %s7167
      %7173 = dma.vmem_to_hbm [thread:$0]  %s7168, 256, %s10, [#allocation18], 128, 128, 8
    $region61: #{tpu_custom_call.1} parent=1 // pred_fallthru
      _
    // Predicated region
    $region62: #{tpu_custom_call.1} parent=1 // pred_check
      _
    $region63: #{tpu_custom_call.1} parent=1 // pred_check_branch
      %7175 = sbr.rel (0) target = $region65
    $region64: #{tpu_custom_call.1} parent=1 // pred_region
      %s7177 = ssub.s32 256, 256
      %7178 = vsyncadd [#allocation18], %s7177
      %s7179 = sshll.u32 [#allocation19], 4
      %s7180 = int_to_ptr.vmem [resolvable:$true] %s7179
      %7185 = dma.vmem_to_hbm [thread:$0]  %s7180, 256, %s11, [#allocation18], 128, 128, 8
    $region65: #{tpu_custom_call.1} parent=1 // pred_fallthru
      _
    // Predicated region
    $region66: #{tpu_custom_call.1} parent=1 // pred_check
      _
    $region67: #{tpu_custom_call.1} parent=1 // pred_check_branch
      %7187 = sbr.rel (0) target = $region69
    $region68: #{tpu_custom_call.1} parent=1 // pred_region
      %7188 = dma.done [#allocation9], 1024
    $region69: #{tpu_custom_call.1} parent=1 // pred_fallthru
      _
    // Predicated region
    $region70: #{tpu_custom_call.1} parent=1 // pred_check
      _
    $region71: #{tpu_custom_call.1} parent=1 // pred_check_branch
      %7190 = sbr.rel (0) target = $region73
    $region72: #{tpu_custom_call.1} parent=1 // pred_region
      %7191 = dma.done [#allocation18], 256
    $region73: #{tpu_custom_call.1} parent=1 // pred_fallthru
      _
    // Predicated region
    $region74: #{tpu_custom_call.1} parent=1 // pred_check
      _
    $region75: #{tpu_custom_call.1} parent=1 // pred_check_branch
      %7193 = sbr.rel (0) target = $region77
    $region76: #{tpu_custom_call.1} parent=1 // pred_region
      %7194 = dma.done [#allocation18], 256
    $region77: #{tpu_custom_call.1} parent=1 // pred_fallthru
      _
    %7195 = vsyncpa [#allocation8], 1
    %7196 = vsyncpa [#allocation11], 1
    %7197 = vsyncpa [#allocation14], 1
    %7198 = vsyncpa [#allocation9], 1
    %7199 = vsyncpa [#allocation18], 1

</llo_original>
